<compile_context>
chip_gen: v7x
topology: tpu7x:2x2x1
jax: 0.10.0
libtpu: 0.0.40
codegen_flags: <defaults>
</compile_context>

<pallas_src>
import numpy as np
import jax
import jax.numpy as jnp
from jax import lax
from jax.experimental import pallas as pl
from jax.experimental.pallas import tpu as pltpu

MFCC_FEATURES = 12
BN_EPS = 1e-5
_TAPS = ((0, 0), (0, 1), (1, 0), (1, 1))   # (dh, dw) of the 2x2 kernel
_CONV1_CHUNK = 128                         # rows per conv1 chunk (limits live vregs)


def _next_pow2(n):
    p = 1
    while p < n:
        p *= 2
    return p


def _ru8(n):
    return ((n + 7) // 8) * 8


def _geometry(B, H0, W0):
    """All static layout constants for the flat-slab scheme."""
    g = {}
    H1, W1 = H0 + 1, W0 + 1            # conv1 out (k=2, pad=1)
    P1h, P1w = H1 // 2, W1 // 2        # pool1 out
    H2, W2 = P1h + 1, P1w + 1          # conv2 out
    P2h, P2w = H2 // 2, W2 // 2        # pool2 out
    H3, W3 = P2h + 1, P2w + 1          # conv3 out
    P3h, P3w = H3 // 2, W3 // 2        # pool3 out
    g.update(B=B, H1=H1, W1=W1, P1h=P1h, P1w=P1w, H2=H2, W2=W2,
             P2h=P2h, P2w=P2w, H3=H3, W3=W3, P3h=P3h, P3w=P3w)

    # slab 0: padded input to conv1 (valid data at h in [1,1+H0), w in [1,1+W0))
    g['Hp0'], g['Wp0'] = H0 + 2, _ru8(W0 + 2)
    g['R0'] = B * g['Hp0'] * g['Wp0']
    g['R0A'] = _ru8(g['R0'] + g['Wp0'] + 1)          # + slack for shifted reads

    # slab 1: padded pool1 output / input to conv2 (pow2 dims -> cheap BN mask)
    g['Hp1'], g['Wp1'] = _next_pow2(P1h + 2), _next_pow2(P1w + 2)
    g['R1'] = B * g['Hp1'] * g['Wp1']
    g['R1A'] = _ru8(g['R1'] + g['Wp1'] + 1)

    # slab 2: padded pool2 output / input to conv3
    g['Hp2'], g['Wp2'] = _next_pow2(P2h + 2), _next_pow2(P2w + 2)
    g['R2'] = B * g['Hp2'] * g['Wp2']
    g['R2A'] = _ru8(g['R2'] + g['Wp2'] + 1)

    g['NQ'] = P3h * P3w                # spatial positions feeding the fc layer
    return g


# ------------------------------------------------------------------
# The single fused kernel
# ------------------------------------------------------------------
def _make_kernel(g, eps):
    B = g['B']
    Hp0, Wp0, R0 = g['Hp0'], g['Wp0'], g['R0']
    Hp1, Wp1, R1 = g['Hp1'], g['Wp1'], g['R1']
    Hp2, Wp2, R2 = g['Hp2'], g['Wp2'], g['R2']
    P1h, P1w = g['P1h'], g['P1w']
    P2h, P2w = g['P2h'], g['P2w']
    P3h, P3w = g['P3h'], g['P3w']
    H2, W2, H3, W3 = g['H2'], g['W2'], g['H3'], g['W3']
    NQ = g['NQ']
    sh1 = Wp1.bit_length() - 1        # log2(Wp1)
    sh2 = Wp2.bit_length() - 1        # log2(Wp2)

    def _max4(vs):
        return jnp.maximum(jnp.maximum(vs[0], vs[1]), jnp.maximum(vs[2], vs[3]))

    def _bn(z, n_rows, wlim, hlim, wp, hp, shift, count, gamma, beta):
        # training-mode BatchNorm2d: batch stats over the VALID rows only.
        r = lax.broadcasted_iota(jnp.int32, (n_rows, 1), 0)
        w_idx = r & (wp - 1)
        h_idx = (r >> shift) & (hp - 1)
        mask = ((w_idx < wlim) & (h_idx < hlim)).astype(jnp.float32)
        inv_n = 1.0 / count
        mean = jnp.sum(z * mask, axis=0, keepdims=True) * inv_n
        d = (z - mean) * mask
        var = jnp.sum(d * d, axis=0, keepdims=True) * inv_n
        return (z - mean) * (lax.rsqrt(var + eps) * gamma) + beta

    def kernel(x_ref, w1_ref, b1_ref,
               w2_ref, b2_ref, g1_ref, be1_ref,
               w3_ref, b3_ref, g2_ref, be2_ref,
               wfc_ref, bfc_ref,
               out_ref,
               c1_ref, a1_ref, c2_ref, a2_ref, c3_ref, fcin_ref):
        c1ch = w1_ref.shape[1]        # 128
        c2ch = w2_ref.shape[1]        # 64
        c3ch = w3_ref.shape[1]        # 32

        # ---- conv1 + ReLU (Cin=1 -> 4 VPU broadcast-FMAs, chunked over rows) ----
        b1v = b1_ref[...]
        w1v = [w1_ref[pl.ds(t, 1), :] for t in range(4)]
        for r0 in range(0, R0, _CONV1_CHUNK):
            n = min(_CONV1_CHUNK, R0 - r0)
            acc = None
            for t, (dh, dw) in enumerate(_TAPS):
                xs = x_ref[pl.ds(r0 + dh * Wp0 + dw, n), :]        # (n, 1)
                term = xs * w1v[t]                                 # (n, 128)
                acc = term if acc is None else acc + term
            c1_ref[pl.ds(r0, n), :] = jnp.maximum(acc + b1v, 0.0)

        # ---- pool1 -> zero-padded slab A1 ----
        a1_ref[...] = jnp.zeros_like(a1_ref)
        for b in range(B):
            for i in range(P1h):
                vs = [c1_ref[pl.ds((b * Hp0 + 2 * i + a) * Wp0 + w_, P1w, stride=2), :]
                      for a in (0, 1) for w_ in (0, 1)]
                a1_ref[pl.ds((b * Hp1 + i + 1) * Wp1 + 1, P1w), :] = _max4(vs)

        # ---- conv2 (4 shifted MXU matmuls) + bias + ReLU + BN1 ----
        z = None
        for t, (dh, dw) in enumerate(_TAPS):
            xs = a1_ref[pl.ds(dh * Wp1 + dw, R1), :]               # (R1, 128)
            wt = w2_ref[pl.ds(t * c1ch, c1ch), :]                  # (128, 64)
            zz = jnp.dot(xs, wt, preferred_element_type=jnp.float32)
            z = zz if z is None else z + zz
        z = jnp.maximum(z + b2_ref[...], 0.0)
        c2_ref[...] = _bn(z, R1, W2, H2, Wp1, Hp1, sh1,
                          float(B * H2 * W2), g1_ref[...], be1_ref[...])

        # ---- pool2 -> zero-padded slab A2 ----
        a2_ref[...] = jnp.zeros_like(a2_ref)
        for b in range(B):
            for i in range(P2h):
                vs = [c2_ref[pl.ds((b * Hp1 + 2 * i + a) * Wp1 + w_, P2w, stride=2), :]
                      for a in (0, 1) for w_ in (0, 1)]
                a2_ref[pl.ds((b * Hp2 + i + 1) * Wp2 + 1, P2w), :] = _max4(vs)

        # ---- conv3 + bias + ReLU + BN2 ----
        z = None
        for t, (dh, dw) in enumerate(_TAPS):
            xs = a2_ref[pl.ds(dh * Wp2 + dw, R2), :]               # (R2, 64)
            wt = w3_ref[pl.ds(t * c2ch, c2ch), :]                  # (64, 32)
            zz = jnp.dot(xs, wt, preferred_element_type=jnp.float32)
            z = zz if z is None else z + zz
        z = jnp.maximum(z + b3_ref[...], 0.0)
        c3_ref[...] = _bn(z, R2, W3, H3, Wp2, Hp2, sh2,
                          float(B * H3 * W3), g2_ref[...], be2_ref[...])

        # ---- pool3 -> fc input rows (row q*B + b holds pooled[b, i, j, :]) ----
        for b in range(B):
            for i in range(P3h):
                vs = [c3_ref[pl.ds((b * Hp2 + 2 * i + a) * Wp2 + w_, P3w, stride=2), :]
                      for a in (0, 1) for w_ in (0, 1)]
                pooled = _max4(vs)                                 # (P3w, 32)
                for j in range(P3w):
                    q = i * P3w + j
                    fcin_ref[pl.ds(q * B + b, 1), :] = pooled[j:j + 1, :]

        # ---- fc + ReLU (NCHW flatten is baked into wfc's row order) ----
        acc = None
        for q in range(NQ):
            lhs = fcin_ref[pl.ds(q * B, B), :]                     # (B, 32)
            rhs = wfc_ref[pl.ds(q * c3ch, c3ch), :]                # (32, 1024)
            zz = jnp.dot(lhs, rhs, preferred_element_type=jnp.float32)
            acc = zz if acc is None else acc + zz
        out_ref[...] = jnp.maximum(acc + bfc_ref[...], 0.0)

    return kernel


# ------------------------------------------------------------------
# Parameter packing (one-time, outside the jitted forward)
# ------------------------------------------------------------------
def pack_params(p):
    """Repack PyTorch-layout params into the kernel layout.

    Conv weights become (4*Cin, Cout) tap-major im2col matrices; the FC weight
    is pre-transposed to (flat, 1024) with the NCHW-flatten permutation baked
    into its rows, so the kernel never transposes/permutes at runtime.
    """
    c1 = p['w1'].shape[0]
    c2 = p['w2'].shape[0]
    c3 = p['w3'].shape[0]
    nout = p['wfc'].shape[0]
    nq = p['wfc'].shape[1] // c3

    kp = {}
    kp['w1k'] = jnp.transpose(p['w1'][:, 0, :, :], (1, 2, 0)).reshape(4, c1)
    kp['w2k'] = jnp.transpose(p['w2'], (2, 3, 1, 0)).reshape(4 * p['w2'].shape[1], c2)
    kp['w3k'] = jnp.transpose(p['w3'], (2, 3, 1, 0)).reshape(4 * p['w3'].shape[1], c3)
    kp['b1k'] = p['b1'].reshape(1, c1)
    kp['b2k'] = p['b2'].reshape(1, c2)
    kp['b3k'] = p['b3'].reshape(1, c3)
    kp['g1k'] = p['g1'].reshape(1, c2)
    kp['be1k'] = p['be1'].reshape(1, c2)
    kp['g2k'] = p['g2'].reshape(1, c3)
    kp['be2k'] = p['be2'].reshape(1, c3)
    # torch flat index = c*nq + q  ->  kernel row = q*c3 + c
    kp['wfck'] = jnp.transpose(p['wfc'].reshape(nout, c3, nq), (2, 1, 0)).reshape(nq * c3, nout)
    kp['bfck'] = p['bfc'].reshape(1, nout)
    return kp


# ------------------------------------------------------------------
# Forward pass (single pallas_call)
# ------------------------------------------------------------------
def audio_network_forward(x, kp):
    """x: (B, num_mfcc_rows, MFCC_FEATURES) f32, kp: pack_params output -> (B, 1024)."""
    B, H0, W0 = x.shape
    g = _geometry(B, H0, W0)
    c1 = kp['w1k'].shape[1]
    c2 = kp['w2k'].shape[1]
    c3 = kp['w3k'].shape[1]
    nout = kp['wfck'].shape[1]
    assert kp['wfck'].shape[0] == g['NQ'] * c3, "fc size mismatch with input geometry"

    # Only XLA glue: pad+reshape the tiny input into its flat zero-ring slab.
    xp = jnp.pad(x.astype(jnp.float32),
                 ((0, 0), (1, g['Hp0'] - H0 - 1), (1, g['Wp0'] - W0 - 1)))
    x_flat = xp.reshape(B * g['Hp0'] * g['Wp0'], 1)
    x_flat = jnp.pad(x_flat, ((0, g['R0A'] - g['R0']), (0, 0)))

    kernel = _make_kernel(g, BN_EPS)
    vspec = pl.BlockSpec(memory_space=pltpu.MemorySpace.VMEM)
    return pl.pallas_call(
        kernel,
        out_shape=jax.ShapeDtypeStruct((B, nout), jnp.float32),
        in_specs=[vspec] * 13,
        out_specs=vspec,
        scratch_shapes=[
            pltpu.VMEM((g['R0'], c1), jnp.float32),       # conv1 output slab
            pltpu.VMEM((g['R1A'], c1), jnp.float32),      # pool1 padded slab
            pltpu.VMEM((g['R1'], c2), jnp.float32),       # conv2+BN output slab
            pltpu.VMEM((g['R2A'], c2), jnp.float32),      # pool2 padded slab
            pltpu.VMEM((g['R2'], c3), jnp.float32),       # conv3+BN output slab
            pltpu.VMEM((g['NQ'] * B, c3), jnp.float32),   # fc input rows
        ],
    )(x_flat, kp['w1k'], kp['b1k'],
      kp['w2k'], kp['b2k'], kp['g1k'], kp['be1k'],
      kp['w3k'], kp['b3k'], kp['g2k'], kp['be2k'],
      kp['wfck'], kp['bfck'])


# ------------------------------------------------------------------
# Pure-JAX reference (for correctness check)
# ------------------------------------------------------------------
def reference_forward(x, p):
    y = x[:, None, :, :]  # NCHW

    def conv(y, w, b):
        o = jax.lax.conv_general_dilated(
            y, w, window_strides=(1, 1), padding=((1, 1), (1, 1)),
            dimension_numbers=('NCHW', 'OIHW', 'NCHW'))
        return o + b[None, :, None, None]

    def pool(y):
        return jax.lax.reduce_window(y, -jnp.inf, jax.lax.max,
                                     (1, 1, 2, 2), (1, 1, 2, 2), 'VALID')

    def bn(y, g, b):
        mean = jnp.mean(y, axis=(0, 2, 3), keepdims=True)
        var = jnp.mean(jnp.square(y - mean), axis=(0, 2, 3), keepdims=True)
        return ((y - mean) * jax.lax.rsqrt(var + BN_EPS)
                * g[None, :, None, None] + b[None, :, None, None])

    y = jax.nn.relu(conv(y, p['w1'], p['b1'])); y = pool(y)
    y = jax.nn.relu(conv(y, p['w2'], p['b2'])); y = bn(y, p['g1'], p['be1']); y = pool(y)
    y = jax.nn.relu(conv(y, p['w3'], p['b3'])); y = bn(y, p['g2'], p['be2']); y = pool(y)
    flat = y.reshape(y.shape[0], -1)
    return jax.nn.relu(flat @ p['wfc'].T + p['bfc'])


# ------------------------------------------------------------------
# Deterministic parameter init (shapes from AudioNetwork.__init__)
# ------------------------------------------------------------------
def init_params(key, num_mfcc_rows, num_mfcc_features=MFCC_FEATURES):
    ks = jax.random.split(key, 12)

    def u(k, shape, fan_in):
        bnd = 1.0 / np.sqrt(fan_in)
        return jax.random.uniform(k, shape, jnp.float32, -bnd, bnd)

    p = {}
    p['w1'] = u(ks[0], (128, 1, 2, 2), 1 * 4);    p['b1'] = u(ks[1], (128,), 1 * 4)
    p['w2'] = u(ks[2], (64, 128, 2, 2), 128 * 4); p['b2'] = u(ks[3], (64,), 128 * 4)
    p['w3'] = u(ks[4], (32, 64, 2, 2), 64 * 4);   p['b3'] = u(ks[5], (32,), 64 * 4)
    p['g1'] = 1.0 + 0.1 * jax.random.normal(ks[6], (64,), jnp.float32)
    p['be1'] = 0.1 * jax.random.normal(ks[7], (64,), jnp.float32)
    p['g2'] = 1.0 + 0.1 * jax.random.normal(ks[8], (32,), jnp.float32)
    p['be2'] = 0.1 * jax.random.normal(ks[9], (32,), jnp.float32)

    # flattened size, mirroring the dummy-input trace in __init__
    h, w = num_mfcc_rows, num_mfcc_features
    for _ in range(3):
        h, w = h + 1, w + 1      # conv k=2, pad=1
        h, w = h // 2, w // 2    # maxpool 2x2
    flat = 32 * h * w
    p['wfc'] = u(ks[10], (1024, flat), flat)
    p['bfc'] = u(ks[11], (1024,), flat)
    return p


if __name__ == "__main__":
    key = jax.random.PRNGKey(0)
    kx, kpk = jax.random.split(key)
    B, ROWS = 2, 16
    x = jax.random.normal(kx, (B, ROWS, MFCC_FEATURES), jnp.float32)
    params = init_params(kpk, ROWS)
    kparams = pack_params(params)           # one-time repack (baked FC permutation)

    fwd = jax.jit(audio_network_forward)
    out = jax.block_until_ready(fwd(x, kparams))

    ref = reference_forward(x, params)
    np.testing.assert_allclose(np.asarray(out), np.asarray(ref),
                               rtol=2e-2, atol=2e-2)
    assert out.shape == (B, 1024)
    print("KERNEL_OK")
</pallas_src>

<mosaic_0001>
module attributes {stable_mosaic.version = 11 : i64} {
  func.func @kernel(%arg0: memref<600x1xf32, #tpu.memory_space<vmem>>, %arg1: memref<4x128xf32, #tpu.memory_space<vmem>>, %arg2: memref<1x128xf32, #tpu.memory_space<vmem>>, %arg3: memref<512x64xf32, #tpu.memory_space<vmem>>, %arg4: memref<1x64xf32, #tpu.memory_space<vmem>>, %arg5: memref<1x64xf32, #tpu.memory_space<vmem>>, %arg6: memref<1x64xf32, #tpu.memory_space<vmem>>, %arg7: memref<256x32xf32, #tpu.memory_space<vmem>>, %arg8: memref<1x32xf32, #tpu.memory_space<vmem>>, %arg9: memref<1x32xf32, #tpu.memory_space<vmem>>, %arg10: memref<1x32xf32, #tpu.memory_space<vmem>>, %arg11: memref<128x1024xf32, #tpu.memory_space<vmem>>, %arg12: memref<1x1024xf32, #tpu.memory_space<vmem>>, %arg13: memref<2x1024xf32, #tpu.memory_space<vmem>>, %arg14: memref<576x128xf32, #tpu.memory_space<vmem>>, %arg15: memref<272x128xf32, #tpu.memory_space<vmem>>, %arg16: memref<256x64xf32, #tpu.memory_space<vmem>>, %arg17: memref<144x64xf32, #tpu.memory_space<vmem>>, %arg18: memref<128x32xf32, #tpu.memory_space<vmem>>, %arg19: memref<8x32xf32, #tpu.memory_space<vmem>>) attributes {dimension_semantics = [], scalar_prefetch = 0 : i64, scratch_operands = 6 : i64, tpu.core_type = #tpu.core_type<tc>} {
    %c0 = arith.constant 0 : index
    %c0_0 = arith.constant 0 : index
    %0 = vector.load %arg2[%c0, %c0_0] : memref<1x128xf32, #tpu.memory_space<vmem>>, vector<1x128xf32>
    %c0_1 = arith.constant 0 : index
    %c0_2 = arith.constant 0 : index
    %1 = vector.load %arg1[%c0_1, %c0_2] : memref<4x128xf32, #tpu.memory_space<vmem>>, vector<1x128xf32>
    %c1 = arith.constant 1 : index
    %c0_3 = arith.constant 0 : index
    %2 = vector.load %arg1[%c1, %c0_3] : memref<4x128xf32, #tpu.memory_space<vmem>>, vector<1x128xf32>
    %c2 = arith.constant 2 : index
    %c0_4 = arith.constant 0 : index
    %3 = vector.load %arg1[%c2, %c0_4] : memref<4x128xf32, #tpu.memory_space<vmem>>, vector<1x128xf32>
    %c3 = arith.constant 3 : index
    %c0_5 = arith.constant 0 : index
    %4 = vector.load %arg1[%c3, %c0_5] : memref<4x128xf32, #tpu.memory_space<vmem>>, vector<1x128xf32>
    %c0_6 = arith.constant 0 : index
    %c0_7 = arith.constant 0 : index
    %5 = vector.load %arg0[%c0_6, %c0_7] : memref<600x1xf32, #tpu.memory_space<vmem>>, vector<128x1xf32>
    %6 = vector.broadcast %5 : vector<128x1xf32> to vector<128x128xf32>
    %7 = vector.broadcast %1 : vector<1x128xf32> to vector<128x128xf32>
    %8 = arith.mulf %6, %7 : vector<128x128xf32>
    %c1_8 = arith.constant 1 : index
    %c0_9 = arith.constant 0 : index
    %9 = vector.load %arg0[%c1_8, %c0_9] : memref<600x1xf32, #tpu.memory_space<vmem>>, vector<128x1xf32>
    %10 = vector.broadcast %9 : vector<128x1xf32> to vector<128x128xf32>
    %11 = vector.broadcast %2 : vector<1x128xf32> to vector<128x128xf32>
    %12 = arith.mulf %10, %11 : vector<128x128xf32>
    %13 = arith.addf %8, %12 : vector<128x128xf32>
    %c16 = arith.constant 16 : index
    %c0_10 = arith.constant 0 : index
    %14 = vector.load %arg0[%c16, %c0_10] : memref<600x1xf32, #tpu.memory_space<vmem>>, vector<128x1xf32>
    %15 = vector.broadcast %14 : vector<128x1xf32> to vector<128x128xf32>
    %16 = vector.broadcast %3 : vector<1x128xf32> to vector<128x128xf32>
    %17 = arith.mulf %15, %16 : vector<128x128xf32>
    %18 = arith.addf %13, %17 : vector<128x128xf32>
    %c17 = arith.constant 17 : index
    %c0_11 = arith.constant 0 : index
    %19 = vector.load %arg0[%c17, %c0_11] : memref<600x1xf32, #tpu.memory_space<vmem>>, vector<128x1xf32>
    %20 = vector.broadcast %19 : vector<128x1xf32> to vector<128x128xf32>
    %21 = vector.broadcast %4 : vector<1x128xf32> to vector<128x128xf32>
    %22 = arith.mulf %20, %21 : vector<128x128xf32>
    %23 = arith.addf %18, %22 : vector<128x128xf32>
    %24 = vector.broadcast %0 : vector<1x128xf32> to vector<128x128xf32>
    %25 = arith.addf %23, %24 : vector<128x128xf32>
    %cst = arith.constant 0.000000e+00 : f32
    %26 = vector.broadcast %cst : f32 to vector<128x128xf32>
    %27 = arith.maximumf %25, %26 : vector<128x128xf32>
    %c0_12 = arith.constant 0 : index
    %c0_13 = arith.constant 0 : index
    %28 = vector.load %arg14[%c0_12, %c0_13] : memref<576x128xf32, #tpu.memory_space<vmem>>, vector<128x128xf32>
    tpu.vector_store %arg14[%c0_12, %c0_13], %27 {strides = array<i32>} : memref<576x128xf32, #tpu.memory_space<vmem>>, vector<128x128xf32>,
    %c128 = arith.constant 128 : index
    %c0_14 = arith.constant 0 : index
    %29 = vector.load %arg0[%c128, %c0_14] : memref<600x1xf32, #tpu.memory_space<vmem>>, vector<128x1xf32>
    %30 = vector.broadcast %29 : vector<128x1xf32> to vector<128x128xf32>
    %31 = vector.broadcast %1 : vector<1x128xf32> to vector<128x128xf32>
    %32 = arith.mulf %30, %31 : vector<128x128xf32>
    %c129 = arith.constant 129 : index
    %c0_15 = arith.constant 0 : index
    %33 = vector.load %arg0[%c129, %c0_15] : memref<600x1xf32, #tpu.memory_space<vmem>>, vector<128x1xf32>
    %34 = vector.broadcast %33 : vector<128x1xf32> to vector<128x128xf32>
    %35 = vector.broadcast %2 : vector<1x128xf32> to vector<128x128xf32>
    %36 = arith.mulf %34, %35 : vector<128x128xf32>
    %37 = arith.addf %32, %36 : vector<128x128xf32>
    %c144 = arith.constant 144 : index
    %c0_16 = arith.constant 0 : index
    %38 = vector.load %arg0[%c144, %c0_16] : memref<600x1xf32, #tpu.memory_space<vmem>>, vector<128x1xf32>
    %39 = vector.broadcast %38 : vector<128x1xf32> to vector<128x128xf32>
    %40 = vector.broadcast %3 : vector<1x128xf32> to vector<128x128xf32>
    %41 = arith.mulf %39, %40 : vector<128x128xf32>
    %42 = arith.addf %37, %41 : vector<128x128xf32>
    %c145 = arith.constant 145 : index
    %c0_17 = arith.constant 0 : index
    %43 = vector.load %arg0[%c145, %c0_17] : memref<600x1xf32, #tpu.memory_space<vmem>>, vector<128x1xf32>
    %44 = vector.broadcast %43 : vector<128x1xf32> to vector<128x128xf32>
    %45 = vector.broadcast %4 : vector<1x128xf32> to vector<128x128xf32>
    %46 = arith.mulf %44, %45 : vector<128x128xf32>
    %47 = arith.addf %42, %46 : vector<128x128xf32>
    %48 = vector.broadcast %0 : vector<1x128xf32> to vector<128x128xf32>
    %49 = arith.addf %47, %48 : vector<128x128xf32>
    %cst_18 = arith.constant 0.000000e+00 : f32
    %50 = vector.broadcast %cst_18 : f32 to vector<128x128xf32>
    %51 = arith.maximumf %49, %50 : vector<128x128xf32>
    %c128_19 = arith.constant 128 : index
    %c0_20 = arith.constant 0 : index
    %52 = vector.load %arg14[%c128_19, %c0_20] : memref<576x128xf32, #tpu.memory_space<vmem>>, vector<128x128xf32>
    tpu.vector_store %arg14[%c128_19, %c0_20], %51 {strides = array<i32>} : memref<576x128xf32, #tpu.memory_space<vmem>>, vector<128x128xf32>,
    %c256 = arith.constant 256 : index
    %c0_21 = arith.constant 0 : index
    %53 = vector.load %arg0[%c256, %c0_21] : memref<600x1xf32, #tpu.memory_space<vmem>>, vector<128x1xf32>
    %54 = vector.broadcast %53 : vector<128x1xf32> to vector<128x128xf32>
    %55 = vector.broadcast %1 : vector<1x128xf32> to vector<128x128xf32>
    %56 = arith.mulf %54, %55 : vector<128x128xf32>
    %c257 = arith.constant 257 : index
    %c0_22 = arith.constant 0 : index
    %57 = vector.load %arg0[%c257, %c0_22] : memref<600x1xf32, #tpu.memory_space<vmem>>, vector<128x1xf32>
    %58 = vector.broadcast %57 : vector<128x1xf32> to vector<128x128xf32>
    %59 = vector.broadcast %2 : vector<1x128xf32> to vector<128x128xf32>
    %60 = arith.mulf %58, %59 : vector<128x128xf32>
    %61 = arith.addf %56, %60 : vector<128x128xf32>
    %c272 = arith.constant 272 : index
    %c0_23 = arith.constant 0 : index
    %62 = vector.load %arg0[%c272, %c0_23] : memref<600x1xf32, #tpu.memory_space<vmem>>, vector<128x1xf32>
    %63 = vector.broadcast %62 : vector<128x1xf32> to vector<128x128xf32>
    %64 = vector.broadcast %3 : vector<1x128xf32> to vector<128x128xf32>
    %65 = arith.mulf %63, %64 : vector<128x128xf32>
    %66 = arith.addf %61, %65 : vector<128x128xf32>
    %c273 = arith.constant 273 : index
    %c0_24 = arith.constant 0 : index
    %67 = vector.load %arg0[%c273, %c0_24] : memref<600x1xf32, #tpu.memory_space<vmem>>, vector<128x1xf32>
    %68 = vector.broadcast %67 : vector<128x1xf32> to vector<128x128xf32>
    %69 = vector.broadcast %4 : vector<1x128xf32> to vector<128x128xf32>
    %70 = arith.mulf %68, %69 : vector<128x128xf32>
    %71 = arith.addf %66, %70 : vector<128x128xf32>
    %72 = vector.broadcast %0 : vector<1x128xf32> to vector<128x128xf32>
    %73 = arith.addf %71, %72 : vector<128x128xf32>
    %cst_25 = arith.constant 0.000000e+00 : f32
    %74 = vector.broadcast %cst_25 : f32 to vector<128x128xf32>
    %75 = arith.maximumf %73, %74 : vector<128x128xf32>
    %c256_26 = arith.constant 256 : index
    %c0_27 = arith.constant 0 : index
    %76 = vector.load %arg14[%c256_26, %c0_27] : memref<576x128xf32, #tpu.memory_space<vmem>>, vector<128x128xf32>
    tpu.vector_store %arg14[%c256_26, %c0_27], %75 {strides = array<i32>} : memref<576x128xf32, #tpu.memory_space<vmem>>, vector<128x128xf32>,
    %c384 = arith.constant 384 : index
    %c0_28 = arith.constant 0 : index
    %77 = vector.load %arg0[%c384, %c0_28] : memref<600x1xf32, #tpu.memory_space<vmem>>, vector<128x1xf32>
    %78 = vector.broadcast %77 : vector<128x1xf32> to vector<128x128xf32>
    %79 = vector.broadcast %1 : vector<1x128xf32> to vector<128x128xf32>
    %80 = arith.mulf %78, %79 : vector<128x128xf32>
    %c385 = arith.constant 385 : index
    %c0_29 = arith.constant 0 : index
    %81 = vector.load %arg0[%c385, %c0_29] : memref<600x1xf32, #tpu.memory_space<vmem>>, vector<128x1xf32>
    %82 = vector.broadcast %81 : vector<128x1xf32> to vector<128x128xf32>
    %83 = vector.broadcast %2 : vector<1x128xf32> to vector<128x128xf32>
    %84 = arith.mulf %82, %83 : vector<128x128xf32>
    %85 = arith.addf %80, %84 : vector<128x128xf32>
    %c400 = arith.constant 400 : index
    %c0_30 = arith.constant 0 : index
    %86 = vector.load %arg0[%c400, %c0_30] : memref<600x1xf32, #tpu.memory_space<vmem>>, vector<128x1xf32>
    %87 = vector.broadcast %86 : vector<128x1xf32> to vector<128x128xf32>
    %88 = vector.broadcast %3 : vector<1x128xf32> to vector<128x128xf32>
    %89 = arith.mulf %87, %88 : vector<128x128xf32>
    %90 = arith.addf %85, %89 : vector<128x128xf32>
    %c401 = arith.constant 401 : index
    %c0_31 = arith.constant 0 : index
    %91 = vector.load %arg0[%c401, %c0_31] : memref<600x1xf32, #tpu.memory_space<vmem>>, vector<128x1xf32>
    %92 = vector.broadcast %91 : vector<128x1xf32> to vector<128x128xf32>
    %93 = vector.broadcast %4 : vector<1x128xf32> to vector<128x128xf32>
    %94 = arith.mulf %92, %93 : vector<128x128xf32>
    %95 = arith.addf %90, %94 : vector<128x128xf32>
    %96 = vector.broadcast %0 : vector<1x128xf32> to vector<128x128xf32>
    %97 = arith.addf %95, %96 : vector<128x128xf32>
    %cst_32 = arith.constant 0.000000e+00 : f32
    %98 = vector.broadcast %cst_32 : f32 to vector<128x128xf32>
    %99 = arith.maximumf %97, %98 : vector<128x128xf32>
    %c384_33 = arith.constant 384 : index
    %c0_34 = arith.constant 0 : index
    %100 = vector.load %arg14[%c384_33, %c0_34] : memref<576x128xf32, #tpu.memory_space<vmem>>, vector<128x128xf32>
    tpu.vector_store %arg14[%c384_33, %c0_34], %99 {strides = array<i32>} : memref<576x128xf32, #tpu.memory_space<vmem>>, vector<128x128xf32>,
    %c512 = arith.constant 512 : index
    %c0_35 = arith.constant 0 : index
    %101 = vector.load %arg0[%c512, %c0_35] : memref<600x1xf32, #tpu.memory_space<vmem>>, vector<64x1xf32>
    %102 = vector.broadcast %101 : vector<64x1xf32> to vector<64x128xf32>
    %103 = vector.broadcast %1 : vector<1x128xf32> to vector<64x128xf32>
    %104 = arith.mulf %102, %103 : vector<64x128xf32>
    %c513 = arith.constant 513 : index
    %c0_36 = arith.constant 0 : index
    %105 = vector.load %arg0[%c513, %c0_36] : memref<600x1xf32, #tpu.memory_space<vmem>>, vector<64x1xf32>
    %106 = vector.broadcast %105 : vector<64x1xf32> to vector<64x128xf32>
    %107 = vector.broadcast %2 : vector<1x128xf32> to vector<64x128xf32>
    %108 = arith.mulf %106, %107 : vector<64x128xf32>
    %109 = arith.addf %104, %108 : vector<64x128xf32>
    %c528 = arith.constant 528 : index
    %c0_37 = arith.constant 0 : index
    %110 = vector.load %arg0[%c528, %c0_37] : memref<600x1xf32, #tpu.memory_space<vmem>>, vector<64x1xf32>
    %111 = vector.broadcast %110 : vector<64x1xf32> to vector<64x128xf32>
    %112 = vector.broadcast %3 : vector<1x128xf32> to vector<64x128xf32>
    %113 = arith.mulf %111, %112 : vector<64x128xf32>
    %114 = arith.addf %109, %113 : vector<64x128xf32>
    %c529 = arith.constant 529 : index
    %c0_38 = arith.constant 0 : index
    %115 = vector.load %arg0[%c529, %c0_38] : memref<600x1xf32, #tpu.memory_space<vmem>>, vector<64x1xf32>
    %116 = vector.broadcast %115 : vector<64x1xf32> to vector<64x128xf32>
    %117 = vector.broadcast %4 : vector<1x128xf32> to vector<64x128xf32>
    %118 = arith.mulf %116, %117 : vector<64x128xf32>
    %119 = arith.addf %114, %118 : vector<64x128xf32>
    %120 = vector.broadcast %0 : vector<1x128xf32> to vector<64x128xf32>
    %121 = arith.addf %119, %120 : vector<64x128xf32>
    %cst_39 = arith.constant 0.000000e+00 : f32
    %122 = vector.broadcast %cst_39 : f32 to vector<64x128xf32>
    %123 = arith.maximumf %121, %122 : vector<64x128xf32>
    %c512_40 = arith.constant 512 : index
    %c0_41 = arith.constant 0 : index
    %124 = vector.load %arg14[%c512_40, %c0_41] : memref<576x128xf32, #tpu.memory_space<vmem>>, vector<64x128xf32>
    tpu.vector_store %arg14[%c512_40, %c0_41], %123 {strides = array<i32>} : memref<576x128xf32, #tpu.memory_space<vmem>>, vector<64x128xf32>,
    %cst_42 = arith.constant 0.000000e+00 : f32
    %125 = vector.broadcast %cst_42 : f32 to vector<272x128xf32>
    %c0_43 = arith.constant 0 : index
    %c0_44 = arith.constant 0 : index
    %126 = vector.load %arg15[%c0_43, %c0_44] : memref<272x128xf32, #tpu.memory_space<vmem>>, vector<272x128xf32>
    tpu.vector_store %arg15[%c0_43, %c0_44], %125 {strides = array<i32>} : memref<272x128xf32, #tpu.memory_space<vmem>>, vector<272x128xf32>,
    %c0_45 = arith.constant 0 : index
    %c0_46 = arith.constant 0 : index
    %127 = tpu.strided_load %arg14[%c0_45, %c0_46] {strides = array<i32: 2, 1>} : memref<576x128xf32, #tpu.memory_space<vmem>>, vector<6x128xf32>
    %c1_47 = arith.constant 1 : index
    %c0_48 = arith.constant 0 : index
    %128 = tpu.strided_load %arg14[%c1_47, %c0_48] {strides = array<i32: 2, 1>} : memref<576x128xf32, #tpu.memory_space<vmem>>, vector<6x128xf32>
    %c16_49 = arith.constant 16 : index
    %c0_50 = arith.constant 0 : index
    %129 = tpu.strided_load %arg14[%c16_49, %c0_50] {strides = array<i32: 2, 1>} : memref<576x128xf32, #tpu.memory_space<vmem>>, vector<6x128xf32>
    %c17_51 = arith.constant 17 : index
    %c0_52 = arith.constant 0 : index
    %130 = tpu.strided_load %arg14[%c17_51, %c0_52] {strides = array<i32: 2, 1>} : memref<576x128xf32, #tpu.memory_space<vmem>>, vector<6x128xf32>
    %131 = arith.maximumf %127, %128 : vector<6x128xf32>
    %132 = arith.maximumf %129, %130 : vector<6x128xf32>
    %133 = arith.maximumf %131, %132 : vector<6x128xf32>
    %c9 = arith.constant 9 : index
    %c0_53 = arith.constant 0 : index
    %134 = vector.load %arg15[%c9, %c0_53] : memref<272x128xf32, #tpu.memory_space<vmem>>, vector<6x128xf32>
    tpu.vector_store %arg15[%c9, %c0_53], %133 {strides = array<i32>} : memref<272x128xf32, #tpu.memory_space<vmem>>, vector<6x128xf32>,
    %c32 = arith.constant 32 : index
    %c0_54 = arith.constant 0 : index
    %135 = tpu.strided_load %arg14[%c32, %c0_54] {strides = array<i32: 2, 1>} : memref<576x128xf32, #tpu.memory_space<vmem>>, vector<6x128xf32>
    %c33 = arith.constant 33 : index
    %c0_55 = arith.constant 0 : index
    %136 = tpu.strided_load %arg14[%c33, %c0_55] {strides = array<i32: 2, 1>} : memref<576x128xf32, #tpu.memory_space<vmem>>, vector<6x128xf32>
    %c48 = arith.constant 48 : index
    %c0_56 = arith.constant 0 : index
    %137 = tpu.strided_load %arg14[%c48, %c0_56] {strides = array<i32: 2, 1>} : memref<576x128xf32, #tpu.memory_space<vmem>>, vector<6x128xf32>
    %c49 = arith.constant 49 : index
    %c0_57 = arith.constant 0 : index
    %138 = tpu.strided_load %arg14[%c49, %c0_57] {strides = array<i32: 2, 1>} : memref<576x128xf32, #tpu.memory_space<vmem>>, vector<6x128xf32>
    %139 = arith.maximumf %135, %136 : vector<6x128xf32>
    %140 = arith.maximumf %137, %138 : vector<6x128xf32>
    %141 = arith.maximumf %139, %140 : vector<6x128xf32>
    %c17_58 = arith.constant 17 : index
    %c0_59 = arith.constant 0 : index
    %142 = vector.load %arg15[%c17_58, %c0_59] : memref<272x128xf32, #tpu.memory_space<vmem>>, vector<6x128xf32>
    tpu.vector_store %arg15[%c17_58, %c0_59], %141 {strides = array<i32>} : memref<272x128xf32, #tpu.memory_space<vmem>>, vector<6x128xf32>,
    %c64 = arith.constant 64 : index
    %c0_60 = arith.constant 0 : index
    %143 = tpu.strided_load %arg14[%c64, %c0_60] {strides = array<i32: 2, 1>} : memref<576x128xf32, #tpu.memory_space<vmem>>, vector<6x128xf32>
    %c65 = arith.constant 65 : index
    %c0_61 = arith.constant 0 : index
    %144 = tpu.strided_load %arg14[%c65, %c0_61] {strides = array<i32: 2, 1>} : memref<576x128xf32, #tpu.memory_space<vmem>>, vector<6x128xf32>
    %c80 = arith.constant 80 : index
    %c0_62 = arith.constant 0 : index
    %145 = tpu.strided_load %arg14[%c80, %c0_62] {strides = array<i32: 2, 1>} : memref<576x128xf32, #tpu.memory_space<vmem>>, vector<6x128xf32>
    %c81 = arith.constant 81 : index
    %c0_63 = arith.constant 0 : index
    %146 = tpu.strided_load %arg14[%c81, %c0_63] {strides = array<i32: 2, 1>} : memref<576x128xf32, #tpu.memory_space<vmem>>, vector<6x128xf32>
    %147 = arith.maximumf %143, %144 : vector<6x128xf32>
    %148 = arith.maximumf %145, %146 : vector<6x128xf32>
    %149 = arith.maximumf %147, %148 : vector<6x128xf32>
    %c25 = arith.constant 25 : index
    %c0_64 = arith.constant 0 : index
    %150 = vector.load %arg15[%c25, %c0_64] : memref<272x128xf32, #tpu.memory_space<vmem>>, vector<6x128xf32>
    tpu.vector_store %arg15[%c25, %c0_64], %149 {strides = array<i32>} : memref<272x128xf32, #tpu.memory_space<vmem>>, vector<6x128xf32>,
    %c96 = arith.constant 96 : index
    %c0_65 = arith.constant 0 : index
    %151 = tpu.strided_load %arg14[%c96, %c0_65] {strides = array<i32: 2, 1>} : memref<576x128xf32, #tpu.memory_space<vmem>>, vector<6x128xf32>
    %c97 = arith.constant 97 : index
    %c0_66 = arith.constant 0 : index
    %152 = tpu.strided_load %arg14[%c97, %c0_66] {strides = array<i32: 2, 1>} : memref<576x128xf32, #tpu.memory_space<vmem>>, vector<6x128xf32>
    %c112 = arith.constant 112 : index
    %c0_67 = arith.constant 0 : index
    %153 = tpu.strided_load %arg14[%c112, %c0_67] {strides = array<i32: 2, 1>} : memref<576x128xf32, #tpu.memory_space<vmem>>, vector<6x128xf32>
    %c113 = arith.constant 113 : index
    %c0_68 = arith.constant 0 : index
    %154 = tpu.strided_load %arg14[%c113, %c0_68] {strides = array<i32: 2, 1>} : memref<576x128xf32, #tpu.memory_space<vmem>>, vector<6x128xf32>
    %155 = arith.maximumf %151, %152 : vector<6x128xf32>
    %156 = arith.maximumf %153, %154 : vector<6x128xf32>
    %157 = arith.maximumf %155, %156 : vector<6x128xf32>
    %c33_69 = arith.constant 33 : index
    %c0_70 = arith.constant 0 : index
    %158 = vector.load %arg15[%c33_69, %c0_70] : memref<272x128xf32, #tpu.memory_space<vmem>>, vector<6x128xf32>
    tpu.vector_store %arg15[%c33_69, %c0_70], %157 {strides = array<i32>} : memref<272x128xf32, #tpu.memory_space<vmem>>, vector<6x128xf32>,
    %c128_71 = arith.constant 128 : index
    %c0_72 = arith.constant 0 : index
    %159 = tpu.strided_load %arg14[%c128_71, %c0_72] {strides = array<i32: 2, 1>} : memref<576x128xf32, #tpu.memory_space<vmem>>, vector<6x128xf32>
    %c129_73 = arith.constant 129 : index
    %c0_74 = arith.constant 0 : index
    %160 = tpu.strided_load %arg14[%c129_73, %c0_74] {strides = array<i32: 2, 1>} : memref<576x128xf32, #tpu.memory_space<vmem>>, vector<6x128xf32>
    %c144_75 = arith.constant 144 : index
    %c0_76 = arith.constant 0 : index
    %161 = tpu.strided_load %arg14[%c144_75, %c0_76] {strides = array<i32: 2, 1>} : memref<576x128xf32, #tpu.memory_space<vmem>>, vector<6x128xf32>
    %c145_77 = arith.constant 145 : index
    %c0_78 = arith.constant 0 : index
    %162 = tpu.strided_load %arg14[%c145_77, %c0_78] {strides = array<i32: 2, 1>} : memref<576x128xf32, #tpu.memory_space<vmem>>, vector<6x128xf32>
    %163 = arith.maximumf %159, %160 : vector<6x128xf32>
    %164 = arith.maximumf %161, %162 : vector<6x128xf32>
    %165 = arith.maximumf %163, %164 : vector<6x128xf32>
    %c41 = arith.constant 41 : index
    %c0_79 = arith.constant 0 : index
    %166 = vector.load %arg15[%c41, %c0_79] : memref<272x128xf32, #tpu.memory_space<vmem>>, vector<6x128xf32>
    tpu.vector_store %arg15[%c41, %c0_79], %165 {strides = array<i32>} : memref<272x128xf32, #tpu.memory_space<vmem>>, vector<6x128xf32>,
    %c160 = arith.constant 160 : index
    %c0_80 = arith.constant 0 : index
    %167 = tpu.strided_load %arg14[%c160, %c0_80] {strides = array<i32: 2, 1>} : memref<576x128xf32, #tpu.memory_space<vmem>>, vector<6x128xf32>
    %c161 = arith.constant 161 : index
    %c0_81 = arith.constant 0 : index
    %168 = tpu.strided_load %arg14[%c161, %c0_81] {strides = array<i32: 2, 1>} : memref<576x128xf32, #tpu.memory_space<vmem>>, vector<6x128xf32>
    %c176 = arith.constant 176 : index
    %c0_82 = arith.constant 0 : index
    %169 = tpu.strided_load %arg14[%c176, %c0_82] {strides = array<i32: 2, 1>} : memref<576x128xf32, #tpu.memory_space<vmem>>, vector<6x128xf32>
    %c177 = arith.constant 177 : index
    %c0_83 = arith.constant 0 : index
    %170 = tpu.strided_load %arg14[%c177, %c0_83] {strides = array<i32: 2, 1>} : memref<576x128xf32, #tpu.memory_space<vmem>>, vector<6x128xf32>
    %171 = arith.maximumf %167, %168 : vector<6x128xf32>
    %172 = arith.maximumf %169, %170 : vector<6x128xf32>
    %173 = arith.maximumf %171, %172 : vector<6x128xf32>
    %c49_84 = arith.constant 49 : index
    %c0_85 = arith.constant 0 : index
    %174 = vector.load %arg15[%c49_84, %c0_85] : memref<272x128xf32, #tpu.memory_space<vmem>>, vector<6x128xf32>
    tpu.vector_store %arg15[%c49_84, %c0_85], %173 {strides = array<i32>} : memref<272x128xf32, #tpu.memory_space<vmem>>, vector<6x128xf32>,
    %c192 = arith.constant 192 : index
    %c0_86 = arith.constant 0 : index
    %175 = tpu.strided_load %arg14[%c192, %c0_86] {strides = array<i32: 2, 1>} : memref<576x128xf32, #tpu.memory_space<vmem>>, vector<6x128xf32>
    %c193 = arith.constant 193 : index
    %c0_87 = arith.constant 0 : index
    %176 = tpu.strided_load %arg14[%c193, %c0_87] {strides = array<i32: 2, 1>} : memref<576x128xf32, #tpu.memory_space<vmem>>, vector<6x128xf32>
    %c208 = arith.constant 208 : index
    %c0_88 = arith.constant 0 : index
    %177 = tpu.strided_load %arg14[%c208, %c0_88] {strides = array<i32: 2, 1>} : memref<576x128xf32, #tpu.memory_space<vmem>>, vector<6x128xf32>
    %c209 = arith.constant 209 : index
    %c0_89 = arith.constant 0 : index
    %178 = tpu.strided_load %arg14[%c209, %c0_89] {strides = array<i32: 2, 1>} : memref<576x128xf32, #tpu.memory_space<vmem>>, vector<6x128xf32>
    %179 = arith.maximumf %175, %176 : vector<6x128xf32>
    %180 = arith.maximumf %177, %178 : vector<6x128xf32>
    %181 = arith.maximumf %179, %180 : vector<6x128xf32>
    %c57 = arith.constant 57 : index
    %c0_90 = arith.constant 0 : index
    %182 = vector.load %arg15[%c57, %c0_90] : memref<272x128xf32, #tpu.memory_space<vmem>>, vector<6x128xf32>
    tpu.vector_store %arg15[%c57, %c0_90], %181 {strides = array<i32>} : memref<272x128xf32, #tpu.memory_space<vmem>>, vector<6x128xf32>,
    %c224 = arith.constant 224 : index
    %c0_91 = arith.constant 0 : index
    %183 = tpu.strided_load %arg14[%c224, %c0_91] {strides = array<i32: 2, 1>} : memref<576x128xf32, #tpu.memory_space<vmem>>, vector<6x128xf32>
    %c225 = arith.constant 225 : index
    %c0_92 = arith.constant 0 : index
    %184 = tpu.strided_load %arg14[%c225, %c0_92] {strides = array<i32: 2, 1>} : memref<576x128xf32, #tpu.memory_space<vmem>>, vector<6x128xf32>
    %c240 = arith.constant 240 : index
    %c0_93 = arith.constant 0 : index
    %185 = tpu.strided_load %arg14[%c240, %c0_93] {strides = array<i32: 2, 1>} : memref<576x128xf32, #tpu.memory_space<vmem>>, vector<6x128xf32>
    %c241 = arith.constant 241 : index
    %c0_94 = arith.constant 0 : index
    %186 = tpu.strided_load %arg14[%c241, %c0_94] {strides = array<i32: 2, 1>} : memref<576x128xf32, #tpu.memory_space<vmem>>, vector<6x128xf32>
    %187 = arith.maximumf %183, %184 : vector<6x128xf32>
    %188 = arith.maximumf %185, %186 : vector<6x128xf32>
    %189 = arith.maximumf %187, %188 : vector<6x128xf32>
    %c65_95 = arith.constant 65 : index
    %c0_96 = arith.constant 0 : index
    %190 = vector.load %arg15[%c65_95, %c0_96] : memref<272x128xf32, #tpu.memory_space<vmem>>, vector<6x128xf32>
    tpu.vector_store %arg15[%c65_95, %c0_96], %189 {strides = array<i32>} : memref<272x128xf32, #tpu.memory_space<vmem>>, vector<6x128xf32>,
    %c288 = arith.constant 288 : index
    %c0_97 = arith.constant 0 : index
    %191 = tpu.strided_load %arg14[%c288, %c0_97] {strides = array<i32: 2, 1>} : memref<576x128xf32, #tpu.memory_space<vmem>>, vector<6x128xf32>
    %c289 = arith.constant 289 : index
    %c0_98 = arith.constant 0 : index
    %192 = tpu.strided_load %arg14[%c289, %c0_98] {strides = array<i32: 2, 1>} : memref<576x128xf32, #tpu.memory_space<vmem>>, vector<6x128xf32>
    %c304 = arith.constant 304 : index
    %c0_99 = arith.constant 0 : index
    %193 = tpu.strided_load %arg14[%c304, %c0_99] {strides = array<i32: 2, 1>} : memref<576x128xf32, #tpu.memory_space<vmem>>, vector<6x128xf32>
    %c305 = arith.constant 305 : index
    %c0_100 = arith.constant 0 : index
    %194 = tpu.strided_load %arg14[%c305, %c0_100] {strides = array<i32: 2, 1>} : memref<576x128xf32, #tpu.memory_space<vmem>>, vector<6x128xf32>
    %195 = arith.maximumf %191, %192 : vector<6x128xf32>
    %196 = arith.maximumf %193, %194 : vector<6x128xf32>
    %197 = arith.maximumf %195, %196 : vector<6x128xf32>
    %c137 = arith.constant 137 : index
    %c0_101 = arith.constant 0 : index
    %198 = vector.load %arg15[%c137, %c0_101] : memref<272x128xf32, #tpu.memory_space<vmem>>, vector<6x128xf32>
    tpu.vector_store %arg15[%c137, %c0_101], %197 {strides = array<i32>} : memref<272x128xf32, #tpu.memory_space<vmem>>, vector<6x128xf32>,
    %c320 = arith.constant 320 : index
    %c0_102 = arith.constant 0 : index
    %199 = tpu.strided_load %arg14[%c320, %c0_102] {strides = array<i32: 2, 1>} : memref<576x128xf32, #tpu.memory_space<vmem>>, vector<6x128xf32>
    %c321 = arith.constant 321 : index
    %c0_103 = arith.constant 0 : index
    %200 = tpu.strided_load %arg14[%c321, %c0_103] {strides = array<i32: 2, 1>} : memref<576x128xf32, #tpu.memory_space<vmem>>, vector<6x128xf32>
    %c336 = arith.constant 336 : index
    %c0_104 = arith.constant 0 : index
    %201 = tpu.strided_load %arg14[%c336, %c0_104] {strides = array<i32: 2, 1>} : memref<576x128xf32, #tpu.memory_space<vmem>>, vector<6x128xf32>
    %c337 = arith.constant 337 : index
    %c0_105 = arith.constant 0 : index
    %202 = tpu.strided_load %arg14[%c337, %c0_105] {strides = array<i32: 2, 1>} : memref<576x128xf32, #tpu.memory_space<vmem>>, vector<6x128xf32>
    %203 = arith.maximumf %199, %200 : vector<6x128xf32>
    %204 = arith.maximumf %201, %202 : vector<6x128xf32>
    %205 = arith.maximumf %203, %204 : vector<6x128xf32>
    %c145_106 = arith.constant 145 : index
    %c0_107 = arith.constant 0 : index
    %206 = vector.load %arg15[%c145_106, %c0_107] : memref<272x128xf32, #tpu.memory_space<vmem>>, vector<6x128xf32>
    tpu.vector_store %arg15[%c145_106, %c0_107], %205 {strides = array<i32>} : memref<272x128xf32, #tpu.memory_space<vmem>>, vector<6x128xf32>,
    %c352 = arith.constant 352 : index
    %c0_108 = arith.constant 0 : index
    %207 = tpu.strided_load %arg14[%c352, %c0_108] {strides = array<i32: 2, 1>} : memref<576x128xf32, #tpu.memory_space<vmem>>, vector<6x128xf32>
    %c353 = arith.constant 353 : index
    %c0_109 = arith.constant 0 : index
    %208 = tpu.strided_load %arg14[%c353, %c0_109] {strides = array<i32: 2, 1>} : memref<576x128xf32, #tpu.memory_space<vmem>>, vector<6x128xf32>
    %c368 = arith.constant 368 : index
    %c0_110 = arith.constant 0 : index
    %209 = tpu.strided_load %arg14[%c368, %c0_110] {strides = array<i32: 2, 1>} : memref<576x128xf32, #tpu.memory_space<vmem>>, vector<6x128xf32>
    %c369 = arith.constant 369 : index
    %c0_111 = arith.constant 0 : index
    %210 = tpu.strided_load %arg14[%c369, %c0_111] {strides = array<i32: 2, 1>} : memref<576x128xf32, #tpu.memory_space<vmem>>, vector<6x128xf32>
    %211 = arith.maximumf %207, %208 : vector<6x128xf32>
    %212 = arith.maximumf %209, %210 : vector<6x128xf32>
    %213 = arith.maximumf %211, %212 : vector<6x128xf32>
    %c153 = arith.constant 153 : index
    %c0_112 = arith.constant 0 : index
    %214 = vector.load %arg15[%c153, %c0_112] : memref<272x128xf32, #tpu.memory_space<vmem>>, vector<6x128xf32>
    tpu.vector_store %arg15[%c153, %c0_112], %213 {strides = array<i32>} : memref<272x128xf32, #tpu.memory_space<vmem>>, vector<6x128xf32>,
    %c384_113 = arith.constant 384 : index
    %c0_114 = arith.constant 0 : index
    %215 = tpu.strided_load %arg14[%c384_113, %c0_114] {strides = array<i32: 2, 1>} : memref<576x128xf32, #tpu.memory_space<vmem>>, vector<6x128xf32>
    %c385_115 = arith.constant 385 : index
    %c0_116 = arith.constant 0 : index
    %216 = tpu.strided_load %arg14[%c385_115, %c0_116] {strides = array<i32: 2, 1>} : memref<576x128xf32, #tpu.memory_space<vmem>>, vector<6x128xf32>
    %c400_117 = arith.constant 400 : index
    %c0_118 = arith.constant 0 : index
    %217 = tpu.strided_load %arg14[%c400_117, %c0_118] {strides = array<i32: 2, 1>} : memref<576x128xf32, #tpu.memory_space<vmem>>, vector<6x128xf32>
    %c401_119 = arith.constant 401 : index
    %c0_120 = arith.constant 0 : index
    %218 = tpu.strided_load %arg14[%c401_119, %c0_120] {strides = array<i32: 2, 1>} : memref<576x128xf32, #tpu.memory_space<vmem>>, vector<6x128xf32>
    %219 = arith.maximumf %215, %216 : vector<6x128xf32>
    %220 = arith.maximumf %217, %218 : vector<6x128xf32>
    %221 = arith.maximumf %219, %220 : vector<6x128xf32>
    %c161_121 = arith.constant 161 : index
    %c0_122 = arith.constant 0 : index
    %222 = vector.load %arg15[%c161_121, %c0_122] : memref<272x128xf32, #tpu.memory_space<vmem>>, vector<6x128xf32>
    tpu.vector_store %arg15[%c161_121, %c0_122], %221 {strides = array<i32>} : memref<272x128xf32, #tpu.memory_space<vmem>>, vector<6x128xf32>,
    %c416 = arith.constant 416 : index
    %c0_123 = arith.constant 0 : index
    %223 = tpu.strided_load %arg14[%c416, %c0_123] {strides = array<i32: 2, 1>} : memref<576x128xf32, #tpu.memory_space<vmem>>, vector<6x128xf32>
    %c417 = arith.constant 417 : index
    %c0_124 = arith.constant 0 : index
    %224 = tpu.strided_load %arg14[%c417, %c0_124] {strides = array<i32: 2, 1>} : memref<576x128xf32, #tpu.memory_space<vmem>>, vector<6x128xf32>
    %c432 = arith.constant 432 : index
    %c0_125 = arith.constant 0 : index
    %225 = tpu.strided_load %arg14[%c432, %c0_125] {strides = array<i32: 2, 1>} : memref<576x128xf32, #tpu.memory_space<vmem>>, vector<6x128xf32>
    %c433 = arith.constant 433 : index
    %c0_126 = arith.constant 0 : index
    %226 = tpu.strided_load %arg14[%c433, %c0_126] {strides = array<i32: 2, 1>} : memref<576x128xf32, #tpu.memory_space<vmem>>, vector<6x128xf32>
    %227 = arith.maximumf %223, %224 : vector<6x128xf32>
    %228 = arith.maximumf %225, %226 : vector<6x128xf32>
    %229 = arith.maximumf %227, %228 : vector<6x128xf32>
    %c169 = arith.constant 169 : index
    %c0_127 = arith.constant 0 : index
    %230 = vector.load %arg15[%c169, %c0_127] : memref<272x128xf32, #tpu.memory_space<vmem>>, vector<6x128xf32>
    tpu.vector_store %arg15[%c169, %c0_127], %229 {strides = array<i32>} : memref<272x128xf32, #tpu.memory_space<vmem>>, vector<6x128xf32>,
    %c448 = arith.constant 448 : index
    %c0_128 = arith.constant 0 : index
    %231 = tpu.strided_load %arg14[%c448, %c0_128] {strides = array<i32: 2, 1>} : memref<576x128xf32, #tpu.memory_space<vmem>>, vector<6x128xf32>
    %c449 = arith.constant 449 : index
    %c0_129 = arith.constant 0 : index
    %232 = tpu.strided_load %arg14[%c449, %c0_129] {strides = array<i32: 2, 1>} : memref<576x128xf32, #tpu.memory_space<vmem>>, vector<6x128xf32>
    %c464 = arith.constant 464 : index
    %c0_130 = arith.constant 0 : index
    %233 = tpu.strided_load %arg14[%c464, %c0_130] {strides = array<i32: 2, 1>} : memref<576x128xf32, #tpu.memory_space<vmem>>, vector<6x128xf32>
    %c465 = arith.constant 465 : index
    %c0_131 = arith.constant 0 : index
    %234 = tpu.strided_load %arg14[%c465, %c0_131] {strides = array<i32: 2, 1>} : memref<576x128xf32, #tpu.memory_space<vmem>>, vector<6x128xf32>
    %235 = arith.maximumf %231, %232 : vector<6x128xf32>
    %236 = arith.maximumf %233, %234 : vector<6x128xf32>
    %237 = arith.maximumf %235, %236 : vector<6x128xf32>
    %c177_132 = arith.constant 177 : index
    %c0_133 = arith.constant 0 : index
    %238 = vector.load %arg15[%c177_132, %c0_133] : memref<272x128xf32, #tpu.memory_space<vmem>>, vector<6x128xf32>
    tpu.vector_store %arg15[%c177_132, %c0_133], %237 {strides = array<i32>} : memref<272x128xf32, #tpu.memory_space<vmem>>, vector<6x128xf32>,
    %c480 = arith.constant 480 : index
    %c0_134 = arith.constant 0 : index
    %239 = tpu.strided_load %arg14[%c480, %c0_134] {strides = array<i32: 2, 1>} : memref<576x128xf32, #tpu.memory_space<vmem>>, vector<6x128xf32>
    %c481 = arith.constant 481 : index
    %c0_135 = arith.constant 0 : index
    %240 = tpu.strided_load %arg14[%c481, %c0_135] {strides = array<i32: 2, 1>} : memref<576x128xf32, #tpu.memory_space<vmem>>, vector<6x128xf32>
    %c496 = arith.constant 496 : index
    %c0_136 = arith.constant 0 : index
    %241 = tpu.strided_load %arg14[%c496, %c0_136] {strides = array<i32: 2, 1>} : memref<576x128xf32, #tpu.memory_space<vmem>>, vector<6x128xf32>
    %c497 = arith.constant 497 : index
    %c0_137 = arith.constant 0 : index
    %242 = tpu.strided_load %arg14[%c497, %c0_137] {strides = array<i32: 2, 1>} : memref<576x128xf32, #tpu.memory_space<vmem>>, vector<6x128xf32>
    %243 = arith.maximumf %239, %240 : vector<6x128xf32>
    %244 = arith.maximumf %241, %242 : vector<6x128xf32>
    %245 = arith.maximumf %243, %244 : vector<6x128xf32>
    %c185 = arith.constant 185 : index
    %c0_138 = arith.constant 0 : index
    %246 = vector.load %arg15[%c185, %c0_138] : memref<272x128xf32, #tpu.memory_space<vmem>>, vector<6x128xf32>
    tpu.vector_store %arg15[%c185, %c0_138], %245 {strides = array<i32>} : memref<272x128xf32, #tpu.memory_space<vmem>>, vector<6x128xf32>,
    %c512_139 = arith.constant 512 : index
    %c0_140 = arith.constant 0 : index
    %247 = tpu.strided_load %arg14[%c512_139, %c0_140] {strides = array<i32: 2, 1>} : memref<576x128xf32, #tpu.memory_space<vmem>>, vector<6x128xf32>
    %c513_141 = arith.constant 513 : index
    %c0_142 = arith.constant 0 : index
    %248 = tpu.strided_load %arg14[%c513_141, %c0_142] {strides = array<i32: 2, 1>} : memref<576x128xf32, #tpu.memory_space<vmem>>, vector<6x128xf32>
    %c528_143 = arith.constant 528 : index
    %c0_144 = arith.constant 0 : index
    %249 = tpu.strided_load %arg14[%c528_143, %c0_144] {strides = array<i32: 2, 1>} : memref<576x128xf32, #tpu.memory_space<vmem>>, vector<6x128xf32>
    %c529_145 = arith.constant 529 : index
    %c0_146 = arith.constant 0 : index
    %250 = tpu.strided_load %arg14[%c529_145, %c0_146] {strides = array<i32: 2, 1>} : memref<576x128xf32, #tpu.memory_space<vmem>>, vector<6x128xf32>
    %251 = arith.maximumf %247, %248 : vector<6x128xf32>
    %252 = arith.maximumf %249, %250 : vector<6x128xf32>
    %253 = arith.maximumf %251, %252 : vector<6x128xf32>
    %c193_147 = arith.constant 193 : index
    %c0_148 = arith.constant 0 : index
    %254 = vector.load %arg15[%c193_147, %c0_148] : memref<272x128xf32, #tpu.memory_space<vmem>>, vector<6x128xf32>
    tpu.vector_store %arg15[%c193_147, %c0_148], %253 {strides = array<i32>} : memref<272x128xf32, #tpu.memory_space<vmem>>, vector<6x128xf32>,
    %c0_149 = arith.constant 0 : index
    %c0_150 = arith.constant 0 : index
    %255 = vector.load %arg15[%c0_149, %c0_150] : memref<272x128xf32, #tpu.memory_space<vmem>>, vector<256x128xf32>
    %c0_151 = arith.constant 0 : index
    %c0_152 = arith.constant 0 : index
    %256 = vector.load %arg3[%c0_151, %c0_152] : memref<512x64xf32, #tpu.memory_space<vmem>>, vector<128x64xf32>
    %cst_153 = arith.constant dense<0.000000e+00> : vector<256x64xf32>
    %257 = tpu.matmul %255, %256, %cst_153 {dimension_numbers = #tpu.dot_dimension_numbers<[1], [0], [0], [1], [0, 0, 1, 1], [], []>} : vector<256x128xf32>, vector<128x64xf32>, vector<256x64xf32> -> vector<256x64xf32>
    %c1_154 = arith.constant 1 : index
    %c0_155 = arith.constant 0 : index
    %258 = vector.load %arg15[%c1_154, %c0_155] : memref<272x128xf32, #tpu.memory_space<vmem>>, vector<256x128xf32>
    %c128_156 = arith.constant 128 : index
    %c0_157 = arith.constant 0 : index
    %259 = vector.load %arg3[%c128_156, %c0_157] : memref<512x64xf32, #tpu.memory_space<vmem>>, vector<128x64xf32>
    %cst_158 = arith.constant dense<0.000000e+00> : vector<256x64xf32>
    %260 = tpu.matmul %258, %259, %cst_158 {dimension_numbers = #tpu.dot_dimension_numbers<[1], [0], [0], [1], [0, 0, 1, 1], [], []>} : vector<256x128xf32>, vector<128x64xf32>, vector<256x64xf32> -> vector<256x64xf32>
    %261 = arith.addf %257, %260 : vector<256x64xf32>
    %c8 = arith.constant 8 : index
    %c0_159 = arith.constant 0 : index
    %262 = vector.load %arg15[%c8, %c0_159] : memref<272x128xf32, #tpu.memory_space<vmem>>, vector<256x128xf32>
    %c256_160 = arith.constant 256 : index
    %c0_161 = arith.constant 0 : index
    %263 = vector.load %arg3[%c256_160, %c0_161] : memref<512x64xf32, #tpu.memory_space<vmem>>, vector<128x64xf32>
    %cst_162 = arith.constant dense<0.000000e+00> : vector<256x64xf32>
    %264 = tpu.matmul %262, %263, %cst_162 {dimension_numbers = #tpu.dot_dimension_numbers<[1], [0], [0], [1], [0, 0, 1, 1], [], []>} : vector<256x128xf32>, vector<128x64xf32>, vector<256x64xf32> -> vector<256x64xf32>
    %265 = arith.addf %261, %264 : vector<256x64xf32>
    %c9_163 = arith.constant 9 : index
    %c0_164 = arith.constant 0 : index
    %266 = vector.load %arg15[%c9_163, %c0_164] : memref<272x128xf32, #tpu.memory_space<vmem>>, vector<256x128xf32>
    %c384_165 = arith.constant 384 : index
    %c0_166 = arith.constant 0 : index
    %267 = vector.load %arg3[%c384_165, %c0_166] : memref<512x64xf32, #tpu.memory_space<vmem>>, vector<128x64xf32>
    %cst_167 = arith.constant dense<0.000000e+00> : vector<256x64xf32>
    %268 = tpu.matmul %266, %267, %cst_167 {dimension_numbers = #tpu.dot_dimension_numbers<[1], [0], [0], [1], [0, 0, 1, 1], [], []>} : vector<256x128xf32>, vector<128x64xf32>, vector<256x64xf32> -> vector<256x64xf32>
    %269 = arith.addf %265, %268 : vector<256x64xf32>
    %c0_168 = arith.constant 0 : index
    %c0_169 = arith.constant 0 : index
    %270 = vector.load %arg4[%c0_168, %c0_169] : memref<1x64xf32, #tpu.memory_space<vmem>>, vector<1x64xf32>
    %271 = vector.broadcast %270 : vector<1x64xf32> to vector<256x64xf32>
    %272 = arith.addf %269, %271 : vector<256x64xf32>
    %cst_170 = arith.constant 0.000000e+00 : f32
    %273 = vector.broadcast %cst_170 : f32 to vector<256x64xf32>
    %274 = arith.maximumf %272, %273 : vector<256x64xf32>
    %c0_171 = arith.constant 0 : index
    %c0_172 = arith.constant 0 : index
    %275 = vector.load %arg5[%c0_171, %c0_172] : memref<1x64xf32, #tpu.memory_space<vmem>>, vector<1x64xf32>
    %c0_173 = arith.constant 0 : index
    %c0_174 = arith.constant 0 : index
    %276 = vector.load %arg6[%c0_173, %c0_174] : memref<1x64xf32, #tpu.memory_space<vmem>>, vector<1x64xf32>
    %277 = tpu.iota {dimensions = array<i32: 0>} : vector<256x1xi32>
    %c7_i32 = arith.constant 7 : i32
    %278 = vector.broadcast %c7_i32 : i32 to vector<256x1xi32>
    %279 = arith.andi %277, %278 : vector<256x1xi32>
    %c3_i32 = arith.constant 3 : i32
    %280 = vector.broadcast %c3_i32 : i32 to vector<256x1xi32>
    %281 = arith.shrsi %277, %280 : vector<256x1xi32>
    %c15_i32 = arith.constant 15 : i32
    %282 = vector.broadcast %c15_i32 : i32 to vector<256x1xi32>
    %283 = arith.andi %281, %282 : vector<256x1xi32>
    %c7_i32_175 = arith.constant 7 : i32
    %284 = vector.broadcast %c7_i32_175 : i32 to vector<256x1xi32>
    %285 = arith.cmpi slt, %279, %284 : vector<256x1xi32>
    %c9_i32 = arith.constant 9 : i32
    %286 = vector.broadcast %c9_i32 : i32 to vector<256x1xi32>
    %287 = arith.cmpi slt, %283, %286 : vector<256x1xi32>
    %288 = arith.andi %285, %287 : vector<256x1xi1>
    %289 = arith.extui %288 : vector<256x1xi1> to vector<256x1xi32>
    %290 = arith.sitofp %289 : vector<256x1xi32> to vector<256x1xf32>
    %291 = vector.broadcast %290 : vector<256x1xf32> to vector<256x64xf32>
    %292 = arith.mulf %274, %291 : vector<256x64xf32>
    %cst_176 = arith.constant dense<0.000000e+00> : vector<64xf32>
    %293 = vector.multi_reduction <add>, %292, %cst_176 [0] : vector<256x64xf32> to vector<64xf32>
    %294 = vector.shape_cast %293 : vector<64xf32> to vector<1x64xf32>
    %cst_177 = arith.constant 0.00793650839 : f32
    %295 = vector.broadcast %cst_177 : f32 to vector<1x64xf32>
    %296 = arith.mulf %294, %295 : vector<1x64xf32>
    %297 = vector.broadcast %296 : vector<1x64xf32> to vector<256x64xf32>
    %298 = arith.subf %274, %297 : vector<256x64xf32>
    %299 = vector.broadcast %290 : vector<256x1xf32> to vector<256x64xf32>
    %300 = arith.mulf %298, %299 : vector<256x64xf32>
    %301 = arith.mulf %300, %300 : vector<256x64xf32>
    %cst_178 = arith.constant dense<0.000000e+00> : vector<64xf32>
    %302 = vector.multi_reduction <add>, %301, %cst_178 [0] : vector<256x64xf32> to vector<64xf32>
    %303 = vector.shape_cast %302 : vector<64xf32> to vector<1x64xf32>
    %cst_179 = arith.constant 0.00793650839 : f32
    %304 = vector.broadcast %cst_179 : f32 to vector<1x64xf32>
    %305 = arith.mulf %303, %304 : vector<1x64xf32>
    %306 = vector.broadcast %296 : vector<1x64xf32> to vector<256x64xf32>
    %307 = arith.subf %274, %306 : vector<256x64xf32>
    %cst_180 = arith.constant 9.99999974E-6 : f32
    %308 = vector.broadcast %cst_180 : f32 to vector<1x64xf32>
    %309 = arith.addf %305, %308 : vector<1x64xf32>
    %310 = math.rsqrt %309 : vector<1x64xf32>
    %311 = arith.mulf %310, %275 : vector<1x64xf32>
    %312 = vector.broadcast %311 : vector<1x64xf32> to vector<256x64xf32>
    %313 = arith.mulf %307, %312 : vector<256x64xf32>
    %314 = vector.broadcast %276 : vector<1x64xf32> to vector<256x64xf32>
    %315 = arith.addf %313, %314 : vector<256x64xf32>
    %c0_181 = arith.constant 0 : index
    %c0_182 = arith.constant 0 : index
    %316 = vector.load %arg16[%c0_181, %c0_182] : memref<256x64xf32, #tpu.memory_space<vmem>>, vector<256x64xf32>
    tpu.vector_store %arg16[%c0_181, %c0_182], %315 {strides = array<i32>} : memref<256x64xf32, #tpu.memory_space<vmem>>, vector<256x64xf32>,
    %cst_183 = arith.constant 0.000000e+00 : f32
    %317 = vector.broadcast %cst_183 : f32 to vector<144x64xf32>
    %c0_184 = arith.constant 0 : index
    %c0_185 = arith.constant 0 : index
    %318 = vector.load %arg17[%c0_184, %c0_185] : memref<144x64xf32, #tpu.memory_space<vmem>>, vector<144x64xf32>
    tpu.vector_store %arg17[%c0_184, %c0_185], %317 {strides = array<i32>} : memref<144x64xf32, #tpu.memory_space<vmem>>, vector<144x64xf32>,
    %c0_186 = arith.constant 0 : index
    %c0_187 = arith.constant 0 : index
    %319 = tpu.strided_load %arg16[%c0_186, %c0_187] {strides = array<i32: 2, 1>} : memref<256x64xf32, #tpu.memory_space<vmem>>, vector<3x64xf32>
    %c1_188 = arith.constant 1 : index
    %c0_189 = arith.constant 0 : index
    %320 = tpu.strided_load %arg16[%c1_188, %c0_189] {strides = array<i32: 2, 1>} : memref<256x64xf32, #tpu.memory_space<vmem>>, vector<3x64xf32>
    %c8_190 = arith.constant 8 : index
    %c0_191 = arith.constant 0 : index
    %321 = tpu.strided_load %arg16[%c8_190, %c0_191] {strides = array<i32: 2, 1>} : memref<256x64xf32, #tpu.memory_space<vmem>>, vector<3x64xf32>
    %c9_192 = arith.constant 9 : index
    %c0_193 = arith.constant 0 : index
    %322 = tpu.strided_load %arg16[%c9_192, %c0_193] {strides = array<i32: 2, 1>} : memref<256x64xf32, #tpu.memory_space<vmem>>, vector<3x64xf32>
    %323 = arith.maximumf %319, %320 : vector<3x64xf32>
    %324 = arith.maximumf %321, %322 : vector<3x64xf32>
    %325 = arith.maximumf %323, %324 : vector<3x64xf32>
    %c9_194 = arith.constant 9 : index
    %c0_195 = arith.constant 0 : index
    %326 = vector.load %arg17[%c9_194, %c0_195] : memref<144x64xf32, #tpu.memory_space<vmem>>, vector<3x64xf32>
    tpu.vector_store %arg17[%c9_194, %c0_195], %325 {strides = array<i32>} : memref<144x64xf32, #tpu.memory_space<vmem>>, vector<3x64xf32>,
    %c16_196 = arith.constant 16 : index
    %c0_197 = arith.constant 0 : index
    %327 = tpu.strided_load %arg16[%c16_196, %c0_197] {strides = array<i32: 2, 1>} : memref<256x64xf32, #tpu.memory_space<vmem>>, vector<3x64xf32>
    %c17_198 = arith.constant 17 : index
    %c0_199 = arith.constant 0 : index
    %328 = tpu.strided_load %arg16[%c17_198, %c0_199] {strides = array<i32: 2, 1>} : memref<256x64xf32, #tpu.memory_space<vmem>>, vector<3x64xf32>
    %c24 = arith.constant 24 : index
    %c0_200 = arith.constant 0 : index
    %329 = tpu.strided_load %arg16[%c24, %c0_200] {strides = array<i32: 2, 1>} : memref<256x64xf32, #tpu.memory_space<vmem>>, vector<3x64xf32>
    %c25_201 = arith.constant 25 : index
    %c0_202 = arith.constant 0 : index
    %330 = tpu.strided_load %arg16[%c25_201, %c0_202] {strides = array<i32: 2, 1>} : memref<256x64xf32, #tpu.memory_space<vmem>>, vector<3x64xf32>
    %331 = arith.maximumf %327, %328 : vector<3x64xf32>
    %332 = arith.maximumf %329, %330 : vector<3x64xf32>
    %333 = arith.maximumf %331, %332 : vector<3x64xf32>
    %c17_203 = arith.constant 17 : index
    %c0_204 = arith.constant 0 : index
    %334 = vector.load %arg17[%c17_203, %c0_204] : memref<144x64xf32, #tpu.memory_space<vmem>>, vector<3x64xf32>
    tpu.vector_store %arg17[%c17_203, %c0_204], %333 {strides = array<i32>} : memref<144x64xf32, #tpu.memory_space<vmem>>, vector<3x64xf32>,
    %c32_205 = arith.constant 32 : index
    %c0_206 = arith.constant 0 : index
    %335 = tpu.strided_load %arg16[%c32_205, %c0_206] {strides = array<i32: 2, 1>} : memref<256x64xf32, #tpu.memory_space<vmem>>, vector<3x64xf32>
    %c33_207 = arith.constant 33 : index
    %c0_208 = arith.constant 0 : index
    %336 = tpu.strided_load %arg16[%c33_207, %c0_208] {strides = array<i32: 2, 1>} : memref<256x64xf32, #tpu.memory_space<vmem>>, vector<3x64xf32>
    %c40 = arith.constant 40 : index
    %c0_209 = arith.constant 0 : index
    %337 = tpu.strided_load %arg16[%c40, %c0_209] {strides = array<i32: 2, 1>} : memref<256x64xf32, #tpu.memory_space<vmem>>, vector<3x64xf32>
    %c41_210 = arith.constant 41 : index
    %c0_211 = arith.constant 0 : index
    %338 = tpu.strided_load %arg16[%c41_210, %c0_211] {strides = array<i32: 2, 1>} : memref<256x64xf32, #tpu.memory_space<vmem>>, vector<3x64xf32>
    %339 = arith.maximumf %335, %336 : vector<3x64xf32>
    %340 = arith.maximumf %337, %338 : vector<3x64xf32>
    %341 = arith.maximumf %339, %340 : vector<3x64xf32>
    %c25_212 = arith.constant 25 : index
    %c0_213 = arith.constant 0 : index
    %342 = vector.load %arg17[%c25_212, %c0_213] : memref<144x64xf32, #tpu.memory_space<vmem>>, vector<3x64xf32>
    tpu.vector_store %arg17[%c25_212, %c0_213], %341 {strides = array<i32>} : memref<144x64xf32, #tpu.memory_space<vmem>>, vector<3x64xf32>,
    %c48_214 = arith.constant 48 : index
    %c0_215 = arith.constant 0 : index
    %343 = tpu.strided_load %arg16[%c48_214, %c0_215] {strides = array<i32: 2, 1>} : memref<256x64xf32, #tpu.memory_space<vmem>>, vector<3x64xf32>
    %c49_216 = arith.constant 49 : index
    %c0_217 = arith.constant 0 : index
    %344 = tpu.strided_load %arg16[%c49_216, %c0_217] {strides = array<i32: 2, 1>} : memref<256x64xf32, #tpu.memory_space<vmem>>, vector<3x64xf32>
    %c56 = arith.constant 56 : index
    %c0_218 = arith.constant 0 : index
    %345 = tpu.strided_load %arg16[%c56, %c0_218] {strides = array<i32: 2, 1>} : memref<256x64xf32, #tpu.memory_space<vmem>>, vector<3x64xf32>
    %c57_219 = arith.constant 57 : index
    %c0_220 = arith.constant 0 : index
    %346 = tpu.strided_load %arg16[%c57_219, %c0_220] {strides = array<i32: 2, 1>} : memref<256x64xf32, #tpu.memory_space<vmem>>, vector<3x64xf32>
    %347 = arith.maximumf %343, %344 : vector<3x64xf32>
    %348 = arith.maximumf %345, %346 : vector<3x64xf32>
    %349 = arith.maximumf %347, %348 : vector<3x64xf32>
    %c33_221 = arith.constant 33 : index
    %c0_222 = arith.constant 0 : index
    %350 = vector.load %arg17[%c33_221, %c0_222] : memref<144x64xf32, #tpu.memory_space<vmem>>, vector<3x64xf32>
    tpu.vector_store %arg17[%c33_221, %c0_222], %349 {strides = array<i32>} : memref<144x64xf32, #tpu.memory_space<vmem>>, vector<3x64xf32>,
    %c128_223 = arith.constant 128 : index
    %c0_224 = arith.constant 0 : index
    %351 = tpu.strided_load %arg16[%c128_223, %c0_224] {strides = array<i32: 2, 1>} : memref<256x64xf32, #tpu.memory_space<vmem>>, vector<3x64xf32>
    %c129_225 = arith.constant 129 : index
    %c0_226 = arith.constant 0 : index
    %352 = tpu.strided_load %arg16[%c129_225, %c0_226] {strides = array<i32: 2, 1>} : memref<256x64xf32, #tpu.memory_space<vmem>>, vector<3x64xf32>
    %c136 = arith.constant 136 : index
    %c0_227 = arith.constant 0 : index
    %353 = tpu.strided_load %arg16[%c136, %c0_227] {strides = array<i32: 2, 1>} : memref<256x64xf32, #tpu.memory_space<vmem>>, vector<3x64xf32>
    %c137_228 = arith.constant 137 : index
    %c0_229 = arith.constant 0 : index
    %354 = tpu.strided_load %arg16[%c137_228, %c0_229] {strides = array<i32: 2, 1>} : memref<256x64xf32, #tpu.memory_space<vmem>>, vector<3x64xf32>
    %355 = arith.maximumf %351, %352 : vector<3x64xf32>
    %356 = arith.maximumf %353, %354 : vector<3x64xf32>
    %357 = arith.maximumf %355, %356 : vector<3x64xf32>
    %c73 = arith.constant 73 : index
    %c0_230 = arith.constant 0 : index
    %358 = vector.load %arg17[%c73, %c0_230] : memref<144x64xf32, #tpu.memory_space<vmem>>, vector<3x64xf32>
    tpu.vector_store %arg17[%c73, %c0_230], %357 {strides = array<i32>} : memref<144x64xf32, #tpu.memory_space<vmem>>, vector<3x64xf32>,
    %c144_231 = arith.constant 144 : index
    %c0_232 = arith.constant 0 : index
    %359 = tpu.strided_load %arg16[%c144_231, %c0_232] {strides = array<i32: 2, 1>} : memref<256x64xf32, #tpu.memory_space<vmem>>, vector<3x64xf32>
    %c145_233 = arith.constant 145 : index
    %c0_234 = arith.constant 0 : index
    %360 = tpu.strided_load %arg16[%c145_233, %c0_234] {strides = array<i32: 2, 1>} : memref<256x64xf32, #tpu.memory_space<vmem>>, vector<3x64xf32>
    %c152 = arith.constant 152 : index
    %c0_235 = arith.constant 0 : index
    %361 = tpu.strided_load %arg16[%c152, %c0_235] {strides = array<i32: 2, 1>} : memref<256x64xf32, #tpu.memory_space<vmem>>, vector<3x64xf32>
    %c153_236 = arith.constant 153 : index
    %c0_237 = arith.constant 0 : index
    %362 = tpu.strided_load %arg16[%c153_236, %c0_237] {strides = array<i32: 2, 1>} : memref<256x64xf32, #tpu.memory_space<vmem>>, vector<3x64xf32>
    %363 = arith.maximumf %359, %360 : vector<3x64xf32>
    %364 = arith.maximumf %361, %362 : vector<3x64xf32>
    %365 = arith.maximumf %363, %364 : vector<3x64xf32>
    %c81_238 = arith.constant 81 : index
    %c0_239 = arith.constant 0 : index
    %366 = vector.load %arg17[%c81_238, %c0_239] : memref<144x64xf32, #tpu.memory_space<vmem>>, vector<3x64xf32>
    tpu.vector_store %arg17[%c81_238, %c0_239], %365 {strides = array<i32>} : memref<144x64xf32, #tpu.memory_space<vmem>>, vector<3x64xf32>,
    %c160_240 = arith.constant 160 : index
    %c0_241 = arith.constant 0 : index
    %367 = tpu.strided_load %arg16[%c160_240, %c0_241] {strides = array<i32: 2, 1>} : memref<256x64xf32, #tpu.memory_space<vmem>>, vector<3x64xf32>
    %c161_242 = arith.constant 161 : index
    %c0_243 = arith.constant 0 : index
    %368 = tpu.strided_load %arg16[%c161_242, %c0_243] {strides = array<i32: 2, 1>} : memref<256x64xf32, #tpu.memory_space<vmem>>, vector<3x64xf32>
    %c168 = arith.constant 168 : index
    %c0_244 = arith.constant 0 : index
    %369 = tpu.strided_load %arg16[%c168, %c0_244] {strides = array<i32: 2, 1>} : memref<256x64xf32, #tpu.memory_space<vmem>>, vector<3x64xf32>
    %c169_245 = arith.constant 169 : index
    %c0_246 = arith.constant 0 : index
    %370 = tpu.strided_load %arg16[%c169_245, %c0_246] {strides = array<i32: 2, 1>} : memref<256x64xf32, #tpu.memory_space<vmem>>, vector<3x64xf32>
    %371 = arith.maximumf %367, %368 : vector<3x64xf32>
    %372 = arith.maximumf %369, %370 : vector<3x64xf32>
    %373 = arith.maximumf %371, %372 : vector<3x64xf32>
    %c89 = arith.constant 89 : index
    %c0_247 = arith.constant 0 : index
    %374 = vector.load %arg17[%c89, %c0_247] : memref<144x64xf32, #tpu.memory_space<vmem>>, vector<3x64xf32>
    tpu.vector_store %arg17[%c89, %c0_247], %373 {strides = array<i32>} : memref<144x64xf32, #tpu.memory_space<vmem>>, vector<3x64xf32>,
    %c176_248 = arith.constant 176 : index
    %c0_249 = arith.constant 0 : index
    %375 = tpu.strided_load %arg16[%c176_248, %c0_249] {strides = array<i32: 2, 1>} : memref<256x64xf32, #tpu.memory_space<vmem>>, vector<3x64xf32>
    %c177_250 = arith.constant 177 : index
    %c0_251 = arith.constant 0 : index
    %376 = tpu.strided_load %arg16[%c177_250, %c0_251] {strides = array<i32: 2, 1>} : memref<256x64xf32, #tpu.memory_space<vmem>>, vector<3x64xf32>
    %c184 = arith.constant 184 : index
    %c0_252 = arith.constant 0 : index
    %377 = tpu.strided_load %arg16[%c184, %c0_252] {strides = array<i32: 2, 1>} : memref<256x64xf32, #tpu.memory_space<vmem>>, vector<3x64xf32>
    %c185_253 = arith.constant 185 : index
    %c0_254 = arith.constant 0 : index
    %378 = tpu.strided_load %arg16[%c185_253, %c0_254] {strides = array<i32: 2, 1>} : memref<256x64xf32, #tpu.memory_space<vmem>>, vector<3x64xf32>
    %379 = arith.maximumf %375, %376 : vector<3x64xf32>
    %380 = arith.maximumf %377, %378 : vector<3x64xf32>
    %381 = arith.maximumf %379, %380 : vector<3x64xf32>
    %c97_255 = arith.constant 97 : index
    %c0_256 = arith.constant 0 : index
    %382 = vector.load %arg17[%c97_255, %c0_256] : memref<144x64xf32, #tpu.memory_space<vmem>>, vector<3x64xf32>
    tpu.vector_store %arg17[%c97_255, %c0_256], %381 {strides = array<i32>} : memref<144x64xf32, #tpu.memory_space<vmem>>, vector<3x64xf32>,
    %c0_257 = arith.constant 0 : index
    %c0_258 = arith.constant 0 : index
    %383 = vector.load %arg17[%c0_257, %c0_258] : memref<144x64xf32, #tpu.memory_space<vmem>>, vector<128x64xf32>
    %c0_259 = arith.constant 0 : index
    %c0_260 = arith.constant 0 : index
    %384 = vector.load %arg7[%c0_259, %c0_260] : memref<256x32xf32, #tpu.memory_space<vmem>>, vector<64x32xf32>
    %cst_261 = arith.constant dense<0.000000e+00> : vector<128x32xf32>
    %385 = tpu.matmul %383, %384, %cst_261 {dimension_numbers = #tpu.dot_dimension_numbers<[1], [0], [0], [1], [0, 0, 1, 1], [], []>} : vector<128x64xf32>, vector<64x32xf32>, vector<128x32xf32> -> vector<128x32xf32>
    %c1_262 = arith.constant 1 : index
    %c0_263 = arith.constant 0 : index
    %386 = vector.load %arg17[%c1_262, %c0_263] : memref<144x64xf32, #tpu.memory_space<vmem>>, vector<128x64xf32>
    %c64_264 = arith.constant 64 : index
    %c0_265 = arith.constant 0 : index
    %387 = vector.load %arg7[%c64_264, %c0_265] : memref<256x32xf32, #tpu.memory_space<vmem>>, vector<64x32xf32>
    %cst_266 = arith.constant dense<0.000000e+00> : vector<128x32xf32>
    %388 = tpu.matmul %386, %387, %cst_266 {dimension_numbers = #tpu.dot_dimension_numbers<[1], [0], [0], [1], [0, 0, 1, 1], [], []>} : vector<128x64xf32>, vector<64x32xf32>, vector<128x32xf32> -> vector<128x32xf32>
    %389 = arith.addf %385, %388 : vector<128x32xf32>
    %c8_267 = arith.constant 8 : index
    %c0_268 = arith.constant 0 : index
    %390 = vector.load %arg17[%c8_267, %c0_268] : memref<144x64xf32, #tpu.memory_space<vmem>>, vector<128x64xf32>
    %c128_269 = arith.constant 128 : index
    %c0_270 = arith.constant 0 : index
    %391 = vector.load %arg7[%c128_269, %c0_270] : memref<256x32xf32, #tpu.memory_space<vmem>>, vector<64x32xf32>
    %cst_271 = arith.constant dense<0.000000e+00> : vector<128x32xf32>
    %392 = tpu.matmul %390, %391, %cst_271 {dimension_numbers = #tpu.dot_dimension_numbers<[1], [0], [0], [1], [0, 0, 1, 1], [], []>} : vector<128x64xf32>, vector<64x32xf32>, vector<128x32xf32> -> vector<128x32xf32>
    %393 = arith.addf %389, %392 : vector<128x32xf32>
    %c9_272 = arith.constant 9 : index
    %c0_273 = arith.constant 0 : index
    %394 = vector.load %arg17[%c9_272, %c0_273] : memref<144x64xf32, #tpu.memory_space<vmem>>, vector<128x64xf32>
    %c192_274 = arith.constant 192 : index
    %c0_275 = arith.constant 0 : index
    %395 = vector.load %arg7[%c192_274, %c0_275] : memref<256x32xf32, #tpu.memory_space<vmem>>, vector<64x32xf32>
    %cst_276 = arith.constant dense<0.000000e+00> : vector<128x32xf32>
    %396 = tpu.matmul %394, %395, %cst_276 {dimension_numbers = #tpu.dot_dimension_numbers<[1], [0], [0], [1], [0, 0, 1, 1], [], []>} : vector<128x64xf32>, vector<64x32xf32>, vector<128x32xf32> -> vector<128x32xf32>
    %397 = arith.addf %393, %396 : vector<128x32xf32>
    %c0_277 = arith.constant 0 : index
    %c0_278 = arith.constant 0 : index
    %398 = vector.load %arg8[%c0_277, %c0_278] : memref<1x32xf32, #tpu.memory_space<vmem>>, vector<1x32xf32>
    %399 = vector.broadcast %398 : vector<1x32xf32> to vector<128x32xf32>
    %400 = arith.addf %397, %399 : vector<128x32xf32>
    %cst_279 = arith.constant 0.000000e+00 : f32
    %401 = vector.broadcast %cst_279 : f32 to vector<128x32xf32>
    %402 = arith.maximumf %400, %401 : vector<128x32xf32>
    %c0_280 = arith.constant 0 : index
    %c0_281 = arith.constant 0 : index
    %403 = vector.load %arg9[%c0_280, %c0_281] : memref<1x32xf32, #tpu.memory_space<vmem>>, vector<1x32xf32>
    %c0_282 = arith.constant 0 : index
    %c0_283 = arith.constant 0 : index
    %404 = vector.load %arg10[%c0_282, %c0_283] : memref<1x32xf32, #tpu.memory_space<vmem>>, vector<1x32xf32>
    %405 = tpu.iota {dimensions = array<i32: 0>} : vector<128x1xi32>
    %c7_i32_284 = arith.constant 7 : i32
    %406 = vector.broadcast %c7_i32_284 : i32 to vector<128x1xi32>
    %407 = arith.andi %405, %406 : vector<128x1xi32>
    %c3_i32_285 = arith.constant 3 : i32
    %408 = vector.broadcast %c3_i32_285 : i32 to vector<128x1xi32>
    %409 = arith.shrsi %405, %408 : vector<128x1xi32>
    %c7_i32_286 = arith.constant 7 : i32
    %410 = vector.broadcast %c7_i32_286 : i32 to vector<128x1xi32>
    %411 = arith.andi %409, %410 : vector<128x1xi32>
    %c4_i32 = arith.constant 4 : i32
    %412 = vector.broadcast %c4_i32 : i32 to vector<128x1xi32>
    %413 = arith.cmpi slt, %407, %412 : vector<128x1xi32>
    %c5_i32 = arith.constant 5 : i32
    %414 = vector.broadcast %c5_i32 : i32 to vector<128x1xi32>
    %415 = arith.cmpi slt, %411, %414 : vector<128x1xi32>
    %416 = arith.andi %413, %415 : vector<128x1xi1>
    %417 = arith.extui %416 : vector<128x1xi1> to vector<128x1xi32>
    %418 = arith.sitofp %417 : vector<128x1xi32> to vector<128x1xf32>
    %419 = vector.broadcast %418 : vector<128x1xf32> to vector<128x32xf32>
    %420 = arith.mulf %402, %419 : vector<128x32xf32>
    %cst_287 = arith.constant dense<0.000000e+00> : vector<32xf32>
    %421 = vector.multi_reduction <add>, %420, %cst_287 [0] : vector<128x32xf32> to vector<32xf32>
    %422 = vector.shape_cast %421 : vector<32xf32> to vector<1x32xf32>
    %cst_288 = arith.constant 2.500000e-02 : f32
    %423 = vector.broadcast %cst_288 : f32 to vector<1x32xf32>
    %424 = arith.mulf %422, %423 : vector<1x32xf32>
    %425 = vector.broadcast %424 : vector<1x32xf32> to vector<128x32xf32>
    %426 = arith.subf %402, %425 : vector<128x32xf32>
    %427 = vector.broadcast %418 : vector<128x1xf32> to vector<128x32xf32>
    %428 = arith.mulf %426, %427 : vector<128x32xf32>
    %429 = arith.mulf %428, %428 : vector<128x32xf32>
    %cst_289 = arith.constant dense<0.000000e+00> : vector<32xf32>
    %430 = vector.multi_reduction <add>, %429, %cst_289 [0] : vector<128x32xf32> to vector<32xf32>
    %431 = vector.shape_cast %430 : vector<32xf32> to vector<1x32xf32>
    %cst_290 = arith.constant 2.500000e-02 : f32
    %432 = vector.broadcast %cst_290 : f32 to vector<1x32xf32>
    %433 = arith.mulf %431, %432 : vector<1x32xf32>
    %434 = vector.broadcast %424 : vector<1x32xf32> to vector<128x32xf32>
    %435 = arith.subf %402, %434 : vector<128x32xf32>
    %cst_291 = arith.constant 9.99999974E-6 : f32
    %436 = vector.broadcast %cst_291 : f32 to vector<1x32xf32>
    %437 = arith.addf %433, %436 : vector<1x32xf32>
    %438 = math.rsqrt %437 : vector<1x32xf32>
    %439 = arith.mulf %438, %403 : vector<1x32xf32>
    %440 = vector.broadcast %439 : vector<1x32xf32> to vector<128x32xf32>
    %441 = arith.mulf %435, %440 : vector<128x32xf32>
    %442 = vector.broadcast %404 : vector<1x32xf32> to vector<128x32xf32>
    %443 = arith.addf %441, %442 : vector<128x32xf32>
    %c0_292 = arith.constant 0 : index
    %c0_293 = arith.constant 0 : index
    %444 = vector.load %arg18[%c0_292, %c0_293] : memref<128x32xf32, #tpu.memory_space<vmem>>, vector<128x32xf32>
    tpu.vector_store %arg18[%c0_292, %c0_293], %443 {strides = array<i32>} : memref<128x32xf32, #tpu.memory_space<vmem>>, vector<128x32xf32>,
    %c0_294 = arith.constant 0 : index
    %c0_295 = arith.constant 0 : index
    %445 = tpu.strided_load %arg18[%c0_294, %c0_295] {strides = array<i32: 2, 1>} : memref<128x32xf32, #tpu.memory_space<vmem>>, vector<2x32xf32>
    %c1_296 = arith.constant 1 : index
    %c0_297 = arith.constant 0 : index
    %446 = tpu.strided_load %arg18[%c1_296, %c0_297] {strides = array<i32: 2, 1>} : memref<128x32xf32, #tpu.memory_space<vmem>>, vector<2x32xf32>
    %c8_298 = arith.constant 8 : index
    %c0_299 = arith.constant 0 : index
    %447 = tpu.strided_load %arg18[%c8_298, %c0_299] {strides = array<i32: 2, 1>} : memref<128x32xf32, #tpu.memory_space<vmem>>, vector<2x32xf32>
    %c9_300 = arith.constant 9 : index
    %c0_301 = arith.constant 0 : index
    %448 = tpu.strided_load %arg18[%c9_300, %c0_301] {strides = array<i32: 2, 1>} : memref<128x32xf32, #tpu.memory_space<vmem>>, vector<2x32xf32>
    %449 = arith.maximumf %445, %446 : vector<2x32xf32>
    %450 = arith.maximumf %447, %448 : vector<2x32xf32>
    %451 = arith.maximumf %449, %450 : vector<2x32xf32>
    %452 = vector.extract_strided_slice %451 {offsets = [0, 0], sizes = [1, 32], strides = [1, 1]} : vector<2x32xf32> to vector<1x32xf32>
    %c0_302 = arith.constant 0 : index
    %c0_303 = arith.constant 0 : index
    %453 = vector.load %arg19[%c0_302, %c0_303] : memref<8x32xf32, #tpu.memory_space<vmem>>, vector<1x32xf32>
    tpu.vector_store %arg19[%c0_302, %c0_303], %452 {strides = array<i32>} : memref<8x32xf32, #tpu.memory_space<vmem>>, vector<1x32xf32>,
    %454 = vector.extract_strided_slice %451 {offsets = [1, 0], sizes = [1, 32], strides = [1, 1]} : vector<2x32xf32> to vector<1x32xf32>
    %c2_304 = arith.constant 2 : index
    %c0_305 = arith.constant 0 : index
    %455 = vector.load %arg19[%c2_304, %c0_305] : memref<8x32xf32, #tpu.memory_space<vmem>>, vector<1x32xf32>
    tpu.vector_store %arg19[%c2_304, %c0_305], %454 {strides = array<i32>} : memref<8x32xf32, #tpu.memory_space<vmem>>, vector<1x32xf32>,
    %c16_306 = arith.constant 16 : index
    %c0_307 = arith.constant 0 : index
    %456 = tpu.strided_load %arg18[%c16_306, %c0_307] {strides = array<i32: 2, 1>} : memref<128x32xf32, #tpu.memory_space<vmem>>, vector<2x32xf32>
    %c17_308 = arith.constant 17 : index
    %c0_309 = arith.constant 0 : index
    %457 = tpu.strided_load %arg18[%c17_308, %c0_309] {strides = array<i32: 2, 1>} : memref<128x32xf32, #tpu.memory_space<vmem>>, vector<2x32xf32>
    %c24_310 = arith.constant 24 : index
    %c0_311 = arith.constant 0 : index
    %458 = tpu.strided_load %arg18[%c24_310, %c0_311] {strides = array<i32: 2, 1>} : memref<128x32xf32, #tpu.memory_space<vmem>>, vector<2x32xf32>
    %c25_312 = arith.constant 25 : index
    %c0_313 = arith.constant 0 : index
    %459 = tpu.strided_load %arg18[%c25_312, %c0_313] {strides = array<i32: 2, 1>} : memref<128x32xf32, #tpu.memory_space<vmem>>, vector<2x32xf32>
    %460 = arith.maximumf %456, %457 : vector<2x32xf32>
    %461 = arith.maximumf %458, %459 : vector<2x32xf32>
    %462 = arith.maximumf %460, %461 : vector<2x32xf32>
    %463 = vector.extract_strided_slice %462 {offsets = [0, 0], sizes = [1, 32], strides = [1, 1]} : vector<2x32xf32> to vector<1x32xf32>
    %c4 = arith.constant 4 : index
    %c0_314 = arith.constant 0 : index
    %464 = vector.load %arg19[%c4, %c0_314] : memref<8x32xf32, #tpu.memory_space<vmem>>, vector<1x32xf32>
    tpu.vector_store %arg19[%c4, %c0_314], %463 {strides = array<i32>} : memref<8x32xf32, #tpu.memory_space<vmem>>, vector<1x32xf32>,
    %465 = vector.extract_strided_slice %462 {offsets = [1, 0], sizes = [1, 32], strides = [1, 1]} : vector<2x32xf32> to vector<1x32xf32>
    %c6 = arith.constant 6 : index
    %c0_315 = arith.constant 0 : index
    %466 = vector.load %arg19[%c6, %c0_315] : memref<8x32xf32, #tpu.memory_space<vmem>>, vector<1x32xf32>
    tpu.vector_store %arg19[%c6, %c0_315], %465 {strides = array<i32>} : memref<8x32xf32, #tpu.memory_space<vmem>>, vector<1x32xf32>,
    %c64_316 = arith.constant 64 : index
    %c0_317 = arith.constant 0 : index
    %467 = tpu.strided_load %arg18[%c64_316, %c0_317] {strides = array<i32: 2, 1>} : memref<128x32xf32, #tpu.memory_space<vmem>>, vector<2x32xf32>
    %c65_318 = arith.constant 65 : index
    %c0_319 = arith.constant 0 : index
    %468 = tpu.strided_load %arg18[%c65_318, %c0_319] {strides = array<i32: 2, 1>} : memref<128x32xf32, #tpu.memory_space<vmem>>, vector<2x32xf32>
    %c72 = arith.constant 72 : index
    %c0_320 = arith.constant 0 : index
    %469 = tpu.strided_load %arg18[%c72, %c0_320] {strides = array<i32: 2, 1>} : memref<128x32xf32, #tpu.memory_space<vmem>>, vector<2x32xf32>
    %c73_321 = arith.constant 73 : index
    %c0_322 = arith.constant 0 : index
    %470 = tpu.strided_load %arg18[%c73_321, %c0_322] {strides = array<i32: 2, 1>} : memref<128x32xf32, #tpu.memory_space<vmem>>, vector<2x32xf32>
    %471 = arith.maximumf %467, %468 : vector<2x32xf32>
    %472 = arith.maximumf %469, %470 : vector<2x32xf32>
    %473 = arith.maximumf %471, %472 : vector<2x32xf32>
    %474 = vector.extract_strided_slice %473 {offsets = [0, 0], sizes = [1, 32], strides = [1, 1]} : vector<2x32xf32> to vector<1x32xf32>
    %c1_323 = arith.constant 1 : index
    %c0_324 = arith.constant 0 : index
    %475 = vector.load %arg19[%c1_323, %c0_324] : memref<8x32xf32, #tpu.memory_space<vmem>>, vector<1x32xf32>
    tpu.vector_store %arg19[%c1_323, %c0_324], %474 {strides = array<i32>} : memref<8x32xf32, #tpu.memory_space<vmem>>, vector<1x32xf32>,
    %476 = vector.extract_strided_slice %473 {offsets = [1, 0], sizes = [1, 32], strides = [1, 1]} : vector<2x32xf32> to vector<1x32xf32>
    %c3_325 = arith.constant 3 : index
    %c0_326 = arith.constant 0 : index
    %477 = vector.load %arg19[%c3_325, %c0_326] : memref<8x32xf32, #tpu.memory_space<vmem>>, vector<1x32xf32>
    tpu.vector_store %arg19[%c3_325, %c0_326], %476 {strides = array<i32>} : memref<8x32xf32, #tpu.memory_space<vmem>>, vector<1x32xf32>,
    %c80_327 = arith.constant 80 : index
    %c0_328 = arith.constant 0 : index
    %478 = tpu.strided_load %arg18[%c80_327, %c0_328] {strides = array<i32: 2, 1>} : memref<128x32xf32, #tpu.memory_space<vmem>>, vector<2x32xf32>
    %c81_329 = arith.constant 81 : index
    %c0_330 = arith.constant 0 : index
    %479 = tpu.strided_load %arg18[%c81_329, %c0_330] {strides = array<i32: 2, 1>} : memref<128x32xf32, #tpu.memory_space<vmem>>, vector<2x32xf32>
    %c88 = arith.constant 88 : index
    %c0_331 = arith.constant 0 : index
    %480 = tpu.strided_load %arg18[%c88, %c0_331] {strides = array<i32: 2, 1>} : memref<128x32xf32, #tpu.memory_space<vmem>>, vector<2x32xf32>
    %c89_332 = arith.constant 89 : index
    %c0_333 = arith.constant 0 : index
    %481 = tpu.strided_load %arg18[%c89_332, %c0_333] {strides = array<i32: 2, 1>} : memref<128x32xf32, #tpu.memory_space<vmem>>, vector<2x32xf32>
    %482 = arith.maximumf %478, %479 : vector<2x32xf32>
    %483 = arith.maximumf %480, %481 : vector<2x32xf32>
    %484 = arith.maximumf %482, %483 : vector<2x32xf32>
    %485 = vector.extract_strided_slice %484 {offsets = [0, 0], sizes = [1, 32], strides = [1, 1]} : vector<2x32xf32> to vector<1x32xf32>
    %c5 = arith.constant 5 : index
    %c0_334 = arith.constant 0 : index
    %486 = vector.load %arg19[%c5, %c0_334] : memref<8x32xf32, #tpu.memory_space<vmem>>, vector<1x32xf32>
    tpu.vector_store %arg19[%c5, %c0_334], %485 {strides = array<i32>} : memref<8x32xf32, #tpu.memory_space<vmem>>, vector<1x32xf32>,
    %487 = vector.extract_strided_slice %484 {offsets = [1, 0], sizes = [1, 32], strides = [1, 1]} : vector<2x32xf32> to vector<1x32xf32>
    %c7 = arith.constant 7 : index
    %c0_335 = arith.constant 0 : index
    %488 = vector.load %arg19[%c7, %c0_335] : memref<8x32xf32, #tpu.memory_space<vmem>>, vector<1x32xf32>
    tpu.vector_store %arg19[%c7, %c0_335], %487 {strides = array<i32>} : memref<8x32xf32, #tpu.memory_space<vmem>>, vector<1x32xf32>,
    %c0_336 = arith.constant 0 : index
    %c0_337 = arith.constant 0 : index
    %489 = vector.load %arg19[%c0_336, %c0_337] : memref<8x32xf32, #tpu.memory_space<vmem>>, vector<2x32xf32>
    %c0_338 = arith.constant 0 : index
    %c0_339 = arith.constant 0 : index
    %490 = vector.load %arg11[%c0_338, %c0_339] : memref<128x1024xf32, #tpu.memory_space<vmem>>, vector<32x1024xf32>
    %cst_340 = arith.constant dense<0.000000e+00> : vector<2x1024xf32>
    %491 = tpu.matmul %489, %490, %cst_340 {dimension_numbers = #tpu.dot_dimension_numbers<[1], [0], [0], [1], [0, 0, 1, 1], [], []>} : vector<2x32xf32>, vector<32x1024xf32>, vector<2x1024xf32> -> vector<2x1024xf32>
    %c2_341 = arith.constant 2 : index
    %c0_342 = arith.constant 0 : index
    %492 = vector.load %arg19[%c2_341, %c0_342] : memref<8x32xf32, #tpu.memory_space<vmem>>, vector<2x32xf32>
    %c32_343 = arith.constant 32 : index
    %c0_344 = arith.constant 0 : index
    %493 = vector.load %arg11[%c32_343, %c0_344] : memref<128x1024xf32, #tpu.memory_space<vmem>>, vector<32x1024xf32>
    %cst_345 = arith.constant dense<0.000000e+00> : vector<2x1024xf32>
    %494 = tpu.matmul %492, %493, %cst_345 {dimension_numbers = #tpu.dot_dimension_numbers<[1], [0], [0], [1], [0, 0, 1, 1], [], []>} : vector<2x32xf32>, vector<32x1024xf32>, vector<2x1024xf32> -> vector<2x1024xf32>
    %495 = arith.addf %491, %494 : vector<2x1024xf32>
    %c4_346 = arith.constant 4 : index
    %c0_347 = arith.constant 0 : index
    %496 = vector.load %arg19[%c4_346, %c0_347] : memref<8x32xf32, #tpu.memory_space<vmem>>, vector<2x32xf32>
    %c64_348 = arith.constant 64 : index
    %c0_349 = arith.constant 0 : index
    %497 = vector.load %arg11[%c64_348, %c0_349] : memref<128x1024xf32, #tpu.memory_space<vmem>>, vector<32x1024xf32>
    %cst_350 = arith.constant dense<0.000000e+00> : vector<2x1024xf32>
    %498 = tpu.matmul %496, %497, %cst_350 {dimension_numbers = #tpu.dot_dimension_numbers<[1], [0], [0], [1], [0, 0, 1, 1], [], []>} : vector<2x32xf32>, vector<32x1024xf32>, vector<2x1024xf32> -> vector<2x1024xf32>
    %499 = arith.addf %495, %498 : vector<2x1024xf32>
    %c6_351 = arith.constant 6 : index
    %c0_352 = arith.constant 0 : index
    %500 = vector.load %arg19[%c6_351, %c0_352] : memref<8x32xf32, #tpu.memory_space<vmem>>, vector<2x32xf32>
    %c96_353 = arith.constant 96 : index
    %c0_354 = arith.constant 0 : index
    %501 = vector.load %arg11[%c96_353, %c0_354] : memref<128x1024xf32, #tpu.memory_space<vmem>>, vector<32x1024xf32>
    %cst_355 = arith.constant dense<0.000000e+00> : vector<2x1024xf32>
    %502 = tpu.matmul %500, %501, %cst_355 {dimension_numbers = #tpu.dot_dimension_numbers<[1], [0], [0], [1], [0, 0, 1, 1], [], []>} : vector<2x32xf32>, vector<32x1024xf32>, vector<2x1024xf32> -> vector<2x1024xf32>
    %503 = arith.addf %499, %502 : vector<2x1024xf32>
    %c0_356 = arith.constant 0 : index
    %c0_357 = arith.constant 0 : index
    %504 = vector.load %arg12[%c0_356, %c0_357] : memref<1x1024xf32, #tpu.memory_space<vmem>>, vector<1x1024xf32>
    %505 = vector.broadcast %504 : vector<1x1024xf32> to vector<2x1024xf32>
    %506 = arith.addf %503, %505 : vector<2x1024xf32>
    %cst_358 = arith.constant 0.000000e+00 : f32
    %507 = vector.broadcast %cst_358 : f32 to vector<2x1024xf32>
    %508 = arith.maximumf %506, %507 : vector<2x1024xf32>
    %c0_359 = arith.constant 0 : index
    %c0_360 = arith.constant 0 : index
    %509 = vector.load %arg13[%c0_359, %c0_360] : memref<2x1024xf32, #tpu.memory_space<vmem>>, vector<2x1024xf32>
    tpu.vector_store %arg13[%c0_359, %c0_360], %508 {strides = array<i32>} : memref<2x1024xf32, #tpu.memory_space<vmem>>, vector<2x1024xf32>,
    return
  }
}

</mosaic_0001>

<llo_original>
// kernel: audio_network_forward.1
$region0: #{audio_network_forward.1}
  #allocation0 [shape = 'u32[]', space=smem, size = 0x4, offset = 0x4, fixed_abs, tag = 'smem constant byte address 0x4 - core index']
  #allocation1 [shape = 'u32[144,128]{1,0:T(1,128)}', space=vmem, size = 0x12000, scoped, tag = 'internal scratch']
  #allocation2 [shape = 'f32[576,128]{1,0:T(8,128)}', space=vmem, size = 0x48000, scoped, tag = 'scratch operand']
  #allocation3 [shape = 'f32[272,128]{1,0:T(8,128)}', space=vmem, size = 0x22000, scoped, tag = 'scratch operand']
  #allocation4 [shape = 'f32[256,64]{1,0:T(8,128)}', space=vmem, size = 0x20000, scoped, tag = 'scratch operand']
  #allocation5 [shape = 'f32[144,64]{1,0:T(8,128)}', space=vmem, size = 0x12000, scoped, tag = 'scratch operand']
  #allocation6 [shape = 'f32[128,32]{1,0:T(8,128)}', space=vmem, size = 0x10000, scoped, tag = 'scratch operand']
  #allocation7 [shape = 'f32[8,32]{1,0:T(8,128)}', space=vmem, size = 0x1000, scoped, tag = 'scratch operand']
  %s0 = inlined_call_operand.vmem [shape: f32[600,1], index: 0, kind: input, shape index: {}]
  %s1 = inlined_call_operand.vmem [shape: f32[4,128], index: 1, kind: input, shape index: {}]
  %s2 = inlined_call_operand.vmem [shape: f32[1,128], index: 2, kind: input, shape index: {}]
  %s3 = inlined_call_operand.vmem [shape: f32[512,64], index: 3, kind: input, shape index: {}]
  %s4 = inlined_call_operand.vmem [shape: f32[1,64], index: 4, kind: input, shape index: {}]
  %s5 = inlined_call_operand.vmem [shape: f32[1,64], index: 5, kind: input, shape index: {}]
  %s6 = inlined_call_operand.vmem [shape: f32[1,64], index: 6, kind: input, shape index: {}]
  %s7 = inlined_call_operand.vmem [shape: f32[256,32], index: 7, kind: input, shape index: {}]
  %s8 = inlined_call_operand.vmem [shape: f32[1,32], index: 8, kind: input, shape index: {}]
  %s9 = inlined_call_operand.vmem [shape: f32[1,32], index: 9, kind: input, shape index: {}]
  %s10 = inlined_call_operand.vmem [shape: f32[1,32], index: 10, kind: input, shape index: {}]
  %s11 = inlined_call_operand.vmem [shape: f32[128,1024], index: 11, kind: input, shape index: {}]
  %s12 = inlined_call_operand.vmem [shape: f32[1,1024], index: 12, kind: input, shape index: {}]
  %s13 = inlined_call_operand.hbm [shape: f32[2,1024], index: 13, kind: output, shape index: {}]
  %s14 = sld [smem:[#allocation0]]
  $region62: #{audio_network_forward.1} parent=0
    _
  %s16 = ssub.s32 1, %s14
  %s17 = scalar_select 0, %s16, %s14
  $region1: #{audio_network_forward.1} parent=0
    #allocation8 [shape = 'u8[8192]{0}', space=vmem, size = 0x2000, scoped, tag = 'output window, operand 0, single buffered']
    #allocation9 [shape = 's32[1]{0}', space=sflag, size = 0x4, scoped, tag = 'scoped memory for audio_network_forward.1']
    %18 = vsyncpa [#allocation9], 0
    // Predicated region
    $region2: #{audio_network_forward.1} parent=1 // pred_check
      _
    $region3: #{audio_network_forward.1} parent=1 // pred_check_branch
      %20 = sbr.rel (0) target = $region5
    $region4: #{audio_network_forward.1} parent=1 // pred_region
      _
    $region5: #{audio_network_forward.1} parent=1 // pred_fallthru
      _
    // Predicated region
    $region6: #{audio_network_forward.1} parent=1 // pred_check
      _
    $region7: #{audio_network_forward.1} parent=1 // pred_check_branch
      %22 = sbr.rel (0) target = $region9
    $region8: #{audio_network_forward.1} parent=1 // pred_region
      _
    $region9: #{audio_network_forward.1} parent=1 // pred_fallthru
      _
    // Predicated region
    $region10: #{audio_network_forward.1} parent=1 // pred_check
      _
    $region11: #{audio_network_forward.1} parent=1 // pred_check_branch
      %24 = sbr.rel (0) target = $region13
    $region12: #{audio_network_forward.1} parent=1 // pred_region
      _
    $region13: #{audio_network_forward.1} parent=1 // pred_fallthru
      _
    // Predicated region
    $region14: #{audio_network_forward.1} parent=1 // pred_check
      _
    $region15: #{audio_network_forward.1} parent=1 // pred_check_branch
      %26 = sbr.rel (0) target = $region17
    $region16: #{audio_network_forward.1} parent=1 // pred_region
      _
    $region17: #{audio_network_forward.1} parent=1 // pred_fallthru
      _
    // Predicated region
    $region18: #{audio_network_forward.1} parent=1 // pred_check
      _
    $region19: #{audio_network_forward.1} parent=1 // pred_check_branch
      %28 = sbr.rel (0) target = $region21
    $region20: #{audio_network_forward.1} parent=1 // pred_region
      _
    $region21: #{audio_network_forward.1} parent=1 // pred_fallthru
      _
    // Predicated region
    $region22: #{audio_network_forward.1} parent=1 // pred_check
      _
    $region23: #{audio_network_forward.1} parent=1 // pred_check_branch
      %30 = sbr.rel (0) target = $region25
    $region24: #{audio_network_forward.1} parent=1 // pred_region
      _
    $region25: #{audio_network_forward.1} parent=1 // pred_fallthru
      _
    // Predicated region
    $region26: #{audio_network_forward.1} parent=1 // pred_check
      _
    $region27: #{audio_network_forward.1} parent=1 // pred_check_branch
      %32 = sbr.rel (0) target = $region29
    $region28: #{audio_network_forward.1} parent=1 // pred_region
      _
    $region29: #{audio_network_forward.1} parent=1 // pred_fallthru
      _
    // Predicated region
    $region30: #{audio_network_forward.1} parent=1 // pred_check
      _
    $region31: #{audio_network_forward.1} parent=1 // pred_check_branch
      %34 = sbr.rel (0) target = $region33
    $region32: #{audio_network_forward.1} parent=1 // pred_region
      _
    $region33: #{audio_network_forward.1} parent=1 // pred_fallthru
      _
    // Predicated region
    $region34: #{audio_network_forward.1} parent=1 // pred_check
      _
    $region35: #{audio_network_forward.1} parent=1 // pred_check_branch
      %36 = sbr.rel (0) target = $region37
    $region36: #{audio_network_forward.1} parent=1 // pred_region
      _
    $region37: #{audio_network_forward.1} parent=1 // pred_fallthru
      _
    // Predicated region
    $region38: #{audio_network_forward.1} parent=1 // pred_check
      _
    $region39: #{audio_network_forward.1} parent=1 // pred_check_branch
      %38 = sbr.rel (0) target = $region41
    $region40: #{audio_network_forward.1} parent=1 // pred_region
      _
    $region41: #{audio_network_forward.1} parent=1 // pred_fallthru
      _
    // Predicated region
    $region42: #{audio_network_forward.1} parent=1 // pred_check
      _
    $region43: #{audio_network_forward.1} parent=1 // pred_check_branch
      %40 = sbr.rel (0) target = $region45
    $region44: #{audio_network_forward.1} parent=1 // pred_region
      _
    $region45: #{audio_network_forward.1} parent=1 // pred_fallthru
      _
    // Predicated region
    $region46: #{audio_network_forward.1} parent=1 // pred_check
      _
    $region47: #{audio_network_forward.1} parent=1 // pred_check_branch
      %42 = sbr.rel (0) target = $region49
    $region48: #{audio_network_forward.1} parent=1 // pred_region
      _
    $region49: #{audio_network_forward.1} parent=1 // pred_fallthru
      _
    // Predicated region
    $region50: #{audio_network_forward.1} parent=1 // pred_check
      _
    $region51: #{audio_network_forward.1} parent=1 // pred_check_branch
      %44 = sbr.rel (0) target = $region53
    $region52: #{audio_network_forward.1} parent=1 // pred_region
      _
    $region53: #{audio_network_forward.1} parent=1 // pred_fallthru
      _
    %v45 = vld [vmem:[%s2] sm:$0x1]
    %v46 = vld [vmem:[%s1] sm:$0x1]
    %v47 = vld [vmem:[%s1 + $0x1] sm:$0x1]
    %v48 = vld [vmem:[%s1 + $0x2] sm:$0x1]
    %v49 = vld [vmem:[%s1 + $0x3] sm:$0x1]
    %v50 = vld [vmem:[%s0] sm:$0xff]
    %v51 = vld [vmem:[%s0 + $0x8] sm:$0xff]
    %v52 = vld [vmem:[%s0 + $0x10] sm:$0xff]
    %v53 = vld [vmem:[%s0 + $0x18] sm:$0xff]
    %v54 = vld [vmem:[%s0 + $0x20] sm:$0xff]
    %v55 = vld [vmem:[%s0 + $0x28] sm:$0xff]
    %v56 = vld [vmem:[%s0 + $0x30] sm:$0xff]
    %v57 = vld [vmem:[%s0 + $0x38] sm:$0xff]
    %v58 = vld [vmem:[%s0 + $0x40] sm:$0xff]
    %v59 = vld [vmem:[%s0 + $0x48] sm:$0xff]
    %v60 = vld [vmem:[%s0 + $0x50] sm:$0xff]
    %v61 = vld [vmem:[%s0 + $0x58] sm:$0xff]
    %v62 = vld [vmem:[%s0 + $0x60] sm:$0xff]
    %v63 = vld [vmem:[%s0 + $0x68] sm:$0xff]
    %v64 = vld [vmem:[%s0 + $0x70] sm:$0xff]
    %v65 = vld [vmem:[%s0 + $0x78] sm:$0xff]
    %67 = vset.pattern.permute.xlu0 0
    %68 = vperm.xlu0 %67, %v50
    %v69 = vpop.permute.xlu0 %68
    %72 = vset.pattern.permute.xlu0 0
    %73 = vperm.xlu0 %72, %v51
    %v74 = vpop.permute.xlu0 %73
    %77 = vset.pattern.permute.xlu0 0
    %78 = vperm.xlu0 %77, %v52
    %v79 = vpop.permute.xlu0 %78
    %82 = vset.pattern.permute.xlu0 0
    %83 = vperm.xlu0 %82, %v53
    %v84 = vpop.permute.xlu0 %83
    %87 = vset.pattern.permute.xlu0 0
    %88 = vperm.xlu0 %87, %v54
    %v89 = vpop.permute.xlu0 %88
    %92 = vset.pattern.permute.xlu0 0
    %93 = vperm.xlu0 %92, %v55
    %v94 = vpop.permute.xlu0 %93
    %97 = vset.pattern.permute.xlu0 0
    %98 = vperm.xlu0 %97, %v56
    %v99 = vpop.permute.xlu0 %98
    %102 = vset.pattern.permute.xlu0 0
    %103 = vperm.xlu0 %102, %v57
    %v104 = vpop.permute.xlu0 %103
    %107 = vset.pattern.permute.xlu0 0
    %108 = vperm.xlu0 %107, %v58
    %v109 = vpop.permute.xlu0 %108
    %112 = vset.pattern.permute.xlu0 0
    %113 = vperm.xlu0 %112, %v59
    %v114 = vpop.permute.xlu0 %113
    %117 = vset.pattern.permute.xlu0 0
    %118 = vperm.xlu0 %117, %v60
    %v119 = vpop.permute.xlu0 %118
    %122 = vset.pattern.permute.xlu0 0
    %123 = vperm.xlu0 %122, %v61
    %v124 = vpop.permute.xlu0 %123
    %127 = vset.pattern.permute.xlu0 0
    %128 = vperm.xlu0 %127, %v62
    %v129 = vpop.permute.xlu0 %128
    %132 = vset.pattern.permute.xlu0 0
    %133 = vperm.xlu0 %132, %v63
    %v134 = vpop.permute.xlu0 %133
    %137 = vset.pattern.permute.xlu0 0
    %138 = vperm.xlu0 %137, %v64
    %v139 = vpop.permute.xlu0 %138
    %142 = vset.pattern.permute.xlu0 0
    %143 = vperm.xlu0 %142, %v65
    %v144 = vpop.permute.xlu0 %143
    %v146 = vlaneseq
    %v147 = vshrl.u32 %v146, 7
    %v148 = vsub.s32 0, %v147
    %v149 = vrot.slane %v46, %v148
    %v150 = vmul.f32 %v69, %v149
    %v151 = vmul.f32 %v74, %v149
    %v152 = vmul.f32 %v79, %v149
    %v153 = vmul.f32 %v84, %v149
    %v154 = vmul.f32 %v89, %v149
    %v155 = vmul.f32 %v94, %v149
    %v156 = vmul.f32 %v99, %v149
    %v157 = vmul.f32 %v104, %v149
    %v158 = vmul.f32 %v109, %v149
    %v159 = vmul.f32 %v114, %v149
    %v160 = vmul.f32 %v119, %v149
    %v161 = vmul.f32 %v124, %v149
    %v162 = vmul.f32 %v129, %v149
    %v163 = vmul.f32 %v134, %v149
    %v164 = vmul.f32 %v139, %v149
    %v165 = vmul.f32 %v144, %v149
    %v166 = vld [vmem:[%s0 + $0x1] sm:$0xff]
    %v167 = vld [vmem:[%s0 + $0x9] sm:$0xff]
    %v168 = vld [vmem:[%s0 + $0x11] sm:$0xff]
    %v169 = vld [vmem:[%s0 + $0x19] sm:$0xff]
    %v170 = vld [vmem:[%s0 + $0x21] sm:$0xff]
    %v171 = vld [vmem:[%s0 + $0x29] sm:$0xff]
    %v172 = vld [vmem:[%s0 + $0x31] sm:$0xff]
    %v173 = vld [vmem:[%s0 + $0x39] sm:$0xff]
    %v174 = vld [vmem:[%s0 + $0x41] sm:$0xff]
    %v175 = vld [vmem:[%s0 + $0x49] sm:$0xff]
    %v176 = vld [vmem:[%s0 + $0x51] sm:$0xff]
    %v177 = vld [vmem:[%s0 + $0x59] sm:$0xff]
    %v178 = vld [vmem:[%s0 + $0x61] sm:$0xff]
    %v179 = vld [vmem:[%s0 + $0x69] sm:$0xff]
    %v180 = vld [vmem:[%s0 + $0x71] sm:$0xff]
    %v181 = vld [vmem:[%s0 + $0x79] sm:$0xff]
    %183 = vset.pattern.permute.xlu0 0
    %184 = vperm.xlu0 %183, %v166
    %v185 = vpop.permute.xlu0 %184
    %188 = vset.pattern.permute.xlu0 0
    %189 = vperm.xlu0 %188, %v167
    %v190 = vpop.permute.xlu0 %189
    %193 = vset.pattern.permute.xlu0 0
    %194 = vperm.xlu0 %193, %v168
    %v195 = vpop.permute.xlu0 %194
    %198 = vset.pattern.permute.xlu0 0
    %199 = vperm.xlu0 %198, %v169
    %v200 = vpop.permute.xlu0 %199
    %203 = vset.pattern.permute.xlu0 0
    %204 = vperm.xlu0 %203, %v170
    %v205 = vpop.permute.xlu0 %204
    %208 = vset.pattern.permute.xlu0 0
    %209 = vperm.xlu0 %208, %v171
    %v210 = vpop.permute.xlu0 %209
    %213 = vset.pattern.permute.xlu0 0
    %214 = vperm.xlu0 %213, %v172
    %v215 = vpop.permute.xlu0 %214
    %218 = vset.pattern.permute.xlu0 0
    %219 = vperm.xlu0 %218, %v173
    %v220 = vpop.permute.xlu0 %219
    %223 = vset.pattern.permute.xlu0 0
    %224 = vperm.xlu0 %223, %v174
    %v225 = vpop.permute.xlu0 %224
    %228 = vset.pattern.permute.xlu0 0
    %229 = vperm.xlu0 %228, %v175
    %v230 = vpop.permute.xlu0 %229
    %233 = vset.pattern.permute.xlu0 0
    %234 = vperm.xlu0 %233, %v176
    %v235 = vpop.permute.xlu0 %234
    %238 = vset.pattern.permute.xlu0 0
    %239 = vperm.xlu0 %238, %v177
    %v240 = vpop.permute.xlu0 %239
    %243 = vset.pattern.permute.xlu0 0
    %244 = vperm.xlu0 %243, %v178
    %v245 = vpop.permute.xlu0 %244
    %248 = vset.pattern.permute.xlu0 0
    %249 = vperm.xlu0 %248, %v179
    %v250 = vpop.permute.xlu0 %249
    %253 = vset.pattern.permute.xlu0 0
    %254 = vperm.xlu0 %253, %v180
    %v255 = vpop.permute.xlu0 %254
    %258 = vset.pattern.permute.xlu0 0
    %259 = vperm.xlu0 %258, %v181
    %v260 = vpop.permute.xlu0 %259
    %v262 = vlaneseq
    %v263 = vshrl.u32 %v262, 7
    %v264 = vsub.s32 0, %v263
    %v265 = vrot.slane %v47, %v264
    %v266 = vmul.f32 %v185, %v265
    %v267 = vmul.f32 %v190, %v265
    %v268 = vmul.f32 %v195, %v265
    %v269 = vmul.f32 %v200, %v265
    %v270 = vmul.f32 %v205, %v265
    %v271 = vmul.f32 %v210, %v265
    %v272 = vmul.f32 %v215, %v265
    %v273 = vmul.f32 %v220, %v265
    %v274 = vmul.f32 %v225, %v265
    %v275 = vmul.f32 %v230, %v265
    %v276 = vmul.f32 %v235, %v265
    %v277 = vmul.f32 %v240, %v265
    %v278 = vmul.f32 %v245, %v265
    %v279 = vmul.f32 %v250, %v265
    %v280 = vmul.f32 %v255, %v265
    %v281 = vmul.f32 %v260, %v265
    %v282 = vadd.f32 %v150, %v266
    %v283 = vadd.f32 %v151, %v267
    %v284 = vadd.f32 %v152, %v268
    %v285 = vadd.f32 %v153, %v269
    %v286 = vadd.f32 %v154, %v270
    %v287 = vadd.f32 %v155, %v271
    %v288 = vadd.f32 %v156, %v272
    %v289 = vadd.f32 %v157, %v273
    %v290 = vadd.f32 %v158, %v274
    %v291 = vadd.f32 %v159, %v275
    %v292 = vadd.f32 %v160, %v276
    %v293 = vadd.f32 %v161, %v277
    %v294 = vadd.f32 %v162, %v278
    %v295 = vadd.f32 %v163, %v279
    %v296 = vadd.f32 %v164, %v280
    %v297 = vadd.f32 %v165, %v281
    %v298 = vld [vmem:[%s0 + $0x10] sm:$0xff]
    %v299 = vld [vmem:[%s0 + $0x18] sm:$0xff]
    %v300 = vld [vmem:[%s0 + $0x20] sm:$0xff]
    %v301 = vld [vmem:[%s0 + $0x28] sm:$0xff]
    %v302 = vld [vmem:[%s0 + $0x30] sm:$0xff]
    %v303 = vld [vmem:[%s0 + $0x38] sm:$0xff]
    %v304 = vld [vmem:[%s0 + $0x40] sm:$0xff]
    %v305 = vld [vmem:[%s0 + $0x48] sm:$0xff]
    %v306 = vld [vmem:[%s0 + $0x50] sm:$0xff]
    %v307 = vld [vmem:[%s0 + $0x58] sm:$0xff]
    %v308 = vld [vmem:[%s0 + $0x60] sm:$0xff]
    %v309 = vld [vmem:[%s0 + $0x68] sm:$0xff]
    %v310 = vld [vmem:[%s0 + $0x70] sm:$0xff]
    %v311 = vld [vmem:[%s0 + $0x78] sm:$0xff]
    %v312 = vld [vmem:[%s0 + $0x80] sm:$0xff]
    %v313 = vld [vmem:[%s0 + $0x88] sm:$0xff]
    %315 = vset.pattern.permute.xlu0 0
    %316 = vperm.xlu0 %315, %v298
    %v317 = vpop.permute.xlu0 %316
    %320 = vset.pattern.permute.xlu0 0
    %321 = vperm.xlu0 %320, %v299
    %v322 = vpop.permute.xlu0 %321
    %325 = vset.pattern.permute.xlu0 0
    %326 = vperm.xlu0 %325, %v300
    %v327 = vpop.permute.xlu0 %326
    %330 = vset.pattern.permute.xlu0 0
    %331 = vperm.xlu0 %330, %v301
    %v332 = vpop.permute.xlu0 %331
    %335 = vset.pattern.permute.xlu0 0
    %336 = vperm.xlu0 %335, %v302
    %v337 = vpop.permute.xlu0 %336
    %340 = vset.pattern.permute.xlu0 0
    %341 = vperm.xlu0 %340, %v303
    %v342 = vpop.permute.xlu0 %341
    %345 = vset.pattern.permute.xlu0 0
    %346 = vperm.xlu0 %345, %v304
    %v347 = vpop.permute.xlu0 %346
    %350 = vset.pattern.permute.xlu0 0
    %351 = vperm.xlu0 %350, %v305
    %v352 = vpop.permute.xlu0 %351
    %355 = vset.pattern.permute.xlu0 0
    %356 = vperm.xlu0 %355, %v306
    %v357 = vpop.permute.xlu0 %356
    %360 = vset.pattern.permute.xlu0 0
    %361 = vperm.xlu0 %360, %v307
    %v362 = vpop.permute.xlu0 %361
    %365 = vset.pattern.permute.xlu0 0
    %366 = vperm.xlu0 %365, %v308
    %v367 = vpop.permute.xlu0 %366
    %370 = vset.pattern.permute.xlu0 0
    %371 = vperm.xlu0 %370, %v309
    %v372 = vpop.permute.xlu0 %371
    %375 = vset.pattern.permute.xlu0 0
    %376 = vperm.xlu0 %375, %v310
    %v377 = vpop.permute.xlu0 %376
    %380 = vset.pattern.permute.xlu0 0
    %381 = vperm.xlu0 %380, %v311
    %v382 = vpop.permute.xlu0 %381
    %385 = vset.pattern.permute.xlu0 0
    %386 = vperm.xlu0 %385, %v312
    %v387 = vpop.permute.xlu0 %386
    %390 = vset.pattern.permute.xlu0 0
    %391 = vperm.xlu0 %390, %v313
    %v392 = vpop.permute.xlu0 %391
    %v394 = vlaneseq
    %v395 = vshrl.u32 %v394, 7
    %v396 = vsub.s32 0, %v395
    %v397 = vrot.slane %v48, %v396
    %v398 = vmul.f32 %v317, %v397
    %v399 = vmul.f32 %v322, %v397
    %v400 = vmul.f32 %v327, %v397
    %v401 = vmul.f32 %v332, %v397
    %v402 = vmul.f32 %v337, %v397
    %v403 = vmul.f32 %v342, %v397
    %v404 = vmul.f32 %v347, %v397
    %v405 = vmul.f32 %v352, %v397
    %v406 = vmul.f32 %v357, %v397
    %v407 = vmul.f32 %v362, %v397
    %v408 = vmul.f32 %v367, %v397
    %v409 = vmul.f32 %v372, %v397
    %v410 = vmul.f32 %v377, %v397
    %v411 = vmul.f32 %v382, %v397
    %v412 = vmul.f32 %v387, %v397
    %v413 = vmul.f32 %v392, %v397
    %v414 = vadd.f32 %v282, %v398
    %v415 = vadd.f32 %v283, %v399
    %v416 = vadd.f32 %v284, %v400
    %v417 = vadd.f32 %v285, %v401
    %v418 = vadd.f32 %v286, %v402
    %v419 = vadd.f32 %v287, %v403
    %v420 = vadd.f32 %v288, %v404
    %v421 = vadd.f32 %v289, %v405
    %v422 = vadd.f32 %v290, %v406
    %v423 = vadd.f32 %v291, %v407
    %v424 = vadd.f32 %v292, %v408
    %v425 = vadd.f32 %v293, %v409
    %v426 = vadd.f32 %v294, %v410
    %v427 = vadd.f32 %v295, %v411
    %v428 = vadd.f32 %v296, %v412
    %v429 = vadd.f32 %v297, %v413
    %v430 = vld [vmem:[%s0 + $0x11] sm:$0xff]
    %v431 = vld [vmem:[%s0 + $0x19] sm:$0xff]
    %v432 = vld [vmem:[%s0 + $0x21] sm:$0xff]
    %v433 = vld [vmem:[%s0 + $0x29] sm:$0xff]
    %v434 = vld [vmem:[%s0 + $0x31] sm:$0xff]
    %v435 = vld [vmem:[%s0 + $0x39] sm:$0xff]
    %v436 = vld [vmem:[%s0 + $0x41] sm:$0xff]
    %v437 = vld [vmem:[%s0 + $0x49] sm:$0xff]
    %v438 = vld [vmem:[%s0 + $0x51] sm:$0xff]
    %v439 = vld [vmem:[%s0 + $0x59] sm:$0xff]
    %v440 = vld [vmem:[%s0 + $0x61] sm:$0xff]
    %v441 = vld [vmem:[%s0 + $0x69] sm:$0xff]
    %v442 = vld [vmem:[%s0 + $0x71] sm:$0xff]
    %v443 = vld [vmem:[%s0 + $0x79] sm:$0xff]
    %v444 = vld [vmem:[%s0 + $0x81] sm:$0xff]
    %v445 = vld [vmem:[%s0 + $0x89] sm:$0xff]
    %447 = vset.pattern.permute.xlu0 0
    %448 = vperm.xlu0 %447, %v430
    %v449 = vpop.permute.xlu0 %448
    %452 = vset.pattern.permute.xlu0 0
    %453 = vperm.xlu0 %452, %v431
    %v454 = vpop.permute.xlu0 %453
    %457 = vset.pattern.permute.xlu0 0
    %458 = vperm.xlu0 %457, %v432
    %v459 = vpop.permute.xlu0 %458
    %462 = vset.pattern.permute.xlu0 0
    %463 = vperm.xlu0 %462, %v433
    %v464 = vpop.permute.xlu0 %463
    %467 = vset.pattern.permute.xlu0 0
    %468 = vperm.xlu0 %467, %v434
    %v469 = vpop.permute.xlu0 %468
    %472 = vset.pattern.permute.xlu0 0
    %473 = vperm.xlu0 %472, %v435
    %v474 = vpop.permute.xlu0 %473
    %477 = vset.pattern.permute.xlu0 0
    %478 = vperm.xlu0 %477, %v436
    %v479 = vpop.permute.xlu0 %478
    %482 = vset.pattern.permute.xlu0 0
    %483 = vperm.xlu0 %482, %v437
    %v484 = vpop.permute.xlu0 %483
    %487 = vset.pattern.permute.xlu0 0
    %488 = vperm.xlu0 %487, %v438
    %v489 = vpop.permute.xlu0 %488
    %492 = vset.pattern.permute.xlu0 0
    %493 = vperm.xlu0 %492, %v439
    %v494 = vpop.permute.xlu0 %493
    %497 = vset.pattern.permute.xlu0 0
    %498 = vperm.xlu0 %497, %v440
    %v499 = vpop.permute.xlu0 %498
    %502 = vset.pattern.permute.xlu0 0
    %503 = vperm.xlu0 %502, %v441
    %v504 = vpop.permute.xlu0 %503
    %507 = vset.pattern.permute.xlu0 0
    %508 = vperm.xlu0 %507, %v442
    %v509 = vpop.permute.xlu0 %508
    %512 = vset.pattern.permute.xlu0 0
    %513 = vperm.xlu0 %512, %v443
    %v514 = vpop.permute.xlu0 %513
    %517 = vset.pattern.permute.xlu0 0
    %518 = vperm.xlu0 %517, %v444
    %v519 = vpop.permute.xlu0 %518
    %522 = vset.pattern.permute.xlu0 0
    %523 = vperm.xlu0 %522, %v445
    %v524 = vpop.permute.xlu0 %523
    %v526 = vlaneseq
    %v527 = vshrl.u32 %v526, 7
    %v528 = vsub.s32 0, %v527
    %v529 = vrot.slane %v49, %v528
    %v530 = vmul.f32 %v449, %v529
    %v531 = vmul.f32 %v454, %v529
    %v532 = vmul.f32 %v459, %v529
    %v533 = vmul.f32 %v464, %v529
    %v534 = vmul.f32 %v469, %v529
    %v535 = vmul.f32 %v474, %v529
    %v536 = vmul.f32 %v479, %v529
    %v537 = vmul.f32 %v484, %v529
    %v538 = vmul.f32 %v489, %v529
    %v539 = vmul.f32 %v494, %v529
    %v540 = vmul.f32 %v499, %v529
    %v541 = vmul.f32 %v504, %v529
    %v542 = vmul.f32 %v509, %v529
    %v543 = vmul.f32 %v514, %v529
    %v544 = vmul.f32 %v519, %v529
    %v545 = vmul.f32 %v524, %v529
    %v546 = vadd.f32 %v414, %v530
    %v547 = vadd.f32 %v415, %v531
    %v548 = vadd.f32 %v416, %v532
    %v549 = vadd.f32 %v417, %v533
    %v550 = vadd.f32 %v418, %v534
    %v551 = vadd.f32 %v419, %v535
    %v552 = vadd.f32 %v420, %v536
    %v553 = vadd.f32 %v421, %v537
    %v554 = vadd.f32 %v422, %v538
    %v555 = vadd.f32 %v423, %v539
    %v556 = vadd.f32 %v424, %v540
    %v557 = vadd.f32 %v425, %v541
    %v558 = vadd.f32 %v426, %v542
    %v559 = vadd.f32 %v427, %v543
    %v560 = vadd.f32 %v428, %v544
    %v561 = vadd.f32 %v429, %v545
    %v563 = vlaneseq
    %v564 = vshrl.u32 %v563, 7
    %v565 = vsub.s32 0, %v564
    %v566 = vrot.slane %v45, %v565
    %v568 = vadd.f32 %v546, %v566
    %v569 = vadd.f32 %v547, %v566
    %v570 = vadd.f32 %v548, %v566
    %v571 = vadd.f32 %v549, %v566
    %v572 = vadd.f32 %v550, %v566
    %v573 = vadd.f32 %v551, %v566
    %v574 = vadd.f32 %v552, %v566
    %v575 = vadd.f32 %v553, %v566
    %v576 = vadd.f32 %v554, %v566
    %v577 = vadd.f32 %v555, %v566
    %v578 = vadd.f32 %v556, %v566
    %v579 = vadd.f32 %v557, %v566
    %v580 = vadd.f32 %v558, %v566
    %v581 = vadd.f32 %v559, %v566
    %v582 = vadd.f32 %v560, %v566
    %v583 = vadd.f32 %v561, %v566
    %v584 = vmax.f32 %v568, 0.0
    %v585 = vmax.f32 %v569, 0.0
    %v586 = vmax.f32 %v570, 0.0
    %v587 = vmax.f32 %v571, 0.0
    %v588 = vmax.f32 %v572, 0.0
    %v589 = vmax.f32 %v573, 0.0
    %v590 = vmax.f32 %v574, 0.0
    %v591 = vmax.f32 %v575, 0.0
    %v592 = vmax.f32 %v576, 0.0
    %v593 = vmax.f32 %v577, 0.0
    %v594 = vmax.f32 %v578, 0.0
    %v595 = vmax.f32 %v579, 0.0
    %v596 = vmax.f32 %v580, 0.0
    %v597 = vmax.f32 %v581, 0.0
    %v598 = vmax.f32 %v582, 0.0
    %v599 = vmax.f32 %v583, 0.0
    %600 = vst [vmem:[#allocation2] sm:$0xff] %v584
    %601 = vst [vmem:[#allocation2 + $0x8] sm:$0xff] %v585
    %602 = vst [vmem:[#allocation2 + $0x10] sm:$0xff] %v586
    %603 = vst [vmem:[#allocation2 + $0x18] sm:$0xff] %v587
    %604 = vst [vmem:[#allocation2 + $0x20] sm:$0xff] %v588
    %605 = vst [vmem:[#allocation2 + $0x28] sm:$0xff] %v589
    %606 = vst [vmem:[#allocation2 + $0x30] sm:$0xff] %v590
    %607 = vst [vmem:[#allocation2 + $0x38] sm:$0xff] %v591
    %608 = vst [vmem:[#allocation2 + $0x40] sm:$0xff] %v592
    %609 = vst [vmem:[#allocation2 + $0x48] sm:$0xff] %v593
    %610 = vst [vmem:[#allocation2 + $0x50] sm:$0xff] %v594
    %611 = vst [vmem:[#allocation2 + $0x58] sm:$0xff] %v595
    %612 = vst [vmem:[#allocation2 + $0x60] sm:$0xff] %v596
    %613 = vst [vmem:[#allocation2 + $0x68] sm:$0xff] %v597
    %614 = vst [vmem:[#allocation2 + $0x70] sm:$0xff] %v598
    %615 = vst [vmem:[#allocation2 + $0x78] sm:$0xff] %v599
    %v616 = vld [vmem:[%s0 + $0x80] sm:$0xff]
    %v617 = vld [vmem:[%s0 + $0x88] sm:$0xff]
    %v618 = vld [vmem:[%s0 + $0x90] sm:$0xff]
    %v619 = vld [vmem:[%s0 + $0x98] sm:$0xff]
    %v620 = vld [vmem:[%s0 + $0xa0] sm:$0xff]
    %v621 = vld [vmem:[%s0 + $0xa8] sm:$0xff]
    %v622 = vld [vmem:[%s0 + $0xb0] sm:$0xff]
    %v623 = vld [vmem:[%s0 + $0xb8] sm:$0xff]
    %v624 = vld [vmem:[%s0 + $0xc0] sm:$0xff]
    %v625 = vld [vmem:[%s0 + $0xc8] sm:$0xff]
    %v626 = vld [vmem:[%s0 + $0xd0] sm:$0xff]
    %v627 = vld [vmem:[%s0 + $0xd8] sm:$0xff]
    %v628 = vld [vmem:[%s0 + $0xe0] sm:$0xff]
    %v629 = vld [vmem:[%s0 + $0xe8] sm:$0xff]
    %v630 = vld [vmem:[%s0 + $0xf0] sm:$0xff]
    %v631 = vld [vmem:[%s0 + $0xf8] sm:$0xff]
    %633 = vset.pattern.permute.xlu0 0
    %634 = vperm.xlu0 %633, %v616
    %v635 = vpop.permute.xlu0 %634
    %638 = vset.pattern.permute.xlu0 0
    %639 = vperm.xlu0 %638, %v617
    %v640 = vpop.permute.xlu0 %639
    %643 = vset.pattern.permute.xlu0 0
    %644 = vperm.xlu0 %643, %v618
    %v645 = vpop.permute.xlu0 %644
    %648 = vset.pattern.permute.xlu0 0
    %649 = vperm.xlu0 %648, %v619
    %v650 = vpop.permute.xlu0 %649
    %653 = vset.pattern.permute.xlu0 0
    %654 = vperm.xlu0 %653, %v620
    %v655 = vpop.permute.xlu0 %654
    %658 = vset.pattern.permute.xlu0 0
    %659 = vperm.xlu0 %658, %v621
    %v660 = vpop.permute.xlu0 %659
    %663 = vset.pattern.permute.xlu0 0
    %664 = vperm.xlu0 %663, %v622
    %v665 = vpop.permute.xlu0 %664
    %668 = vset.pattern.permute.xlu0 0
    %669 = vperm.xlu0 %668, %v623
    %v670 = vpop.permute.xlu0 %669
    %673 = vset.pattern.permute.xlu0 0
    %674 = vperm.xlu0 %673, %v624
    %v675 = vpop.permute.xlu0 %674
    %678 = vset.pattern.permute.xlu0 0
    %679 = vperm.xlu0 %678, %v625
    %v680 = vpop.permute.xlu0 %679
    %683 = vset.pattern.permute.xlu0 0
    %684 = vperm.xlu0 %683, %v626
    %v685 = vpop.permute.xlu0 %684
    %688 = vset.pattern.permute.xlu0 0
    %689 = vperm.xlu0 %688, %v627
    %v690 = vpop.permute.xlu0 %689
    %693 = vset.pattern.permute.xlu0 0
    %694 = vperm.xlu0 %693, %v628
    %v695 = vpop.permute.xlu0 %694
    %698 = vset.pattern.permute.xlu0 0
    %699 = vperm.xlu0 %698, %v629
    %v700 = vpop.permute.xlu0 %699
    %703 = vset.pattern.permute.xlu0 0
    %704 = vperm.xlu0 %703, %v630
    %v705 = vpop.permute.xlu0 %704
    %708 = vset.pattern.permute.xlu0 0
    %709 = vperm.xlu0 %708, %v631
    %v710 = vpop.permute.xlu0 %709
    %v712 = vmul.f32 %v635, %v149
    %v713 = vmul.f32 %v640, %v149
    %v714 = vmul.f32 %v645, %v149
    %v715 = vmul.f32 %v650, %v149
    %v716 = vmul.f32 %v655, %v149
    %v717 = vmul.f32 %v660, %v149
    %v718 = vmul.f32 %v665, %v149
    %v719 = vmul.f32 %v670, %v149
    %v720 = vmul.f32 %v675, %v149
    %v721 = vmul.f32 %v680, %v149
    %v722 = vmul.f32 %v685, %v149
    %v723 = vmul.f32 %v690, %v149
    %v724 = vmul.f32 %v695, %v149
    %v725 = vmul.f32 %v700, %v149
    %v726 = vmul.f32 %v705, %v149
    %v727 = vmul.f32 %v710, %v149
    %v728 = vld [vmem:[%s0 + $0x81] sm:$0xff]
    %v729 = vld [vmem:[%s0 + $0x89] sm:$0xff]
    %v730 = vld [vmem:[%s0 + $0x91] sm:$0xff]
    %v731 = vld [vmem:[%s0 + $0x99] sm:$0xff]
    %v732 = vld [vmem:[%s0 + $0xa1] sm:$0xff]
    %v733 = vld [vmem:[%s0 + $0xa9] sm:$0xff]
    %v734 = vld [vmem:[%s0 + $0xb1] sm:$0xff]
    %v735 = vld [vmem:[%s0 + $0xb9] sm:$0xff]
    %v736 = vld [vmem:[%s0 + $0xc1] sm:$0xff]
    %v737 = vld [vmem:[%s0 + $0xc9] sm:$0xff]
    %v738 = vld [vmem:[%s0 + $0xd1] sm:$0xff]
    %v739 = vld [vmem:[%s0 + $0xd9] sm:$0xff]
    %v740 = vld [vmem:[%s0 + $0xe1] sm:$0xff]
    %v741 = vld [vmem:[%s0 + $0xe9] sm:$0xff]
    %v742 = vld [vmem:[%s0 + $0xf1] sm:$0xff]
    %v743 = vld [vmem:[%s0 + $0xf9] sm:$0xff]
    %745 = vset.pattern.permute.xlu0 0
    %746 = vperm.xlu0 %745, %v728
    %v747 = vpop.permute.xlu0 %746
    %750 = vset.pattern.permute.xlu0 0
    %751 = vperm.xlu0 %750, %v729
    %v752 = vpop.permute.xlu0 %751
    %755 = vset.pattern.permute.xlu0 0
    %756 = vperm.xlu0 %755, %v730
    %v757 = vpop.permute.xlu0 %756
    %760 = vset.pattern.permute.xlu0 0
    %761 = vperm.xlu0 %760, %v731
    %v762 = vpop.permute.xlu0 %761
    %765 = vset.pattern.permute.xlu0 0
    %766 = vperm.xlu0 %765, %v732
    %v767 = vpop.permute.xlu0 %766
    %770 = vset.pattern.permute.xlu0 0
    %771 = vperm.xlu0 %770, %v733
    %v772 = vpop.permute.xlu0 %771
    %775 = vset.pattern.permute.xlu0 0
    %776 = vperm.xlu0 %775, %v734
    %v777 = vpop.permute.xlu0 %776
    %780 = vset.pattern.permute.xlu0 0
    %781 = vperm.xlu0 %780, %v735
    %v782 = vpop.permute.xlu0 %781
    %785 = vset.pattern.permute.xlu0 0
    %786 = vperm.xlu0 %785, %v736
    %v787 = vpop.permute.xlu0 %786
    %790 = vset.pattern.permute.xlu0 0
    %791 = vperm.xlu0 %790, %v737
    %v792 = vpop.permute.xlu0 %791
    %795 = vset.pattern.permute.xlu0 0
    %796 = vperm.xlu0 %795, %v738
    %v797 = vpop.permute.xlu0 %796
    %800 = vset.pattern.permute.xlu0 0
    %801 = vperm.xlu0 %800, %v739
    %v802 = vpop.permute.xlu0 %801
    %805 = vset.pattern.permute.xlu0 0
    %806 = vperm.xlu0 %805, %v740
    %v807 = vpop.permute.xlu0 %806
    %810 = vset.pattern.permute.xlu0 0
    %811 = vperm.xlu0 %810, %v741
    %v812 = vpop.permute.xlu0 %811
    %815 = vset.pattern.permute.xlu0 0
    %816 = vperm.xlu0 %815, %v742
    %v817 = vpop.permute.xlu0 %816
    %820 = vset.pattern.permute.xlu0 0
    %821 = vperm.xlu0 %820, %v743
    %v822 = vpop.permute.xlu0 %821
    %v824 = vmul.f32 %v747, %v265
    %v825 = vmul.f32 %v752, %v265
    %v826 = vmul.f32 %v757, %v265
    %v827 = vmul.f32 %v762, %v265
    %v828 = vmul.f32 %v767, %v265
    %v829 = vmul.f32 %v772, %v265
    %v830 = vmul.f32 %v777, %v265
    %v831 = vmul.f32 %v782, %v265
    %v832 = vmul.f32 %v787, %v265
    %v833 = vmul.f32 %v792, %v265
    %v834 = vmul.f32 %v797, %v265
    %v835 = vmul.f32 %v802, %v265
    %v836 = vmul.f32 %v807, %v265
    %v837 = vmul.f32 %v812, %v265
    %v838 = vmul.f32 %v817, %v265
    %v839 = vmul.f32 %v822, %v265
    %v840 = vadd.f32 %v712, %v824
    %v841 = vadd.f32 %v713, %v825
    %v842 = vadd.f32 %v714, %v826
    %v843 = vadd.f32 %v715, %v827
    %v844 = vadd.f32 %v716, %v828
    %v845 = vadd.f32 %v717, %v829
    %v846 = vadd.f32 %v718, %v830
    %v847 = vadd.f32 %v719, %v831
    %v848 = vadd.f32 %v720, %v832
    %v849 = vadd.f32 %v721, %v833
    %v850 = vadd.f32 %v722, %v834
    %v851 = vadd.f32 %v723, %v835
    %v852 = vadd.f32 %v724, %v836
    %v853 = vadd.f32 %v725, %v837
    %v854 = vadd.f32 %v726, %v838
    %v855 = vadd.f32 %v727, %v839
    %v856 = vld [vmem:[%s0 + $0x90] sm:$0xff]
    %v857 = vld [vmem:[%s0 + $0x98] sm:$0xff]
    %v858 = vld [vmem:[%s0 + $0xa0] sm:$0xff]
    %v859 = vld [vmem:[%s0 + $0xa8] sm:$0xff]
    %v860 = vld [vmem:[%s0 + $0xb0] sm:$0xff]
    %v861 = vld [vmem:[%s0 + $0xb8] sm:$0xff]
    %v862 = vld [vmem:[%s0 + $0xc0] sm:$0xff]
    %v863 = vld [vmem:[%s0 + $0xc8] sm:$0xff]
    %v864 = vld [vmem:[%s0 + $0xd0] sm:$0xff]
    %v865 = vld [vmem:[%s0 + $0xd8] sm:$0xff]
    %v866 = vld [vmem:[%s0 + $0xe0] sm:$0xff]
    %v867 = vld [vmem:[%s0 + $0xe8] sm:$0xff]
    %v868 = vld [vmem:[%s0 + $0xf0] sm:$0xff]
    %v869 = vld [vmem:[%s0 + $0xf8] sm:$0xff]
    %v870 = vld [vmem:[%s0 + $0x100] sm:$0xff]
    %v871 = vld [vmem:[%s0 + $0x108] sm:$0xff]
    %873 = vset.pattern.permute.xlu0 0
    %874 = vperm.xlu0 %873, %v856
    %v875 = vpop.permute.xlu0 %874
    %878 = vset.pattern.permute.xlu0 0
    %879 = vperm.xlu0 %878, %v857
    %v880 = vpop.permute.xlu0 %879
    %883 = vset.pattern.permute.xlu0 0
    %884 = vperm.xlu0 %883, %v858
    %v885 = vpop.permute.xlu0 %884
    %888 = vset.pattern.permute.xlu0 0
    %889 = vperm.xlu0 %888, %v859
    %v890 = vpop.permute.xlu0 %889
    %893 = vset.pattern.permute.xlu0 0
    %894 = vperm.xlu0 %893, %v860
    %v895 = vpop.permute.xlu0 %894
    %898 = vset.pattern.permute.xlu0 0
    %899 = vperm.xlu0 %898, %v861
    %v900 = vpop.permute.xlu0 %899
    %903 = vset.pattern.permute.xlu0 0
    %904 = vperm.xlu0 %903, %v862
    %v905 = vpop.permute.xlu0 %904
    %908 = vset.pattern.permute.xlu0 0
    %909 = vperm.xlu0 %908, %v863
    %v910 = vpop.permute.xlu0 %909
    %913 = vset.pattern.permute.xlu0 0
    %914 = vperm.xlu0 %913, %v864
    %v915 = vpop.permute.xlu0 %914
    %918 = vset.pattern.permute.xlu0 0
    %919 = vperm.xlu0 %918, %v865
    %v920 = vpop.permute.xlu0 %919
    %923 = vset.pattern.permute.xlu0 0
    %924 = vperm.xlu0 %923, %v866
    %v925 = vpop.permute.xlu0 %924
    %928 = vset.pattern.permute.xlu0 0
    %929 = vperm.xlu0 %928, %v867
    %v930 = vpop.permute.xlu0 %929
    %933 = vset.pattern.permute.xlu0 0
    %934 = vperm.xlu0 %933, %v868
    %v935 = vpop.permute.xlu0 %934
    %938 = vset.pattern.permute.xlu0 0
    %939 = vperm.xlu0 %938, %v869
    %v940 = vpop.permute.xlu0 %939
    %943 = vset.pattern.permute.xlu0 0
    %944 = vperm.xlu0 %943, %v870
    %v945 = vpop.permute.xlu0 %944
    %948 = vset.pattern.permute.xlu0 0
    %949 = vperm.xlu0 %948, %v871
    %v950 = vpop.permute.xlu0 %949
    %v952 = vmul.f32 %v875, %v397
    %v953 = vmul.f32 %v880, %v397
    %v954 = vmul.f32 %v885, %v397
    %v955 = vmul.f32 %v890, %v397
    %v956 = vmul.f32 %v895, %v397
    %v957 = vmul.f32 %v900, %v397
    %v958 = vmul.f32 %v905, %v397
    %v959 = vmul.f32 %v910, %v397
    %v960 = vmul.f32 %v915, %v397
    %v961 = vmul.f32 %v920, %v397
    %v962 = vmul.f32 %v925, %v397
    %v963 = vmul.f32 %v930, %v397
    %v964 = vmul.f32 %v935, %v397
    %v965 = vmul.f32 %v940, %v397
    %v966 = vmul.f32 %v945, %v397
    %v967 = vmul.f32 %v950, %v397
    %v968 = vadd.f32 %v840, %v952
    %v969 = vadd.f32 %v841, %v953
    %v970 = vadd.f32 %v842, %v954
    %v971 = vadd.f32 %v843, %v955
    %v972 = vadd.f32 %v844, %v956
    %v973 = vadd.f32 %v845, %v957
    %v974 = vadd.f32 %v846, %v958
    %v975 = vadd.f32 %v847, %v959
    %v976 = vadd.f32 %v848, %v960
    %v977 = vadd.f32 %v849, %v961
    %v978 = vadd.f32 %v850, %v962
    %v979 = vadd.f32 %v851, %v963
    %v980 = vadd.f32 %v852, %v964
    %v981 = vadd.f32 %v853, %v965
    %v982 = vadd.f32 %v854, %v966
    %v983 = vadd.f32 %v855, %v967
    %v984 = vld [vmem:[%s0 + $0x91] sm:$0xff]
    %v985 = vld [vmem:[%s0 + $0x99] sm:$0xff]
    %v986 = vld [vmem:[%s0 + $0xa1] sm:$0xff]
    %v987 = vld [vmem:[%s0 + $0xa9] sm:$0xff]
    %v988 = vld [vmem:[%s0 + $0xb1] sm:$0xff]
    %v989 = vld [vmem:[%s0 + $0xb9] sm:$0xff]
    %v990 = vld [vmem:[%s0 + $0xc1] sm:$0xff]
    %v991 = vld [vmem:[%s0 + $0xc9] sm:$0xff]
    %v992 = vld [vmem:[%s0 + $0xd1] sm:$0xff]
    %v993 = vld [vmem:[%s0 + $0xd9] sm:$0xff]
    %v994 = vld [vmem:[%s0 + $0xe1] sm:$0xff]
    %v995 = vld [vmem:[%s0 + $0xe9] sm:$0xff]
    %v996 = vld [vmem:[%s0 + $0xf1] sm:$0xff]
    %v997 = vld [vmem:[%s0 + $0xf9] sm:$0xff]
    %v998 = vld [vmem:[%s0 + $0x101] sm:$0xff]
    %v999 = vld [vmem:[%s0 + $0x109] sm:$0xff]
    %1001 = vset.pattern.permute.xlu0 0
    %1002 = vperm.xlu0 %1001, %v984
    %v1003 = vpop.permute.xlu0 %1002
    %1006 = vset.pattern.permute.xlu0 0
    %1007 = vperm.xlu0 %1006, %v985
    %v1008 = vpop.permute.xlu0 %1007
    %1011 = vset.pattern.permute.xlu0 0
    %1012 = vperm.xlu0 %1011, %v986
    %v1013 = vpop.permute.xlu0 %1012
    %1016 = vset.pattern.permute.xlu0 0
    %1017 = vperm.xlu0 %1016, %v987
    %v1018 = vpop.permute.xlu0 %1017
    %1021 = vset.pattern.permute.xlu0 0
    %1022 = vperm.xlu0 %1021, %v988
    %v1023 = vpop.permute.xlu0 %1022
    %1026 = vset.pattern.permute.xlu0 0
    %1027 = vperm.xlu0 %1026, %v989
    %v1028 = vpop.permute.xlu0 %1027
    %1031 = vset.pattern.permute.xlu0 0
    %1032 = vperm.xlu0 %1031, %v990
    %v1033 = vpop.permute.xlu0 %1032
    %1036 = vset.pattern.permute.xlu0 0
    %1037 = vperm.xlu0 %1036, %v991
    %v1038 = vpop.permute.xlu0 %1037
    %1041 = vset.pattern.permute.xlu0 0
    %1042 = vperm.xlu0 %1041, %v992
    %v1043 = vpop.permute.xlu0 %1042
    %1046 = vset.pattern.permute.xlu0 0
    %1047 = vperm.xlu0 %1046, %v993
    %v1048 = vpop.permute.xlu0 %1047
    %1051 = vset.pattern.permute.xlu0 0
    %1052 = vperm.xlu0 %1051, %v994
    %v1053 = vpop.permute.xlu0 %1052
    %1056 = vset.pattern.permute.xlu0 0
    %1057 = vperm.xlu0 %1056, %v995
    %v1058 = vpop.permute.xlu0 %1057
    %1061 = vset.pattern.permute.xlu0 0
    %1062 = vperm.xlu0 %1061, %v996
    %v1063 = vpop.permute.xlu0 %1062
    %1066 = vset.pattern.permute.xlu0 0
    %1067 = vperm.xlu0 %1066, %v997
    %v1068 = vpop.permute.xlu0 %1067
    %1071 = vset.pattern.permute.xlu0 0
    %1072 = vperm.xlu0 %1071, %v998
    %v1073 = vpop.permute.xlu0 %1072
    %1076 = vset.pattern.permute.xlu0 0
    %1077 = vperm.xlu0 %1076, %v999
    %v1078 = vpop.permute.xlu0 %1077
    %v1080 = vmul.f32 %v1003, %v529
    %v1081 = vmul.f32 %v1008, %v529
    %v1082 = vmul.f32 %v1013, %v529
    %v1083 = vmul.f32 %v1018, %v529
    %v1084 = vmul.f32 %v1023, %v529
    %v1085 = vmul.f32 %v1028, %v529
    %v1086 = vmul.f32 %v1033, %v529
    %v1087 = vmul.f32 %v1038, %v529
    %v1088 = vmul.f32 %v1043, %v529
    %v1089 = vmul.f32 %v1048, %v529
    %v1090 = vmul.f32 %v1053, %v529
    %v1091 = vmul.f32 %v1058, %v529
    %v1092 = vmul.f32 %v1063, %v529
    %v1093 = vmul.f32 %v1068, %v529
    %v1094 = vmul.f32 %v1073, %v529
    %v1095 = vmul.f32 %v1078, %v529
    %v1096 = vadd.f32 %v968, %v1080
    %v1097 = vadd.f32 %v969, %v1081
    %v1098 = vadd.f32 %v970, %v1082
    %v1099 = vadd.f32 %v971, %v1083
    %v1100 = vadd.f32 %v972, %v1084
    %v1101 = vadd.f32 %v973, %v1085
    %v1102 = vadd.f32 %v974, %v1086
    %v1103 = vadd.f32 %v975, %v1087
    %v1104 = vadd.f32 %v976, %v1088
    %v1105 = vadd.f32 %v977, %v1089
    %v1106 = vadd.f32 %v978, %v1090
    %v1107 = vadd.f32 %v979, %v1091
    %v1108 = vadd.f32 %v980, %v1092
    %v1109 = vadd.f32 %v981, %v1093
    %v1110 = vadd.f32 %v982, %v1094
    %v1111 = vadd.f32 %v983, %v1095
    %v1112 = vadd.f32 %v1096, %v566
    %v1113 = vadd.f32 %v1097, %v566
    %v1114 = vadd.f32 %v1098, %v566
    %v1115 = vadd.f32 %v1099, %v566
    %v1116 = vadd.f32 %v1100, %v566
    %v1117 = vadd.f32 %v1101, %v566
    %v1118 = vadd.f32 %v1102, %v566
    %v1119 = vadd.f32 %v1103, %v566
    %v1120 = vadd.f32 %v1104, %v566
    %v1121 = vadd.f32 %v1105, %v566
    %v1122 = vadd.f32 %v1106, %v566
    %v1123 = vadd.f32 %v1107, %v566
    %v1124 = vadd.f32 %v1108, %v566
    %v1125 = vadd.f32 %v1109, %v566
    %v1126 = vadd.f32 %v1110, %v566
    %v1127 = vadd.f32 %v1111, %v566
    %v1128 = vmax.f32 %v1112, 0.0
    %v1129 = vmax.f32 %v1113, 0.0
    %v1130 = vmax.f32 %v1114, 0.0
    %v1131 = vmax.f32 %v1115, 0.0
    %v1132 = vmax.f32 %v1116, 0.0
    %v1133 = vmax.f32 %v1117, 0.0
    %v1134 = vmax.f32 %v1118, 0.0
    %v1135 = vmax.f32 %v1119, 0.0
    %v1136 = vmax.f32 %v1120, 0.0
    %v1137 = vmax.f32 %v1121, 0.0
    %v1138 = vmax.f32 %v1122, 0.0
    %v1139 = vmax.f32 %v1123, 0.0
    %v1140 = vmax.f32 %v1124, 0.0
    %v1141 = vmax.f32 %v1125, 0.0
    %v1142 = vmax.f32 %v1126, 0.0
    %v1143 = vmax.f32 %v1127, 0.0
    %1144 = vst [vmem:[#allocation2 + $0x80] sm:$0xff] %v1128
    %1145 = vst [vmem:[#allocation2 + $0x88] sm:$0xff] %v1129
    %1146 = vst [vmem:[#allocation2 + $0x90] sm:$0xff] %v1130
    %1147 = vst [vmem:[#allocation2 + $0x98] sm:$0xff] %v1131
    %1148 = vst [vmem:[#allocation2 + $0xa0] sm:$0xff] %v1132
    %1149 = vst [vmem:[#allocation2 + $0xa8] sm:$0xff] %v1133
    %1150 = vst [vmem:[#allocation2 + $0xb0] sm:$0xff] %v1134
    %1151 = vst [vmem:[#allocation2 + $0xb8] sm:$0xff] %v1135
    %1152 = vst [vmem:[#allocation2 + $0xc0] sm:$0xff] %v1136
    %1153 = vst [vmem:[#allocation2 + $0xc8] sm:$0xff] %v1137
    %1154 = vst [vmem:[#allocation2 + $0xd0] sm:$0xff] %v1138
    %1155 = vst [vmem:[#allocation2 + $0xd8] sm:$0xff] %v1139
    %1156 = vst [vmem:[#allocation2 + $0xe0] sm:$0xff] %v1140
    %1157 = vst [vmem:[#allocation2 + $0xe8] sm:$0xff] %v1141
    %1158 = vst [vmem:[#allocation2 + $0xf0] sm:$0xff] %v1142
    %1159 = vst [vmem:[#allocation2 + $0xf8] sm:$0xff] %v1143
    %v1160 = vld [vmem:[%s0 + $0x100] sm:$0xff]
    %v1161 = vld [vmem:[%s0 + $0x108] sm:$0xff]
    %v1162 = vld [vmem:[%s0 + $0x110] sm:$0xff]
    %v1163 = vld [vmem:[%s0 + $0x118] sm:$0xff]
    %v1164 = vld [vmem:[%s0 + $0x120] sm:$0xff]
    %v1165 = vld [vmem:[%s0 + $0x128] sm:$0xff]
    %v1166 = vld [vmem:[%s0 + $0x130] sm:$0xff]
    %v1167 = vld [vmem:[%s0 + $0x138] sm:$0xff]
    %v1168 = vld [vmem:[%s0 + $0x140] sm:$0xff]
    %v1169 = vld [vmem:[%s0 + $0x148] sm:$0xff]
    %v1170 = vld [vmem:[%s0 + $0x150] sm:$0xff]
    %v1171 = vld [vmem:[%s0 + $0x158] sm:$0xff]
    %v1172 = vld [vmem:[%s0 + $0x160] sm:$0xff]
    %v1173 = vld [vmem:[%s0 + $0x168] sm:$0xff]
    %v1174 = vld [vmem:[%s0 + $0x170] sm:$0xff]
    %v1175 = vld [vmem:[%s0 + $0x178] sm:$0xff]
    %1177 = vset.pattern.permute.xlu0 0
    %1178 = vperm.xlu0 %1177, %v1160
    %v1179 = vpop.permute.xlu0 %1178
    %1182 = vset.pattern.permute.xlu0 0
    %1183 = vperm.xlu0 %1182, %v1161
    %v1184 = vpop.permute.xlu0 %1183
    %1187 = vset.pattern.permute.xlu0 0
    %1188 = vperm.xlu0 %1187, %v1162
    %v1189 = vpop.permute.xlu0 %1188
    %1192 = vset.pattern.permute.xlu0 0
    %1193 = vperm.xlu0 %1192, %v1163
    %v1194 = vpop.permute.xlu0 %1193
    %1197 = vset.pattern.permute.xlu0 0
    %1198 = vperm.xlu0 %1197, %v1164
    %v1199 = vpop.permute.xlu0 %1198
    %1202 = vset.pattern.permute.xlu0 0
    %1203 = vperm.xlu0 %1202, %v1165
    %v1204 = vpop.permute.xlu0 %1203
    %1207 = vset.pattern.permute.xlu0 0
    %1208 = vperm.xlu0 %1207, %v1166
    %v1209 = vpop.permute.xlu0 %1208
    %1212 = vset.pattern.permute.xlu0 0
    %1213 = vperm.xlu0 %1212, %v1167
    %v1214 = vpop.permute.xlu0 %1213
    %1217 = vset.pattern.permute.xlu0 0
    %1218 = vperm.xlu0 %1217, %v1168
    %v1219 = vpop.permute.xlu0 %1218
    %1222 = vset.pattern.permute.xlu0 0
    %1223 = vperm.xlu0 %1222, %v1169
    %v1224 = vpop.permute.xlu0 %1223
    %1227 = vset.pattern.permute.xlu0 0
    %1228 = vperm.xlu0 %1227, %v1170
    %v1229 = vpop.permute.xlu0 %1228
    %1232 = vset.pattern.permute.xlu0 0
    %1233 = vperm.xlu0 %1232, %v1171
    %v1234 = vpop.permute.xlu0 %1233
    %1237 = vset.pattern.permute.xlu0 0
    %1238 = vperm.xlu0 %1237, %v1172
    %v1239 = vpop.permute.xlu0 %1238
    %1242 = vset.pattern.permute.xlu0 0
    %1243 = vperm.xlu0 %1242, %v1173
    %v1244 = vpop.permute.xlu0 %1243
    %1247 = vset.pattern.permute.xlu0 0
    %1248 = vperm.xlu0 %1247, %v1174
    %v1249 = vpop.permute.xlu0 %1248
    %1252 = vset.pattern.permute.xlu0 0
    %1253 = vperm.xlu0 %1252, %v1175
    %v1254 = vpop.permute.xlu0 %1253
    %v1256 = vmul.f32 %v1179, %v149
    %v1257 = vmul.f32 %v1184, %v149
    %v1258 = vmul.f32 %v1189, %v149
    %v1259 = vmul.f32 %v1194, %v149
    %v1260 = vmul.f32 %v1199, %v149
    %v1261 = vmul.f32 %v1204, %v149
    %v1262 = vmul.f32 %v1209, %v149
    %v1263 = vmul.f32 %v1214, %v149
    %v1264 = vmul.f32 %v1219, %v149
    %v1265 = vmul.f32 %v1224, %v149
    %v1266 = vmul.f32 %v1229, %v149
    %v1267 = vmul.f32 %v1234, %v149
    %v1268 = vmul.f32 %v1239, %v149
    %v1269 = vmul.f32 %v1244, %v149
    %v1270 = vmul.f32 %v1249, %v149
    %v1271 = vmul.f32 %v1254, %v149
    %v1272 = vld [vmem:[%s0 + $0x101] sm:$0xff]
    %v1273 = vld [vmem:[%s0 + $0x109] sm:$0xff]
    %v1274 = vld [vmem:[%s0 + $0x111] sm:$0xff]
    %v1275 = vld [vmem:[%s0 + $0x119] sm:$0xff]
    %v1276 = vld [vmem:[%s0 + $0x121] sm:$0xff]
    %v1277 = vld [vmem:[%s0 + $0x129] sm:$0xff]
    %v1278 = vld [vmem:[%s0 + $0x131] sm:$0xff]
    %v1279 = vld [vmem:[%s0 + $0x139] sm:$0xff]
    %v1280 = vld [vmem:[%s0 + $0x141] sm:$0xff]
    %v1281 = vld [vmem:[%s0 + $0x149] sm:$0xff]
    %v1282 = vld [vmem:[%s0 + $0x151] sm:$0xff]
    %v1283 = vld [vmem:[%s0 + $0x159] sm:$0xff]
    %v1284 = vld [vmem:[%s0 + $0x161] sm:$0xff]
    %v1285 = vld [vmem:[%s0 + $0x169] sm:$0xff]
    %v1286 = vld [vmem:[%s0 + $0x171] sm:$0xff]
    %v1287 = vld [vmem:[%s0 + $0x179] sm:$0xff]
    %1289 = vset.pattern.permute.xlu0 0
    %1290 = vperm.xlu0 %1289, %v1272
    %v1291 = vpop.permute.xlu0 %1290
    %1294 = vset.pattern.permute.xlu0 0
    %1295 = vperm.xlu0 %1294, %v1273
    %v1296 = vpop.permute.xlu0 %1295
    %1299 = vset.pattern.permute.xlu0 0
    %1300 = vperm.xlu0 %1299, %v1274
    %v1301 = vpop.permute.xlu0 %1300
    %1304 = vset.pattern.permute.xlu0 0
    %1305 = vperm.xlu0 %1304, %v1275
    %v1306 = vpop.permute.xlu0 %1305
    %1309 = vset.pattern.permute.xlu0 0
    %1310 = vperm.xlu0 %1309, %v1276
    %v1311 = vpop.permute.xlu0 %1310
    %1314 = vset.pattern.permute.xlu0 0
    %1315 = vperm.xlu0 %1314, %v1277
    %v1316 = vpop.permute.xlu0 %1315
    %1319 = vset.pattern.permute.xlu0 0
    %1320 = vperm.xlu0 %1319, %v1278
    %v1321 = vpop.permute.xlu0 %1320
    %1324 = vset.pattern.permute.xlu0 0
    %1325 = vperm.xlu0 %1324, %v1279
    %v1326 = vpop.permute.xlu0 %1325
    %1329 = vset.pattern.permute.xlu0 0
    %1330 = vperm.xlu0 %1329, %v1280
    %v1331 = vpop.permute.xlu0 %1330
    %1334 = vset.pattern.permute.xlu0 0
    %1335 = vperm.xlu0 %1334, %v1281
    %v1336 = vpop.permute.xlu0 %1335
    %1339 = vset.pattern.permute.xlu0 0
    %1340 = vperm.xlu0 %1339, %v1282
    %v1341 = vpop.permute.xlu0 %1340
    %1344 = vset.pattern.permute.xlu0 0
    %1345 = vperm.xlu0 %1344, %v1283
    %v1346 = vpop.permute.xlu0 %1345
    %1349 = vset.pattern.permute.xlu0 0
    %1350 = vperm.xlu0 %1349, %v1284
    %v1351 = vpop.permute.xlu0 %1350
    %1354 = vset.pattern.permute.xlu0 0
    %1355 = vperm.xlu0 %1354, %v1285
    %v1356 = vpop.permute.xlu0 %1355
    %1359 = vset.pattern.permute.xlu0 0
    %1360 = vperm.xlu0 %1359, %v1286
    %v1361 = vpop.permute.xlu0 %1360
    %1364 = vset.pattern.permute.xlu0 0
    %1365 = vperm.xlu0 %1364, %v1287
    %v1366 = vpop.permute.xlu0 %1365
    %v1368 = vmul.f32 %v1291, %v265
    %v1369 = vmul.f32 %v1296, %v265
    %v1370 = vmul.f32 %v1301, %v265
    %v1371 = vmul.f32 %v1306, %v265
    %v1372 = vmul.f32 %v1311, %v265
    %v1373 = vmul.f32 %v1316, %v265
    %v1374 = vmul.f32 %v1321, %v265
    %v1375 = vmul.f32 %v1326, %v265
    %v1376 = vmul.f32 %v1331, %v265
    %v1377 = vmul.f32 %v1336, %v265
    %v1378 = vmul.f32 %v1341, %v265
    %v1379 = vmul.f32 %v1346, %v265
    %v1380 = vmul.f32 %v1351, %v265
    %v1381 = vmul.f32 %v1356, %v265
    %v1382 = vmul.f32 %v1361, %v265
    %v1383 = vmul.f32 %v1366, %v265
    %v1384 = vadd.f32 %v1256, %v1368
    %v1385 = vadd.f32 %v1257, %v1369
    %v1386 = vadd.f32 %v1258, %v1370
    %v1387 = vadd.f32 %v1259, %v1371
    %v1388 = vadd.f32 %v1260, %v1372
    %v1389 = vadd.f32 %v1261, %v1373
    %v1390 = vadd.f32 %v1262, %v1374
    %v1391 = vadd.f32 %v1263, %v1375
    %v1392 = vadd.f32 %v1264, %v1376
    %v1393 = vadd.f32 %v1265, %v1377
    %v1394 = vadd.f32 %v1266, %v1378
    %v1395 = vadd.f32 %v1267, %v1379
    %v1396 = vadd.f32 %v1268, %v1380
    %v1397 = vadd.f32 %v1269, %v1381
    %v1398 = vadd.f32 %v1270, %v1382
    %v1399 = vadd.f32 %v1271, %v1383
    %v1400 = vld [vmem:[%s0 + $0x110] sm:$0xff]
    %v1401 = vld [vmem:[%s0 + $0x118] sm:$0xff]
    %v1402 = vld [vmem:[%s0 + $0x120] sm:$0xff]
    %v1403 = vld [vmem:[%s0 + $0x128] sm:$0xff]
    %v1404 = vld [vmem:[%s0 + $0x130] sm:$0xff]
    %v1405 = vld [vmem:[%s0 + $0x138] sm:$0xff]
    %v1406 = vld [vmem:[%s0 + $0x140] sm:$0xff]
    %v1407 = vld [vmem:[%s0 + $0x148] sm:$0xff]
    %v1408 = vld [vmem:[%s0 + $0x150] sm:$0xff]
    %v1409 = vld [vmem:[%s0 + $0x158] sm:$0xff]
    %v1410 = vld [vmem:[%s0 + $0x160] sm:$0xff]
    %v1411 = vld [vmem:[%s0 + $0x168] sm:$0xff]
    %v1412 = vld [vmem:[%s0 + $0x170] sm:$0xff]
    %v1413 = vld [vmem:[%s0 + $0x178] sm:$0xff]
    %v1414 = vld [vmem:[%s0 + $0x180] sm:$0xff]
    %v1415 = vld [vmem:[%s0 + $0x188] sm:$0xff]
    %1417 = vset.pattern.permute.xlu0 0
    %1418 = vperm.xlu0 %1417, %v1400
    %v1419 = vpop.permute.xlu0 %1418
    %1422 = vset.pattern.permute.xlu0 0
    %1423 = vperm.xlu0 %1422, %v1401
    %v1424 = vpop.permute.xlu0 %1423
    %1427 = vset.pattern.permute.xlu0 0
    %1428 = vperm.xlu0 %1427, %v1402
    %v1429 = vpop.permute.xlu0 %1428
    %1432 = vset.pattern.permute.xlu0 0
    %1433 = vperm.xlu0 %1432, %v1403
    %v1434 = vpop.permute.xlu0 %1433
    %1437 = vset.pattern.permute.xlu0 0
    %1438 = vperm.xlu0 %1437, %v1404
    %v1439 = vpop.permute.xlu0 %1438
    %1442 = vset.pattern.permute.xlu0 0
    %1443 = vperm.xlu0 %1442, %v1405
    %v1444 = vpop.permute.xlu0 %1443
    %1447 = vset.pattern.permute.xlu0 0
    %1448 = vperm.xlu0 %1447, %v1406
    %v1449 = vpop.permute.xlu0 %1448
    %1452 = vset.pattern.permute.xlu0 0
    %1453 = vperm.xlu0 %1452, %v1407
    %v1454 = vpop.permute.xlu0 %1453
    %1457 = vset.pattern.permute.xlu0 0
    %1458 = vperm.xlu0 %1457, %v1408
    %v1459 = vpop.permute.xlu0 %1458
    %1462 = vset.pattern.permute.xlu0 0
    %1463 = vperm.xlu0 %1462, %v1409
    %v1464 = vpop.permute.xlu0 %1463
    %1467 = vset.pattern.permute.xlu0 0
    %1468 = vperm.xlu0 %1467, %v1410
    %v1469 = vpop.permute.xlu0 %1468
    %1472 = vset.pattern.permute.xlu0 0
    %1473 = vperm.xlu0 %1472, %v1411
    %v1474 = vpop.permute.xlu0 %1473
    %1477 = vset.pattern.permute.xlu0 0
    %1478 = vperm.xlu0 %1477, %v1412
    %v1479 = vpop.permute.xlu0 %1478
    %1482 = vset.pattern.permute.xlu0 0
    %1483 = vperm.xlu0 %1482, %v1413
    %v1484 = vpop.permute.xlu0 %1483
    %1487 = vset.pattern.permute.xlu0 0
    %1488 = vperm.xlu0 %1487, %v1414
    %v1489 = vpop.permute.xlu0 %1488
    %1492 = vset.pattern.permute.xlu0 0
    %1493 = vperm.xlu0 %1492, %v1415
    %v1494 = vpop.permute.xlu0 %1493
    %v1496 = vmul.f32 %v1419, %v397
    %v1497 = vmul.f32 %v1424, %v397
    %v1498 = vmul.f32 %v1429, %v397
    %v1499 = vmul.f32 %v1434, %v397
    %v1500 = vmul.f32 %v1439, %v397
    %v1501 = vmul.f32 %v1444, %v397
    %v1502 = vmul.f32 %v1449, %v397
    %v1503 = vmul.f32 %v1454, %v397
    %v1504 = vmul.f32 %v1459, %v397
    %v1505 = vmul.f32 %v1464, %v397
    %v1506 = vmul.f32 %v1469, %v397
    %v1507 = vmul.f32 %v1474, %v397
    %v1508 = vmul.f32 %v1479, %v397
    %v1509 = vmul.f32 %v1484, %v397
    %v1510 = vmul.f32 %v1489, %v397
    %v1511 = vmul.f32 %v1494, %v397
    %v1512 = vadd.f32 %v1384, %v1496
    %v1513 = vadd.f32 %v1385, %v1497
    %v1514 = vadd.f32 %v1386, %v1498
    %v1515 = vadd.f32 %v1387, %v1499
    %v1516 = vadd.f32 %v1388, %v1500
    %v1517 = vadd.f32 %v1389, %v1501
    %v1518 = vadd.f32 %v1390, %v1502
    %v1519 = vadd.f32 %v1391, %v1503
    %v1520 = vadd.f32 %v1392, %v1504
    %v1521 = vadd.f32 %v1393, %v1505
    %v1522 = vadd.f32 %v1394, %v1506
    %v1523 = vadd.f32 %v1395, %v1507
    %v1524 = vadd.f32 %v1396, %v1508
    %v1525 = vadd.f32 %v1397, %v1509
    %v1526 = vadd.f32 %v1398, %v1510
    %v1527 = vadd.f32 %v1399, %v1511
    %v1528 = vld [vmem:[%s0 + $0x111] sm:$0xff]
    %v1529 = vld [vmem:[%s0 + $0x119] sm:$0xff]
    %v1530 = vld [vmem:[%s0 + $0x121] sm:$0xff]
    %v1531 = vld [vmem:[%s0 + $0x129] sm:$0xff]
    %v1532 = vld [vmem:[%s0 + $0x131] sm:$0xff]
    %v1533 = vld [vmem:[%s0 + $0x139] sm:$0xff]
    %v1534 = vld [vmem:[%s0 + $0x141] sm:$0xff]
    %v1535 = vld [vmem:[%s0 + $0x149] sm:$0xff]
    %v1536 = vld [vmem:[%s0 + $0x151] sm:$0xff]
    %v1537 = vld [vmem:[%s0 + $0x159] sm:$0xff]
    %v1538 = vld [vmem:[%s0 + $0x161] sm:$0xff]
    %v1539 = vld [vmem:[%s0 + $0x169] sm:$0xff]
    %v1540 = vld [vmem:[%s0 + $0x171] sm:$0xff]
    %v1541 = vld [vmem:[%s0 + $0x179] sm:$0xff]
    %v1542 = vld [vmem:[%s0 + $0x181] sm:$0xff]
    %v1543 = vld [vmem:[%s0 + $0x189] sm:$0xff]
    %1545 = vset.pattern.permute.xlu0 0
    %1546 = vperm.xlu0 %1545, %v1528
    %v1547 = vpop.permute.xlu0 %1546
    %1550 = vset.pattern.permute.xlu0 0
    %1551 = vperm.xlu0 %1550, %v1529
    %v1552 = vpop.permute.xlu0 %1551
    %1555 = vset.pattern.permute.xlu0 0
    %1556 = vperm.xlu0 %1555, %v1530
    %v1557 = vpop.permute.xlu0 %1556
    %1560 = vset.pattern.permute.xlu0 0
    %1561 = vperm.xlu0 %1560, %v1531
    %v1562 = vpop.permute.xlu0 %1561
    %1565 = vset.pattern.permute.xlu0 0
    %1566 = vperm.xlu0 %1565, %v1532
    %v1567 = vpop.permute.xlu0 %1566
    %1570 = vset.pattern.permute.xlu0 0
    %1571 = vperm.xlu0 %1570, %v1533
    %v1572 = vpop.permute.xlu0 %1571
    %1575 = vset.pattern.permute.xlu0 0
    %1576 = vperm.xlu0 %1575, %v1534
    %v1577 = vpop.permute.xlu0 %1576
    %1580 = vset.pattern.permute.xlu0 0
    %1581 = vperm.xlu0 %1580, %v1535
    %v1582 = vpop.permute.xlu0 %1581
    %1585 = vset.pattern.permute.xlu0 0
    %1586 = vperm.xlu0 %1585, %v1536
    %v1587 = vpop.permute.xlu0 %1586
    %1590 = vset.pattern.permute.xlu0 0
    %1591 = vperm.xlu0 %1590, %v1537
    %v1592 = vpop.permute.xlu0 %1591
    %1595 = vset.pattern.permute.xlu0 0
    %1596 = vperm.xlu0 %1595, %v1538
    %v1597 = vpop.permute.xlu0 %1596
    %1600 = vset.pattern.permute.xlu0 0
    %1601 = vperm.xlu0 %1600, %v1539
    %v1602 = vpop.permute.xlu0 %1601
    %1605 = vset.pattern.permute.xlu0 0
    %1606 = vperm.xlu0 %1605, %v1540
    %v1607 = vpop.permute.xlu0 %1606
    %1610 = vset.pattern.permute.xlu0 0
    %1611 = vperm.xlu0 %1610, %v1541
    %v1612 = vpop.permute.xlu0 %1611
    %1615 = vset.pattern.permute.xlu0 0
    %1616 = vperm.xlu0 %1615, %v1542
    %v1617 = vpop.permute.xlu0 %1616
    %1620 = vset.pattern.permute.xlu0 0
    %1621 = vperm.xlu0 %1620, %v1543
    %v1622 = vpop.permute.xlu0 %1621
    %v1624 = vmul.f32 %v1547, %v529
    %v1625 = vmul.f32 %v1552, %v529
    %v1626 = vmul.f32 %v1557, %v529
    %v1627 = vmul.f32 %v1562, %v529
    %v1628 = vmul.f32 %v1567, %v529
    %v1629 = vmul.f32 %v1572, %v529
    %v1630 = vmul.f32 %v1577, %v529
    %v1631 = vmul.f32 %v1582, %v529
    %v1632 = vmul.f32 %v1587, %v529
    %v1633 = vmul.f32 %v1592, %v529
    %v1634 = vmul.f32 %v1597, %v529
    %v1635 = vmul.f32 %v1602, %v529
    %v1636 = vmul.f32 %v1607, %v529
    %v1637 = vmul.f32 %v1612, %v529
    %v1638 = vmul.f32 %v1617, %v529
    %v1639 = vmul.f32 %v1622, %v529
    %v1640 = vadd.f32 %v1512, %v1624
    %v1641 = vadd.f32 %v1513, %v1625
    %v1642 = vadd.f32 %v1514, %v1626
    %v1643 = vadd.f32 %v1515, %v1627
    %v1644 = vadd.f32 %v1516, %v1628
    %v1645 = vadd.f32 %v1517, %v1629
    %v1646 = vadd.f32 %v1518, %v1630
    %v1647 = vadd.f32 %v1519, %v1631
    %v1648 = vadd.f32 %v1520, %v1632
    %v1649 = vadd.f32 %v1521, %v1633
    %v1650 = vadd.f32 %v1522, %v1634
    %v1651 = vadd.f32 %v1523, %v1635
    %v1652 = vadd.f32 %v1524, %v1636
    %v1653 = vadd.f32 %v1525, %v1637
    %v1654 = vadd.f32 %v1526, %v1638
    %v1655 = vadd.f32 %v1527, %v1639
    %v1656 = vadd.f32 %v1640, %v566
    %v1657 = vadd.f32 %v1641, %v566
    %v1658 = vadd.f32 %v1642, %v566
    %v1659 = vadd.f32 %v1643, %v566
    %v1660 = vadd.f32 %v1644, %v566
    %v1661 = vadd.f32 %v1645, %v566
    %v1662 = vadd.f32 %v1646, %v566
    %v1663 = vadd.f32 %v1647, %v566
    %v1664 = vadd.f32 %v1648, %v566
    %v1665 = vadd.f32 %v1649, %v566
    %v1666 = vadd.f32 %v1650, %v566
    %v1667 = vadd.f32 %v1651, %v566
    %v1668 = vadd.f32 %v1652, %v566
    %v1669 = vadd.f32 %v1653, %v566
    %v1670 = vadd.f32 %v1654, %v566
    %v1671 = vadd.f32 %v1655, %v566
    %v1672 = vmax.f32 %v1656, 0.0
    %v1673 = vmax.f32 %v1657, 0.0
    %v1674 = vmax.f32 %v1658, 0.0
    %v1675 = vmax.f32 %v1659, 0.0
    %v1676 = vmax.f32 %v1660, 0.0
    %v1677 = vmax.f32 %v1661, 0.0
    %v1678 = vmax.f32 %v1662, 0.0
    %v1679 = vmax.f32 %v1663, 0.0
    %v1680 = vmax.f32 %v1664, 0.0
    %v1681 = vmax.f32 %v1665, 0.0
    %v1682 = vmax.f32 %v1666, 0.0
    %v1683 = vmax.f32 %v1667, 0.0
    %v1684 = vmax.f32 %v1668, 0.0
    %v1685 = vmax.f32 %v1669, 0.0
    %v1686 = vmax.f32 %v1670, 0.0
    %v1687 = vmax.f32 %v1671, 0.0
    %1688 = vst [vmem:[#allocation2 + $0x100] sm:$0xff] %v1672
    %1689 = vst [vmem:[#allocation2 + $0x108] sm:$0xff] %v1673
    %1690 = vst [vmem:[#allocation2 + $0x110] sm:$0xff] %v1674
    %1691 = vst [vmem:[#allocation2 + $0x118] sm:$0xff] %v1675
    %1692 = vst [vmem:[#allocation2 + $0x120] sm:$0xff] %v1676
    %1693 = vst [vmem:[#allocation2 + $0x128] sm:$0xff] %v1677
    %1694 = vst [vmem:[#allocation2 + $0x130] sm:$0xff] %v1678
    %1695 = vst [vmem:[#allocation2 + $0x138] sm:$0xff] %v1679
    %1696 = vst [vmem:[#allocation2 + $0x140] sm:$0xff] %v1680
    %1697 = vst [vmem:[#allocation2 + $0x148] sm:$0xff] %v1681
    %1698 = vst [vmem:[#allocation2 + $0x150] sm:$0xff] %v1682
    %1699 = vst [vmem:[#allocation2 + $0x158] sm:$0xff] %v1683
    %1700 = vst [vmem:[#allocation2 + $0x160] sm:$0xff] %v1684
    %1701 = vst [vmem:[#allocation2 + $0x168] sm:$0xff] %v1685
    %1702 = vst [vmem:[#allocation2 + $0x170] sm:$0xff] %v1686
    %1703 = vst [vmem:[#allocation2 + $0x178] sm:$0xff] %v1687
    %v1704 = vld [vmem:[%s0 + $0x180] sm:$0xff]
    %v1705 = vld [vmem:[%s0 + $0x188] sm:$0xff]
    %v1706 = vld [vmem:[%s0 + $0x190] sm:$0xff]
    %v1707 = vld [vmem:[%s0 + $0x198] sm:$0xff]
    %v1708 = vld [vmem:[%s0 + $0x1a0] sm:$0xff]
    %v1709 = vld [vmem:[%s0 + $0x1a8] sm:$0xff]
    %v1710 = vld [vmem:[%s0 + $0x1b0] sm:$0xff]
    %v1711 = vld [vmem:[%s0 + $0x1b8] sm:$0xff]
    %v1712 = vld [vmem:[%s0 + $0x1c0] sm:$0xff]
    %v1713 = vld [vmem:[%s0 + $0x1c8] sm:$0xff]
    %v1714 = vld [vmem:[%s0 + $0x1d0] sm:$0xff]
    %v1715 = vld [vmem:[%s0 + $0x1d8] sm:$0xff]
    %v1716 = vld [vmem:[%s0 + $0x1e0] sm:$0xff]
    %v1717 = vld [vmem:[%s0 + $0x1e8] sm:$0xff]
    %v1718 = vld [vmem:[%s0 + $0x1f0] sm:$0xff]
    %v1719 = vld [vmem:[%s0 + $0x1f8] sm:$0xff]
    %1721 = vset.pattern.permute.xlu0 0
    %1722 = vperm.xlu0 %1721, %v1704
    %v1723 = vpop.permute.xlu0 %1722
    %1726 = vset.pattern.permute.xlu0 0
    %1727 = vperm.xlu0 %1726, %v1705
    %v1728 = vpop.permute.xlu0 %1727
    %1731 = vset.pattern.permute.xlu0 0
    %1732 = vperm.xlu0 %1731, %v1706
    %v1733 = vpop.permute.xlu0 %1732
    %1736 = vset.pattern.permute.xlu0 0
    %1737 = vperm.xlu0 %1736, %v1707
    %v1738 = vpop.permute.xlu0 %1737
    %1741 = vset.pattern.permute.xlu0 0
    %1742 = vperm.xlu0 %1741, %v1708
    %v1743 = vpop.permute.xlu0 %1742
    %1746 = vset.pattern.permute.xlu0 0
    %1747 = vperm.xlu0 %1746, %v1709
    %v1748 = vpop.permute.xlu0 %1747
    %1751 = vset.pattern.permute.xlu0 0
    %1752 = vperm.xlu0 %1751, %v1710
    %v1753 = vpop.permute.xlu0 %1752
    %1756 = vset.pattern.permute.xlu0 0
    %1757 = vperm.xlu0 %1756, %v1711
    %v1758 = vpop.permute.xlu0 %1757
    %1761 = vset.pattern.permute.xlu0 0
    %1762 = vperm.xlu0 %1761, %v1712
    %v1763 = vpop.permute.xlu0 %1762
    %1766 = vset.pattern.permute.xlu0 0
    %1767 = vperm.xlu0 %1766, %v1713
    %v1768 = vpop.permute.xlu0 %1767
    %1771 = vset.pattern.permute.xlu0 0
    %1772 = vperm.xlu0 %1771, %v1714
    %v1773 = vpop.permute.xlu0 %1772
    %1776 = vset.pattern.permute.xlu0 0
    %1777 = vperm.xlu0 %1776, %v1715
    %v1778 = vpop.permute.xlu0 %1777
    %1781 = vset.pattern.permute.xlu0 0
    %1782 = vperm.xlu0 %1781, %v1716
    %v1783 = vpop.permute.xlu0 %1782
    %1786 = vset.pattern.permute.xlu0 0
    %1787 = vperm.xlu0 %1786, %v1717
    %v1788 = vpop.permute.xlu0 %1787
    %1791 = vset.pattern.permute.xlu0 0
    %1792 = vperm.xlu0 %1791, %v1718
    %v1793 = vpop.permute.xlu0 %1792
    %1796 = vset.pattern.permute.xlu0 0
    %1797 = vperm.xlu0 %1796, %v1719
    %v1798 = vpop.permute.xlu0 %1797
    %v1800 = vmul.f32 %v1723, %v149
    %v1801 = vmul.f32 %v1728, %v149
    %v1802 = vmul.f32 %v1733, %v149
    %v1803 = vmul.f32 %v1738, %v149
    %v1804 = vmul.f32 %v1743, %v149
    %v1805 = vmul.f32 %v1748, %v149
    %v1806 = vmul.f32 %v1753, %v149
    %v1807 = vmul.f32 %v1758, %v149
    %v1808 = vmul.f32 %v1763, %v149
    %v1809 = vmul.f32 %v1768, %v149
    %v1810 = vmul.f32 %v1773, %v149
    %v1811 = vmul.f32 %v1778, %v149
    %v1812 = vmul.f32 %v1783, %v149
    %v1813 = vmul.f32 %v1788, %v149
    %v1814 = vmul.f32 %v1793, %v149
    %v1815 = vmul.f32 %v1798, %v149
    %v1816 = vld [vmem:[%s0 + $0x181] sm:$0xff]
    %v1817 = vld [vmem:[%s0 + $0x189] sm:$0xff]
    %v1818 = vld [vmem:[%s0 + $0x191] sm:$0xff]
    %v1819 = vld [vmem:[%s0 + $0x199] sm:$0xff]
    %v1820 = vld [vmem:[%s0 + $0x1a1] sm:$0xff]
    %v1821 = vld [vmem:[%s0 + $0x1a9] sm:$0xff]
    %v1822 = vld [vmem:[%s0 + $0x1b1] sm:$0xff]
    %v1823 = vld [vmem:[%s0 + $0x1b9] sm:$0xff]
    %v1824 = vld [vmem:[%s0 + $0x1c1] sm:$0xff]
    %v1825 = vld [vmem:[%s0 + $0x1c9] sm:$0xff]
    %v1826 = vld [vmem:[%s0 + $0x1d1] sm:$0xff]
    %v1827 = vld [vmem:[%s0 + $0x1d9] sm:$0xff]
    %v1828 = vld [vmem:[%s0 + $0x1e1] sm:$0xff]
    %v1829 = vld [vmem:[%s0 + $0x1e9] sm:$0xff]
    %v1830 = vld [vmem:[%s0 + $0x1f1] sm:$0xff]
    %v1831 = vld [vmem:[%s0 + $0x1f9] sm:$0xff]
    %1833 = vset.pattern.permute.xlu0 0
    %1834 = vperm.xlu0 %1833, %v1816
    %v1835 = vpop.permute.xlu0 %1834
    %1838 = vset.pattern.permute.xlu0 0
    %1839 = vperm.xlu0 %1838, %v1817
    %v1840 = vpop.permute.xlu0 %1839
    %1843 = vset.pattern.permute.xlu0 0
    %1844 = vperm.xlu0 %1843, %v1818
    %v1845 = vpop.permute.xlu0 %1844
    %1848 = vset.pattern.permute.xlu0 0
    %1849 = vperm.xlu0 %1848, %v1819
    %v1850 = vpop.permute.xlu0 %1849
    %1853 = vset.pattern.permute.xlu0 0
    %1854 = vperm.xlu0 %1853, %v1820
    %v1855 = vpop.permute.xlu0 %1854
    %1858 = vset.pattern.permute.xlu0 0
    %1859 = vperm.xlu0 %1858, %v1821
    %v1860 = vpop.permute.xlu0 %1859
    %1863 = vset.pattern.permute.xlu0 0
    %1864 = vperm.xlu0 %1863, %v1822
    %v1865 = vpop.permute.xlu0 %1864
    %1868 = vset.pattern.permute.xlu0 0
    %1869 = vperm.xlu0 %1868, %v1823
    %v1870 = vpop.permute.xlu0 %1869
    %1873 = vset.pattern.permute.xlu0 0
    %1874 = vperm.xlu0 %1873, %v1824
    %v1875 = vpop.permute.xlu0 %1874
    %1878 = vset.pattern.permute.xlu0 0
    %1879 = vperm.xlu0 %1878, %v1825
    %v1880 = vpop.permute.xlu0 %1879
    %1883 = vset.pattern.permute.xlu0 0
    %1884 = vperm.xlu0 %1883, %v1826
    %v1885 = vpop.permute.xlu0 %1884
    %1888 = vset.pattern.permute.xlu0 0
    %1889 = vperm.xlu0 %1888, %v1827
    %v1890 = vpop.permute.xlu0 %1889
    %1893 = vset.pattern.permute.xlu0 0
    %1894 = vperm.xlu0 %1893, %v1828
    %v1895 = vpop.permute.xlu0 %1894
    %1898 = vset.pattern.permute.xlu0 0
    %1899 = vperm.xlu0 %1898, %v1829
    %v1900 = vpop.permute.xlu0 %1899
    %1903 = vset.pattern.permute.xlu0 0
    %1904 = vperm.xlu0 %1903, %v1830
    %v1905 = vpop.permute.xlu0 %1904
    %1908 = vset.pattern.permute.xlu0 0
    %1909 = vperm.xlu0 %1908, %v1831
    %v1910 = vpop.permute.xlu0 %1909
    %v1912 = vmul.f32 %v1835, %v265
    %v1913 = vmul.f32 %v1840, %v265
    %v1914 = vmul.f32 %v1845, %v265
    %v1915 = vmul.f32 %v1850, %v265
    %v1916 = vmul.f32 %v1855, %v265
    %v1917 = vmul.f32 %v1860, %v265
    %v1918 = vmul.f32 %v1865, %v265
    %v1919 = vmul.f32 %v1870, %v265
    %v1920 = vmul.f32 %v1875, %v265
    %v1921 = vmul.f32 %v1880, %v265
    %v1922 = vmul.f32 %v1885, %v265
    %v1923 = vmul.f32 %v1890, %v265
    %v1924 = vmul.f32 %v1895, %v265
    %v1925 = vmul.f32 %v1900, %v265
    %v1926 = vmul.f32 %v1905, %v265
    %v1927 = vmul.f32 %v1910, %v265
    %v1928 = vadd.f32 %v1800, %v1912
    %v1929 = vadd.f32 %v1801, %v1913
    %v1930 = vadd.f32 %v1802, %v1914
    %v1931 = vadd.f32 %v1803, %v1915
    %v1932 = vadd.f32 %v1804, %v1916
    %v1933 = vadd.f32 %v1805, %v1917
    %v1934 = vadd.f32 %v1806, %v1918
    %v1935 = vadd.f32 %v1807, %v1919
    %v1936 = vadd.f32 %v1808, %v1920
    %v1937 = vadd.f32 %v1809, %v1921
    %v1938 = vadd.f32 %v1810, %v1922
    %v1939 = vadd.f32 %v1811, %v1923
    %v1940 = vadd.f32 %v1812, %v1924
    %v1941 = vadd.f32 %v1813, %v1925
    %v1942 = vadd.f32 %v1814, %v1926
    %v1943 = vadd.f32 %v1815, %v1927
    %v1944 = vld [vmem:[%s0 + $0x190] sm:$0xff]
    %v1945 = vld [vmem:[%s0 + $0x198] sm:$0xff]
    %v1946 = vld [vmem:[%s0 + $0x1a0] sm:$0xff]
    %v1947 = vld [vmem:[%s0 + $0x1a8] sm:$0xff]
    %v1948 = vld [vmem:[%s0 + $0x1b0] sm:$0xff]
    %v1949 = vld [vmem:[%s0 + $0x1b8] sm:$0xff]
    %v1950 = vld [vmem:[%s0 + $0x1c0] sm:$0xff]
    %v1951 = vld [vmem:[%s0 + $0x1c8] sm:$0xff]
    %v1952 = vld [vmem:[%s0 + $0x1d0] sm:$0xff]
    %v1953 = vld [vmem:[%s0 + $0x1d8] sm:$0xff]
    %v1954 = vld [vmem:[%s0 + $0x1e0] sm:$0xff]
    %v1955 = vld [vmem:[%s0 + $0x1e8] sm:$0xff]
    %v1956 = vld [vmem:[%s0 + $0x1f0] sm:$0xff]
    %v1957 = vld [vmem:[%s0 + $0x1f8] sm:$0xff]
    %v1958 = vld [vmem:[%s0 + $0x200] sm:$0xff]
    %v1959 = vld [vmem:[%s0 + $0x208] sm:$0xff]
    %1961 = vset.pattern.permute.xlu0 0
    %1962 = vperm.xlu0 %1961, %v1944
    %v1963 = vpop.permute.xlu0 %1962
    %1966 = vset.pattern.permute.xlu0 0
    %1967 = vperm.xlu0 %1966, %v1945
    %v1968 = vpop.permute.xlu0 %1967
    %1971 = vset.pattern.permute.xlu0 0
    %1972 = vperm.xlu0 %1971, %v1946
    %v1973 = vpop.permute.xlu0 %1972
    %1976 = vset.pattern.permute.xlu0 0
    %1977 = vperm.xlu0 %1976, %v1947
    %v1978 = vpop.permute.xlu0 %1977
    %1981 = vset.pattern.permute.xlu0 0
    %1982 = vperm.xlu0 %1981, %v1948
    %v1983 = vpop.permute.xlu0 %1982
    %1986 = vset.pattern.permute.xlu0 0
    %1987 = vperm.xlu0 %1986, %v1949
    %v1988 = vpop.permute.xlu0 %1987
    %1991 = vset.pattern.permute.xlu0 0
    %1992 = vperm.xlu0 %1991, %v1950
    %v1993 = vpop.permute.xlu0 %1992
    %1996 = vset.pattern.permute.xlu0 0
    %1997 = vperm.xlu0 %1996, %v1951
    %v1998 = vpop.permute.xlu0 %1997
    %2001 = vset.pattern.permute.xlu0 0
    %2002 = vperm.xlu0 %2001, %v1952
    %v2003 = vpop.permute.xlu0 %2002
    %2006 = vset.pattern.permute.xlu0 0
    %2007 = vperm.xlu0 %2006, %v1953
    %v2008 = vpop.permute.xlu0 %2007
    %2011 = vset.pattern.permute.xlu0 0
    %2012 = vperm.xlu0 %2011, %v1954
    %v2013 = vpop.permute.xlu0 %2012
    %2016 = vset.pattern.permute.xlu0 0
    %2017 = vperm.xlu0 %2016, %v1955
    %v2018 = vpop.permute.xlu0 %2017
    %2021 = vset.pattern.permute.xlu0 0
    %2022 = vperm.xlu0 %2021, %v1956
    %v2023 = vpop.permute.xlu0 %2022
    %2026 = vset.pattern.permute.xlu0 0
    %2027 = vperm.xlu0 %2026, %v1957
    %v2028 = vpop.permute.xlu0 %2027
    %2031 = vset.pattern.permute.xlu0 0
    %2032 = vperm.xlu0 %2031, %v1958
    %v2033 = vpop.permute.xlu0 %2032
    %2036 = vset.pattern.permute.xlu0 0
    %2037 = vperm.xlu0 %2036, %v1959
    %v2038 = vpop.permute.xlu0 %2037
    %v2040 = vmul.f32 %v1963, %v397
    %v2041 = vmul.f32 %v1968, %v397
    %v2042 = vmul.f32 %v1973, %v397
    %v2043 = vmul.f32 %v1978, %v397
    %v2044 = vmul.f32 %v1983, %v397
    %v2045 = vmul.f32 %v1988, %v397
    %v2046 = vmul.f32 %v1993, %v397
    %v2047 = vmul.f32 %v1998, %v397
    %v2048 = vmul.f32 %v2003, %v397
    %v2049 = vmul.f32 %v2008, %v397
    %v2050 = vmul.f32 %v2013, %v397
    %v2051 = vmul.f32 %v2018, %v397
    %v2052 = vmul.f32 %v2023, %v397
    %v2053 = vmul.f32 %v2028, %v397
    %v2054 = vmul.f32 %v2033, %v397
    %v2055 = vmul.f32 %v2038, %v397
    %v2056 = vadd.f32 %v1928, %v2040
    %v2057 = vadd.f32 %v1929, %v2041
    %v2058 = vadd.f32 %v1930, %v2042
    %v2059 = vadd.f32 %v1931, %v2043
    %v2060 = vadd.f32 %v1932, %v2044
    %v2061 = vadd.f32 %v1933, %v2045
    %v2062 = vadd.f32 %v1934, %v2046
    %v2063 = vadd.f32 %v1935, %v2047
    %v2064 = vadd.f32 %v1936, %v2048
    %v2065 = vadd.f32 %v1937, %v2049
    %v2066 = vadd.f32 %v1938, %v2050
    %v2067 = vadd.f32 %v1939, %v2051
    %v2068 = vadd.f32 %v1940, %v2052
    %v2069 = vadd.f32 %v1941, %v2053
    %v2070 = vadd.f32 %v1942, %v2054
    %v2071 = vadd.f32 %v1943, %v2055
    %v2072 = vld [vmem:[%s0 + $0x191] sm:$0xff]
    %v2073 = vld [vmem:[%s0 + $0x199] sm:$0xff]
    %v2074 = vld [vmem:[%s0 + $0x1a1] sm:$0xff]
    %v2075 = vld [vmem:[%s0 + $0x1a9] sm:$0xff]
    %v2076 = vld [vmem:[%s0 + $0x1b1] sm:$0xff]
    %v2077 = vld [vmem:[%s0 + $0x1b9] sm:$0xff]
    %v2078 = vld [vmem:[%s0 + $0x1c1] sm:$0xff]
    %v2079 = vld [vmem:[%s0 + $0x1c9] sm:$0xff]
    %v2080 = vld [vmem:[%s0 + $0x1d1] sm:$0xff]
    %v2081 = vld [vmem:[%s0 + $0x1d9] sm:$0xff]
    %v2082 = vld [vmem:[%s0 + $0x1e1] sm:$0xff]
    %v2083 = vld [vmem:[%s0 + $0x1e9] sm:$0xff]
    %v2084 = vld [vmem:[%s0 + $0x1f1] sm:$0xff]
    %v2085 = vld [vmem:[%s0 + $0x1f9] sm:$0xff]
    %v2086 = vld [vmem:[%s0 + $0x201] sm:$0xff]
    %v2087 = vld [vmem:[%s0 + $0x209] sm:$0xff]
    %2089 = vset.pattern.permute.xlu0 0
    %2090 = vperm.xlu0 %2089, %v2072
    %v2091 = vpop.permute.xlu0 %2090
    %2094 = vset.pattern.permute.xlu0 0
    %2095 = vperm.xlu0 %2094, %v2073
    %v2096 = vpop.permute.xlu0 %2095
    %2099 = vset.pattern.permute.xlu0 0
    %2100 = vperm.xlu0 %2099, %v2074
    %v2101 = vpop.permute.xlu0 %2100
    %2104 = vset.pattern.permute.xlu0 0
    %2105 = vperm.xlu0 %2104, %v2075
    %v2106 = vpop.permute.xlu0 %2105
    %2109 = vset.pattern.permute.xlu0 0
    %2110 = vperm.xlu0 %2109, %v2076
    %v2111 = vpop.permute.xlu0 %2110
    %2114 = vset.pattern.permute.xlu0 0
    %2115 = vperm.xlu0 %2114, %v2077
    %v2116 = vpop.permute.xlu0 %2115
    %2119 = vset.pattern.permute.xlu0 0
    %2120 = vperm.xlu0 %2119, %v2078
    %v2121 = vpop.permute.xlu0 %2120
    %2124 = vset.pattern.permute.xlu0 0
    %2125 = vperm.xlu0 %2124, %v2079
    %v2126 = vpop.permute.xlu0 %2125
    %2129 = vset.pattern.permute.xlu0 0
    %2130 = vperm.xlu0 %2129, %v2080
    %v2131 = vpop.permute.xlu0 %2130
    %2134 = vset.pattern.permute.xlu0 0
    %2135 = vperm.xlu0 %2134, %v2081
    %v2136 = vpop.permute.xlu0 %2135
    %2139 = vset.pattern.permute.xlu0 0
    %2140 = vperm.xlu0 %2139, %v2082
    %v2141 = vpop.permute.xlu0 %2140
    %2144 = vset.pattern.permute.xlu0 0
    %2145 = vperm.xlu0 %2144, %v2083
    %v2146 = vpop.permute.xlu0 %2145
    %2149 = vset.pattern.permute.xlu0 0
    %2150 = vperm.xlu0 %2149, %v2084
    %v2151 = vpop.permute.xlu0 %2150
    %2154 = vset.pattern.permute.xlu0 0
    %2155 = vperm.xlu0 %2154, %v2085
    %v2156 = vpop.permute.xlu0 %2155
    %2159 = vset.pattern.permute.xlu0 0
    %2160 = vperm.xlu0 %2159, %v2086
    %v2161 = vpop.permute.xlu0 %2160
    %2164 = vset.pattern.permute.xlu0 0
    %2165 = vperm.xlu0 %2164, %v2087
    %v2166 = vpop.permute.xlu0 %2165
    %v2168 = vmul.f32 %v2091, %v529
    %v2169 = vmul.f32 %v2096, %v529
    %v2170 = vmul.f32 %v2101, %v529
    %v2171 = vmul.f32 %v2106, %v529
    %v2172 = vmul.f32 %v2111, %v529
    %v2173 = vmul.f32 %v2116, %v529
    %v2174 = vmul.f32 %v2121, %v529
    %v2175 = vmul.f32 %v2126, %v529
    %v2176 = vmul.f32 %v2131, %v529
    %v2177 = vmul.f32 %v2136, %v529
    %v2178 = vmul.f32 %v2141, %v529
    %v2179 = vmul.f32 %v2146, %v529
    %v2180 = vmul.f32 %v2151, %v529
    %v2181 = vmul.f32 %v2156, %v529
    %v2182 = vmul.f32 %v2161, %v529
    %v2183 = vmul.f32 %v2166, %v529
    %v2184 = vadd.f32 %v2056, %v2168
    %v2185 = vadd.f32 %v2057, %v2169
    %v2186 = vadd.f32 %v2058, %v2170
    %v2187 = vadd.f32 %v2059, %v2171
    %v2188 = vadd.f32 %v2060, %v2172
    %v2189 = vadd.f32 %v2061, %v2173
    %v2190 = vadd.f32 %v2062, %v2174
    %v2191 = vadd.f32 %v2063, %v2175
    %v2192 = vadd.f32 %v2064, %v2176
    %v2193 = vadd.f32 %v2065, %v2177
    %v2194 = vadd.f32 %v2066, %v2178
    %v2195 = vadd.f32 %v2067, %v2179
    %v2196 = vadd.f32 %v2068, %v2180
    %v2197 = vadd.f32 %v2069, %v2181
    %v2198 = vadd.f32 %v2070, %v2182
    %v2199 = vadd.f32 %v2071, %v2183
    %v2200 = vadd.f32 %v2184, %v566
    %v2201 = vadd.f32 %v2185, %v566
    %v2202 = vadd.f32 %v2186, %v566
    %v2203 = vadd.f32 %v2187, %v566
    %v2204 = vadd.f32 %v2188, %v566
    %v2205 = vadd.f32 %v2189, %v566
    %v2206 = vadd.f32 %v2190, %v566
    %v2207 = vadd.f32 %v2191, %v566
    %v2208 = vadd.f32 %v2192, %v566
    %v2209 = vadd.f32 %v2193, %v566
    %v2210 = vadd.f32 %v2194, %v566
    %v2211 = vadd.f32 %v2195, %v566
    %v2212 = vadd.f32 %v2196, %v566
    %v2213 = vadd.f32 %v2197, %v566
    %v2214 = vadd.f32 %v2198, %v566
    %v2215 = vadd.f32 %v2199, %v566
    %v2216 = vmax.f32 %v2200, 0.0
    %v2217 = vmax.f32 %v2201, 0.0
    %v2218 = vmax.f32 %v2202, 0.0
    %v2219 = vmax.f32 %v2203, 0.0
    %v2220 = vmax.f32 %v2204, 0.0
    %v2221 = vmax.f32 %v2205, 0.0
    %v2222 = vmax.f32 %v2206, 0.0
    %v2223 = vmax.f32 %v2207, 0.0
    %v2224 = vmax.f32 %v2208, 0.0
    %v2225 = vmax.f32 %v2209, 0.0
    %v2226 = vmax.f32 %v2210, 0.0
    %v2227 = vmax.f32 %v2211, 0.0
    %v2228 = vmax.f32 %v2212, 0.0
    %v2229 = vmax.f32 %v2213, 0.0
    %v2230 = vmax.f32 %v2214, 0.0
    %v2231 = vmax.f32 %v2215, 0.0
    %2232 = vst [vmem:[#allocation2 + $0x180] sm:$0xff] %v2216
    %2233 = vst [vmem:[#allocation2 + $0x188] sm:$0xff] %v2217
    %2234 = vst [vmem:[#allocation2 + $0x190] sm:$0xff] %v2218
    %2235 = vst [vmem:[#allocation2 + $0x198] sm:$0xff] %v2219
    %2236 = vst [vmem:[#allocation2 + $0x1a0] sm:$0xff] %v2220
    %2237 = vst [vmem:[#allocation2 + $0x1a8] sm:$0xff] %v2221
    %2238 = vst [vmem:[#allocation2 + $0x1b0] sm:$0xff] %v2222
    %2239 = vst [vmem:[#allocation2 + $0x1b8] sm:$0xff] %v2223
    %2240 = vst [vmem:[#allocation2 + $0x1c0] sm:$0xff] %v2224
    %2241 = vst [vmem:[#allocation2 + $0x1c8] sm:$0xff] %v2225
    %2242 = vst [vmem:[#allocation2 + $0x1d0] sm:$0xff] %v2226
    %2243 = vst [vmem:[#allocation2 + $0x1d8] sm:$0xff] %v2227
    %2244 = vst [vmem:[#allocation2 + $0x1e0] sm:$0xff] %v2228
    %2245 = vst [vmem:[#allocation2 + $0x1e8] sm:$0xff] %v2229
    %2246 = vst [vmem:[#allocation2 + $0x1f0] sm:$0xff] %v2230
    %2247 = vst [vmem:[#allocation2 + $0x1f8] sm:$0xff] %v2231
    %v2248 = vld [vmem:[%s0 + $0x200] sm:$0xff]
    %v2249 = vld [vmem:[%s0 + $0x208] sm:$0xff]
    %v2250 = vld [vmem:[%s0 + $0x210] sm:$0xff]
    %v2251 = vld [vmem:[%s0 + $0x218] sm:$0xff]
    %v2252 = vld [vmem:[%s0 + $0x220] sm:$0xff]
    %v2253 = vld [vmem:[%s0 + $0x228] sm:$0xff]
    %v2254 = vld [vmem:[%s0 + $0x230] sm:$0xff]
    %v2255 = vld [vmem:[%s0 + $0x238] sm:$0xff]
    %2257 = vset.pattern.permute.xlu0 0
    %2258 = vperm.xlu0 %2257, %v2248
    %v2259 = vpop.permute.xlu0 %2258
    %2262 = vset.pattern.permute.xlu0 0
    %2263 = vperm.xlu0 %2262, %v2249
    %v2264 = vpop.permute.xlu0 %2263
    %2267 = vset.pattern.permute.xlu0 0
    %2268 = vperm.xlu0 %2267, %v2250
    %v2269 = vpop.permute.xlu0 %2268
    %2272 = vset.pattern.permute.xlu0 0
    %2273 = vperm.xlu0 %2272, %v2251
    %v2274 = vpop.permute.xlu0 %2273
    %2277 = vset.pattern.permute.xlu0 0
    %2278 = vperm.xlu0 %2277, %v2252
    %v2279 = vpop.permute.xlu0 %2278
    %2282 = vset.pattern.permute.xlu0 0
    %2283 = vperm.xlu0 %2282, %v2253
    %v2284 = vpop.permute.xlu0 %2283
    %2287 = vset.pattern.permute.xlu0 0
    %2288 = vperm.xlu0 %2287, %v2254
    %v2289 = vpop.permute.xlu0 %2288
    %2292 = vset.pattern.permute.xlu0 0
    %2293 = vperm.xlu0 %2292, %v2255
    %v2294 = vpop.permute.xlu0 %2293
    %v2296 = vmul.f32 %v2259, %v149
    %v2297 = vmul.f32 %v2264, %v149
    %v2298 = vmul.f32 %v2269, %v149
    %v2299 = vmul.f32 %v2274, %v149
    %v2300 = vmul.f32 %v2279, %v149
    %v2301 = vmul.f32 %v2284, %v149
    %v2302 = vmul.f32 %v2289, %v149
    %v2303 = vmul.f32 %v2294, %v149
    %v2304 = vld [vmem:[%s0 + $0x201] sm:$0xff]
    %v2305 = vld [vmem:[%s0 + $0x209] sm:$0xff]
    %v2306 = vld [vmem:[%s0 + $0x211] sm:$0xff]
    %v2307 = vld [vmem:[%s0 + $0x219] sm:$0xff]
    %v2308 = vld [vmem:[%s0 + $0x221] sm:$0xff]
    %v2309 = vld [vmem:[%s0 + $0x229] sm:$0xff]
    %v2310 = vld [vmem:[%s0 + $0x231] sm:$0xff]
    %v2311 = vld [vmem:[%s0 + $0x239] sm:$0xff]
    %2313 = vset.pattern.permute.xlu0 0
    %2314 = vperm.xlu0 %2313, %v2304
    %v2315 = vpop.permute.xlu0 %2314
    %2318 = vset.pattern.permute.xlu0 0
    %2319 = vperm.xlu0 %2318, %v2305
    %v2320 = vpop.permute.xlu0 %2319
    %2323 = vset.pattern.permute.xlu0 0
    %2324 = vperm.xlu0 %2323, %v2306
    %v2325 = vpop.permute.xlu0 %2324
    %2328 = vset.pattern.permute.xlu0 0
    %2329 = vperm.xlu0 %2328, %v2307
    %v2330 = vpop.permute.xlu0 %2329
    %2333 = vset.pattern.permute.xlu0 0
    %2334 = vperm.xlu0 %2333, %v2308
    %v2335 = vpop.permute.xlu0 %2334
    %2338 = vset.pattern.permute.xlu0 0
    %2339 = vperm.xlu0 %2338, %v2309
    %v2340 = vpop.permute.xlu0 %2339
    %2343 = vset.pattern.permute.xlu0 0
    %2344 = vperm.xlu0 %2343, %v2310
    %v2345 = vpop.permute.xlu0 %2344
    %2348 = vset.pattern.permute.xlu0 0
    %2349 = vperm.xlu0 %2348, %v2311
    %v2350 = vpop.permute.xlu0 %2349
    %v2352 = vmul.f32 %v2315, %v265
    %v2353 = vmul.f32 %v2320, %v265
    %v2354 = vmul.f32 %v2325, %v265
    %v2355 = vmul.f32 %v2330, %v265
    %v2356 = vmul.f32 %v2335, %v265
    %v2357 = vmul.f32 %v2340, %v265
    %v2358 = vmul.f32 %v2345, %v265
    %v2359 = vmul.f32 %v2350, %v265
    %v2360 = vadd.f32 %v2296, %v2352
    %v2361 = vadd.f32 %v2297, %v2353
    %v2362 = vadd.f32 %v2298, %v2354
    %v2363 = vadd.f32 %v2299, %v2355
    %v2364 = vadd.f32 %v2300, %v2356
    %v2365 = vadd.f32 %v2301, %v2357
    %v2366 = vadd.f32 %v2302, %v2358
    %v2367 = vadd.f32 %v2303, %v2359
    %v2368 = vld [vmem:[%s0 + $0x210] sm:$0xff]
    %v2369 = vld [vmem:[%s0 + $0x218] sm:$0xff]
    %v2370 = vld [vmem:[%s0 + $0x220] sm:$0xff]
    %v2371 = vld [vmem:[%s0 + $0x228] sm:$0xff]
    %v2372 = vld [vmem:[%s0 + $0x230] sm:$0xff]
    %v2373 = vld [vmem:[%s0 + $0x238] sm:$0xff]
    %v2374 = vld [vmem:[%s0 + $0x240] sm:$0xff]
    %v2375 = vld [vmem:[%s0 + $0x248] sm:$0xff]
    %2377 = vset.pattern.permute.xlu0 0
    %2378 = vperm.xlu0 %2377, %v2368
    %v2379 = vpop.permute.xlu0 %2378
    %2382 = vset.pattern.permute.xlu0 0
    %2383 = vperm.xlu0 %2382, %v2369
    %v2384 = vpop.permute.xlu0 %2383
    %2387 = vset.pattern.permute.xlu0 0
    %2388 = vperm.xlu0 %2387, %v2370
    %v2389 = vpop.permute.xlu0 %2388
    %2392 = vset.pattern.permute.xlu0 0
    %2393 = vperm.xlu0 %2392, %v2371
    %v2394 = vpop.permute.xlu0 %2393
    %2397 = vset.pattern.permute.xlu0 0
    %2398 = vperm.xlu0 %2397, %v2372
    %v2399 = vpop.permute.xlu0 %2398
    %2402 = vset.pattern.permute.xlu0 0
    %2403 = vperm.xlu0 %2402, %v2373
    %v2404 = vpop.permute.xlu0 %2403
    %2407 = vset.pattern.permute.xlu0 0
    %2408 = vperm.xlu0 %2407, %v2374
    %v2409 = vpop.permute.xlu0 %2408
    %2412 = vset.pattern.permute.xlu0 0
    %2413 = vperm.xlu0 %2412, %v2375
    %v2414 = vpop.permute.xlu0 %2413
    %v2416 = vmul.f32 %v2379, %v397
    %v2417 = vmul.f32 %v2384, %v397
    %v2418 = vmul.f32 %v2389, %v397
    %v2419 = vmul.f32 %v2394, %v397
    %v2420 = vmul.f32 %v2399, %v397
    %v2421 = vmul.f32 %v2404, %v397
    %v2422 = vmul.f32 %v2409, %v397
    %v2423 = vmul.f32 %v2414, %v397
    %v2424 = vadd.f32 %v2360, %v2416
    %v2425 = vadd.f32 %v2361, %v2417
    %v2426 = vadd.f32 %v2362, %v2418
    %v2427 = vadd.f32 %v2363, %v2419
    %v2428 = vadd.f32 %v2364, %v2420
    %v2429 = vadd.f32 %v2365, %v2421
    %v2430 = vadd.f32 %v2366, %v2422
    %v2431 = vadd.f32 %v2367, %v2423
    %v2432 = vld [vmem:[%s0 + $0x211] sm:$0xff]
    %v2433 = vld [vmem:[%s0 + $0x219] sm:$0xff]
    %v2434 = vld [vmem:[%s0 + $0x221] sm:$0xff]
    %v2435 = vld [vmem:[%s0 + $0x229] sm:$0xff]
    %v2436 = vld [vmem:[%s0 + $0x231] sm:$0xff]
    %v2437 = vld [vmem:[%s0 + $0x239] sm:$0xff]
    %v2438 = vld [vmem:[%s0 + $0x241] sm:$0xff]
    %v2439 = vld [vmem:[%s0 + $0x249] sm:$0xff]
    %2441 = vset.pattern.permute.xlu0 0
    %2442 = vperm.xlu0 %2441, %v2432
    %v2443 = vpop.permute.xlu0 %2442
    %2446 = vset.pattern.permute.xlu0 0
    %2447 = vperm.xlu0 %2446, %v2433
    %v2448 = vpop.permute.xlu0 %2447
    %2451 = vset.pattern.permute.xlu0 0
    %2452 = vperm.xlu0 %2451, %v2434
    %v2453 = vpop.permute.xlu0 %2452
    %2456 = vset.pattern.permute.xlu0 0
    %2457 = vperm.xlu0 %2456, %v2435
    %v2458 = vpop.permute.xlu0 %2457
    %2461 = vset.pattern.permute.xlu0 0
    %2462 = vperm.xlu0 %2461, %v2436
    %v2463 = vpop.permute.xlu0 %2462
    %2466 = vset.pattern.permute.xlu0 0
    %2467 = vperm.xlu0 %2466, %v2437
    %v2468 = vpop.permute.xlu0 %2467
    %2471 = vset.pattern.permute.xlu0 0
    %2472 = vperm.xlu0 %2471, %v2438
    %v2473 = vpop.permute.xlu0 %2472
    %2476 = vset.pattern.permute.xlu0 0
    %2477 = vperm.xlu0 %2476, %v2439
    %v2478 = vpop.permute.xlu0 %2477
    %v2480 = vmul.f32 %v2443, %v529
    %v2481 = vmul.f32 %v2448, %v529
    %v2482 = vmul.f32 %v2453, %v529
    %v2483 = vmul.f32 %v2458, %v529
    %v2484 = vmul.f32 %v2463, %v529
    %v2485 = vmul.f32 %v2468, %v529
    %v2486 = vmul.f32 %v2473, %v529
    %v2487 = vmul.f32 %v2478, %v529
    %v2488 = vadd.f32 %v2424, %v2480
    %v2489 = vadd.f32 %v2425, %v2481
    %v2490 = vadd.f32 %v2426, %v2482
    %v2491 = vadd.f32 %v2427, %v2483
    %v2492 = vadd.f32 %v2428, %v2484
    %v2493 = vadd.f32 %v2429, %v2485
    %v2494 = vadd.f32 %v2430, %v2486
    %v2495 = vadd.f32 %v2431, %v2487
    %v2496 = vadd.f32 %v2488, %v566
    %v2497 = vadd.f32 %v2489, %v566
    %v2498 = vadd.f32 %v2490, %v566
    %v2499 = vadd.f32 %v2491, %v566
    %v2500 = vadd.f32 %v2492, %v566
    %v2501 = vadd.f32 %v2493, %v566
    %v2502 = vadd.f32 %v2494, %v566
    %v2503 = vadd.f32 %v2495, %v566
    %v2504 = vmax.f32 %v2496, 0.0
    %v2505 = vmax.f32 %v2497, 0.0
    %v2506 = vmax.f32 %v2498, 0.0
    %v2507 = vmax.f32 %v2499, 0.0
    %v2508 = vmax.f32 %v2500, 0.0
    %v2509 = vmax.f32 %v2501, 0.0
    %v2510 = vmax.f32 %v2502, 0.0
    %v2511 = vmax.f32 %v2503, 0.0
    %2512 = vst [vmem:[#allocation2 + $0x200] sm:$0xff] %v2504
    %2513 = vst [vmem:[#allocation2 + $0x208] sm:$0xff] %v2505
    %2514 = vst [vmem:[#allocation2 + $0x210] sm:$0xff] %v2506
    %2515 = vst [vmem:[#allocation2 + $0x218] sm:$0xff] %v2507
    %2516 = vst [vmem:[#allocation2 + $0x220] sm:$0xff] %v2508
    %2517 = vst [vmem:[#allocation2 + $0x228] sm:$0xff] %v2509
    %2518 = vst [vmem:[#allocation2 + $0x230] sm:$0xff] %v2510
    %2519 = vst [vmem:[#allocation2 + $0x238] sm:$0xff] %v2511
    %2520 = vst [vmem:[#allocation3] sm:$0xff] 0.0
    %2521 = vst [vmem:[#allocation3 + $0x8] sm:$0xff] 0.0
    %2522 = vst [vmem:[#allocation3 + $0x10] sm:$0xff] 0.0
    %2523 = vst [vmem:[#allocation3 + $0x18] sm:$0xff] 0.0
    %2524 = vst [vmem:[#allocation3 + $0x20] sm:$0xff] 0.0
    %2525 = vst [vmem:[#allocation3 + $0x28] sm:$0xff] 0.0
    %2526 = vst [vmem:[#allocation3 + $0x30] sm:$0xff] 0.0
    %2527 = vst [vmem:[#allocation3 + $0x38] sm:$0xff] 0.0
    %2528 = vst [vmem:[#allocation3 + $0x40] sm:$0xff] 0.0
    %2529 = vst [vmem:[#allocation3 + $0x48] sm:$0xff] 0.0
    %2530 = vst [vmem:[#allocation3 + $0x50] sm:$0xff] 0.0
    %2531 = vst [vmem:[#allocation3 + $0x58] sm:$0xff] 0.0
    %2532 = vst [vmem:[#allocation3 + $0x60] sm:$0xff] 0.0
    %2533 = vst [vmem:[#allocation3 + $0x68] sm:$0xff] 0.0
    %2534 = vst [vmem:[#allocation3 + $0x70] sm:$0xff] 0.0
    %2535 = vst [vmem:[#allocation3 + $0x78] sm:$0xff] 0.0
    %2536 = vst [vmem:[#allocation3 + $0x80] sm:$0xff] 0.0
    %2537 = vst [vmem:[#allocation3 + $0x88] sm:$0xff] 0.0
    %2538 = vst [vmem:[#allocation3 + $0x90] sm:$0xff] 0.0
    %2539 = vst [vmem:[#allocation3 + $0x98] sm:$0xff] 0.0
    %2540 = vst [vmem:[#allocation3 + $0xa0] sm:$0xff] 0.0
    %2541 = vst [vmem:[#allocation3 + $0xa8] sm:$0xff] 0.0
    %2542 = vst [vmem:[#allocation3 + $0xb0] sm:$0xff] 0.0
    %2543 = vst [vmem:[#allocation3 + $0xb8] sm:$0xff] 0.0
    %2544 = vst [vmem:[#allocation3 + $0xc0] sm:$0xff] 0.0
    %2545 = vst [vmem:[#allocation3 + $0xc8] sm:$0xff] 0.0
    %2546 = vst [vmem:[#allocation3 + $0xd0] sm:$0xff] 0.0
    %2547 = vst [vmem:[#allocation3 + $0xd8] sm:$0xff] 0.0
    %2548 = vst [vmem:[#allocation3 + $0xe0] sm:$0xff] 0.0
    %2549 = vst [vmem:[#allocation3 + $0xe8] sm:$0xff] 0.0
    %2550 = vst [vmem:[#allocation3 + $0xf0] sm:$0xff] 0.0
    %2551 = vst [vmem:[#allocation3 + $0xf8] sm:$0xff] 0.0
    %2552 = vst [vmem:[#allocation3 + $0x100] sm:$0xff] 0.0
    %2553 = vst [vmem:[#allocation3 + $0x108] sm:$0xff] 0.0
    %v2554 = vld [vmem:[#allocation2] ss:$2 sm:$0x3f]
    %s2555 = scalar_lea.vmem [#allocation2], 1
    %v2556 = vld [vmem:[%s2555] ss:$2 sm:$0x3f]
    %s2557 = scalar_lea.vmem [#allocation2], 16
    %v2558 = vld [vmem:[%s2557] ss:$2 sm:$0x3f]
    %s2559 = scalar_lea.vmem [#allocation2], 17
    %v2560 = vld [vmem:[%s2559] ss:$2 sm:$0x3f]
    %v2561 = vmax.f32 %v2554, %v2556
    %v2562 = vmax.f32 %v2558, %v2560
    %v2563 = vmax.f32 %v2561, %v2562
    %2564 = vst [vmem:[#allocation3 + $0x9] sm:$0x3f] %v2563
    %s2565 = scalar_lea.vmem [#allocation2], 32
    %v2566 = vld [vmem:[%s2565] ss:$2 sm:$0x3f]
    %s2567 = scalar_lea.vmem [#allocation2], 33
    %v2568 = vld [vmem:[%s2567] ss:$2 sm:$0x3f]
    %s2569 = scalar_lea.vmem [#allocation2], 48
    %v2570 = vld [vmem:[%s2569] ss:$2 sm:$0x3f]
    %s2571 = scalar_lea.vmem [#allocation2], 49
    %v2572 = vld [vmem:[%s2571] ss:$2 sm:$0x3f]
    %v2573 = vmax.f32 %v2566, %v2568
    %v2574 = vmax.f32 %v2570, %v2572
    %v2575 = vmax.f32 %v2573, %v2574
    %2576 = vst [vmem:[#allocation3 + $0x11] sm:$0x3f] %v2575
    %s2577 = scalar_lea.vmem [#allocation2], 64
    %v2578 = vld [vmem:[%s2577] ss:$2 sm:$0x3f]
    %s2579 = scalar_lea.vmem [#allocation2], 65
    %v2580 = vld [vmem:[%s2579] ss:$2 sm:$0x3f]
    %s2581 = scalar_lea.vmem [#allocation2], 80
    %v2582 = vld [vmem:[%s2581] ss:$2 sm:$0x3f]
    %s2583 = scalar_lea.vmem [#allocation2], 81
    %v2584 = vld [vmem:[%s2583] ss:$2 sm:$0x3f]
    %v2585 = vmax.f32 %v2578, %v2580
    %v2586 = vmax.f32 %v2582, %v2584
    %v2587 = vmax.f32 %v2585, %v2586
    %2588 = vst [vmem:[#allocation3 + $0x19] sm:$0x3f] %v2587
    %s2589 = scalar_lea.vmem [#allocation2], 96
    %v2590 = vld [vmem:[%s2589] ss:$2 sm:$0x3f]
    %s2591 = scalar_lea.vmem [#allocation2], 97
    %v2592 = vld [vmem:[%s2591] ss:$2 sm:$0x3f]
    %s2593 = scalar_lea.vmem [#allocation2], 112
    %v2594 = vld [vmem:[%s2593] ss:$2 sm:$0x3f]
    %s2595 = scalar_lea.vmem [#allocation2], 113
    %v2596 = vld [vmem:[%s2595] ss:$2 sm:$0x3f]
    %v2597 = vmax.f32 %v2590, %v2592
    %v2598 = vmax.f32 %v2594, %v2596
    %v2599 = vmax.f32 %v2597, %v2598
    %2600 = vst [vmem:[#allocation3 + $0x21] sm:$0x3f] %v2599
    %s2601 = scalar_lea.vmem [#allocation2], 128
    %v2602 = vld [vmem:[%s2601] ss:$2 sm:$0x3f]
    %s2603 = scalar_lea.vmem [#allocation2], 129
    %v2604 = vld [vmem:[%s2603] ss:$2 sm:$0x3f]
    %s2605 = scalar_lea.vmem [#allocation2], 144
    %v2606 = vld [vmem:[%s2605] ss:$2 sm:$0x3f]
    %s2607 = scalar_lea.vmem [#allocation2], 145
    %v2608 = vld [vmem:[%s2607] ss:$2 sm:$0x3f]
    %v2609 = vmax.f32 %v2602, %v2604
    %v2610 = vmax.f32 %v2606, %v2608
    %v2611 = vmax.f32 %v2609, %v2610
    %2612 = vst [vmem:[#allocation3 + $0x29] sm:$0x3f] %v2611
    %s2613 = scalar_lea.vmem [#allocation2], 160
    %v2614 = vld [vmem:[%s2613] ss:$2 sm:$0x3f]
    %s2615 = scalar_lea.vmem [#allocation2], 161
    %v2616 = vld [vmem:[%s2615] ss:$2 sm:$0x3f]
    %s2617 = scalar_lea.vmem [#allocation2], 176
    %v2618 = vld [vmem:[%s2617] ss:$2 sm:$0x3f]
    %s2619 = scalar_lea.vmem [#allocation2], 177
    %v2620 = vld [vmem:[%s2619] ss:$2 sm:$0x3f]
    %v2621 = vmax.f32 %v2614, %v2616
    %v2622 = vmax.f32 %v2618, %v2620
    %v2623 = vmax.f32 %v2621, %v2622
    %2624 = vst [vmem:[#allocation3 + $0x31] sm:$0x3f] %v2623
    %s2625 = scalar_lea.vmem [#allocation2], 192
    %v2626 = vld [vmem:[%s2625] ss:$2 sm:$0x3f]
    %s2627 = scalar_lea.vmem [#allocation2], 193
    %v2628 = vld [vmem:[%s2627] ss:$2 sm:$0x3f]
    %s2629 = scalar_lea.vmem [#allocation2], 208
    %v2630 = vld [vmem:[%s2629] ss:$2 sm:$0x3f]
    %s2631 = scalar_lea.vmem [#allocation2], 209
    %v2632 = vld [vmem:[%s2631] ss:$2 sm:$0x3f]
    %v2633 = vmax.f32 %v2626, %v2628
    %v2634 = vmax.f32 %v2630, %v2632
    %v2635 = vmax.f32 %v2633, %v2634
    %2636 = vst [vmem:[#allocation3 + $0x39] sm:$0x3f] %v2635
    %s2637 = scalar_lea.vmem [#allocation2], 224
    %v2638 = vld [vmem:[%s2637] ss:$2 sm:$0x3f]
    %s2639 = scalar_lea.vmem [#allocation2], 225
    %v2640 = vld [vmem:[%s2639] ss:$2 sm:$0x3f]
    %s2641 = scalar_lea.vmem [#allocation2], 240
    %v2642 = vld [vmem:[%s2641] ss:$2 sm:$0x3f]
    %s2643 = scalar_lea.vmem [#allocation2], 241
    %v2644 = vld [vmem:[%s2643] ss:$2 sm:$0x3f]
    %v2645 = vmax.f32 %v2638, %v2640
    %v2646 = vmax.f32 %v2642, %v2644
    %v2647 = vmax.f32 %v2645, %v2646
    %2648 = vst [vmem:[#allocation3 + $0x41] sm:$0x3f] %v2647
    %s2649 = scalar_lea.vmem [#allocation2], 288
    %v2650 = vld [vmem:[%s2649] ss:$2 sm:$0x3f]
    %s2651 = scalar_lea.vmem [#allocation2], 289
    %v2652 = vld [vmem:[%s2651] ss:$2 sm:$0x3f]
    %s2653 = scalar_lea.vmem [#allocation2], 304
    %v2654 = vld [vmem:[%s2653] ss:$2 sm:$0x3f]
    %s2655 = scalar_lea.vmem [#allocation2], 305
    %v2656 = vld [vmem:[%s2655] ss:$2 sm:$0x3f]
    %v2657 = vmax.f32 %v2650, %v2652
    %v2658 = vmax.f32 %v2654, %v2656
    %v2659 = vmax.f32 %v2657, %v2658
    %2660 = vst [vmem:[#allocation3 + $0x89] sm:$0x3f] %v2659
    %s2661 = scalar_lea.vmem [#allocation2], 320
    %v2662 = vld [vmem:[%s2661] ss:$2 sm:$0x3f]
    %s2663 = scalar_lea.vmem [#allocation2], 321
    %v2664 = vld [vmem:[%s2663] ss:$2 sm:$0x3f]
    %s2665 = scalar_lea.vmem [#allocation2], 336
    %v2666 = vld [vmem:[%s2665] ss:$2 sm:$0x3f]
    %s2667 = scalar_lea.vmem [#allocation2], 337
    %v2668 = vld [vmem:[%s2667] ss:$2 sm:$0x3f]
    %v2669 = vmax.f32 %v2662, %v2664
    %v2670 = vmax.f32 %v2666, %v2668
    %v2671 = vmax.f32 %v2669, %v2670
    %2672 = vst [vmem:[#allocation3 + $0x91] sm:$0x3f] %v2671
    %s2673 = scalar_lea.vmem [#allocation2], 352
    %v2674 = vld [vmem:[%s2673] ss:$2 sm:$0x3f]
    %s2675 = scalar_lea.vmem [#allocation2], 353
    %v2676 = vld [vmem:[%s2675] ss:$2 sm:$0x3f]
    %s2677 = scalar_lea.vmem [#allocation2], 368
    %v2678 = vld [vmem:[%s2677] ss:$2 sm:$0x3f]
    %s2679 = scalar_lea.vmem [#allocation2], 369
    %v2680 = vld [vmem:[%s2679] ss:$2 sm:$0x3f]
    %v2681 = vmax.f32 %v2674, %v2676
    %v2682 = vmax.f32 %v2678, %v2680
    %v2683 = vmax.f32 %v2681, %v2682
    %2684 = vst [vmem:[#allocation3 + $0x99] sm:$0x3f] %v2683
    %s2685 = scalar_lea.vmem [#allocation2], 384
    %v2686 = vld [vmem:[%s2685] ss:$2 sm:$0x3f]
    %s2687 = scalar_lea.vmem [#allocation2], 385
    %v2688 = vld [vmem:[%s2687] ss:$2 sm:$0x3f]
    %s2689 = scalar_lea.vmem [#allocation2], 400
    %v2690 = vld [vmem:[%s2689] ss:$2 sm:$0x3f]
    %s2691 = scalar_lea.vmem [#allocation2], 401
    %v2692 = vld [vmem:[%s2691] ss:$2 sm:$0x3f]
    %v2693 = vmax.f32 %v2686, %v2688
    %v2694 = vmax.f32 %v2690, %v2692
    %v2695 = vmax.f32 %v2693, %v2694
    %2696 = vst [vmem:[#allocation3 + $0xa1] sm:$0x3f] %v2695
    %s2697 = scalar_lea.vmem [#allocation2], 416
    %v2698 = vld [vmem:[%s2697] ss:$2 sm:$0x3f]
    %s2699 = scalar_lea.vmem [#allocation2], 417
    %v2700 = vld [vmem:[%s2699] ss:$2 sm:$0x3f]
    %s2701 = scalar_lea.vmem [#allocation2], 432
    %v2702 = vld [vmem:[%s2701] ss:$2 sm:$0x3f]
    %s2703 = scalar_lea.vmem [#allocation2], 433
    %v2704 = vld [vmem:[%s2703] ss:$2 sm:$0x3f]
    %v2705 = vmax.f32 %v2698, %v2700
    %v2706 = vmax.f32 %v2702, %v2704
    %v2707 = vmax.f32 %v2705, %v2706
    %2708 = vst [vmem:[#allocation3 + $0xa9] sm:$0x3f] %v2707
    %s2709 = scalar_lea.vmem [#allocation2], 448
    %v2710 = vld [vmem:[%s2709] ss:$2 sm:$0x3f]
    %s2711 = scalar_lea.vmem [#allocation2], 449
    %v2712 = vld [vmem:[%s2711] ss:$2 sm:$0x3f]
    %s2713 = scalar_lea.vmem [#allocation2], 464
    %v2714 = vld [vmem:[%s2713] ss:$2 sm:$0x3f]
    %s2715 = scalar_lea.vmem [#allocation2], 465
    %v2716 = vld [vmem:[%s2715] ss:$2 sm:$0x3f]
    %v2717 = vmax.f32 %v2710, %v2712
    %v2718 = vmax.f32 %v2714, %v2716
    %v2719 = vmax.f32 %v2717, %v2718
    %2720 = vst [vmem:[#allocation3 + $0xb1] sm:$0x3f] %v2719
    %s2721 = scalar_lea.vmem [#allocation2], 480
    %v2722 = vld [vmem:[%s2721] ss:$2 sm:$0x3f]
    %s2723 = scalar_lea.vmem [#allocation2], 481
    %v2724 = vld [vmem:[%s2723] ss:$2 sm:$0x3f]
    %s2725 = scalar_lea.vmem [#allocation2], 496
    %v2726 = vld [vmem:[%s2725] ss:$2 sm:$0x3f]
    %s2727 = scalar_lea.vmem [#allocation2], 497
    %v2728 = vld [vmem:[%s2727] ss:$2 sm:$0x3f]
    %v2729 = vmax.f32 %v2722, %v2724
    %v2730 = vmax.f32 %v2726, %v2728
    %v2731 = vmax.f32 %v2729, %v2730
    %2732 = vst [vmem:[#allocation3 + $0xb9] sm:$0x3f] %v2731
    %s2733 = scalar_lea.vmem [#allocation2], 512
    %v2734 = vld [vmem:[%s2733] ss:$2 sm:$0x3f]
    %s2735 = scalar_lea.vmem [#allocation2], 513
    %v2736 = vld [vmem:[%s2735] ss:$2 sm:$0x3f]
    %s2737 = scalar_lea.vmem [#allocation2], 528
    %v2738 = vld [vmem:[%s2737] ss:$2 sm:$0x3f]
    %s2739 = scalar_lea.vmem [#allocation2], 529
    %v2740 = vld [vmem:[%s2739] ss:$2 sm:$0x3f]
    %v2741 = vmax.f32 %v2734, %v2736
    %v2742 = vmax.f32 %v2738, %v2740
    %v2743 = vmax.f32 %v2741, %v2742
    %2744 = vst [vmem:[#allocation3 + $0xc1] sm:$0x3f] %v2743
    %v2745 = vld [vmem:[#allocation3] sm:$0xff]
    %v2746 = vld [vmem:[#allocation3 + $0x8] sm:$0xff]
    %v2747 = vld [vmem:[#allocation3 + $0x10] sm:$0xff]
    %v2748 = vld [vmem:[#allocation3 + $0x18] sm:$0xff]
    %v2749 = vld [vmem:[#allocation3 + $0x20] sm:$0xff]
    %v2750 = vld [vmem:[#allocation3 + $0x28] sm:$0xff]
    %v2751 = vld [vmem:[#allocation3 + $0x30] sm:$0xff]
    %v2752 = vld [vmem:[#allocation3 + $0x38] sm:$0xff]
    %v2753 = vld [vmem:[#allocation3 + $0x40] sm:$0xff]
    %v2754 = vld [vmem:[#allocation3 + $0x48] sm:$0xff]
    %v2755 = vld [vmem:[#allocation3 + $0x50] sm:$0xff]
    %v2756 = vld [vmem:[#allocation3 + $0x58] sm:$0xff]
    %v2757 = vld [vmem:[#allocation3 + $0x60] sm:$0xff]
    %v2758 = vld [vmem:[#allocation3 + $0x68] sm:$0xff]
    %v2759 = vld [vmem:[#allocation3 + $0x70] sm:$0xff]
    %v2760 = vld [vmem:[#allocation3 + $0x78] sm:$0xff]
    %v2761 = vld [vmem:[#allocation3 + $0x80] sm:$0xff]
    %v2762 = vld [vmem:[#allocation3 + $0x88] sm:$0xff]
    %v2763 = vld [vmem:[#allocation3 + $0x90] sm:$0xff]
    %v2764 = vld [vmem:[#allocation3 + $0x98] sm:$0xff]
    %v2765 = vld [vmem:[#allocation3 + $0xa0] sm:$0xff]
    %v2766 = vld [vmem:[#allocation3 + $0xa8] sm:$0xff]
    %v2767 = vld [vmem:[#allocation3 + $0xb0] sm:$0xff]
    %v2768 = vld [vmem:[#allocation3 + $0xb8] sm:$0xff]
    %v2769 = vld [vmem:[#allocation3 + $0xc0] sm:$0xff]
    %v2770 = vld [vmem:[#allocation3 + $0xc8] sm:$0xff]
    %v2771 = vld [vmem:[#allocation3 + $0xd0] sm:$0xff]
    %v2772 = vld [vmem:[#allocation3 + $0xd8] sm:$0xff]
    %v2773 = vld [vmem:[#allocation3 + $0xe0] sm:$0xff]
    %v2774 = vld [vmem:[#allocation3 + $0xe8] sm:$0xff]
    %v2775 = vld [vmem:[#allocation3 + $0xf0] sm:$0xff]
    %v2776 = vld [vmem:[#allocation3 + $0xf8] sm:$0xff]
    %v2777 = vld [vmem:[%s3] sm:$0xff]
    %v2778 = vld [vmem:[%s3 + $0x8] sm:$0xff]
    %v2779 = vld [vmem:[%s3 + $0x10] sm:$0xff]
    %v2780 = vld [vmem:[%s3 + $0x18] sm:$0xff]
    %v2781 = vld [vmem:[%s3 + $0x20] sm:$0xff]
    %v2782 = vld [vmem:[%s3 + $0x28] sm:$0xff]
    %v2783 = vld [vmem:[%s3 + $0x30] sm:$0xff]
    %v2784 = vld [vmem:[%s3 + $0x38] sm:$0xff]
    %v2785 = vld [vmem:[%s3 + $0x40] sm:$0xff]
    %v2786 = vld [vmem:[%s3 + $0x48] sm:$0xff]
    %v2787 = vld [vmem:[%s3 + $0x50] sm:$0xff]
    %v2788 = vld [vmem:[%s3 + $0x58] sm:$0xff]
    %v2789 = vld [vmem:[%s3 + $0x60] sm:$0xff]
    %v2790 = vld [vmem:[%s3 + $0x68] sm:$0xff]
    %v2791 = vld [vmem:[%s3 + $0x70] sm:$0xff]
    %v2792 = vld [vmem:[%s3 + $0x78] sm:$0xff]
    %v2793 = vld [vmem:[#allocation3 + $0x1] sm:$0xff]
    %v2794 = vld [vmem:[#allocation3 + $0x9] sm:$0xff]
    %v2795 = vld [vmem:[#allocation3 + $0x11] sm:$0xff]
    %v2796 = vld [vmem:[#allocation3 + $0x19] sm:$0xff]
    %v2797 = vld [vmem:[#allocation3 + $0x21] sm:$0xff]
    %v2798 = vld [vmem:[#allocation3 + $0x29] sm:$0xff]
    %v2799 = vld [vmem:[#allocation3 + $0x31] sm:$0xff]
    %v2800 = vld [vmem:[#allocation3 + $0x39] sm:$0xff]
    %v2801 = vld [vmem:[#allocation3 + $0x41] sm:$0xff]
    %v2802 = vld [vmem:[#allocation3 + $0x49] sm:$0xff]
    %v2803 = vld [vmem:[#allocation3 + $0x51] sm:$0xff]
    %v2804 = vld [vmem:[#allocation3 + $0x59] sm:$0xff]
    %v2805 = vld [vmem:[#allocation3 + $0x61] sm:$0xff]
    %v2806 = vld [vmem:[#allocation3 + $0x69] sm:$0xff]
    %v2807 = vld [vmem:[#allocation3 + $0x71] sm:$0xff]
    %v2808 = vld [vmem:[#allocation3 + $0x79] sm:$0xff]
    %v2809 = vld [vmem:[#allocation3 + $0x81] sm:$0xff]
    %v2810 = vld [vmem:[#allocation3 + $0x89] sm:$0xff]
    %v2811 = vld [vmem:[#allocation3 + $0x91] sm:$0xff]
    %v2812 = vld [vmem:[#allocation3 + $0x99] sm:$0xff]
    %v2813 = vld [vmem:[#allocation3 + $0xa1] sm:$0xff]
    %v2814 = vld [vmem:[#allocation3 + $0xa9] sm:$0xff]
    %v2815 = vld [vmem:[#allocation3 + $0xb1] sm:$0xff]
    %v2816 = vld [vmem:[#allocation3 + $0xb9] sm:$0xff]
    %v2817 = vld [vmem:[#allocation3 + $0xc1] sm:$0xff]
    %v2818 = vld [vmem:[#allocation3 + $0xc9] sm:$0xff]
    %v2819 = vld [vmem:[#allocation3 + $0xd1] sm:$0xff]
    %v2820 = vld [vmem:[#allocation3 + $0xd9] sm:$0xff]
    %v2821 = vld [vmem:[#allocation3 + $0xe1] sm:$0xff]
    %v2822 = vld [vmem:[#allocation3 + $0xe9] sm:$0xff]
    %v2823 = vld [vmem:[#allocation3 + $0xf1] sm:$0xff]
    %v2824 = vld [vmem:[#allocation3 + $0xf9] sm:$0xff]
    %v2825 = vld [vmem:[%s3 + $0x80] sm:$0xff]
    %v2826 = vld [vmem:[%s3 + $0x88] sm:$0xff]
    %v2827 = vld [vmem:[%s3 + $0x90] sm:$0xff]
    %v2828 = vld [vmem:[%s3 + $0x98] sm:$0xff]
    %v2829 = vld [vmem:[%s3 + $0xa0] sm:$0xff]
    %v2830 = vld [vmem:[%s3 + $0xa8] sm:$0xff]
    %v2831 = vld [vmem:[%s3 + $0xb0] sm:$0xff]
    %v2832 = vld [vmem:[%s3 + $0xb8] sm:$0xff]
    %v2833 = vld [vmem:[%s3 + $0xc0] sm:$0xff]
    %v2834 = vld [vmem:[%s3 + $0xc8] sm:$0xff]
    %v2835 = vld [vmem:[%s3 + $0xd0] sm:$0xff]
    %v2836 = vld [vmem:[%s3 + $0xd8] sm:$0xff]
    %v2837 = vld [vmem:[%s3 + $0xe0] sm:$0xff]
    %v2838 = vld [vmem:[%s3 + $0xe8] sm:$0xff]
    %v2839 = vld [vmem:[%s3 + $0xf0] sm:$0xff]
    %v2840 = vld [vmem:[%s3 + $0xf8] sm:$0xff]
    %2841 = vmatprep.subr.mxu0 0.0
    %2842 = vmatpush1.msra.mxu0 %v2825
    %2843 = vmatprep.subr.mxu0 0.0
    %2844 = vmatpush1.msra.mxu0 %v2826
    %2845 = vmatprep.subr.mxu0 0.0
    %2846 = vmatpush1.msra.mxu0 %v2827
    %2847 = vmatprep.subr.mxu0 0.0
    %2848 = vmatpush1.msra.mxu0 %v2828
    %2849 = vmatprep.subr.mxu0 0.0
    %2850 = vmatpush1.msra.mxu0 %v2829
    %2851 = vmatprep.subr.mxu0 0.0
    %2852 = vmatpush1.msra.mxu0 %v2830
    %2853 = vmatprep.subr.mxu0 0.0
    %2854 = vmatpush1.msra.mxu0 %v2831
    %2855 = vmatprep.subr.mxu0 0.0
    %2856 = vmatpush1.msra.mxu0 %v2832
    %2857 = vmatprep.subr.mxu0 0.0
    %2858 = vmatpush1.msra.mxu0 %v2833
    %2859 = vmatprep.subr.mxu0 0.0
    %2860 = vmatpush1.msra.mxu0 %v2834
    %2861 = vmatprep.subr.mxu0 0.0
    %2862 = vmatpush1.msra.mxu0 %v2835
    %2863 = vmatprep.subr.mxu0 0.0
    %2864 = vmatpush1.msra.mxu0 %v2836
    %2865 = vmatprep.subr.mxu0 0.0
    %2866 = vmatpush1.msra.mxu0 %v2837
    %2867 = vmatprep.subr.mxu0 0.0
    %2868 = vmatpush1.msra.mxu0 %v2838
    %2869 = vmatprep.subr.mxu0 0.0
    %2870 = vmatpush1.msra.mxu0 %v2839
    %2871 = vmatprep.subr.mxu0 0.0
    %2872 = vmatpush1.msra.mxu0 %v2840
    %2873 = vmatprep.subr.mxu0 0.0
    %2874 = vmatpush1.msra.mxu0 0.0
    %2875 = vmatprep.subr.mxu0 0.0
    %2876 = vmatpush1.msra.mxu0 0.0
    %2877 = vmatprep.subr.mxu0 0.0
    %2878 = vmatpush1.msra.mxu0 0.0
    %2879 = vmatprep.subr.mxu0 0.0
    %2880 = vmatpush1.msra.mxu0 0.0
    %2881 = vmatprep.subr.mxu0 0.0
    %2882 = vmatpush1.msra.mxu0 0.0
    %2883 = vmatprep.subr.mxu0 0.0
    %2884 = vmatpush1.msra.mxu0 0.0
    %2885 = vmatprep.subr.mxu0 0.0
    %2886 = vmatpush1.msra.mxu0 0.0
    %2887 = vmatprep.subr.mxu0 0.0
    %2888 = vmatpush1.msra.mxu0 0.0
    %2889 = vmatprep.subr.mxu0 0.0
    %2890 = vmatpush1.msra.mxu0 0.0
    %2891 = vmatprep.subr.mxu0 0.0
    %2892 = vmatpush1.msra.mxu0 0.0
    %2893 = vmatprep.subr.mxu0 0.0
    %2894 = vmatpush1.msra.mxu0 0.0
    %2895 = vmatprep.subr.mxu0 0.0
    %2896 = vmatpush1.msra.mxu0 0.0
    %2897 = vmatprep.subr.mxu0 0.0
    %2898 = vmatpush1.msra.mxu0 0.0
    %2899 = vmatprep.subr.mxu0 0.0
    %2900 = vmatpush1.msra.mxu0 0.0
    %2901 = vmatprep.subr.mxu0 0.0
    %2902 = vmatpush1.msra.mxu0 0.0
    %2903 = vmatprep.subr.mxu0 0.0
    %2904 = vmatpush1.msra.mxu0 0.0
    %2905 = vmatprep.mubr.f32.mxu0 0.0
    %2906 = vmatmul.mubr.f32.gmra.mrb[0].mxu0 %v2793
    %v2907 = vpop.f32.mrb[0].mxu0
    %v2908 = vadd.f32 0.0, %v2907
    %v2909 = vpop.f32.mrb[0].mxu0
    %2910 = vmatprep.mubr.f32.mxu0 0.0
    %2911 = vmatmul.mubr.f32.gmra.mrb[0].mxu0 %v2794
    %v2912 = vpop.f32.mrb[0].mxu0
    %v2913 = vadd.f32 0.0, %v2912
    %v2914 = vpop.f32.mrb[0].mxu0
    %2915 = vmatprep.mubr.f32.mxu0 0.0
    %2916 = vmatmul.mubr.f32.gmra.mrb[0].mxu0 %v2795
    %v2917 = vpop.f32.mrb[0].mxu0
    %v2918 = vadd.f32 0.0, %v2917
    %v2919 = vpop.f32.mrb[0].mxu0
    %2920 = vmatprep.mubr.f32.mxu0 0.0
    %2921 = vmatmul.mubr.f32.gmra.mrb[0].mxu0 %v2796
    %v2922 = vpop.f32.mrb[0].mxu0
    %v2923 = vadd.f32 0.0, %v2922
    %v2924 = vpop.f32.mrb[0].mxu0
    %2925 = vmatprep.mubr.f32.mxu0 0.0
    %2926 = vmatmul.mubr.f32.gmra.mrb[0].mxu0 %v2797
    %v2927 = vpop.f32.mrb[0].mxu0
    %v2928 = vadd.f32 0.0, %v2927
    %v2929 = vpop.f32.mrb[0].mxu0
    %2930 = vmatprep.mubr.f32.mxu0 0.0
    %2931 = vmatmul.mubr.f32.gmra.mrb[0].mxu0 %v2798
    %v2932 = vpop.f32.mrb[0].mxu0
    %v2933 = vadd.f32 0.0, %v2932
    %v2934 = vpop.f32.mrb[0].mxu0
    %2935 = vmatprep.mubr.f32.mxu0 0.0
    %2936 = vmatmul.mubr.f32.gmra.mrb[0].mxu0 %v2799
    %v2937 = vpop.f32.mrb[0].mxu0
    %v2938 = vadd.f32 0.0, %v2937
    %v2939 = vpop.f32.mrb[0].mxu0
    %2940 = vmatprep.mubr.f32.mxu0 0.0
    %2941 = vmatmul.mubr.f32.gmra.mrb[0].mxu0 %v2800
    %v2942 = vpop.f32.mrb[0].mxu0
    %v2943 = vadd.f32 0.0, %v2942
    %v2944 = vpop.f32.mrb[0].mxu0
    %2945 = vmatprep.mubr.f32.mxu0 0.0
    %2946 = vmatmul.mubr.f32.gmra.mrb[0].mxu0 %v2801
    %v2947 = vpop.f32.mrb[0].mxu0
    %v2948 = vadd.f32 0.0, %v2947
    %v2949 = vpop.f32.mrb[0].mxu0
    %2950 = vmatprep.mubr.f32.mxu0 0.0
    %2951 = vmatmul.mubr.f32.gmra.mrb[0].mxu0 %v2802
    %v2952 = vpop.f32.mrb[0].mxu0
    %v2953 = vadd.f32 0.0, %v2952
    %v2954 = vpop.f32.mrb[0].mxu0
    %2955 = vmatprep.mubr.f32.mxu0 0.0
    %2956 = vmatmul.mubr.f32.gmra.mrb[0].mxu0 %v2803
    %v2957 = vpop.f32.mrb[0].mxu0
    %v2958 = vadd.f32 0.0, %v2957
    %v2959 = vpop.f32.mrb[0].mxu0
    %2960 = vmatprep.mubr.f32.mxu0 0.0
    %2961 = vmatmul.mubr.f32.gmra.mrb[0].mxu0 %v2804
    %v2962 = vpop.f32.mrb[0].mxu0
    %v2963 = vadd.f32 0.0, %v2962
    %v2964 = vpop.f32.mrb[0].mxu0
    %2965 = vmatprep.mubr.f32.mxu0 0.0
    %2966 = vmatmul.mubr.f32.gmra.mrb[0].mxu0 %v2805
    %v2967 = vpop.f32.mrb[0].mxu0
    %v2968 = vadd.f32 0.0, %v2967
    %v2969 = vpop.f32.mrb[0].mxu0
    %2970 = vmatprep.mubr.f32.mxu0 0.0
    %2971 = vmatmul.mubr.f32.gmra.mrb[0].mxu0 %v2806
    %v2972 = vpop.f32.mrb[0].mxu0
    %v2973 = vadd.f32 0.0, %v2972
    %v2974 = vpop.f32.mrb[0].mxu0
    %2975 = vmatprep.mubr.f32.mxu0 0.0
    %2976 = vmatmul.mubr.f32.gmra.mrb[0].mxu0 %v2807
    %v2977 = vpop.f32.mrb[0].mxu0
    %v2978 = vadd.f32 0.0, %v2977
    %v2979 = vpop.f32.mrb[0].mxu0
    %2980 = vmatprep.mubr.f32.mxu0 0.0
    %2981 = vmatmul.mubr.f32.gmra.mrb[0].mxu0 %v2808
    %v2982 = vpop.f32.mrb[0].mxu0
    %v2983 = vadd.f32 0.0, %v2982
    %v2984 = vpop.f32.mrb[0].mxu0
    %2985 = vmatprep.mubr.f32.mxu0 0.0
    %2986 = vmatmul.mubr.f32.gmra.mrb[0].mxu0 %v2809
    %v2987 = vpop.f32.mrb[0].mxu0
    %v2988 = vadd.f32 0.0, %v2987
    %v2989 = vpop.f32.mrb[0].mxu0
    %2990 = vmatprep.mubr.f32.mxu0 0.0
    %2991 = vmatmul.mubr.f32.gmra.mrb[0].mxu0 %v2810
    %v2992 = vpop.f32.mrb[0].mxu0
    %v2993 = vadd.f32 0.0, %v2992
    %v2994 = vpop.f32.mrb[0].mxu0
    %2995 = vmatprep.mubr.f32.mxu0 0.0
    %2996 = vmatmul.mubr.f32.gmra.mrb[0].mxu0 %v2811
    %v2997 = vpop.f32.mrb[0].mxu0
    %v2998 = vadd.f32 0.0, %v2997
    %v2999 = vpop.f32.mrb[0].mxu0
    %3000 = vmatprep.mubr.f32.mxu0 0.0
    %3001 = vmatmul.mubr.f32.gmra.mrb[0].mxu0 %v2812
    %v3002 = vpop.f32.mrb[0].mxu0
    %v3003 = vadd.f32 0.0, %v3002
    %v3004 = vpop.f32.mrb[0].mxu0
    %3005 = vmatprep.mubr.f32.mxu0 0.0
    %3006 = vmatmul.mubr.f32.gmra.mrb[0].mxu0 %v2813
    %v3007 = vpop.f32.mrb[0].mxu0
    %v3008 = vadd.f32 0.0, %v3007
    %v3009 = vpop.f32.mrb[0].mxu0
    %3010 = vmatprep.mubr.f32.mxu0 0.0
    %3011 = vmatmul.mubr.f32.gmra.mrb[0].mxu0 %v2814
    %v3012 = vpop.f32.mrb[0].mxu0
    %v3013 = vadd.f32 0.0, %v3012
    %v3014 = vpop.f32.mrb[0].mxu0
    %3015 = vmatprep.mubr.f32.mxu0 0.0
    %3016 = vmatmul.mubr.f32.gmra.mrb[0].mxu0 %v2815
    %v3017 = vpop.f32.mrb[0].mxu0
    %v3018 = vadd.f32 0.0, %v3017
    %v3019 = vpop.f32.mrb[0].mxu0
    %3020 = vmatprep.mubr.f32.mxu0 0.0
    %3021 = vmatmul.mubr.f32.gmra.mrb[0].mxu0 %v2816
    %v3022 = vpop.f32.mrb[0].mxu0
    %v3023 = vadd.f32 0.0, %v3022
    %v3024 = vpop.f32.mrb[0].mxu0
    %3025 = vmatprep.mubr.f32.mxu0 0.0
    %3026 = vmatmul.mubr.f32.gmra.mrb[0].mxu0 %v2817
    %v3027 = vpop.f32.mrb[0].mxu0
    %v3028 = vadd.f32 0.0, %v3027
    %v3029 = vpop.f32.mrb[0].mxu0
    %3030 = vmatprep.mubr.f32.mxu0 0.0
    %3031 = vmatmul.mubr.f32.gmra.mrb[0].mxu0 %v2818
    %v3032 = vpop.f32.mrb[0].mxu0
    %v3033 = vadd.f32 0.0, %v3032
    %v3034 = vpop.f32.mrb[0].mxu0
    %3035 = vmatprep.mubr.f32.mxu0 0.0
    %3036 = vmatmul.mubr.f32.gmra.mrb[0].mxu0 %v2819
    %v3037 = vpop.f32.mrb[0].mxu0
    %v3038 = vadd.f32 0.0, %v3037
    %v3039 = vpop.f32.mrb[0].mxu0
    %3040 = vmatprep.mubr.f32.mxu0 0.0
    %3041 = vmatmul.mubr.f32.gmra.mrb[0].mxu0 %v2820
    %v3042 = vpop.f32.mrb[0].mxu0
    %v3043 = vadd.f32 0.0, %v3042
    %v3044 = vpop.f32.mrb[0].mxu0
    %3045 = vmatprep.mubr.f32.mxu0 0.0
    %3046 = vmatmul.mubr.f32.gmra.mrb[0].mxu0 %v2821
    %v3047 = vpop.f32.mrb[0].mxu0
    %v3048 = vadd.f32 0.0, %v3047
    %v3049 = vpop.f32.mrb[0].mxu0
    %3050 = vmatprep.mubr.f32.mxu0 0.0
    %3051 = vmatmul.mubr.f32.gmra.mrb[0].mxu0 %v2822
    %v3052 = vpop.f32.mrb[0].mxu0
    %v3053 = vadd.f32 0.0, %v3052
    %v3054 = vpop.f32.mrb[0].mxu0
    %3055 = vmatprep.mubr.f32.mxu0 0.0
    %3056 = vmatmul.mubr.f32.gmra.mrb[0].mxu0 %v2823
    %v3057 = vpop.f32.mrb[0].mxu0
    %v3058 = vadd.f32 0.0, %v3057
    %v3059 = vpop.f32.mrb[0].mxu0
    %3060 = vmatprep.mubr.f32.mxu0 0.0
    %3061 = vmatmul.mubr.f32.gmra.mrb[0].mxu0 %v2824
    %v3062 = vpop.f32.mrb[0].mxu0
    %v3063 = vadd.f32 0.0, %v3062
    %v3064 = vpop.f32.mrb[0].mxu0
    %3065 = vdwg.mxu0
    %3066 = vmatprep.subr.mxu0 0.0
    %3067 = vmatpush1.msra.mxu0 %v2777
    %3068 = vmatprep.subr.mxu0 0.0
    %3069 = vmatpush1.msra.mxu0 %v2778
    %3070 = vmatprep.subr.mxu0 0.0
    %3071 = vmatpush1.msra.mxu0 %v2779
    %3072 = vmatprep.subr.mxu0 0.0
    %3073 = vmatpush1.msra.mxu0 %v2780
    %3074 = vmatprep.subr.mxu0 0.0
    %3075 = vmatpush1.msra.mxu0 %v2781
    %3076 = vmatprep.subr.mxu0 0.0
    %3077 = vmatpush1.msra.mxu0 %v2782
    %3078 = vmatprep.subr.mxu0 0.0
    %3079 = vmatpush1.msra.mxu0 %v2783
    %3080 = vmatprep.subr.mxu0 0.0
    %3081 = vmatpush1.msra.mxu0 %v2784
    %3082 = vmatprep.subr.mxu0 0.0
    %3083 = vmatpush1.msra.mxu0 %v2785
    %3084 = vmatprep.subr.mxu0 0.0
    %3085 = vmatpush1.msra.mxu0 %v2786
    %3086 = vmatprep.subr.mxu0 0.0
    %3087 = vmatpush1.msra.mxu0 %v2787
    %3088 = vmatprep.subr.mxu0 0.0
    %3089 = vmatpush1.msra.mxu0 %v2788
    %3090 = vmatprep.subr.mxu0 0.0
    %3091 = vmatpush1.msra.mxu0 %v2789
    %3092 = vmatprep.subr.mxu0 0.0
    %3093 = vmatpush1.msra.mxu0 %v2790
    %3094 = vmatprep.subr.mxu0 0.0
    %3095 = vmatpush1.msra.mxu0 %v2791
    %3096 = vmatprep.subr.mxu0 0.0
    %3097 = vmatpush1.msra.mxu0 %v2792
    %3098 = vmatprep.subr.mxu0 0.0
    %3099 = vmatpush1.msra.mxu0 0.0
    %3100 = vmatprep.subr.mxu0 0.0
    %3101 = vmatpush1.msra.mxu0 0.0
    %3102 = vmatprep.subr.mxu0 0.0
    %3103 = vmatpush1.msra.mxu0 0.0
    %3104 = vmatprep.subr.mxu0 0.0
    %3105 = vmatpush1.msra.mxu0 0.0
    %3106 = vmatprep.subr.mxu0 0.0
    %3107 = vmatpush1.msra.mxu0 0.0
    %3108 = vmatprep.subr.mxu0 0.0
    %3109 = vmatpush1.msra.mxu0 0.0
    %3110 = vmatprep.subr.mxu0 0.0
    %3111 = vmatpush1.msra.mxu0 0.0
    %3112 = vmatprep.subr.mxu0 0.0
    %3113 = vmatpush1.msra.mxu0 0.0
    %3114 = vmatprep.subr.mxu0 0.0
    %3115 = vmatpush1.msra.mxu0 0.0
    %3116 = vmatprep.subr.mxu0 0.0
    %3117 = vmatpush1.msra.mxu0 0.0
    %3118 = vmatprep.subr.mxu0 0.0
    %3119 = vmatpush1.msra.mxu0 0.0
    %3120 = vmatprep.subr.mxu0 0.0
    %3121 = vmatpush1.msra.mxu0 0.0
    %3122 = vmatprep.subr.mxu0 0.0
    %3123 = vmatpush1.msra.mxu0 0.0
    %3124 = vmatprep.subr.mxu0 0.0
    %3125 = vmatpush1.msra.mxu0 0.0
    %3126 = vmatprep.subr.mxu0 0.0
    %3127 = vmatpush1.msra.mxu0 0.0
    %3128 = vmatprep.subr.mxu0 0.0
    %3129 = vmatpush1.msra.mxu0 0.0
    %3130 = vmatprep.mubr.f32.mxu0 0.0
    %3131 = vmatmul.mubr.f32.gmra.mrb[0].mxu0 %v2745
    %v3132 = vpop.f32.mrb[0].mxu0
    %v3133 = vadd.f32 %v2908, %v3132
    %v3134 = vpop.f32.mrb[0].mxu0
    %3135 = vmatprep.mubr.f32.mxu0 0.0
    %3136 = vmatmul.mubr.f32.gmra.mrb[0].mxu0 %v2746
    %v3137 = vpop.f32.mrb[0].mxu0
    %v3138 = vadd.f32 %v2913, %v3137
    %v3139 = vpop.f32.mrb[0].mxu0
    %3140 = vmatprep.mubr.f32.mxu0 0.0
    %3141 = vmatmul.mubr.f32.gmra.mrb[0].mxu0 %v2747
    %v3142 = vpop.f32.mrb[0].mxu0
    %v3143 = vadd.f32 %v2918, %v3142
    %v3144 = vpop.f32.mrb[0].mxu0
    %3145 = vmatprep.mubr.f32.mxu0 0.0
    %3146 = vmatmul.mubr.f32.gmra.mrb[0].mxu0 %v2748
    %v3147 = vpop.f32.mrb[0].mxu0
    %v3148 = vadd.f32 %v2923, %v3147
    %v3149 = vpop.f32.mrb[0].mxu0
    %3150 = vmatprep.mubr.f32.mxu0 0.0
    %3151 = vmatmul.mubr.f32.gmra.mrb[0].mxu0 %v2749
    %v3152 = vpop.f32.mrb[0].mxu0
    %v3153 = vadd.f32 %v2928, %v3152
    %v3154 = vpop.f32.mrb[0].mxu0
    %3155 = vmatprep.mubr.f32.mxu0 0.0
    %3156 = vmatmul.mubr.f32.gmra.mrb[0].mxu0 %v2750
    %v3157 = vpop.f32.mrb[0].mxu0
    %v3158 = vadd.f32 %v2933, %v3157
    %v3159 = vpop.f32.mrb[0].mxu0
    %3160 = vmatprep.mubr.f32.mxu0 0.0
    %3161 = vmatmul.mubr.f32.gmra.mrb[0].mxu0 %v2751
    %v3162 = vpop.f32.mrb[0].mxu0
    %v3163 = vadd.f32 %v2938, %v3162
    %v3164 = vpop.f32.mrb[0].mxu0
    %3165 = vmatprep.mubr.f32.mxu0 0.0
    %3166 = vmatmul.mubr.f32.gmra.mrb[0].mxu0 %v2752
    %v3167 = vpop.f32.mrb[0].mxu0
    %v3168 = vadd.f32 %v2943, %v3167
    %v3169 = vpop.f32.mrb[0].mxu0
    %3170 = vmatprep.mubr.f32.mxu0 0.0
    %3171 = vmatmul.mubr.f32.gmra.mrb[0].mxu0 %v2753
    %v3172 = vpop.f32.mrb[0].mxu0
    %v3173 = vadd.f32 %v2948, %v3172
    %v3174 = vpop.f32.mrb[0].mxu0
    %3175 = vmatprep.mubr.f32.mxu0 0.0
    %3176 = vmatmul.mubr.f32.gmra.mrb[0].mxu0 %v2754
    %v3177 = vpop.f32.mrb[0].mxu0
    %v3178 = vadd.f32 %v2953, %v3177
    %v3179 = vpop.f32.mrb[0].mxu0
    %3180 = vmatprep.mubr.f32.mxu0 0.0
    %3181 = vmatmul.mubr.f32.gmra.mrb[0].mxu0 %v2755
    %v3182 = vpop.f32.mrb[0].mxu0
    %v3183 = vadd.f32 %v2958, %v3182
    %v3184 = vpop.f32.mrb[0].mxu0
    %3185 = vmatprep.mubr.f32.mxu0 0.0
    %3186 = vmatmul.mubr.f32.gmra.mrb[0].mxu0 %v2756
    %v3187 = vpop.f32.mrb[0].mxu0
    %v3188 = vadd.f32 %v2963, %v3187
    %v3189 = vpop.f32.mrb[0].mxu0
    %3190 = vmatprep.mubr.f32.mxu0 0.0
    %3191 = vmatmul.mubr.f32.gmra.mrb[0].mxu0 %v2757
    %v3192 = vpop.f32.mrb[0].mxu0
    %v3193 = vadd.f32 %v2968, %v3192
    %v3194 = vpop.f32.mrb[0].mxu0
    %3195 = vmatprep.mubr.f32.mxu0 0.0
    %3196 = vmatmul.mubr.f32.gmra.mrb[0].mxu0 %v2758
    %v3197 = vpop.f32.mrb[0].mxu0
    %v3198 = vadd.f32 %v2973, %v3197
    %v3199 = vpop.f32.mrb[0].mxu0
    %3200 = vmatprep.mubr.f32.mxu0 0.0
    %3201 = vmatmul.mubr.f32.gmra.mrb[0].mxu0 %v2759
    %v3202 = vpop.f32.mrb[0].mxu0
    %v3203 = vadd.f32 %v2978, %v3202
    %v3204 = vpop.f32.mrb[0].mxu0
    %3205 = vmatprep.mubr.f32.mxu0 0.0
    %3206 = vmatmul.mubr.f32.gmra.mrb[0].mxu0 %v2760
    %v3207 = vpop.f32.mrb[0].mxu0
    %v3208 = vadd.f32 %v2983, %v3207
    %v3209 = vpop.f32.mrb[0].mxu0
    %3210 = vmatprep.mubr.f32.mxu0 0.0
    %3211 = vmatmul.mubr.f32.gmra.mrb[0].mxu0 %v2761
    %v3212 = vpop.f32.mrb[0].mxu0
    %v3213 = vadd.f32 %v2988, %v3212
    %v3214 = vpop.f32.mrb[0].mxu0
    %3215 = vmatprep.mubr.f32.mxu0 0.0
    %3216 = vmatmul.mubr.f32.gmra.mrb[0].mxu0 %v2762
    %v3217 = vpop.f32.mrb[0].mxu0
    %v3218 = vadd.f32 %v2993, %v3217
    %v3219 = vpop.f32.mrb[0].mxu0
    %3220 = vmatprep.mubr.f32.mxu0 0.0
    %3221 = vmatmul.mubr.f32.gmra.mrb[0].mxu0 %v2763
    %v3222 = vpop.f32.mrb[0].mxu0
    %v3223 = vadd.f32 %v2998, %v3222
    %v3224 = vpop.f32.mrb[0].mxu0
    %3225 = vmatprep.mubr.f32.mxu0 0.0
    %3226 = vmatmul.mubr.f32.gmra.mrb[0].mxu0 %v2764
    %v3227 = vpop.f32.mrb[0].mxu0
    %v3228 = vadd.f32 %v3003, %v3227
    %v3229 = vpop.f32.mrb[0].mxu0
    %3230 = vmatprep.mubr.f32.mxu0 0.0
    %3231 = vmatmul.mubr.f32.gmra.mrb[0].mxu0 %v2765
    %v3232 = vpop.f32.mrb[0].mxu0
    %v3233 = vadd.f32 %v3008, %v3232
    %v3234 = vpop.f32.mrb[0].mxu0
    %3235 = vmatprep.mubr.f32.mxu0 0.0
    %3236 = vmatmul.mubr.f32.gmra.mrb[0].mxu0 %v2766
    %v3237 = vpop.f32.mrb[0].mxu0
    %v3238 = vadd.f32 %v3013, %v3237
    %v3239 = vpop.f32.mrb[0].mxu0
    %3240 = vmatprep.mubr.f32.mxu0 0.0
    %3241 = vmatmul.mubr.f32.gmra.mrb[0].mxu0 %v2767
    %v3242 = vpop.f32.mrb[0].mxu0
    %v3243 = vadd.f32 %v3018, %v3242
    %v3244 = vpop.f32.mrb[0].mxu0
    %3245 = vmatprep.mubr.f32.mxu0 0.0
    %3246 = vmatmul.mubr.f32.gmra.mrb[0].mxu0 %v2768
    %v3247 = vpop.f32.mrb[0].mxu0
    %v3248 = vadd.f32 %v3023, %v3247
    %v3249 = vpop.f32.mrb[0].mxu0
    %3250 = vmatprep.mubr.f32.mxu0 0.0
    %3251 = vmatmul.mubr.f32.gmra.mrb[0].mxu0 %v2769
    %v3252 = vpop.f32.mrb[0].mxu0
    %v3253 = vadd.f32 %v3028, %v3252
    %v3254 = vpop.f32.mrb[0].mxu0
    %3255 = vmatprep.mubr.f32.mxu0 0.0
    %3256 = vmatmul.mubr.f32.gmra.mrb[0].mxu0 %v2770
    %v3257 = vpop.f32.mrb[0].mxu0
    %v3258 = vadd.f32 %v3033, %v3257
    %v3259 = vpop.f32.mrb[0].mxu0
    %3260 = vmatprep.mubr.f32.mxu0 0.0
    %3261 = vmatmul.mubr.f32.gmra.mrb[0].mxu0 %v2771
    %v3262 = vpop.f32.mrb[0].mxu0
    %v3263 = vadd.f32 %v3038, %v3262
    %v3264 = vpop.f32.mrb[0].mxu0
    %3265 = vmatprep.mubr.f32.mxu0 0.0
    %3266 = vmatmul.mubr.f32.gmra.mrb[0].mxu0 %v2772
    %v3267 = vpop.f32.mrb[0].mxu0
    %v3268 = vadd.f32 %v3043, %v3267
    %v3269 = vpop.f32.mrb[0].mxu0
    %3270 = vmatprep.mubr.f32.mxu0 0.0
    %3271 = vmatmul.mubr.f32.gmra.mrb[0].mxu0 %v2773
    %v3272 = vpop.f32.mrb[0].mxu0
    %v3273 = vadd.f32 %v3048, %v3272
    %v3274 = vpop.f32.mrb[0].mxu0
    %3275 = vmatprep.mubr.f32.mxu0 0.0
    %3276 = vmatmul.mubr.f32.gmra.mrb[0].mxu0 %v2774
    %v3277 = vpop.f32.mrb[0].mxu0
    %v3278 = vadd.f32 %v3053, %v3277
    %v3279 = vpop.f32.mrb[0].mxu0
    %3280 = vmatprep.mubr.f32.mxu0 0.0
    %3281 = vmatmul.mubr.f32.gmra.mrb[0].mxu0 %v2775
    %v3282 = vpop.f32.mrb[0].mxu0
    %v3283 = vadd.f32 %v3058, %v3282
    %v3284 = vpop.f32.mrb[0].mxu0
    %3285 = vmatprep.mubr.f32.mxu0 0.0
    %3286 = vmatmul.mubr.f32.gmra.mrb[0].mxu0 %v2776
    %v3287 = vpop.f32.mrb[0].mxu0
    %v3288 = vadd.f32 %v3063, %v3287
    %v3289 = vpop.f32.mrb[0].mxu0
    %3290 = vdwg.mxu0
    %v3291 = vld [vmem:[#allocation3 + $0x8] sm:$0xff]
    %v3292 = vld [vmem:[#allocation3 + $0x10] sm:$0xff]
    %v3293 = vld [vmem:[#allocation3 + $0x18] sm:$0xff]
    %v3294 = vld [vmem:[#allocation3 + $0x20] sm:$0xff]
    %v3295 = vld [vmem:[#allocation3 + $0x28] sm:$0xff]
    %v3296 = vld [vmem:[#allocation3 + $0x30] sm:$0xff]
    %v3297 = vld [vmem:[#allocation3 + $0x38] sm:$0xff]
    %v3298 = vld [vmem:[#allocation3 + $0x40] sm:$0xff]
    %v3299 = vld [vmem:[#allocation3 + $0x48] sm:$0xff]
    %v3300 = vld [vmem:[#allocation3 + $0x50] sm:$0xff]
    %v3301 = vld [vmem:[#allocation3 + $0x58] sm:$0xff]
    %v3302 = vld [vmem:[#allocation3 + $0x60] sm:$0xff]
    %v3303 = vld [vmem:[#allocation3 + $0x68] sm:$0xff]
    %v3304 = vld [vmem:[#allocation3 + $0x70] sm:$0xff]
    %v3305 = vld [vmem:[#allocation3 + $0x78] sm:$0xff]
    %v3306 = vld [vmem:[#allocation3 + $0x80] sm:$0xff]
    %v3307 = vld [vmem:[#allocation3 + $0x88] sm:$0xff]
    %v3308 = vld [vmem:[#allocation3 + $0x90] sm:$0xff]
    %v3309 = vld [vmem:[#allocation3 + $0x98] sm:$0xff]
    %v3310 = vld [vmem:[#allocation3 + $0xa0] sm:$0xff]
    %v3311 = vld [vmem:[#allocation3 + $0xa8] sm:$0xff]
    %v3312 = vld [vmem:[#allocation3 + $0xb0] sm:$0xff]
    %v3313 = vld [vmem:[#allocation3 + $0xb8] sm:$0xff]
    %v3314 = vld [vmem:[#allocation3 + $0xc0] sm:$0xff]
    %v3315 = vld [vmem:[#allocation3 + $0xc8] sm:$0xff]
    %v3316 = vld [vmem:[#allocation3 + $0xd0] sm:$0xff]
    %v3317 = vld [vmem:[#allocation3 + $0xd8] sm:$0xff]
    %v3318 = vld [vmem:[#allocation3 + $0xe0] sm:$0xff]
    %v3319 = vld [vmem:[#allocation3 + $0xe8] sm:$0xff]
    %v3320 = vld [vmem:[#allocation3 + $0xf0] sm:$0xff]
    %v3321 = vld [vmem:[#allocation3 + $0xf8] sm:$0xff]
    %v3322 = vld [vmem:[#allocation3 + $0x100] sm:$0xff]
    %v3323 = vld [vmem:[%s3 + $0x100] sm:$0xff]
    %v3324 = vld [vmem:[%s3 + $0x108] sm:$0xff]
    %v3325 = vld [vmem:[%s3 + $0x110] sm:$0xff]
    %v3326 = vld [vmem:[%s3 + $0x118] sm:$0xff]
    %v3327 = vld [vmem:[%s3 + $0x120] sm:$0xff]
    %v3328 = vld [vmem:[%s3 + $0x128] sm:$0xff]
    %v3329 = vld [vmem:[%s3 + $0x130] sm:$0xff]
    %v3330 = vld [vmem:[%s3 + $0x138] sm:$0xff]
    %v3331 = vld [vmem:[%s3 + $0x140] sm:$0xff]
    %v3332 = vld [vmem:[%s3 + $0x148] sm:$0xff]
    %v3333 = vld [vmem:[%s3 + $0x150] sm:$0xff]
    %v3334 = vld [vmem:[%s3 + $0x158] sm:$0xff]
    %v3335 = vld [vmem:[%s3 + $0x160] sm:$0xff]
    %v3336 = vld [vmem:[%s3 + $0x168] sm:$0xff]
    %v3337 = vld [vmem:[%s3 + $0x170] sm:$0xff]
    %v3338 = vld [vmem:[%s3 + $0x178] sm:$0xff]
    %3339 = vmatprep.subr.mxu0 0.0
    %3340 = vmatpush1.msra.mxu0 %v3323
    %3341 = vmatprep.subr.mxu0 0.0
    %3342 = vmatpush1.msra.mxu0 %v3324
    %3343 = vmatprep.subr.mxu0 0.0
    %3344 = vmatpush1.msra.mxu0 %v3325
    %3345 = vmatprep.subr.mxu0 0.0
    %3346 = vmatpush1.msra.mxu0 %v3326
    %3347 = vmatprep.subr.mxu0 0.0
    %3348 = vmatpush1.msra.mxu0 %v3327
    %3349 = vmatprep.subr.mxu0 0.0
    %3350 = vmatpush1.msra.mxu0 %v3328
    %3351 = vmatprep.subr.mxu0 0.0
    %3352 = vmatpush1.msra.mxu0 %v3329
    %3353 = vmatprep.subr.mxu0 0.0
    %3354 = vmatpush1.msra.mxu0 %v3330
    %3355 = vmatprep.subr.mxu0 0.0
    %3356 = vmatpush1.msra.mxu0 %v3331
    %3357 = vmatprep.subr.mxu0 0.0
    %3358 = vmatpush1.msra.mxu0 %v3332
    %3359 = vmatprep.subr.mxu0 0.0
    %3360 = vmatpush1.msra.mxu0 %v3333
    %3361 = vmatprep.subr.mxu0 0.0
    %3362 = vmatpush1.msra.mxu0 %v3334
    %3363 = vmatprep.subr.mxu0 0.0
    %3364 = vmatpush1.msra.mxu0 %v3335
    %3365 = vmatprep.subr.mxu0 0.0
    %3366 = vmatpush1.msra.mxu0 %v3336
    %3367 = vmatprep.subr.mxu0 0.0
    %3368 = vmatpush1.msra.mxu0 %v3337
    %3369 = vmatprep.subr.mxu0 0.0
    %3370 = vmatpush1.msra.mxu0 %v3338
    %3371 = vmatprep.subr.mxu0 0.0
    %3372 = vmatpush1.msra.mxu0 0.0
    %3373 = vmatprep.subr.mxu0 0.0
    %3374 = vmatpush1.msra.mxu0 0.0
    %3375 = vmatprep.subr.mxu0 0.0
    %3376 = vmatpush1.msra.mxu0 0.0
    %3377 = vmatprep.subr.mxu0 0.0
    %3378 = vmatpush1.msra.mxu0 0.0
    %3379 = vmatprep.subr.mxu0 0.0
    %3380 = vmatpush1.msra.mxu0 0.0
    %3381 = vmatprep.subr.mxu0 0.0
    %3382 = vmatpush1.msra.mxu0 0.0
    %3383 = vmatprep.subr.mxu0 0.0
    %3384 = vmatpush1.msra.mxu0 0.0
    %3385 = vmatprep.subr.mxu0 0.0
    %3386 = vmatpush1.msra.mxu0 0.0
    %3387 = vmatprep.subr.mxu0 0.0
    %3388 = vmatpush1.msra.mxu0 0.0
    %3389 = vmatprep.subr.mxu0 0.0
    %3390 = vmatpush1.msra.mxu0 0.0
    %3391 = vmatprep.subr.mxu0 0.0
    %3392 = vmatpush1.msra.mxu0 0.0
    %3393 = vmatprep.subr.mxu0 0.0
    %3394 = vmatpush1.msra.mxu0 0.0
    %3395 = vmatprep.subr.mxu0 0.0
    %3396 = vmatpush1.msra.mxu0 0.0
    %3397 = vmatprep.subr.mxu0 0.0
    %3398 = vmatpush1.msra.mxu0 0.0
    %3399 = vmatprep.subr.mxu0 0.0
    %3400 = vmatpush1.msra.mxu0 0.0
    %3401 = vmatprep.subr.mxu0 0.0
    %3402 = vmatpush1.msra.mxu0 0.0
    %3403 = vmatprep.mubr.f32.mxu0 0.0
    %3404 = vmatmul.mubr.f32.gmra.mrb[0].mxu0 %v3291
    %v3405 = vpop.f32.mrb[0].mxu0
    %v3406 = vadd.f32 0.0, %v3405
    %v3407 = vpop.f32.mrb[0].mxu0
    %3408 = vmatprep.mubr.f32.mxu0 0.0
    %3409 = vmatmul.mubr.f32.gmra.mrb[0].mxu0 %v3292
    %v3410 = vpop.f32.mrb[0].mxu0
    %v3411 = vadd.f32 0.0, %v3410
    %v3412 = vpop.f32.mrb[0].mxu0
    %3413 = vmatprep.mubr.f32.mxu0 0.0
    %3414 = vmatmul.mubr.f32.gmra.mrb[0].mxu0 %v3293
    %v3415 = vpop.f32.mrb[0].mxu0
    %v3416 = vadd.f32 0.0, %v3415
    %v3417 = vpop.f32.mrb[0].mxu0
    %3418 = vmatprep.mubr.f32.mxu0 0.0
    %3419 = vmatmul.mubr.f32.gmra.mrb[0].mxu0 %v3294
    %v3420 = vpop.f32.mrb[0].mxu0
    %v3421 = vadd.f32 0.0, %v3420
    %v3422 = vpop.f32.mrb[0].mxu0
    %3423 = vmatprep.mubr.f32.mxu0 0.0
    %3424 = vmatmul.mubr.f32.gmra.mrb[0].mxu0 %v3295
    %v3425 = vpop.f32.mrb[0].mxu0
    %v3426 = vadd.f32 0.0, %v3425
    %v3427 = vpop.f32.mrb[0].mxu0
    %3428 = vmatprep.mubr.f32.mxu0 0.0
    %3429 = vmatmul.mubr.f32.gmra.mrb[0].mxu0 %v3296
    %v3430 = vpop.f32.mrb[0].mxu0
    %v3431 = vadd.f32 0.0, %v3430
    %v3432 = vpop.f32.mrb[0].mxu0
    %3433 = vmatprep.mubr.f32.mxu0 0.0
    %3434 = vmatmul.mubr.f32.gmra.mrb[0].mxu0 %v3297
    %v3435 = vpop.f32.mrb[0].mxu0
    %v3436 = vadd.f32 0.0, %v3435
    %v3437 = vpop.f32.mrb[0].mxu0
    %3438 = vmatprep.mubr.f32.mxu0 0.0
    %3439 = vmatmul.mubr.f32.gmra.mrb[0].mxu0 %v3298
    %v3440 = vpop.f32.mrb[0].mxu0
    %v3441 = vadd.f32 0.0, %v3440
    %v3442 = vpop.f32.mrb[0].mxu0
    %3443 = vmatprep.mubr.f32.mxu0 0.0
    %3444 = vmatmul.mubr.f32.gmra.mrb[0].mxu0 %v3299
    %v3445 = vpop.f32.mrb[0].mxu0
    %v3446 = vadd.f32 0.0, %v3445
    %v3447 = vpop.f32.mrb[0].mxu0
    %3448 = vmatprep.mubr.f32.mxu0 0.0
    %3449 = vmatmul.mubr.f32.gmra.mrb[0].mxu0 %v3300
    %v3450 = vpop.f32.mrb[0].mxu0
    %v3451 = vadd.f32 0.0, %v3450
    %v3452 = vpop.f32.mrb[0].mxu0
    %3453 = vmatprep.mubr.f32.mxu0 0.0
    %3454 = vmatmul.mubr.f32.gmra.mrb[0].mxu0 %v3301
    %v3455 = vpop.f32.mrb[0].mxu0
    %v3456 = vadd.f32 0.0, %v3455
    %v3457 = vpop.f32.mrb[0].mxu0
    %3458 = vmatprep.mubr.f32.mxu0 0.0
    %3459 = vmatmul.mubr.f32.gmra.mrb[0].mxu0 %v3302
    %v3460 = vpop.f32.mrb[0].mxu0
    %v3461 = vadd.f32 0.0, %v3460
    %v3462 = vpop.f32.mrb[0].mxu0
    %3463 = vmatprep.mubr.f32.mxu0 0.0
    %3464 = vmatmul.mubr.f32.gmra.mrb[0].mxu0 %v3303
    %v3465 = vpop.f32.mrb[0].mxu0
    %v3466 = vadd.f32 0.0, %v3465
    %v3467 = vpop.f32.mrb[0].mxu0
    %3468 = vmatprep.mubr.f32.mxu0 0.0
    %3469 = vmatmul.mubr.f32.gmra.mrb[0].mxu0 %v3304
    %v3470 = vpop.f32.mrb[0].mxu0
    %v3471 = vadd.f32 0.0, %v3470
    %v3472 = vpop.f32.mrb[0].mxu0
    %3473 = vmatprep.mubr.f32.mxu0 0.0
    %3474 = vmatmul.mubr.f32.gmra.mrb[0].mxu0 %v3305
    %v3475 = vpop.f32.mrb[0].mxu0
    %v3476 = vadd.f32 0.0, %v3475
    %v3477 = vpop.f32.mrb[0].mxu0
    %3478 = vmatprep.mubr.f32.mxu0 0.0
    %3479 = vmatmul.mubr.f32.gmra.mrb[0].mxu0 %v3306
    %v3480 = vpop.f32.mrb[0].mxu0
    %v3481 = vadd.f32 0.0, %v3480
    %v3482 = vpop.f32.mrb[0].mxu0
    %3483 = vmatprep.mubr.f32.mxu0 0.0
    %3484 = vmatmul.mubr.f32.gmra.mrb[0].mxu0 %v3307
    %v3485 = vpop.f32.mrb[0].mxu0
    %v3486 = vadd.f32 0.0, %v3485
    %v3487 = vpop.f32.mrb[0].mxu0
    %3488 = vmatprep.mubr.f32.mxu0 0.0
    %3489 = vmatmul.mubr.f32.gmra.mrb[0].mxu0 %v3308
    %v3490 = vpop.f32.mrb[0].mxu0
    %v3491 = vadd.f32 0.0, %v3490
    %v3492 = vpop.f32.mrb[0].mxu0
    %3493 = vmatprep.mubr.f32.mxu0 0.0
    %3494 = vmatmul.mubr.f32.gmra.mrb[0].mxu0 %v3309
    %v3495 = vpop.f32.mrb[0].mxu0
    %v3496 = vadd.f32 0.0, %v3495
    %v3497 = vpop.f32.mrb[0].mxu0
    %3498 = vmatprep.mubr.f32.mxu0 0.0
    %3499 = vmatmul.mubr.f32.gmra.mrb[0].mxu0 %v3310
    %v3500 = vpop.f32.mrb[0].mxu0
    %v3501 = vadd.f32 0.0, %v3500
    %v3502 = vpop.f32.mrb[0].mxu0
    %3503 = vmatprep.mubr.f32.mxu0 0.0
    %3504 = vmatmul.mubr.f32.gmra.mrb[0].mxu0 %v3311
    %v3505 = vpop.f32.mrb[0].mxu0
    %v3506 = vadd.f32 0.0, %v3505
    %v3507 = vpop.f32.mrb[0].mxu0
    %3508 = vmatprep.mubr.f32.mxu0 0.0
    %3509 = vmatmul.mubr.f32.gmra.mrb[0].mxu0 %v3312
    %v3510 = vpop.f32.mrb[0].mxu0
    %v3511 = vadd.f32 0.0, %v3510
    %v3512 = vpop.f32.mrb[0].mxu0
    %3513 = vmatprep.mubr.f32.mxu0 0.0
    %3514 = vmatmul.mubr.f32.gmra.mrb[0].mxu0 %v3313
    %v3515 = vpop.f32.mrb[0].mxu0
    %v3516 = vadd.f32 0.0, %v3515
    %v3517 = vpop.f32.mrb[0].mxu0
    %3518 = vmatprep.mubr.f32.mxu0 0.0
    %3519 = vmatmul.mubr.f32.gmra.mrb[0].mxu0 %v3314
    %v3520 = vpop.f32.mrb[0].mxu0
    %v3521 = vadd.f32 0.0, %v3520
    %v3522 = vpop.f32.mrb[0].mxu0
    %3523 = vmatprep.mubr.f32.mxu0 0.0
    %3524 = vmatmul.mubr.f32.gmra.mrb[0].mxu0 %v3315
    %v3525 = vpop.f32.mrb[0].mxu0
    %v3526 = vadd.f32 0.0, %v3525
    %v3527 = vpop.f32.mrb[0].mxu0
    %3528 = vmatprep.mubr.f32.mxu0 0.0
    %3529 = vmatmul.mubr.f32.gmra.mrb[0].mxu0 %v3316
    %v3530 = vpop.f32.mrb[0].mxu0
    %v3531 = vadd.f32 0.0, %v3530
    %v3532 = vpop.f32.mrb[0].mxu0
    %3533 = vmatprep.mubr.f32.mxu0 0.0
    %3534 = vmatmul.mubr.f32.gmra.mrb[0].mxu0 %v3317
    %v3535 = vpop.f32.mrb[0].mxu0
    %v3536 = vadd.f32 0.0, %v3535
    %v3537 = vpop.f32.mrb[0].mxu0
    %3538 = vmatprep.mubr.f32.mxu0 0.0
    %3539 = vmatmul.mubr.f32.gmra.mrb[0].mxu0 %v3318
    %v3540 = vpop.f32.mrb[0].mxu0
    %v3541 = vadd.f32 0.0, %v3540
    %v3542 = vpop.f32.mrb[0].mxu0
    %3543 = vmatprep.mubr.f32.mxu0 0.0
    %3544 = vmatmul.mubr.f32.gmra.mrb[0].mxu0 %v3319
    %v3545 = vpop.f32.mrb[0].mxu0
    %v3546 = vadd.f32 0.0, %v3545
    %v3547 = vpop.f32.mrb[0].mxu0
    %3548 = vmatprep.mubr.f32.mxu0 0.0
    %3549 = vmatmul.mubr.f32.gmra.mrb[0].mxu0 %v3320
    %v3550 = vpop.f32.mrb[0].mxu0
    %v3551 = vadd.f32 0.0, %v3550
    %v3552 = vpop.f32.mrb[0].mxu0
    %3553 = vmatprep.mubr.f32.mxu0 0.0
    %3554 = vmatmul.mubr.f32.gmra.mrb[0].mxu0 %v3321
    %v3555 = vpop.f32.mrb[0].mxu0
    %v3556 = vadd.f32 0.0, %v3555
    %v3557 = vpop.f32.mrb[0].mxu0
    %3558 = vmatprep.mubr.f32.mxu0 0.0
    %3559 = vmatmul.mubr.f32.gmra.mrb[0].mxu0 %v3322
    %v3560 = vpop.f32.mrb[0].mxu0
    %v3561 = vadd.f32 0.0, %v3560
    %v3562 = vpop.f32.mrb[0].mxu0
    %3563 = vdwg.mxu0
    %v3564 = vadd.f32 %v3133, %v3406
    %v3565 = vadd.f32 %v3138, %v3411
    %v3566 = vadd.f32 %v3143, %v3416
    %v3567 = vadd.f32 %v3148, %v3421
    %v3568 = vadd.f32 %v3153, %v3426
    %v3569 = vadd.f32 %v3158, %v3431
    %v3570 = vadd.f32 %v3163, %v3436
    %v3571 = vadd.f32 %v3168, %v3441
    %v3572 = vadd.f32 %v3173, %v3446
    %v3573 = vadd.f32 %v3178, %v3451
    %v3574 = vadd.f32 %v3183, %v3456
    %v3575 = vadd.f32 %v3188, %v3461
    %v3576 = vadd.f32 %v3193, %v3466
    %v3577 = vadd.f32 %v3198, %v3471
    %v3578 = vadd.f32 %v3203, %v3476
    %v3579 = vadd.f32 %v3208, %v3481
    %v3580 = vadd.f32 %v3213, %v3486
    %v3581 = vadd.f32 %v3218, %v3491
    %v3582 = vadd.f32 %v3223, %v3496
    %v3583 = vadd.f32 %v3228, %v3501
    %v3584 = vadd.f32 %v3233, %v3506
    %v3585 = vadd.f32 %v3238, %v3511
    %v3586 = vadd.f32 %v3243, %v3516
    %v3587 = vadd.f32 %v3248, %v3521
    %v3588 = vadd.f32 %v3253, %v3526
    %v3589 = vadd.f32 %v3258, %v3531
    %v3590 = vadd.f32 %v3263, %v3536
    %v3591 = vadd.f32 %v3268, %v3541
    %v3592 = vadd.f32 %v3273, %v3546
    %v3593 = vadd.f32 %v3278, %v3551
    %v3594 = vadd.f32 %v3283, %v3556
    %v3595 = vadd.f32 %v3288, %v3561
    %v3596 = vld [vmem:[#allocation3 + $0x9] sm:$0xff]
    %v3597 = vld [vmem:[#allocation3 + $0x11] sm:$0xff]
    %v3598 = vld [vmem:[#allocation3 + $0x19] sm:$0xff]
    %v3599 = vld [vmem:[#allocation3 + $0x21] sm:$0xff]
    %v3600 = vld [vmem:[#allocation3 + $0x29] sm:$0xff]
    %v3601 = vld [vmem:[#allocation3 + $0x31] sm:$0xff]
    %v3602 = vld [vmem:[#allocation3 + $0x39] sm:$0xff]
    %v3603 = vld [vmem:[#allocation3 + $0x41] sm:$0xff]
    %v3604 = vld [vmem:[#allocation3 + $0x49] sm:$0xff]
    %v3605 = vld [vmem:[#allocation3 + $0x51] sm:$0xff]
    %v3606 = vld [vmem:[#allocation3 + $0x59] sm:$0xff]
    %v3607 = vld [vmem:[#allocation3 + $0x61] sm:$0xff]
    %v3608 = vld [vmem:[#allocation3 + $0x69] sm:$0xff]
    %v3609 = vld [vmem:[#allocation3 + $0x71] sm:$0xff]
    %v3610 = vld [vmem:[#allocation3 + $0x79] sm:$0xff]
    %v3611 = vld [vmem:[#allocation3 + $0x81] sm:$0xff]
    %v3612 = vld [vmem:[#allocation3 + $0x89] sm:$0xff]
    %v3613 = vld [vmem:[#allocation3 + $0x91] sm:$0xff]
    %v3614 = vld [vmem:[#allocation3 + $0x99] sm:$0xff]
    %v3615 = vld [vmem:[#allocation3 + $0xa1] sm:$0xff]
    %v3616 = vld [vmem:[#allocation3 + $0xa9] sm:$0xff]
    %v3617 = vld [vmem:[#allocation3 + $0xb1] sm:$0xff]
    %v3618 = vld [vmem:[#allocation3 + $0xb9] sm:$0xff]
    %v3619 = vld [vmem:[#allocation3 + $0xc1] sm:$0xff]
    %v3620 = vld [vmem:[#allocation3 + $0xc9] sm:$0xff]
    %v3621 = vld [vmem:[#allocation3 + $0xd1] sm:$0xff]
    %v3622 = vld [vmem:[#allocation3 + $0xd9] sm:$0xff]
    %v3623 = vld [vmem:[#allocation3 + $0xe1] sm:$0xff]
    %v3624 = vld [vmem:[#allocation3 + $0xe9] sm:$0xff]
    %v3625 = vld [vmem:[#allocation3 + $0xf1] sm:$0xff]
    %v3626 = vld [vmem:[#allocation3 + $0xf9] sm:$0xff]
    %v3627 = vld [vmem:[#allocation3 + $0x101] sm:$0xff]
    %v3628 = vld [vmem:[%s3 + $0x180] sm:$0xff]
    %v3629 = vld [vmem:[%s3 + $0x188] sm:$0xff]
    %v3630 = vld [vmem:[%s3 + $0x190] sm:$0xff]
    %v3631 = vld [vmem:[%s3 + $0x198] sm:$0xff]
    %v3632 = vld [vmem:[%s3 + $0x1a0] sm:$0xff]
    %v3633 = vld [vmem:[%s3 + $0x1a8] sm:$0xff]
    %v3634 = vld [vmem:[%s3 + $0x1b0] sm:$0xff]
    %v3635 = vld [vmem:[%s3 + $0x1b8] sm:$0xff]
    %v3636 = vld [vmem:[%s3 + $0x1c0] sm:$0xff]
    %v3637 = vld [vmem:[%s3 + $0x1c8] sm:$0xff]
    %v3638 = vld [vmem:[%s3 + $0x1d0] sm:$0xff]
    %v3639 = vld [vmem:[%s3 + $0x1d8] sm:$0xff]
    %v3640 = vld [vmem:[%s3 + $0x1e0] sm:$0xff]
    %v3641 = vld [vmem:[%s3 + $0x1e8] sm:$0xff]
    %v3642 = vld [vmem:[%s3 + $0x1f0] sm:$0xff]
    %v3643 = vld [vmem:[%s3 + $0x1f8] sm:$0xff]
    %3644 = vmatprep.subr.mxu0 0.0
    %3645 = vmatpush1.msra.mxu0 %v3628
    %3646 = vmatprep.subr.mxu0 0.0
    %3647 = vmatpush1.msra.mxu0 %v3629
    %3648 = vmatprep.subr.mxu0 0.0
    %3649 = vmatpush1.msra.mxu0 %v3630
    %3650 = vmatprep.subr.mxu0 0.0
    %3651 = vmatpush1.msra.mxu0 %v3631
    %3652 = vmatprep.subr.mxu0 0.0
    %3653 = vmatpush1.msra.mxu0 %v3632
    %3654 = vmatprep.subr.mxu0 0.0
    %3655 = vmatpush1.msra.mxu0 %v3633
    %3656 = vmatprep.subr.mxu0 0.0
    %3657 = vmatpush1.msra.mxu0 %v3634
    %3658 = vmatprep.subr.mxu0 0.0
    %3659 = vmatpush1.msra.mxu0 %v3635
    %3660 = vmatprep.subr.mxu0 0.0
    %3661 = vmatpush1.msra.mxu0 %v3636
    %3662 = vmatprep.subr.mxu0 0.0
    %3663 = vmatpush1.msra.mxu0 %v3637
    %3664 = vmatprep.subr.mxu0 0.0
    %3665 = vmatpush1.msra.mxu0 %v3638
    %3666 = vmatprep.subr.mxu0 0.0
    %3667 = vmatpush1.msra.mxu0 %v3639
    %3668 = vmatprep.subr.mxu0 0.0
    %3669 = vmatpush1.msra.mxu0 %v3640
    %3670 = vmatprep.subr.mxu0 0.0
    %3671 = vmatpush1.msra.mxu0 %v3641
    %3672 = vmatprep.subr.mxu0 0.0
    %3673 = vmatpush1.msra.mxu0 %v3642
    %3674 = vmatprep.subr.mxu0 0.0
    %3675 = vmatpush1.msra.mxu0 %v3643
    %3676 = vmatprep.subr.mxu0 0.0
    %3677 = vmatpush1.msra.mxu0 0.0
    %3678 = vmatprep.subr.mxu0 0.0
    %3679 = vmatpush1.msra.mxu0 0.0
    %3680 = vmatprep.subr.mxu0 0.0
    %3681 = vmatpush1.msra.mxu0 0.0
    %3682 = vmatprep.subr.mxu0 0.0
    %3683 = vmatpush1.msra.mxu0 0.0
    %3684 = vmatprep.subr.mxu0 0.0
    %3685 = vmatpush1.msra.mxu0 0.0
    %3686 = vmatprep.subr.mxu0 0.0
    %3687 = vmatpush1.msra.mxu0 0.0
    %3688 = vmatprep.subr.mxu0 0.0
    %3689 = vmatpush1.msra.mxu0 0.0
    %3690 = vmatprep.subr.mxu0 0.0
    %3691 = vmatpush1.msra.mxu0 0.0
    %3692 = vmatprep.subr.mxu0 0.0
    %3693 = vmatpush1.msra.mxu0 0.0
    %3694 = vmatprep.subr.mxu0 0.0
    %3695 = vmatpush1.msra.mxu0 0.0
    %3696 = vmatprep.subr.mxu0 0.0
    %3697 = vmatpush1.msra.mxu0 0.0
    %3698 = vmatprep.subr.mxu0 0.0
    %3699 = vmatpush1.msra.mxu0 0.0
    %3700 = vmatprep.subr.mxu0 0.0
    %3701 = vmatpush1.msra.mxu0 0.0
    %3702 = vmatprep.subr.mxu0 0.0
    %3703 = vmatpush1.msra.mxu0 0.0
    %3704 = vmatprep.subr.mxu0 0.0
    %3705 = vmatpush1.msra.mxu0 0.0
    %3706 = vmatprep.subr.mxu0 0.0
    %3707 = vmatpush1.msra.mxu0 0.0
    %3708 = vmatprep.mubr.f32.mxu0 0.0
    %3709 = vmatmul.mubr.f32.gmra.mrb[0].mxu0 %v3596
    %v3710 = vpop.f32.mrb[0].mxu0
    %v3711 = vadd.f32 0.0, %v3710
    %v3712 = vpop.f32.mrb[0].mxu0
    %3713 = vmatprep.mubr.f32.mxu0 0.0
    %3714 = vmatmul.mubr.f32.gmra.mrb[0].mxu0 %v3597
    %v3715 = vpop.f32.mrb[0].mxu0
    %v3716 = vadd.f32 0.0, %v3715
    %v3717 = vpop.f32.mrb[0].mxu0
    %3718 = vmatprep.mubr.f32.mxu0 0.0
    %3719 = vmatmul.mubr.f32.gmra.mrb[0].mxu0 %v3598
    %v3720 = vpop.f32.mrb[0].mxu0
    %v3721 = vadd.f32 0.0, %v3720
    %v3722 = vpop.f32.mrb[0].mxu0
    %3723 = vmatprep.mubr.f32.mxu0 0.0
    %3724 = vmatmul.mubr.f32.gmra.mrb[0].mxu0 %v3599
    %v3725 = vpop.f32.mrb[0].mxu0
    %v3726 = vadd.f32 0.0, %v3725
    %v3727 = vpop.f32.mrb[0].mxu0
    %3728 = vmatprep.mubr.f32.mxu0 0.0
    %3729 = vmatmul.mubr.f32.gmra.mrb[0].mxu0 %v3600
    %v3730 = vpop.f32.mrb[0].mxu0
    %v3731 = vadd.f32 0.0, %v3730
    %v3732 = vpop.f32.mrb[0].mxu0
    %3733 = vmatprep.mubr.f32.mxu0 0.0
    %3734 = vmatmul.mubr.f32.gmra.mrb[0].mxu0 %v3601
    %v3735 = vpop.f32.mrb[0].mxu0
    %v3736 = vadd.f32 0.0, %v3735
    %v3737 = vpop.f32.mrb[0].mxu0
    %3738 = vmatprep.mubr.f32.mxu0 0.0
    %3739 = vmatmul.mubr.f32.gmra.mrb[0].mxu0 %v3602
    %v3740 = vpop.f32.mrb[0].mxu0
    %v3741 = vadd.f32 0.0, %v3740
    %v3742 = vpop.f32.mrb[0].mxu0
    %3743 = vmatprep.mubr.f32.mxu0 0.0
    %3744 = vmatmul.mubr.f32.gmra.mrb[0].mxu0 %v3603
    %v3745 = vpop.f32.mrb[0].mxu0
    %v3746 = vadd.f32 0.0, %v3745
    %v3747 = vpop.f32.mrb[0].mxu0
    %3748 = vmatprep.mubr.f32.mxu0 0.0
    %3749 = vmatmul.mubr.f32.gmra.mrb[0].mxu0 %v3604
    %v3750 = vpop.f32.mrb[0].mxu0
    %v3751 = vadd.f32 0.0, %v3750
    %v3752 = vpop.f32.mrb[0].mxu0
    %3753 = vmatprep.mubr.f32.mxu0 0.0
    %3754 = vmatmul.mubr.f32.gmra.mrb[0].mxu0 %v3605
    %v3755 = vpop.f32.mrb[0].mxu0
    %v3756 = vadd.f32 0.0, %v3755
    %v3757 = vpop.f32.mrb[0].mxu0
    %3758 = vmatprep.mubr.f32.mxu0 0.0
    %3759 = vmatmul.mubr.f32.gmra.mrb[0].mxu0 %v3606
    %v3760 = vpop.f32.mrb[0].mxu0
    %v3761 = vadd.f32 0.0, %v3760
    %v3762 = vpop.f32.mrb[0].mxu0
    %3763 = vmatprep.mubr.f32.mxu0 0.0
    %3764 = vmatmul.mubr.f32.gmra.mrb[0].mxu0 %v3607
    %v3765 = vpop.f32.mrb[0].mxu0
    %v3766 = vadd.f32 0.0, %v3765
    %v3767 = vpop.f32.mrb[0].mxu0
    %3768 = vmatprep.mubr.f32.mxu0 0.0
    %3769 = vmatmul.mubr.f32.gmra.mrb[0].mxu0 %v3608
    %v3770 = vpop.f32.mrb[0].mxu0
    %v3771 = vadd.f32 0.0, %v3770
    %v3772 = vpop.f32.mrb[0].mxu0
    %3773 = vmatprep.mubr.f32.mxu0 0.0
    %3774 = vmatmul.mubr.f32.gmra.mrb[0].mxu0 %v3609
    %v3775 = vpop.f32.mrb[0].mxu0
    %v3776 = vadd.f32 0.0, %v3775
    %v3777 = vpop.f32.mrb[0].mxu0
    %3778 = vmatprep.mubr.f32.mxu0 0.0
    %3779 = vmatmul.mubr.f32.gmra.mrb[0].mxu0 %v3610
    %v3780 = vpop.f32.mrb[0].mxu0
    %v3781 = vadd.f32 0.0, %v3780
    %v3782 = vpop.f32.mrb[0].mxu0
    %3783 = vmatprep.mubr.f32.mxu0 0.0
    %3784 = vmatmul.mubr.f32.gmra.mrb[0].mxu0 %v3611
    %v3785 = vpop.f32.mrb[0].mxu0
    %v3786 = vadd.f32 0.0, %v3785
    %v3787 = vpop.f32.mrb[0].mxu0
    %3788 = vmatprep.mubr.f32.mxu0 0.0
    %3789 = vmatmul.mubr.f32.gmra.mrb[0].mxu0 %v3612
    %v3790 = vpop.f32.mrb[0].mxu0
    %v3791 = vadd.f32 0.0, %v3790
    %v3792 = vpop.f32.mrb[0].mxu0
    %3793 = vmatprep.mubr.f32.mxu0 0.0
    %3794 = vmatmul.mubr.f32.gmra.mrb[0].mxu0 %v3613
    %v3795 = vpop.f32.mrb[0].mxu0
    %v3796 = vadd.f32 0.0, %v3795
    %v3797 = vpop.f32.mrb[0].mxu0
    %3798 = vmatprep.mubr.f32.mxu0 0.0
    %3799 = vmatmul.mubr.f32.gmra.mrb[0].mxu0 %v3614
    %v3800 = vpop.f32.mrb[0].mxu0
    %v3801 = vadd.f32 0.0, %v3800
    %v3802 = vpop.f32.mrb[0].mxu0
    %3803 = vmatprep.mubr.f32.mxu0 0.0
    %3804 = vmatmul.mubr.f32.gmra.mrb[0].mxu0 %v3615
    %v3805 = vpop.f32.mrb[0].mxu0
    %v3806 = vadd.f32 0.0, %v3805
    %v3807 = vpop.f32.mrb[0].mxu0
    %3808 = vmatprep.mubr.f32.mxu0 0.0
    %3809 = vmatmul.mubr.f32.gmra.mrb[0].mxu0 %v3616
    %v3810 = vpop.f32.mrb[0].mxu0
    %v3811 = vadd.f32 0.0, %v3810
    %v3812 = vpop.f32.mrb[0].mxu0
    %3813 = vmatprep.mubr.f32.mxu0 0.0
    %3814 = vmatmul.mubr.f32.gmra.mrb[0].mxu0 %v3617
    %v3815 = vpop.f32.mrb[0].mxu0
    %v3816 = vadd.f32 0.0, %v3815
    %v3817 = vpop.f32.mrb[0].mxu0
    %3818 = vmatprep.mubr.f32.mxu0 0.0
    %3819 = vmatmul.mubr.f32.gmra.mrb[0].mxu0 %v3618
    %v3820 = vpop.f32.mrb[0].mxu0
    %v3821 = vadd.f32 0.0, %v3820
    %v3822 = vpop.f32.mrb[0].mxu0
    %3823 = vmatprep.mubr.f32.mxu0 0.0
    %3824 = vmatmul.mubr.f32.gmra.mrb[0].mxu0 %v3619
    %v3825 = vpop.f32.mrb[0].mxu0
    %v3826 = vadd.f32 0.0, %v3825
    %v3827 = vpop.f32.mrb[0].mxu0
    %3828 = vmatprep.mubr.f32.mxu0 0.0
    %3829 = vmatmul.mubr.f32.gmra.mrb[0].mxu0 %v3620
    %v3830 = vpop.f32.mrb[0].mxu0
    %v3831 = vadd.f32 0.0, %v3830
    %v3832 = vpop.f32.mrb[0].mxu0
    %3833 = vmatprep.mubr.f32.mxu0 0.0
    %3834 = vmatmul.mubr.f32.gmra.mrb[0].mxu0 %v3621
    %v3835 = vpop.f32.mrb[0].mxu0
    %v3836 = vadd.f32 0.0, %v3835
    %v3837 = vpop.f32.mrb[0].mxu0
    %3838 = vmatprep.mubr.f32.mxu0 0.0
    %3839 = vmatmul.mubr.f32.gmra.mrb[0].mxu0 %v3622
    %v3840 = vpop.f32.mrb[0].mxu0
    %v3841 = vadd.f32 0.0, %v3840
    %v3842 = vpop.f32.mrb[0].mxu0
    %3843 = vmatprep.mubr.f32.mxu0 0.0
    %3844 = vmatmul.mubr.f32.gmra.mrb[0].mxu0 %v3623
    %v3845 = vpop.f32.mrb[0].mxu0
    %v3846 = vadd.f32 0.0, %v3845
    %v3847 = vpop.f32.mrb[0].mxu0
    %3848 = vmatprep.mubr.f32.mxu0 0.0
    %3849 = vmatmul.mubr.f32.gmra.mrb[0].mxu0 %v3624
    %v3850 = vpop.f32.mrb[0].mxu0
    %v3851 = vadd.f32 0.0, %v3850
    %v3852 = vpop.f32.mrb[0].mxu0
    %3853 = vmatprep.mubr.f32.mxu0 0.0
    %3854 = vmatmul.mubr.f32.gmra.mrb[0].mxu0 %v3625
    %v3855 = vpop.f32.mrb[0].mxu0
    %v3856 = vadd.f32 0.0, %v3855
    %v3857 = vpop.f32.mrb[0].mxu0
    %3858 = vmatprep.mubr.f32.mxu0 0.0
    %3859 = vmatmul.mubr.f32.gmra.mrb[0].mxu0 %v3626
    %v3860 = vpop.f32.mrb[0].mxu0
    %v3861 = vadd.f32 0.0, %v3860
    %v3862 = vpop.f32.mrb[0].mxu0
    %3863 = vmatprep.mubr.f32.mxu0 0.0
    %3864 = vmatmul.mubr.f32.gmra.mrb[0].mxu0 %v3627
    %v3865 = vpop.f32.mrb[0].mxu0
    %v3866 = vadd.f32 0.0, %v3865
    %v3867 = vpop.f32.mrb[0].mxu0
    %3868 = vdwg.mxu0
    %v3869 = vadd.f32 %v3564, %v3711
    %v3870 = vadd.f32 %v3565, %v3716
    %v3871 = vadd.f32 %v3566, %v3721
    %v3872 = vadd.f32 %v3567, %v3726
    %v3873 = vadd.f32 %v3568, %v3731
    %v3874 = vadd.f32 %v3569, %v3736
    %v3875 = vadd.f32 %v3570, %v3741
    %v3876 = vadd.f32 %v3571, %v3746
    %v3877 = vadd.f32 %v3572, %v3751
    %v3878 = vadd.f32 %v3573, %v3756
    %v3879 = vadd.f32 %v3574, %v3761
    %v3880 = vadd.f32 %v3575, %v3766
    %v3881 = vadd.f32 %v3576, %v3771
    %v3882 = vadd.f32 %v3577, %v3776
    %v3883 = vadd.f32 %v3578, %v3781
    %v3884 = vadd.f32 %v3579, %v3786
    %v3885 = vadd.f32 %v3580, %v3791
    %v3886 = vadd.f32 %v3581, %v3796
    %v3887 = vadd.f32 %v3582, %v3801
    %v3888 = vadd.f32 %v3583, %v3806
    %v3889 = vadd.f32 %v3584, %v3811
    %v3890 = vadd.f32 %v3585, %v3816
    %v3891 = vadd.f32 %v3586, %v3821
    %v3892 = vadd.f32 %v3587, %v3826
    %v3893 = vadd.f32 %v3588, %v3831
    %v3894 = vadd.f32 %v3589, %v3836
    %v3895 = vadd.f32 %v3590, %v3841
    %v3896 = vadd.f32 %v3591, %v3846
    %v3897 = vadd.f32 %v3592, %v3851
    %v3898 = vadd.f32 %v3593, %v3856
    %v3899 = vadd.f32 %v3594, %v3861
    %v3900 = vadd.f32 %v3595, %v3866
    %v3901 = vld [vmem:[%s4] sm:$0x1]
    %v3903 = vlaneseq
    %v3904 = vshrl.u32 %v3903, 7
    %v3905 = vsub.s32 0, %v3904
    %v3906 = vrot.slane %v3901, %v3905
    %v3908 = vadd.f32 %v3869, %v3906
    %v3909 = vadd.f32 %v3870, %v3906
    %v3910 = vadd.f32 %v3871, %v3906
    %v3911 = vadd.f32 %v3872, %v3906
    %v3912 = vadd.f32 %v3873, %v3906
    %v3913 = vadd.f32 %v3874, %v3906
    %v3914 = vadd.f32 %v3875, %v3906
    %v3915 = vadd.f32 %v3876, %v3906
    %v3916 = vadd.f32 %v3877, %v3906
    %v3917 = vadd.f32 %v3878, %v3906
    %v3918 = vadd.f32 %v3879, %v3906
    %v3919 = vadd.f32 %v3880, %v3906
    %v3920 = vadd.f32 %v3881, %v3906
    %v3921 = vadd.f32 %v3882, %v3906
    %v3922 = vadd.f32 %v3883, %v3906
    %v3923 = vadd.f32 %v3884, %v3906
    %v3924 = vadd.f32 %v3885, %v3906
    %v3925 = vadd.f32 %v3886, %v3906
    %v3926 = vadd.f32 %v3887, %v3906
    %v3927 = vadd.f32 %v3888, %v3906
    %v3928 = vadd.f32 %v3889, %v3906
    %v3929 = vadd.f32 %v3890, %v3906
    %v3930 = vadd.f32 %v3891, %v3906
    %v3931 = vadd.f32 %v3892, %v3906
    %v3932 = vadd.f32 %v3893, %v3906
    %v3933 = vadd.f32 %v3894, %v3906
    %v3934 = vadd.f32 %v3895, %v3906
    %v3935 = vadd.f32 %v3896, %v3906
    %v3936 = vadd.f32 %v3897, %v3906
    %v3937 = vadd.f32 %v3898, %v3906
    %v3938 = vadd.f32 %v3899, %v3906
    %v3939 = vadd.f32 %v3900, %v3906
    %v3940 = vmax.f32 %v3908, 0.0
    %v3941 = vmax.f32 %v3909, 0.0
    %v3942 = vmax.f32 %v3910, 0.0
    %v3943 = vmax.f32 %v3911, 0.0
    %v3944 = vmax.f32 %v3912, 0.0
    %v3945 = vmax.f32 %v3913, 0.0
    %v3946 = vmax.f32 %v3914, 0.0
    %v3947 = vmax.f32 %v3915, 0.0
    %v3948 = vmax.f32 %v3916, 0.0
    %v3949 = vmax.f32 %v3917, 0.0
    %v3950 = vmax.f32 %v3918, 0.0
    %v3951 = vmax.f32 %v3919, 0.0
    %v3952 = vmax.f32 %v3920, 0.0
    %v3953 = vmax.f32 %v3921, 0.0
    %v3954 = vmax.f32 %v3922, 0.0
    %v3955 = vmax.f32 %v3923, 0.0
    %v3956 = vmax.f32 %v3924, 0.0
    %v3957 = vmax.f32 %v3925, 0.0
    %v3958 = vmax.f32 %v3926, 0.0
    %v3959 = vmax.f32 %v3927, 0.0
    %v3960 = vmax.f32 %v3928, 0.0
    %v3961 = vmax.f32 %v3929, 0.0
    %v3962 = vmax.f32 %v3930, 0.0
    %v3963 = vmax.f32 %v3931, 0.0
    %v3964 = vmax.f32 %v3932, 0.0
    %v3965 = vmax.f32 %v3933, 0.0
    %v3966 = vmax.f32 %v3934, 0.0
    %v3967 = vmax.f32 %v3935, 0.0
    %v3968 = vmax.f32 %v3936, 0.0
    %v3969 = vmax.f32 %v3937, 0.0
    %v3970 = vmax.f32 %v3938, 0.0
    %v3971 = vmax.f32 %v3939, 0.0
    %v3972 = vld [vmem:[%s5] sm:$0x1]
    %v3973 = vld [vmem:[%s6] sm:$0x1]
    %v3974 = vlaneseq
    %v3975 = vshrl.u32 %v3974, 7
    %v3976 = vadd.s32 %v3975, 8
    %v3977 = vadd.s32 %v3975, 16
    %v3978 = vadd.s32 %v3975, 24
    %v3979 = vadd.s32 %v3975, 32
    %v3980 = vadd.s32 %v3975, 40
    %v3981 = vadd.s32 %v3975, 48
    %v3982 = vadd.s32 %v3975, 56
    %v3983 = vadd.s32 %v3975, 64
    %v3984 = vadd.s32 %v3975, 72
    %v3985 = vadd.s32 %v3975, 80
    %v3986 = vadd.s32 %v3975, 88
    %v3987 = vadd.s32 %v3975, 96
    %v3988 = vadd.s32 %v3975, 104
    %v3989 = vadd.s32 %v3975, 112
    %v3990 = vadd.s32 %v3975, 120
    %v3991 = vadd.s32 %v3975, 128
    %v3992 = vadd.s32 %v3975, 136
    %v3993 = vadd.s32 %v3975, 144
    %v3994 = vadd.s32 %v3975, 152
    %v3995 = vadd.s32 %v3975, 160
    %v3996 = vadd.s32 %v3975, 168
    %v3997 = vadd.s32 %v3975, 176
    %v3998 = vadd.s32 %v3975, 184
    %v3999 = vadd.s32 %v3975, 192
    %v4000 = vadd.s32 %v3975, 200
    %v4001 = vadd.s32 %v3975, 208
    %v4002 = vadd.s32 %v3975, 216
    %v4003 = vadd.s32 %v3975, 224
    %v4004 = vadd.s32 %v3975, 232
    %v4005 = vadd.s32 %v3975, 240
    %v4006 = vadd.s32 %v3975, 248
    %v4007 = vand.u32 %v3975, 7
    %v4008 = vand.u32 %v3976, 7
    %v4009 = vand.u32 %v3977, 7
    %v4010 = vand.u32 %v3978, 7
    %v4011 = vand.u32 %v3979, 7
    %v4012 = vand.u32 %v3980, 7
    %v4013 = vand.u32 %v3981, 7
    %v4014 = vand.u32 %v3982, 7
    %v4015 = vand.u32 %v3983, 7
    %v4016 = vand.u32 %v3984, 7
    %v4017 = vand.u32 %v3985, 7
    %v4018 = vand.u32 %v3986, 7
    %v4019 = vand.u32 %v3987, 7
    %v4020 = vand.u32 %v3988, 7
    %v4021 = vand.u32 %v3989, 7
    %v4022 = vand.u32 %v3990, 7
    %v4023 = vand.u32 %v3991, 7
    %v4024 = vand.u32 %v3992, 7
    %v4025 = vand.u32 %v3993, 7
    %v4026 = vand.u32 %v3994, 7
    %v4027 = vand.u32 %v3995, 7
    %v4028 = vand.u32 %v3996, 7
    %v4029 = vand.u32 %v3997, 7
    %v4030 = vand.u32 %v3998, 7
    %v4031 = vand.u32 %v3999, 7
    %v4032 = vand.u32 %v4000, 7
    %v4033 = vand.u32 %v4001, 7
    %v4034 = vand.u32 %v4002, 7
    %v4035 = vand.u32 %v4003, 7
    %v4036 = vand.u32 %v4004, 7
    %v4037 = vand.u32 %v4005, 7
    %v4038 = vand.u32 %v4006, 7
    %v4039 = vshra.s32 %v3975, 3
    %v4040 = vshra.s32 %v3976, 3
    %v4041 = vshra.s32 %v3977, 3
    %v4042 = vshra.s32 %v3978, 3
    %v4043 = vshra.s32 %v3979, 3
    %v4044 = vshra.s32 %v3980, 3
    %v4045 = vshra.s32 %v3981, 3
    %v4046 = vshra.s32 %v3982, 3
    %v4047 = vshra.s32 %v3983, 3
    %v4048 = vshra.s32 %v3984, 3
    %v4049 = vshra.s32 %v3985, 3
    %v4050 = vshra.s32 %v3986, 3
    %v4051 = vshra.s32 %v3987, 3
    %v4052 = vshra.s32 %v3988, 3
    %v4053 = vshra.s32 %v3989, 3
    %v4054 = vshra.s32 %v3990, 3
    %v4055 = vshra.s32 %v3991, 3
    %v4056 = vshra.s32 %v3992, 3
    %v4057 = vshra.s32 %v3993, 3
    %v4058 = vshra.s32 %v3994, 3
    %v4059 = vshra.s32 %v3995, 3
    %v4060 = vshra.s32 %v3996, 3
    %v4061 = vshra.s32 %v3997, 3
    %v4062 = vshra.s32 %v3998, 3
    %v4063 = vshra.s32 %v3999, 3
    %v4064 = vshra.s32 %v4000, 3
    %v4065 = vshra.s32 %v4001, 3
    %v4066 = vshra.s32 %v4002, 3
    %v4067 = vshra.s32 %v4003, 3
    %v4068 = vshra.s32 %v4004, 3
    %v4069 = vshra.s32 %v4005, 3
    %v4070 = vshra.s32 %v4006, 3
    %v4071 = vand.u32 %v4039, 15
    %v4072 = vand.u32 %v4040, 15
    %v4073 = vand.u32 %v4041, 15
    %v4074 = vand.u32 %v4042, 15
    %v4075 = vand.u32 %v4043, 15
    %v4076 = vand.u32 %v4044, 15
    %v4077 = vand.u32 %v4045, 15
    %v4078 = vand.u32 %v4046, 15
    %v4079 = vand.u32 %v4047, 15
    %v4080 = vand.u32 %v4048, 15
    %v4081 = vand.u32 %v4049, 15
    %v4082 = vand.u32 %v4050, 15
    %v4083 = vand.u32 %v4051, 15
    %v4084 = vand.u32 %v4052, 15
    %v4085 = vand.u32 %v4053, 15
    %v4086 = vand.u32 %v4054, 15
    %v4087 = vand.u32 %v4055, 15
    %v4088 = vand.u32 %v4056, 15
    %v4089 = vand.u32 %v4057, 15
    %v4090 = vand.u32 %v4058, 15
    %v4091 = vand.u32 %v4059, 15
    %v4092 = vand.u32 %v4060, 15
    %v4093 = vand.u32 %v4061, 15
    %v4094 = vand.u32 %v4062, 15
    %v4095 = vand.u32 %v4063, 15
    %v4096 = vand.u32 %v4064, 15
    %v4097 = vand.u32 %v4065, 15
    %v4098 = vand.u32 %v4066, 15
    %v4099 = vand.u32 %v4067, 15
    %v4100 = vand.u32 %v4068, 15
    %v4101 = vand.u32 %v4069, 15
    %v4102 = vand.u32 %v4070, 15
    %vm4103 = vcmp.lt.s32.totalorder %v4007, 7
    %vm4104 = vcmp.lt.s32.totalorder %v4008, 7
    %vm4105 = vcmp.lt.s32.totalorder %v4009, 7
    %vm4106 = vcmp.lt.s32.totalorder %v4010, 7
    %vm4107 = vcmp.lt.s32.totalorder %v4011, 7
    %vm4108 = vcmp.lt.s32.totalorder %v4012, 7
    %vm4109 = vcmp.lt.s32.totalorder %v4013, 7
    %vm4110 = vcmp.lt.s32.totalorder %v4014, 7
    %vm4111 = vcmp.lt.s32.totalorder %v4015, 7
    %vm4112 = vcmp.lt.s32.totalorder %v4016, 7
    %vm4113 = vcmp.lt.s32.totalorder %v4017, 7
    %vm4114 = vcmp.lt.s32.totalorder %v4018, 7
    %vm4115 = vcmp.lt.s32.totalorder %v4019, 7
    %vm4116 = vcmp.lt.s32.totalorder %v4020, 7
    %vm4117 = vcmp.lt.s32.totalorder %v4021, 7
    %vm4118 = vcmp.lt.s32.totalorder %v4022, 7
    %vm4119 = vcmp.lt.s32.totalorder %v4023, 7
    %vm4120 = vcmp.lt.s32.totalorder %v4024, 7
    %vm4121 = vcmp.lt.s32.totalorder %v4025, 7
    %vm4122 = vcmp.lt.s32.totalorder %v4026, 7
    %vm4123 = vcmp.lt.s32.totalorder %v4027, 7
    %vm4124 = vcmp.lt.s32.totalorder %v4028, 7
    %vm4125 = vcmp.lt.s32.totalorder %v4029, 7
    %vm4126 = vcmp.lt.s32.totalorder %v4030, 7
    %vm4127 = vcmp.lt.s32.totalorder %v4031, 7
    %vm4128 = vcmp.lt.s32.totalorder %v4032, 7
    %vm4129 = vcmp.lt.s32.totalorder %v4033, 7
    %vm4130 = vcmp.lt.s32.totalorder %v4034, 7
    %vm4131 = vcmp.lt.s32.totalorder %v4035, 7
    %vm4132 = vcmp.lt.s32.totalorder %v4036, 7
    %vm4133 = vcmp.lt.s32.totalorder %v4037, 7
    %vm4134 = vcmp.lt.s32.totalorder %v4038, 7
    %vm4135 = vcmp.lt.s32.totalorder %v4071, 9
    %vm4136 = vcmp.lt.s32.totalorder %v4072, 9
    %vm4137 = vcmp.lt.s32.totalorder %v4073, 9
    %vm4138 = vcmp.lt.s32.totalorder %v4074, 9
    %vm4139 = vcmp.lt.s32.totalorder %v4075, 9
    %vm4140 = vcmp.lt.s32.totalorder %v4076, 9
    %vm4141 = vcmp.lt.s32.totalorder %v4077, 9
    %vm4142 = vcmp.lt.s32.totalorder %v4078, 9
    %vm4143 = vcmp.lt.s32.totalorder %v4079, 9
    %vm4144 = vcmp.lt.s32.totalorder %v4080, 9
    %vm4145 = vcmp.lt.s32.totalorder %v4081, 9
    %vm4146 = vcmp.lt.s32.totalorder %v4082, 9
    %vm4147 = vcmp.lt.s32.totalorder %v4083, 9
    %vm4148 = vcmp.lt.s32.totalorder %v4084, 9
    %vm4149 = vcmp.lt.s32.totalorder %v4085, 9
    %vm4150 = vcmp.lt.s32.totalorder %v4086, 9
    %vm4151 = vcmp.lt.s32.totalorder %v4087, 9
    %vm4152 = vcmp.lt.s32.totalorder %v4088, 9
    %vm4153 = vcmp.lt.s32.totalorder %v4089, 9
    %vm4154 = vcmp.lt.s32.totalorder %v4090, 9
    %vm4155 = vcmp.lt.s32.totalorder %v4091, 9
    %vm4156 = vcmp.lt.s32.totalorder %v4092, 9
    %vm4157 = vcmp.lt.s32.totalorder %v4093, 9
    %vm4158 = vcmp.lt.s32.totalorder %v4094, 9
    %vm4159 = vcmp.lt.s32.totalorder %v4095, 9
    %vm4160 = vcmp.lt.s32.totalorder %v4096, 9
    %vm4161 = vcmp.lt.s32.totalorder %v4097, 9
    %vm4162 = vcmp.lt.s32.totalorder %v4098, 9
    %vm4163 = vcmp.lt.s32.totalorder %v4099, 9
    %vm4164 = vcmp.lt.s32.totalorder %v4100, 9
    %vm4165 = vcmp.lt.s32.totalorder %v4101, 9
    %vm4166 = vcmp.lt.s32.totalorder %v4102, 9
    %vm4167 = vmand %vm4103, %vm4135
    %vm4168 = vmand %vm4104, %vm4136
    %vm4169 = vmand %vm4105, %vm4137
    %vm4170 = vmand %vm4106, %vm4138
    %vm4171 = vmand %vm4107, %vm4139
    %vm4172 = vmand %vm4108, %vm4140
    %vm4173 = vmand %vm4109, %vm4141
    %vm4174 = vmand %vm4110, %vm4142
    %vm4175 = vmand %vm4111, %vm4143
    %vm4176 = vmand %vm4112, %vm4144
    %vm4177 = vmand %vm4113, %vm4145
    %vm4178 = vmand %vm4114, %vm4146
    %vm4179 = vmand %vm4115, %vm4147
    %vm4180 = vmand %vm4116, %vm4148
    %vm4181 = vmand %vm4117, %vm4149
    %vm4182 = vmand %vm4118, %vm4150
    %vm4183 = vmand %vm4119, %vm4151
    %vm4184 = vmand %vm4120, %vm4152
    %vm4185 = vmand %vm4121, %vm4153
    %vm4186 = vmand %vm4122, %vm4154
    %vm4187 = vmand %vm4123, %vm4155
    %vm4188 = vmand %vm4124, %vm4156
    %vm4189 = vmand %vm4125, %vm4157
    %vm4190 = vmand %vm4126, %vm4158
    %vm4191 = vmand %vm4127, %vm4159
    %vm4192 = vmand %vm4128, %vm4160
    %vm4193 = vmand %vm4129, %vm4161
    %vm4194 = vmand %vm4130, %vm4162
    %vm4195 = vmand %vm4131, %vm4163
    %vm4196 = vmand %vm4132, %vm4164
    %vm4197 = vmand %vm4133, %vm4165
    %vm4198 = vmand %vm4134, %vm4166
    %v4199 = vsel %vm4167, 1, 0
    %v4200 = vsel %vm4168, 1, 0
    %v4201 = vsel %vm4169, 1, 0
    %v4202 = vsel %vm4170, 1, 0
    %v4203 = vsel %vm4171, 1, 0
    %v4204 = vsel %vm4172, 1, 0
    %v4205 = vsel %vm4173, 1, 0
    %v4206 = vsel %vm4174, 1, 0
    %v4207 = vsel %vm4175, 1, 0
    %v4208 = vsel %vm4176, 1, 0
    %v4209 = vsel %vm4177, 1, 0
    %v4210 = vsel %vm4178, 1, 0
    %v4211 = vsel %vm4179, 1, 0
    %v4212 = vsel %vm4180, 1, 0
    %v4213 = vsel %vm4181, 1, 0
    %v4214 = vsel %vm4182, 1, 0
    %v4215 = vsel %vm4183, 1, 0
    %v4216 = vsel %vm4184, 1, 0
    %v4217 = vsel %vm4185, 1, 0
    %v4218 = vsel %vm4186, 1, 0
    %v4219 = vsel %vm4187, 1, 0
    %v4220 = vsel %vm4188, 1, 0
    %v4221 = vsel %vm4189, 1, 0
    %v4222 = vsel %vm4190, 1, 0
    %v4223 = vsel %vm4191, 1, 0
    %v4224 = vsel %vm4192, 1, 0
    %v4225 = vsel %vm4193, 1, 0
    %v4226 = vsel %vm4194, 1, 0
    %v4227 = vsel %vm4195, 1, 0
    %v4228 = vsel %vm4196, 1, 0
    %v4229 = vsel %vm4197, 1, 0
    %v4230 = vsel %vm4198, 1, 0
    %v4231 = vcvt.s32.f32 %v4199
    %v4232 = vcvt.s32.f32 %v4200
    %v4233 = vcvt.s32.f32 %v4201
    %v4234 = vcvt.s32.f32 %v4202
    %v4235 = vcvt.s32.f32 %v4203
    %v4236 = vcvt.s32.f32 %v4204
    %v4237 = vcvt.s32.f32 %v4205
    %v4238 = vcvt.s32.f32 %v4206
    %v4239 = vcvt.s32.f32 %v4207
    %v4240 = vcvt.s32.f32 %v4208
    %v4241 = vcvt.s32.f32 %v4209
    %v4242 = vcvt.s32.f32 %v4210
    %v4243 = vcvt.s32.f32 %v4211
    %v4244 = vcvt.s32.f32 %v4212
    %v4245 = vcvt.s32.f32 %v4213
    %v4246 = vcvt.s32.f32 %v4214
    %v4247 = vcvt.s32.f32 %v4215
    %v4248 = vcvt.s32.f32 %v4216
    %v4249 = vcvt.s32.f32 %v4217
    %v4250 = vcvt.s32.f32 %v4218
    %v4251 = vcvt.s32.f32 %v4219
    %v4252 = vcvt.s32.f32 %v4220
    %v4253 = vcvt.s32.f32 %v4221
    %v4254 = vcvt.s32.f32 %v4222
    %v4255 = vcvt.s32.f32 %v4223
    %v4256 = vcvt.s32.f32 %v4224
    %v4257 = vcvt.s32.f32 %v4225
    %v4258 = vcvt.s32.f32 %v4226
    %v4259 = vcvt.s32.f32 %v4227
    %v4260 = vcvt.s32.f32 %v4228
    %v4261 = vcvt.s32.f32 %v4229
    %v4262 = vcvt.s32.f32 %v4230
    %v4263 = vmul.f32 %v3940, %v4231
    %v4264 = vmul.f32 %v3941, %v4232
    %v4265 = vmul.f32 %v3942, %v4233
    %v4266 = vmul.f32 %v3943, %v4234
    %v4267 = vmul.f32 %v3944, %v4235
    %v4268 = vmul.f32 %v3945, %v4236
    %v4269 = vmul.f32 %v3946, %v4237
    %v4270 = vmul.f32 %v3947, %v4238
    %v4271 = vmul.f32 %v3948, %v4239
    %v4272 = vmul.f32 %v3949, %v4240
    %v4273 = vmul.f32 %v3950, %v4241
    %v4274 = vmul.f32 %v3951, %v4242
    %v4275 = vmul.f32 %v3952, %v4243
    %v4276 = vmul.f32 %v3953, %v4244
    %v4277 = vmul.f32 %v3954, %v4245
    %v4278 = vmul.f32 %v3955, %v4246
    %v4279 = vmul.f32 %v3956, %v4247
    %v4280 = vmul.f32 %v3957, %v4248
    %v4281 = vmul.f32 %v3958, %v4249
    %v4282 = vmul.f32 %v3959, %v4250
    %v4283 = vmul.f32 %v3960, %v4251
    %v4284 = vmul.f32 %v3961, %v4252
    %v4285 = vmul.f32 %v3962, %v4253
    %v4286 = vmul.f32 %v3963, %v4254
    %v4287 = vmul.f32 %v3964, %v4255
    %v4288 = vmul.f32 %v3965, %v4256
    %v4289 = vmul.f32 %v3966, %v4257
    %v4290 = vmul.f32 %v3967, %v4258
    %v4291 = vmul.f32 %v3968, %v4259
    %v4292 = vmul.f32 %v3969, %v4260
    %v4293 = vmul.f32 %v3970, %v4261
    %v4294 = vmul.f32 %v3971, %v4262
    %vm4295 = vcmask 523264
    %v4296 = vsel %vm4295, %v4263, 0.0
    %v4297 = vsel %vm4295, %v4264, 0.0
    %v4298 = vadd.f32 %v4296, %v4297
    %v4299 = vsel %vm4295, %v4265, 0.0
    %v4300 = vadd.f32 %v4298, %v4299
    %v4301 = vsel %vm4295, %v4266, 0.0
    %v4302 = vadd.f32 %v4300, %v4301
    %v4303 = vsel %vm4295, %v4267, 0.0
    %v4304 = vadd.f32 %v4302, %v4303
    %v4305 = vsel %vm4295, %v4268, 0.0
    %v4306 = vadd.f32 %v4304, %v4305
    %v4307 = vsel %vm4295, %v4269, 0.0
    %v4308 = vadd.f32 %v4306, %v4307
    %v4309 = vsel %vm4295, %v4270, 0.0
    %v4310 = vadd.f32 %v4308, %v4309
    %v4311 = vsel %vm4295, %v4271, 0.0
    %v4312 = vadd.f32 %v4310, %v4311
    %v4313 = vsel %vm4295, %v4272, 0.0
    %v4314 = vadd.f32 %v4312, %v4313
    %v4315 = vsel %vm4295, %v4273, 0.0
    %v4316 = vadd.f32 %v4314, %v4315
    %v4317 = vsel %vm4295, %v4274, 0.0
    %v4318 = vadd.f32 %v4316, %v4317
    %v4319 = vsel %vm4295, %v4275, 0.0
    %v4320 = vadd.f32 %v4318, %v4319
    %v4321 = vsel %vm4295, %v4276, 0.0
    %v4322 = vadd.f32 %v4320, %v4321
    %v4323 = vsel %vm4295, %v4277, 0.0
    %v4324 = vadd.f32 %v4322, %v4323
    %v4325 = vsel %vm4295, %v4278, 0.0
    %v4326 = vadd.f32 %v4324, %v4325
    %v4327 = vsel %vm4295, %v4279, 0.0
    %v4328 = vadd.f32 %v4326, %v4327
    %v4329 = vsel %vm4295, %v4280, 0.0
    %v4330 = vadd.f32 %v4328, %v4329
    %v4331 = vsel %vm4295, %v4281, 0.0
    %v4332 = vadd.f32 %v4330, %v4331
    %v4333 = vsel %vm4295, %v4282, 0.0
    %v4334 = vadd.f32 %v4332, %v4333
    %v4335 = vsel %vm4295, %v4283, 0.0
    %v4336 = vadd.f32 %v4334, %v4335
    %v4337 = vsel %vm4295, %v4284, 0.0
    %v4338 = vadd.f32 %v4336, %v4337
    %v4339 = vsel %vm4295, %v4285, 0.0
    %v4340 = vadd.f32 %v4338, %v4339
    %v4341 = vsel %vm4295, %v4286, 0.0
    %v4342 = vadd.f32 %v4340, %v4341
    %v4343 = vsel %vm4295, %v4287, 0.0
    %v4344 = vadd.f32 %v4342, %v4343
    %v4345 = vsel %vm4295, %v4288, 0.0
    %v4346 = vadd.f32 %v4344, %v4345
    %v4347 = vsel %vm4295, %v4289, 0.0
    %v4348 = vadd.f32 %v4346, %v4347
    %v4349 = vsel %vm4295, %v4290, 0.0
    %v4350 = vadd.f32 %v4348, %v4349
    %v4351 = vsel %vm4295, %v4291, 0.0
    %v4352 = vadd.f32 %v4350, %v4351
    %v4353 = vsel %vm4295, %v4292, 0.0
    %v4354 = vadd.f32 %v4352, %v4353
    %v4355 = vsel %vm4295, %v4293, 0.0
    %v4356 = vadd.f32 %v4354, %v4355
    %v4357 = vsel %vm4295, %v4294, 0.0
    %v4358 = vadd.f32 %v4356, %v4357
    %v4359 = vrot.slane %v4358, 4
    %v4360 = vadd.f32 %v4358, %v4359
    %v4361 = vrot.slane %v4360, 2
    %v4362 = vadd.f32 %v4360, %v4361
    %v4363 = vrot.slane %v4362, 1
    %v4364 = vadd.f32 %v4362, %v4363
    %v4365 = vmul.f32 %v4364, 0.007936508
    %v4366 = vsub.f32 %v3940, %v4365
    %v4367 = vsub.f32 %v3941, %v4365
    %v4368 = vsub.f32 %v3942, %v4365
    %v4369 = vsub.f32 %v3943, %v4365
    %v4370 = vsub.f32 %v3944, %v4365
    %v4371 = vsub.f32 %v3945, %v4365
    %v4372 = vsub.f32 %v3946, %v4365
    %v4373 = vsub.f32 %v3947, %v4365
    %v4374 = vsub.f32 %v3948, %v4365
    %v4375 = vsub.f32 %v3949, %v4365
    %v4376 = vsub.f32 %v3950, %v4365
    %v4377 = vsub.f32 %v3951, %v4365
    %v4378 = vsub.f32 %v3952, %v4365
    %v4379 = vsub.f32 %v3953, %v4365
    %v4380 = vsub.f32 %v3954, %v4365
    %v4381 = vsub.f32 %v3955, %v4365
    %v4382 = vsub.f32 %v3956, %v4365
    %v4383 = vsub.f32 %v3957, %v4365
    %v4384 = vsub.f32 %v3958, %v4365
    %v4385 = vsub.f32 %v3959, %v4365
    %v4386 = vsub.f32 %v3960, %v4365
    %v4387 = vsub.f32 %v3961, %v4365
    %v4388 = vsub.f32 %v3962, %v4365
    %v4389 = vsub.f32 %v3963, %v4365
    %v4390 = vsub.f32 %v3964, %v4365
    %v4391 = vsub.f32 %v3965, %v4365
    %v4392 = vsub.f32 %v3966, %v4365
    %v4393 = vsub.f32 %v3967, %v4365
    %v4394 = vsub.f32 %v3968, %v4365
    %v4395 = vsub.f32 %v3969, %v4365
    %v4396 = vsub.f32 %v3970, %v4365
    %v4397 = vsub.f32 %v3971, %v4365
    %v4398 = vmul.f32 %v4366, %v4231
    %v4399 = vmul.f32 %v4367, %v4232
    %v4400 = vmul.f32 %v4368, %v4233
    %v4401 = vmul.f32 %v4369, %v4234
    %v4402 = vmul.f32 %v4370, %v4235
    %v4403 = vmul.f32 %v4371, %v4236
    %v4404 = vmul.f32 %v4372, %v4237
    %v4405 = vmul.f32 %v4373, %v4238
    %v4406 = vmul.f32 %v4374, %v4239
    %v4407 = vmul.f32 %v4375, %v4240
    %v4408 = vmul.f32 %v4376, %v4241
    %v4409 = vmul.f32 %v4377, %v4242
    %v4410 = vmul.f32 %v4378, %v4243
    %v4411 = vmul.f32 %v4379, %v4244
    %v4412 = vmul.f32 %v4380, %v4245
    %v4413 = vmul.f32 %v4381, %v4246
    %v4414 = vmul.f32 %v4382, %v4247
    %v4415 = vmul.f32 %v4383, %v4248
    %v4416 = vmul.f32 %v4384, %v4249
    %v4417 = vmul.f32 %v4385, %v4250
    %v4418 = vmul.f32 %v4386, %v4251
    %v4419 = vmul.f32 %v4387, %v4252
    %v4420 = vmul.f32 %v4388, %v4253
    %v4421 = vmul.f32 %v4389, %v4254
    %v4422 = vmul.f32 %v4390, %v4255
    %v4423 = vmul.f32 %v4391, %v4256
    %v4424 = vmul.f32 %v4392, %v4257
    %v4425 = vmul.f32 %v4393, %v4258
    %v4426 = vmul.f32 %v4394, %v4259
    %v4427 = vmul.f32 %v4395, %v4260
    %v4428 = vmul.f32 %v4396, %v4261
    %v4429 = vmul.f32 %v4397, %v4262
    %v4430 = vmul.f32 %v4398, %v4398
    %v4431 = vmul.f32 %v4399, %v4399
    %v4432 = vmul.f32 %v4400, %v4400
    %v4433 = vmul.f32 %v4401, %v4401
    %v4434 = vmul.f32 %v4402, %v4402
    %v4435 = vmul.f32 %v4403, %v4403
    %v4436 = vmul.f32 %v4404, %v4404
    %v4437 = vmul.f32 %v4405, %v4405
    %v4438 = vmul.f32 %v4406, %v4406
    %v4439 = vmul.f32 %v4407, %v4407
    %v4440 = vmul.f32 %v4408, %v4408
    %v4441 = vmul.f32 %v4409, %v4409
    %v4442 = vmul.f32 %v4410, %v4410
    %v4443 = vmul.f32 %v4411, %v4411
    %v4444 = vmul.f32 %v4412, %v4412
    %v4445 = vmul.f32 %v4413, %v4413
    %v4446 = vmul.f32 %v4414, %v4414
    %v4447 = vmul.f32 %v4415, %v4415
    %v4448 = vmul.f32 %v4416, %v4416
    %v4449 = vmul.f32 %v4417, %v4417
    %v4450 = vmul.f32 %v4418, %v4418
    %v4451 = vmul.f32 %v4419, %v4419
    %v4452 = vmul.f32 %v4420, %v4420
    %v4453 = vmul.f32 %v4421, %v4421
    %v4454 = vmul.f32 %v4422, %v4422
    %v4455 = vmul.f32 %v4423, %v4423
    %v4456 = vmul.f32 %v4424, %v4424
    %v4457 = vmul.f32 %v4425, %v4425
    %v4458 = vmul.f32 %v4426, %v4426
    %v4459 = vmul.f32 %v4427, %v4427
    %v4460 = vmul.f32 %v4428, %v4428
    %v4461 = vmul.f32 %v4429, %v4429
    %v4462 = vsel %vm4295, %v4430, 0.0
    %v4463 = vsel %vm4295, %v4431, 0.0
    %v4464 = vadd.f32 %v4462, %v4463
    %v4465 = vsel %vm4295, %v4432, 0.0
    %v4466 = vadd.f32 %v4464, %v4465
    %v4467 = vsel %vm4295, %v4433, 0.0
    %v4468 = vadd.f32 %v4466, %v4467
    %v4469 = vsel %vm4295, %v4434, 0.0
    %v4470 = vadd.f32 %v4468, %v4469
    %v4471 = vsel %vm4295, %v4435, 0.0
    %v4472 = vadd.f32 %v4470, %v4471
    %v4473 = vsel %vm4295, %v4436, 0.0
    %v4474 = vadd.f32 %v4472, %v4473
    %v4475 = vsel %vm4295, %v4437, 0.0
    %v4476 = vadd.f32 %v4474, %v4475
    %v4477 = vsel %vm4295, %v4438, 0.0
    %v4478 = vadd.f32 %v4476, %v4477
    %v4479 = vsel %vm4295, %v4439, 0.0
    %v4480 = vadd.f32 %v4478, %v4479
    %v4481 = vsel %vm4295, %v4440, 0.0
    %v4482 = vadd.f32 %v4480, %v4481
    %v4483 = vsel %vm4295, %v4441, 0.0
    %v4484 = vadd.f32 %v4482, %v4483
    %v4485 = vsel %vm4295, %v4442, 0.0
    %v4486 = vadd.f32 %v4484, %v4485
    %v4487 = vsel %vm4295, %v4443, 0.0
    %v4488 = vadd.f32 %v4486, %v4487
    %v4489 = vsel %vm4295, %v4444, 0.0
    %v4490 = vadd.f32 %v4488, %v4489
    %v4491 = vsel %vm4295, %v4445, 0.0
    %v4492 = vadd.f32 %v4490, %v4491
    %v4493 = vsel %vm4295, %v4446, 0.0
    %v4494 = vadd.f32 %v4492, %v4493
    %v4495 = vsel %vm4295, %v4447, 0.0
    %v4496 = vadd.f32 %v4494, %v4495
    %v4497 = vsel %vm4295, %v4448, 0.0
    %v4498 = vadd.f32 %v4496, %v4497
    %v4499 = vsel %vm4295, %v4449, 0.0
    %v4500 = vadd.f32 %v4498, %v4499
    %v4501 = vsel %vm4295, %v4450, 0.0
    %v4502 = vadd.f32 %v4500, %v4501
    %v4503 = vsel %vm4295, %v4451, 0.0
    %v4504 = vadd.f32 %v4502, %v4503
    %v4505 = vsel %vm4295, %v4452, 0.0
    %v4506 = vadd.f32 %v4504, %v4505
    %v4507 = vsel %vm4295, %v4453, 0.0
    %v4508 = vadd.f32 %v4506, %v4507
    %v4509 = vsel %vm4295, %v4454, 0.0
    %v4510 = vadd.f32 %v4508, %v4509
    %v4511 = vsel %vm4295, %v4455, 0.0
    %v4512 = vadd.f32 %v4510, %v4511
    %v4513 = vsel %vm4295, %v4456, 0.0
    %v4514 = vadd.f32 %v4512, %v4513
    %v4515 = vsel %vm4295, %v4457, 0.0
    %v4516 = vadd.f32 %v4514, %v4515
    %v4517 = vsel %vm4295, %v4458, 0.0
    %v4518 = vadd.f32 %v4516, %v4517
    %v4519 = vsel %vm4295, %v4459, 0.0
    %v4520 = vadd.f32 %v4518, %v4519
    %v4521 = vsel %vm4295, %v4460, 0.0
    %v4522 = vadd.f32 %v4520, %v4521
    %v4523 = vsel %vm4295, %v4461, 0.0
    %v4524 = vadd.f32 %v4522, %v4523
    %v4525 = vrot.slane %v4524, 4
    %v4526 = vadd.f32 %v4524, %v4525
    %v4527 = vrot.slane %v4526, 2
    %v4528 = vadd.f32 %v4526, %v4527
    %v4529 = vrot.slane %v4528, 1
    %v4530 = vadd.f32 %v4528, %v4529
    %v4531 = vmul.f32 %v4530, 0.007936508
    %v4532 = vadd.f32 %v4531, 1e-05
    %v4533 = vrsqrt.pop %v4532
    %v4534 = vmul.f32 %v4533, %v3972
    %v4535 = vlaneseq
    %v4536 = vshrl.u32 %v4535, 7
    %v4537 = vsub.s32 0, %v4536
    %v4538 = vrot.slane %v4534, %v4537
    %v4539 = vmul.f32 %v4366, %v4538
    %v4540 = vmul.f32 %v4367, %v4538
    %v4541 = vmul.f32 %v4368, %v4538
    %v4542 = vmul.f32 %v4369, %v4538
    %v4543 = vmul.f32 %v4370, %v4538
    %v4544 = vmul.f32 %v4371, %v4538
    %v4545 = vmul.f32 %v4372, %v4538
    %v4546 = vmul.f32 %v4373, %v4538
    %v4547 = vmul.f32 %v4374, %v4538
    %v4548 = vmul.f32 %v4375, %v4538
    %v4549 = vmul.f32 %v4376, %v4538
    %v4550 = vmul.f32 %v4377, %v4538
    %v4551 = vmul.f32 %v4378, %v4538
    %v4552 = vmul.f32 %v4379, %v4538
    %v4553 = vmul.f32 %v4380, %v4538
    %v4554 = vmul.f32 %v4381, %v4538
    %v4555 = vmul.f32 %v4382, %v4538
    %v4556 = vmul.f32 %v4383, %v4538
    %v4557 = vmul.f32 %v4384, %v4538
    %v4558 = vmul.f32 %v4385, %v4538
    %v4559 = vmul.f32 %v4386, %v4538
    %v4560 = vmul.f32 %v4387, %v4538
    %v4561 = vmul.f32 %v4388, %v4538
    %v4562 = vmul.f32 %v4389, %v4538
    %v4563 = vmul.f32 %v4390, %v4538
    %v4564 = vmul.f32 %v4391, %v4538
    %v4565 = vmul.f32 %v4392, %v4538
    %v4566 = vmul.f32 %v4393, %v4538
    %v4567 = vmul.f32 %v4394, %v4538
    %v4568 = vmul.f32 %v4395, %v4538
    %v4569 = vmul.f32 %v4396, %v4538
    %v4570 = vmul.f32 %v4397, %v4538
    %v4572 = vlaneseq
    %v4573 = vshrl.u32 %v4572, 7
    %v4574 = vsub.s32 0, %v4573
    %v4575 = vrot.slane %v3973, %v4574
    %v4577 = vadd.f32 %v4539, %v4575
    %v4578 = vadd.f32 %v4540, %v4575
    %v4579 = vadd.f32 %v4541, %v4575
    %v4580 = vadd.f32 %v4542, %v4575
    %v4581 = vadd.f32 %v4543, %v4575
    %v4582 = vadd.f32 %v4544, %v4575
    %v4583 = vadd.f32 %v4545, %v4575
    %v4584 = vadd.f32 %v4546, %v4575
    %v4585 = vadd.f32 %v4547, %v4575
    %v4586 = vadd.f32 %v4548, %v4575
    %v4587 = vadd.f32 %v4549, %v4575
    %v4588 = vadd.f32 %v4550, %v4575
    %v4589 = vadd.f32 %v4551, %v4575
    %v4590 = vadd.f32 %v4552, %v4575
    %v4591 = vadd.f32 %v4553, %v4575
    %v4592 = vadd.f32 %v4554, %v4575
    %v4593 = vadd.f32 %v4555, %v4575
    %v4594 = vadd.f32 %v4556, %v4575
    %v4595 = vadd.f32 %v4557, %v4575
    %v4596 = vadd.f32 %v4558, %v4575
    %v4597 = vadd.f32 %v4559, %v4575
    %v4598 = vadd.f32 %v4560, %v4575
    %v4599 = vadd.f32 %v4561, %v4575
    %v4600 = vadd.f32 %v4562, %v4575
    %v4601 = vadd.f32 %v4563, %v4575
    %v4602 = vadd.f32 %v4564, %v4575
    %v4603 = vadd.f32 %v4565, %v4575
    %v4604 = vadd.f32 %v4566, %v4575
    %v4605 = vadd.f32 %v4567, %v4575
    %v4606 = vadd.f32 %v4568, %v4575
    %v4607 = vadd.f32 %v4569, %v4575
    %v4608 = vadd.f32 %v4570, %v4575
    %4609 = vst.msk [vmem:[#allocation4] sm:$0xff] %vm4295, %v4577
    %4610 = vst.msk [vmem:[#allocation4 + $0x8] sm:$0xff] %vm4295, %v4578
    %4611 = vst.msk [vmem:[#allocation4 + $0x10] sm:$0xff] %vm4295, %v4579
    %4612 = vst.msk [vmem:[#allocation4 + $0x18] sm:$0xff] %vm4295, %v4580
    %4613 = vst.msk [vmem:[#allocation4 + $0x20] sm:$0xff] %vm4295, %v4581
    %4614 = vst.msk [vmem:[#allocation4 + $0x28] sm:$0xff] %vm4295, %v4582
    %4615 = vst.msk [vmem:[#allocation4 + $0x30] sm:$0xff] %vm4295, %v4583
    %4616 = vst.msk [vmem:[#allocation4 + $0x38] sm:$0xff] %vm4295, %v4584
    %4617 = vst.msk [vmem:[#allocation4 + $0x40] sm:$0xff] %vm4295, %v4585
    %4618 = vst.msk [vmem:[#allocation4 + $0x48] sm:$0xff] %vm4295, %v4586
    %4619 = vst.msk [vmem:[#allocation4 + $0x50] sm:$0xff] %vm4295, %v4587
    %4620 = vst.msk [vmem:[#allocation4 + $0x58] sm:$0xff] %vm4295, %v4588
    %4621 = vst.msk [vmem:[#allocation4 + $0x60] sm:$0xff] %vm4295, %v4589
    %4622 = vst.msk [vmem:[#allocation4 + $0x68] sm:$0xff] %vm4295, %v4590
    %4623 = vst.msk [vmem:[#allocation4 + $0x70] sm:$0xff] %vm4295, %v4591
    %4624 = vst.msk [vmem:[#allocation4 + $0x78] sm:$0xff] %vm4295, %v4592
    %4625 = vst.msk [vmem:[#allocation4 + $0x80] sm:$0xff] %vm4295, %v4593
    %4626 = vst.msk [vmem:[#allocation4 + $0x88] sm:$0xff] %vm4295, %v4594
    %4627 = vst.msk [vmem:[#allocation4 + $0x90] sm:$0xff] %vm4295, %v4595
    %4628 = vst.msk [vmem:[#allocation4 + $0x98] sm:$0xff] %vm4295, %v4596
    %4629 = vst.msk [vmem:[#allocation4 + $0xa0] sm:$0xff] %vm4295, %v4597
    %4630 = vst.msk [vmem:[#allocation4 + $0xa8] sm:$0xff] %vm4295, %v4598
    %4631 = vst.msk [vmem:[#allocation4 + $0xb0] sm:$0xff] %vm4295, %v4599
    %4632 = vst.msk [vmem:[#allocation4 + $0xb8] sm:$0xff] %vm4295, %v4600
    %4633 = vst.msk [vmem:[#allocation4 + $0xc0] sm:$0xff] %vm4295, %v4601
    %4634 = vst.msk [vmem:[#allocation4 + $0xc8] sm:$0xff] %vm4295, %v4602
    %4635 = vst.msk [vmem:[#allocation4 + $0xd0] sm:$0xff] %vm4295, %v4603
    %4636 = vst.msk [vmem:[#allocation4 + $0xd8] sm:$0xff] %vm4295, %v4604
    %4637 = vst.msk [vmem:[#allocation4 + $0xe0] sm:$0xff] %vm4295, %v4605
    %4638 = vst.msk [vmem:[#allocation4 + $0xe8] sm:$0xff] %vm4295, %v4606
    %4639 = vst.msk [vmem:[#allocation4 + $0xf0] sm:$0xff] %vm4295, %v4607
    %4640 = vst.msk [vmem:[#allocation4 + $0xf8] sm:$0xff] %vm4295, %v4608
    %4641 = vst.msk [vmem:[#allocation5] sm:$0xff] %vm4295, 0.0
    %4642 = vst.msk [vmem:[#allocation5 + $0x8] sm:$0xff] %vm4295, 0.0
    %4643 = vst.msk [vmem:[#allocation5 + $0x10] sm:$0xff] %vm4295, 0.0
    %4644 = vst.msk [vmem:[#allocation5 + $0x18] sm:$0xff] %vm4295, 0.0
    %4645 = vst.msk [vmem:[#allocation5 + $0x20] sm:$0xff] %vm4295, 0.0
    %4646 = vst.msk [vmem:[#allocation5 + $0x28] sm:$0xff] %vm4295, 0.0
    %4647 = vst.msk [vmem:[#allocation5 + $0x30] sm:$0xff] %vm4295, 0.0
    %4648 = vst.msk [vmem:[#allocation5 + $0x38] sm:$0xff] %vm4295, 0.0
    %4649 = vst.msk [vmem:[#allocation5 + $0x40] sm:$0xff] %vm4295, 0.0
    %4650 = vst.msk [vmem:[#allocation5 + $0x48] sm:$0xff] %vm4295, 0.0
    %4651 = vst.msk [vmem:[#allocation5 + $0x50] sm:$0xff] %vm4295, 0.0
    %4652 = vst.msk [vmem:[#allocation5 + $0x58] sm:$0xff] %vm4295, 0.0
    %4653 = vst.msk [vmem:[#allocation5 + $0x60] sm:$0xff] %vm4295, 0.0
    %4654 = vst.msk [vmem:[#allocation5 + $0x68] sm:$0xff] %vm4295, 0.0
    %4655 = vst.msk [vmem:[#allocation5 + $0x70] sm:$0xff] %vm4295, 0.0
    %4656 = vst.msk [vmem:[#allocation5 + $0x78] sm:$0xff] %vm4295, 0.0
    %4657 = vst.msk [vmem:[#allocation5 + $0x80] sm:$0xff] %vm4295, 0.0
    %4658 = vst.msk [vmem:[#allocation5 + $0x88] sm:$0xff] %vm4295, 0.0
    %v4659 = vld [vmem:[#allocation4] ss:$2 sm:$0x7]
    %s4660 = scalar_lea.vmem [#allocation4], 1
    %v4661 = vld [vmem:[%s4660] ss:$2 sm:$0x7]
    %s4662 = scalar_lea.vmem [#allocation4], 8
    %v4663 = vld [vmem:[%s4662] ss:$2 sm:$0x7]
    %s4664 = scalar_lea.vmem [#allocation4], 9
    %v4665 = vld [vmem:[%s4664] ss:$2 sm:$0x7]
    %v4666 = vmax.f32 %v4659, %v4661
    %v4667 = vmax.f32 %v4663, %v4665
    %v4668 = vmax.f32 %v4666, %v4667
    %vm4669 = vcmask 518144
    %4670 = vst.msk [vmem:[#allocation5 + $0x9] sm:$0x7] %vm4669, %v4668
    %s4671 = scalar_lea.vmem [#allocation4], 16
    %v4672 = vld [vmem:[%s4671] ss:$2 sm:$0x7]
    %s4673 = scalar_lea.vmem [#allocation4], 17
    %v4674 = vld [vmem:[%s4673] ss:$2 sm:$0x7]
    %s4675 = scalar_lea.vmem [#allocation4], 24
    %v4676 = vld [vmem:[%s4675] ss:$2 sm:$0x7]
    %s4677 = scalar_lea.vmem [#allocation4], 25
    %v4678 = vld [vmem:[%s4677] ss:$2 sm:$0x7]
    %v4679 = vmax.f32 %v4672, %v4674
    %v4680 = vmax.f32 %v4676, %v4678
    %v4681 = vmax.f32 %v4679, %v4680
    %4682 = vst.msk [vmem:[#allocation5 + $0x11] sm:$0x7] %vm4669, %v4681
    %s4683 = scalar_lea.vmem [#allocation4], 32
    %v4684 = vld [vmem:[%s4683] ss:$2 sm:$0x7]
    %s4685 = scalar_lea.vmem [#allocation4], 33
    %v4686 = vld [vmem:[%s4685] ss:$2 sm:$0x7]
    %s4687 = scalar_lea.vmem [#allocation4], 40
    %v4688 = vld [vmem:[%s4687] ss:$2 sm:$0x7]
    %s4689 = scalar_lea.vmem [#allocation4], 41
    %v4690 = vld [vmem:[%s4689] ss:$2 sm:$0x7]
    %v4691 = vmax.f32 %v4684, %v4686
    %v4692 = vmax.f32 %v4688, %v4690
    %v4693 = vmax.f32 %v4691, %v4692
    %4694 = vst.msk [vmem:[#allocation5 + $0x19] sm:$0x7] %vm4669, %v4693
    %s4695 = scalar_lea.vmem [#allocation4], 48
    %v4696 = vld [vmem:[%s4695] ss:$2 sm:$0x7]
    %s4697 = scalar_lea.vmem [#allocation4], 49
    %v4698 = vld [vmem:[%s4697] ss:$2 sm:$0x7]
    %s4699 = scalar_lea.vmem [#allocation4], 56
    %v4700 = vld [vmem:[%s4699] ss:$2 sm:$0x7]
    %s4701 = scalar_lea.vmem [#allocation4], 57
    %v4702 = vld [vmem:[%s4701] ss:$2 sm:$0x7]
    %v4703 = vmax.f32 %v4696, %v4698
    %v4704 = vmax.f32 %v4700, %v4702
    %v4705 = vmax.f32 %v4703, %v4704
    %4706 = vst.msk [vmem:[#allocation5 + $0x21] sm:$0x7] %vm4669, %v4705
    %s4707 = scalar_lea.vmem [#allocation4], 128
    %v4708 = vld [vmem:[%s4707] ss:$2 sm:$0x7]
    %s4709 = scalar_lea.vmem [#allocation4], 129
    %v4710 = vld [vmem:[%s4709] ss:$2 sm:$0x7]
    %s4711 = scalar_lea.vmem [#allocation4], 136
    %v4712 = vld [vmem:[%s4711] ss:$2 sm:$0x7]
    %s4713 = scalar_lea.vmem [#allocation4], 137
    %v4714 = vld [vmem:[%s4713] ss:$2 sm:$0x7]
    %v4715 = vmax.f32 %v4708, %v4710
    %v4716 = vmax.f32 %v4712, %v4714
    %v4717 = vmax.f32 %v4715, %v4716
    %4718 = vst.msk [vmem:[#allocation5 + $0x49] sm:$0x7] %vm4669, %v4717
    %s4719 = scalar_lea.vmem [#allocation4], 144
    %v4720 = vld [vmem:[%s4719] ss:$2 sm:$0x7]
    %s4721 = scalar_lea.vmem [#allocation4], 145
    %v4722 = vld [vmem:[%s4721] ss:$2 sm:$0x7]
    %s4723 = scalar_lea.vmem [#allocation4], 152
    %v4724 = vld [vmem:[%s4723] ss:$2 sm:$0x7]
    %s4725 = scalar_lea.vmem [#allocation4], 153
    %v4726 = vld [vmem:[%s4725] ss:$2 sm:$0x7]
    %v4727 = vmax.f32 %v4720, %v4722
    %v4728 = vmax.f32 %v4724, %v4726
    %v4729 = vmax.f32 %v4727, %v4728
    %4730 = vst.msk [vmem:[#allocation5 + $0x51] sm:$0x7] %vm4669, %v4729
    %s4731 = scalar_lea.vmem [#allocation4], 160
    %v4732 = vld [vmem:[%s4731] ss:$2 sm:$0x7]
    %s4733 = scalar_lea.vmem [#allocation4], 161
    %v4734 = vld [vmem:[%s4733] ss:$2 sm:$0x7]
    %s4735 = scalar_lea.vmem [#allocation4], 168
    %v4736 = vld [vmem:[%s4735] ss:$2 sm:$0x7]
    %s4737 = scalar_lea.vmem [#allocation4], 169
    %v4738 = vld [vmem:[%s4737] ss:$2 sm:$0x7]
    %v4739 = vmax.f32 %v4732, %v4734
    %v4740 = vmax.f32 %v4736, %v4738
    %v4741 = vmax.f32 %v4739, %v4740
    %4742 = vst.msk [vmem:[#allocation5 + $0x59] sm:$0x7] %vm4669, %v4741
    %s4743 = scalar_lea.vmem [#allocation4], 176
    %v4744 = vld [vmem:[%s4743] ss:$2 sm:$0x7]
    %s4745 = scalar_lea.vmem [#allocation4], 177
    %v4746 = vld [vmem:[%s4745] ss:$2 sm:$0x7]
    %s4747 = scalar_lea.vmem [#allocation4], 184
    %v4748 = vld [vmem:[%s4747] ss:$2 sm:$0x7]
    %s4749 = scalar_lea.vmem [#allocation4], 185
    %v4750 = vld [vmem:[%s4749] ss:$2 sm:$0x7]
    %v4751 = vmax.f32 %v4744, %v4746
    %v4752 = vmax.f32 %v4748, %v4750
    %v4753 = vmax.f32 %v4751, %v4752
    %4754 = vst.msk [vmem:[#allocation5 + $0x61] sm:$0x7] %vm4669, %v4753
    %v4755 = vld [vmem:[#allocation5] sm:$0xff]
    %v4756 = vld [vmem:[#allocation5 + $0x8] sm:$0xff]
    %v4757 = vld [vmem:[#allocation5 + $0x10] sm:$0xff]
    %v4758 = vld [vmem:[#allocation5 + $0x18] sm:$0xff]
    %v4759 = vld [vmem:[#allocation5 + $0x20] sm:$0xff]
    %v4760 = vld [vmem:[#allocation5 + $0x28] sm:$0xff]
    %v4761 = vld [vmem:[#allocation5 + $0x30] sm:$0xff]
    %v4762 = vld [vmem:[#allocation5 + $0x38] sm:$0xff]
    %v4763 = vld [vmem:[#allocation5 + $0x40] sm:$0xff]
    %v4764 = vld [vmem:[#allocation5 + $0x48] sm:$0xff]
    %v4765 = vld [vmem:[#allocation5 + $0x50] sm:$0xff]
    %v4766 = vld [vmem:[#allocation5 + $0x58] sm:$0xff]
    %v4767 = vld [vmem:[#allocation5 + $0x60] sm:$0xff]
    %v4768 = vld [vmem:[#allocation5 + $0x68] sm:$0xff]
    %v4769 = vld [vmem:[#allocation5 + $0x70] sm:$0xff]
    %v4770 = vld [vmem:[#allocation5 + $0x78] sm:$0xff]
    %v4771 = vld [vmem:[%s7] sm:$0xff]
    %v4772 = vld [vmem:[%s7 + $0x8] sm:$0xff]
    %v4773 = vld [vmem:[%s7 + $0x10] sm:$0xff]
    %v4774 = vld [vmem:[%s7 + $0x18] sm:$0xff]
    %v4775 = vld [vmem:[%s7 + $0x20] sm:$0xff]
    %v4776 = vld [vmem:[%s7 + $0x28] sm:$0xff]
    %v4777 = vld [vmem:[%s7 + $0x30] sm:$0xff]
    %v4778 = vld [vmem:[%s7 + $0x38] sm:$0xff]
    %v4779 = vld [vmem:[#allocation5 + $0x1] sm:$0xff]
    %v4780 = vld [vmem:[#allocation5 + $0x9] sm:$0xff]
    %v4781 = vld [vmem:[#allocation5 + $0x11] sm:$0xff]
    %v4782 = vld [vmem:[#allocation5 + $0x19] sm:$0xff]
    %v4783 = vld [vmem:[#allocation5 + $0x21] sm:$0xff]
    %v4784 = vld [vmem:[#allocation5 + $0x29] sm:$0xff]
    %v4785 = vld [vmem:[#allocation5 + $0x31] sm:$0xff]
    %v4786 = vld [vmem:[#allocation5 + $0x39] sm:$0xff]
    %v4787 = vld [vmem:[#allocation5 + $0x41] sm:$0xff]
    %v4788 = vld [vmem:[#allocation5 + $0x49] sm:$0xff]
    %v4789 = vld [vmem:[#allocation5 + $0x51] sm:$0xff]
    %v4790 = vld [vmem:[#allocation5 + $0x59] sm:$0xff]
    %v4791 = vld [vmem:[#allocation5 + $0x61] sm:$0xff]
    %v4792 = vld [vmem:[#allocation5 + $0x69] sm:$0xff]
    %v4793 = vld [vmem:[#allocation5 + $0x71] sm:$0xff]
    %v4794 = vld [vmem:[#allocation5 + $0x79] sm:$0xff]
    %v4795 = vld [vmem:[%s7 + $0x40] sm:$0xff]
    %v4796 = vld [vmem:[%s7 + $0x48] sm:$0xff]
    %v4797 = vld [vmem:[%s7 + $0x50] sm:$0xff]
    %v4798 = vld [vmem:[%s7 + $0x58] sm:$0xff]
    %v4799 = vld [vmem:[%s7 + $0x60] sm:$0xff]
    %v4800 = vld [vmem:[%s7 + $0x68] sm:$0xff]
    %v4801 = vld [vmem:[%s7 + $0x70] sm:$0xff]
    %v4802 = vld [vmem:[%s7 + $0x78] sm:$0xff]
    %v4804 = vsel %vm4295, %v4779, 0
    %v4807 = vsel %vm4295, %v4780, 0
    %v4810 = vsel %vm4295, %v4781, 0
    %v4813 = vsel %vm4295, %v4782, 0
    %v4816 = vsel %vm4295, %v4783, 0
    %v4819 = vsel %vm4295, %v4784, 0
    %v4822 = vsel %vm4295, %v4785, 0
    %v4825 = vsel %vm4295, %v4786, 0
    %v4828 = vsel %vm4295, %v4787, 0
    %v4831 = vsel %vm4295, %v4788, 0
    %v4834 = vsel %vm4295, %v4789, 0
    %v4837 = vsel %vm4295, %v4790, 0
    %v4840 = vsel %vm4295, %v4791, 0
    %v4843 = vsel %vm4295, %v4792, 0
    %v4846 = vsel %vm4295, %v4793, 0
    %v4849 = vsel %vm4295, %v4794, 0
    %4851 = vmatprep.subr.mxu0 0.0
    %4852 = vmatpush1.msra.mxu0 %v4795
    %4853 = vmatprep.subr.mxu0 0.0
    %4854 = vmatpush1.msra.mxu0 %v4796
    %4855 = vmatprep.subr.mxu0 0.0
    %4856 = vmatpush1.msra.mxu0 %v4797
    %4857 = vmatprep.subr.mxu0 0.0
    %4858 = vmatpush1.msra.mxu0 %v4798
    %4859 = vmatprep.subr.mxu0 0.0
    %4860 = vmatpush1.msra.mxu0 %v4799
    %4861 = vmatprep.subr.mxu0 0.0
    %4862 = vmatpush1.msra.mxu0 %v4800
    %4863 = vmatprep.subr.mxu0 0.0
    %4864 = vmatpush1.msra.mxu0 %v4801
    %4865 = vmatprep.subr.mxu0 0.0
    %4866 = vmatpush1.msra.mxu0 %v4802
    %4867 = vmatprep.subr.mxu0 0.0
    %4868 = vmatpush1.msra.mxu0 0.0
    %4869 = vmatprep.subr.mxu0 0.0
    %4870 = vmatpush1.msra.mxu0 0.0
    %4871 = vmatprep.subr.mxu0 0.0
    %4872 = vmatpush1.msra.mxu0 0.0
    %4873 = vmatprep.subr.mxu0 0.0
    %4874 = vmatpush1.msra.mxu0 0.0
    %4875 = vmatprep.subr.mxu0 0.0
    %4876 = vmatpush1.msra.mxu0 0.0
    %4877 = vmatprep.subr.mxu0 0.0
    %4878 = vmatpush1.msra.mxu0 0.0
    %4879 = vmatprep.subr.mxu0 0.0
    %4880 = vmatpush1.msra.mxu0 0.0
    %4881 = vmatprep.subr.mxu0 0.0
    %4882 = vmatpush1.msra.mxu0 0.0
    %4883 = vmatprep.subr.mxu0 0.0
    %4884 = vmatpush1.msra.mxu0 0.0
    %4885 = vmatprep.subr.mxu0 0.0
    %4886 = vmatpush1.msra.mxu0 0.0
    %4887 = vmatprep.subr.mxu0 0.0
    %4888 = vmatpush1.msra.mxu0 0.0
    %4889 = vmatprep.subr.mxu0 0.0
    %4890 = vmatpush1.msra.mxu0 0.0
    %4891 = vmatprep.subr.mxu0 0.0
    %4892 = vmatpush1.msra.mxu0 0.0
    %4893 = vmatprep.subr.mxu0 0.0
    %4894 = vmatpush1.msra.mxu0 0.0
    %4895 = vmatprep.subr.mxu0 0.0
    %4896 = vmatpush1.msra.mxu0 0.0
    %4897 = vmatprep.subr.mxu0 0.0
    %4898 = vmatpush1.msra.mxu0 0.0
    %4899 = vmatprep.subr.mxu0 0.0
    %4900 = vmatpush1.msra.mxu0 0.0
    %4901 = vmatprep.subr.mxu0 0.0
    %4902 = vmatpush1.msra.mxu0 0.0
    %4903 = vmatprep.subr.mxu0 0.0
    %4904 = vmatpush1.msra.mxu0 0.0
    %4905 = vmatprep.subr.mxu0 0.0
    %4906 = vmatpush1.msra.mxu0 0.0
    %4907 = vmatprep.subr.mxu0 0.0
    %4908 = vmatpush1.msra.mxu0 0.0
    %4909 = vmatprep.subr.mxu0 0.0
    %4910 = vmatpush1.msra.mxu0 0.0
    %4911 = vmatprep.subr.mxu0 0.0
    %4912 = vmatpush1.msra.mxu0 0.0
    %4913 = vmatprep.subr.mxu0 0.0
    %4914 = vmatpush1.msra.mxu0 0.0
    %4915 = vmatprep.mubr.f32.mxu0 0.0
    %4916 = vmatmul.mubr.f32.gmra.mrb[0].mxu0 %v4804
    %v4917 = vpop.f32.mrb[0].mxu0
    %v4918 = vadd.f32 0.0, %v4917
    %v4919 = vpop.f32.mrb[0].mxu0
    %4920 = vmatprep.mubr.f32.mxu0 0.0
    %4921 = vmatmul.mubr.f32.gmra.mrb[0].mxu0 %v4807
    %v4922 = vpop.f32.mrb[0].mxu0
    %v4923 = vadd.f32 0.0, %v4922
    %v4924 = vpop.f32.mrb[0].mxu0
    %4925 = vmatprep.mubr.f32.mxu0 0.0
    %4926 = vmatmul.mubr.f32.gmra.mrb[0].mxu0 %v4810
    %v4927 = vpop.f32.mrb[0].mxu0
    %v4928 = vadd.f32 0.0, %v4927
    %v4929 = vpop.f32.mrb[0].mxu0
    %4930 = vmatprep.mubr.f32.mxu0 0.0
    %4931 = vmatmul.mubr.f32.gmra.mrb[0].mxu0 %v4813
    %v4932 = vpop.f32.mrb[0].mxu0
    %v4933 = vadd.f32 0.0, %v4932
    %v4934 = vpop.f32.mrb[0].mxu0
    %4935 = vmatprep.mubr.f32.mxu0 0.0
    %4936 = vmatmul.mubr.f32.gmra.mrb[0].mxu0 %v4816
    %v4937 = vpop.f32.mrb[0].mxu0
    %v4938 = vadd.f32 0.0, %v4937
    %v4939 = vpop.f32.mrb[0].mxu0
    %4940 = vmatprep.mubr.f32.mxu0 0.0
    %4941 = vmatmul.mubr.f32.gmra.mrb[0].mxu0 %v4819
    %v4942 = vpop.f32.mrb[0].mxu0
    %v4943 = vadd.f32 0.0, %v4942
    %v4944 = vpop.f32.mrb[0].mxu0
    %4945 = vmatprep.mubr.f32.mxu0 0.0
    %4946 = vmatmul.mubr.f32.gmra.mrb[0].mxu0 %v4822
    %v4947 = vpop.f32.mrb[0].mxu0
    %v4948 = vadd.f32 0.0, %v4947
    %v4949 = vpop.f32.mrb[0].mxu0
    %4950 = vmatprep.mubr.f32.mxu0 0.0
    %4951 = vmatmul.mubr.f32.gmra.mrb[0].mxu0 %v4825
    %v4952 = vpop.f32.mrb[0].mxu0
    %v4953 = vadd.f32 0.0, %v4952
    %v4954 = vpop.f32.mrb[0].mxu0
    %4955 = vmatprep.mubr.f32.mxu0 0.0
    %4956 = vmatmul.mubr.f32.gmra.mrb[0].mxu0 %v4828
    %v4957 = vpop.f32.mrb[0].mxu0
    %v4958 = vadd.f32 0.0, %v4957
    %v4959 = vpop.f32.mrb[0].mxu0
    %4960 = vmatprep.mubr.f32.mxu0 0.0
    %4961 = vmatmul.mubr.f32.gmra.mrb[0].mxu0 %v4831
    %v4962 = vpop.f32.mrb[0].mxu0
    %v4963 = vadd.f32 0.0, %v4962
    %v4964 = vpop.f32.mrb[0].mxu0
    %4965 = vmatprep.mubr.f32.mxu0 0.0
    %4966 = vmatmul.mubr.f32.gmra.mrb[0].mxu0 %v4834
    %v4967 = vpop.f32.mrb[0].mxu0
    %v4968 = vadd.f32 0.0, %v4967
    %v4969 = vpop.f32.mrb[0].mxu0
    %4970 = vmatprep.mubr.f32.mxu0 0.0
    %4971 = vmatmul.mubr.f32.gmra.mrb[0].mxu0 %v4837
    %v4972 = vpop.f32.mrb[0].mxu0
    %v4973 = vadd.f32 0.0, %v4972
    %v4974 = vpop.f32.mrb[0].mxu0
    %4975 = vmatprep.mubr.f32.mxu0 0.0
    %4976 = vmatmul.mubr.f32.gmra.mrb[0].mxu0 %v4840
    %v4977 = vpop.f32.mrb[0].mxu0
    %v4978 = vadd.f32 0.0, %v4977
    %v4979 = vpop.f32.mrb[0].mxu0
    %4980 = vmatprep.mubr.f32.mxu0 0.0
    %4981 = vmatmul.mubr.f32.gmra.mrb[0].mxu0 %v4843
    %v4982 = vpop.f32.mrb[0].mxu0
    %v4983 = vadd.f32 0.0, %v4982
    %v4984 = vpop.f32.mrb[0].mxu0
    %4985 = vmatprep.mubr.f32.mxu0 0.0
    %4986 = vmatmul.mubr.f32.gmra.mrb[0].mxu0 %v4846
    %v4987 = vpop.f32.mrb[0].mxu0
    %v4988 = vadd.f32 0.0, %v4987
    %v4989 = vpop.f32.mrb[0].mxu0
    %4990 = vmatprep.mubr.f32.mxu0 0.0
    %4991 = vmatmul.mubr.f32.gmra.mrb[0].mxu0 %v4849
    %v4992 = vpop.f32.mrb[0].mxu0
    %v4993 = vadd.f32 0.0, %v4992
    %v4994 = vpop.f32.mrb[0].mxu0
    %4995 = vdwg.mxu0
    %v4997 = vsel %vm4295, %v4755, 0
    %v5000 = vsel %vm4295, %v4756, 0
    %v5003 = vsel %vm4295, %v4757, 0
    %v5006 = vsel %vm4295, %v4758, 0
    %v5009 = vsel %vm4295, %v4759, 0
    %v5012 = vsel %vm4295, %v4760, 0
    %v5015 = vsel %vm4295, %v4761, 0
    %v5018 = vsel %vm4295, %v4762, 0
    %v5021 = vsel %vm4295, %v4763, 0
    %v5024 = vsel %vm4295, %v4764, 0
    %v5027 = vsel %vm4295, %v4765, 0
    %v5030 = vsel %vm4295, %v4766, 0
    %v5033 = vsel %vm4295, %v4767, 0
    %v5036 = vsel %vm4295, %v4768, 0
    %v5039 = vsel %vm4295, %v4769, 0
    %v5042 = vsel %vm4295, %v4770, 0
    %5044 = vmatprep.subr.mxu0 0.0
    %5045 = vmatpush1.msra.mxu0 %v4771
    %5046 = vmatprep.subr.mxu0 0.0
    %5047 = vmatpush1.msra.mxu0 %v4772
    %5048 = vmatprep.subr.mxu0 0.0
    %5049 = vmatpush1.msra.mxu0 %v4773
    %5050 = vmatprep.subr.mxu0 0.0
    %5051 = vmatpush1.msra.mxu0 %v4774
    %5052 = vmatprep.subr.mxu0 0.0
    %5053 = vmatpush1.msra.mxu0 %v4775
    %5054 = vmatprep.subr.mxu0 0.0
    %5055 = vmatpush1.msra.mxu0 %v4776
    %5056 = vmatprep.subr.mxu0 0.0
    %5057 = vmatpush1.msra.mxu0 %v4777
    %5058 = vmatprep.subr.mxu0 0.0
    %5059 = vmatpush1.msra.mxu0 %v4778
    %5060 = vmatprep.subr.mxu0 0.0
    %5061 = vmatpush1.msra.mxu0 0.0
    %5062 = vmatprep.subr.mxu0 0.0
    %5063 = vmatpush1.msra.mxu0 0.0
    %5064 = vmatprep.subr.mxu0 0.0
    %5065 = vmatpush1.msra.mxu0 0.0
    %5066 = vmatprep.subr.mxu0 0.0
    %5067 = vmatpush1.msra.mxu0 0.0
    %5068 = vmatprep.subr.mxu0 0.0
    %5069 = vmatpush1.msra.mxu0 0.0
    %5070 = vmatprep.subr.mxu0 0.0
    %5071 = vmatpush1.msra.mxu0 0.0
    %5072 = vmatprep.subr.mxu0 0.0
    %5073 = vmatpush1.msra.mxu0 0.0
    %5074 = vmatprep.subr.mxu0 0.0
    %5075 = vmatpush1.msra.mxu0 0.0
    %5076 = vmatprep.subr.mxu0 0.0
    %5077 = vmatpush1.msra.mxu0 0.0
    %5078 = vmatprep.subr.mxu0 0.0
    %5079 = vmatpush1.msra.mxu0 0.0
    %5080 = vmatprep.subr.mxu0 0.0
    %5081 = vmatpush1.msra.mxu0 0.0
    %5082 = vmatprep.subr.mxu0 0.0
    %5083 = vmatpush1.msra.mxu0 0.0
    %5084 = vmatprep.subr.mxu0 0.0
    %5085 = vmatpush1.msra.mxu0 0.0
    %5086 = vmatprep.subr.mxu0 0.0
    %5087 = vmatpush1.msra.mxu0 0.0
    %5088 = vmatprep.subr.mxu0 0.0
    %5089 = vmatpush1.msra.mxu0 0.0
    %5090 = vmatprep.subr.mxu0 0.0
    %5091 = vmatpush1.msra.mxu0 0.0
    %5092 = vmatprep.subr.mxu0 0.0
    %5093 = vmatpush1.msra.mxu0 0.0
    %5094 = vmatprep.subr.mxu0 0.0
    %5095 = vmatpush1.msra.mxu0 0.0
    %5096 = vmatprep.subr.mxu0 0.0
    %5097 = vmatpush1.msra.mxu0 0.0
    %5098 = vmatprep.subr.mxu0 0.0
    %5099 = vmatpush1.msra.mxu0 0.0
    %5100 = vmatprep.subr.mxu0 0.0
    %5101 = vmatpush1.msra.mxu0 0.0
    %5102 = vmatprep.subr.mxu0 0.0
    %5103 = vmatpush1.msra.mxu0 0.0
    %5104 = vmatprep.subr.mxu0 0.0
    %5105 = vmatpush1.msra.mxu0 0.0
    %5106 = vmatprep.subr.mxu0 0.0
    %5107 = vmatpush1.msra.mxu0 0.0
    %5108 = vmatprep.mubr.f32.mxu0 0.0
    %5109 = vmatmul.mubr.f32.gmra.mrb[0].mxu0 %v4997
    %v5110 = vpop.f32.mrb[0].mxu0
    %v5111 = vadd.f32 %v4918, %v5110
    %v5112 = vpop.f32.mrb[0].mxu0
    %5113 = vmatprep.mubr.f32.mxu0 0.0
    %5114 = vmatmul.mubr.f32.gmra.mrb[0].mxu0 %v5000
    %v5115 = vpop.f32.mrb[0].mxu0
    %v5116 = vadd.f32 %v4923, %v5115
    %v5117 = vpop.f32.mrb[0].mxu0
    %5118 = vmatprep.mubr.f32.mxu0 0.0
    %5119 = vmatmul.mubr.f32.gmra.mrb[0].mxu0 %v5003
    %v5120 = vpop.f32.mrb[0].mxu0
    %v5121 = vadd.f32 %v4928, %v5120
    %v5122 = vpop.f32.mrb[0].mxu0
    %5123 = vmatprep.mubr.f32.mxu0 0.0
    %5124 = vmatmul.mubr.f32.gmra.mrb[0].mxu0 %v5006
    %v5125 = vpop.f32.mrb[0].mxu0
    %v5126 = vadd.f32 %v4933, %v5125
    %v5127 = vpop.f32.mrb[0].mxu0
    %5128 = vmatprep.mubr.f32.mxu0 0.0
    %5129 = vmatmul.mubr.f32.gmra.mrb[0].mxu0 %v5009
    %v5130 = vpop.f32.mrb[0].mxu0
    %v5131 = vadd.f32 %v4938, %v5130
    %v5132 = vpop.f32.mrb[0].mxu0
    %5133 = vmatprep.mubr.f32.mxu0 0.0
    %5134 = vmatmul.mubr.f32.gmra.mrb[0].mxu0 %v5012
    %v5135 = vpop.f32.mrb[0].mxu0
    %v5136 = vadd.f32 %v4943, %v5135
    %v5137 = vpop.f32.mrb[0].mxu0
    %5138 = vmatprep.mubr.f32.mxu0 0.0
    %5139 = vmatmul.mubr.f32.gmra.mrb[0].mxu0 %v5015
    %v5140 = vpop.f32.mrb[0].mxu0
    %v5141 = vadd.f32 %v4948, %v5140
    %v5142 = vpop.f32.mrb[0].mxu0
    %5143 = vmatprep.mubr.f32.mxu0 0.0
    %5144 = vmatmul.mubr.f32.gmra.mrb[0].mxu0 %v5018
    %v5145 = vpop.f32.mrb[0].mxu0
    %v5146 = vadd.f32 %v4953, %v5145
    %v5147 = vpop.f32.mrb[0].mxu0
    %5148 = vmatprep.mubr.f32.mxu0 0.0
    %5149 = vmatmul.mubr.f32.gmra.mrb[0].mxu0 %v5021
    %v5150 = vpop.f32.mrb[0].mxu0
    %v5151 = vadd.f32 %v4958, %v5150
    %v5152 = vpop.f32.mrb[0].mxu0
    %5153 = vmatprep.mubr.f32.mxu0 0.0
    %5154 = vmatmul.mubr.f32.gmra.mrb[0].mxu0 %v5024
    %v5155 = vpop.f32.mrb[0].mxu0
    %v5156 = vadd.f32 %v4963, %v5155
    %v5157 = vpop.f32.mrb[0].mxu0
    %5158 = vmatprep.mubr.f32.mxu0 0.0
    %5159 = vmatmul.mubr.f32.gmra.mrb[0].mxu0 %v5027
    %v5160 = vpop.f32.mrb[0].mxu0
    %v5161 = vadd.f32 %v4968, %v5160
    %v5162 = vpop.f32.mrb[0].mxu0
    %5163 = vmatprep.mubr.f32.mxu0 0.0
    %5164 = vmatmul.mubr.f32.gmra.mrb[0].mxu0 %v5030
    %v5165 = vpop.f32.mrb[0].mxu0
    %v5166 = vadd.f32 %v4973, %v5165
    %v5167 = vpop.f32.mrb[0].mxu0
    %5168 = vmatprep.mubr.f32.mxu0 0.0
    %5169 = vmatmul.mubr.f32.gmra.mrb[0].mxu0 %v5033
    %v5170 = vpop.f32.mrb[0].mxu0
    %v5171 = vadd.f32 %v4978, %v5170
    %v5172 = vpop.f32.mrb[0].mxu0
    %5173 = vmatprep.mubr.f32.mxu0 0.0
    %5174 = vmatmul.mubr.f32.gmra.mrb[0].mxu0 %v5036
    %v5175 = vpop.f32.mrb[0].mxu0
    %v5176 = vadd.f32 %v4983, %v5175
    %v5177 = vpop.f32.mrb[0].mxu0
    %5178 = vmatprep.mubr.f32.mxu0 0.0
    %5179 = vmatmul.mubr.f32.gmra.mrb[0].mxu0 %v5039
    %v5180 = vpop.f32.mrb[0].mxu0
    %v5181 = vadd.f32 %v4988, %v5180
    %v5182 = vpop.f32.mrb[0].mxu0
    %5183 = vmatprep.mubr.f32.mxu0 0.0
    %5184 = vmatmul.mubr.f32.gmra.mrb[0].mxu0 %v5042
    %v5185 = vpop.f32.mrb[0].mxu0
    %v5186 = vadd.f32 %v4993, %v5185
    %v5187 = vpop.f32.mrb[0].mxu0
    %5188 = vdwg.mxu0
    %v5189 = vld [vmem:[#allocation5 + $0x8] sm:$0xff]
    %v5190 = vld [vmem:[#allocation5 + $0x10] sm:$0xff]
    %v5191 = vld [vmem:[#allocation5 + $0x18] sm:$0xff]
    %v5192 = vld [vmem:[#allocation5 + $0x20] sm:$0xff]
    %v5193 = vld [vmem:[#allocation5 + $0x28] sm:$0xff]
    %v5194 = vld [vmem:[#allocation5 + $0x30] sm:$0xff]
    %v5195 = vld [vmem:[#allocation5 + $0x38] sm:$0xff]
    %v5196 = vld [vmem:[#allocation5 + $0x40] sm:$0xff]
    %v5197 = vld [vmem:[#allocation5 + $0x48] sm:$0xff]
    %v5198 = vld [vmem:[#allocation5 + $0x50] sm:$0xff]
    %v5199 = vld [vmem:[#allocation5 + $0x58] sm:$0xff]
    %v5200 = vld [vmem:[#allocation5 + $0x60] sm:$0xff]
    %v5201 = vld [vmem:[#allocation5 + $0x68] sm:$0xff]
    %v5202 = vld [vmem:[#allocation5 + $0x70] sm:$0xff]
    %v5203 = vld [vmem:[#allocation5 + $0x78] sm:$0xff]
    %v5204 = vld [vmem:[#allocation5 + $0x80] sm:$0xff]
    %v5205 = vld [vmem:[%s7 + $0x80] sm:$0xff]
    %v5206 = vld [vmem:[%s7 + $0x88] sm:$0xff]
    %v5207 = vld [vmem:[%s7 + $0x90] sm:$0xff]
    %v5208 = vld [vmem:[%s7 + $0x98] sm:$0xff]
    %v5209 = vld [vmem:[%s7 + $0xa0] sm:$0xff]
    %v5210 = vld [vmem:[%s7 + $0xa8] sm:$0xff]
    %v5211 = vld [vmem:[%s7 + $0xb0] sm:$0xff]
    %v5212 = vld [vmem:[%s7 + $0xb8] sm:$0xff]
    %v5214 = vsel %vm4295, %v5189, 0
    %v5217 = vsel %vm4295, %v5190, 0
    %v5220 = vsel %vm4295, %v5191, 0
    %v5223 = vsel %vm4295, %v5192, 0
    %v5226 = vsel %vm4295, %v5193, 0
    %v5229 = vsel %vm4295, %v5194, 0
    %v5232 = vsel %vm4295, %v5195, 0
    %v5235 = vsel %vm4295, %v5196, 0
    %v5238 = vsel %vm4295, %v5197, 0
    %v5241 = vsel %vm4295, %v5198, 0
    %v5244 = vsel %vm4295, %v5199, 0
    %v5247 = vsel %vm4295, %v5200, 0
    %v5250 = vsel %vm4295, %v5201, 0
    %v5253 = vsel %vm4295, %v5202, 0
    %v5256 = vsel %vm4295, %v5203, 0
    %v5259 = vsel %vm4295, %v5204, 0
    %5261 = vmatprep.subr.mxu0 0.0
    %5262 = vmatpush1.msra.mxu0 %v5205
    %5263 = vmatprep.subr.mxu0 0.0
    %5264 = vmatpush1.msra.mxu0 %v5206
    %5265 = vmatprep.subr.mxu0 0.0
    %5266 = vmatpush1.msra.mxu0 %v5207
    %5267 = vmatprep.subr.mxu0 0.0
    %5268 = vmatpush1.msra.mxu0 %v5208
    %5269 = vmatprep.subr.mxu0 0.0
    %5270 = vmatpush1.msra.mxu0 %v5209
    %5271 = vmatprep.subr.mxu0 0.0
    %5272 = vmatpush1.msra.mxu0 %v5210
    %5273 = vmatprep.subr.mxu0 0.0
    %5274 = vmatpush1.msra.mxu0 %v5211
    %5275 = vmatprep.subr.mxu0 0.0
    %5276 = vmatpush1.msra.mxu0 %v5212
    %5277 = vmatprep.subr.mxu0 0.0
    %5278 = vmatpush1.msra.mxu0 0.0
    %5279 = vmatprep.subr.mxu0 0.0
    %5280 = vmatpush1.msra.mxu0 0.0
    %5281 = vmatprep.subr.mxu0 0.0
    %5282 = vmatpush1.msra.mxu0 0.0
    %5283 = vmatprep.subr.mxu0 0.0
    %5284 = vmatpush1.msra.mxu0 0.0
    %5285 = vmatprep.subr.mxu0 0.0
    %5286 = vmatpush1.msra.mxu0 0.0
    %5287 = vmatprep.subr.mxu0 0.0
    %5288 = vmatpush1.msra.mxu0 0.0
    %5289 = vmatprep.subr.mxu0 0.0
    %5290 = vmatpush1.msra.mxu0 0.0
    %5291 = vmatprep.subr.mxu0 0.0
    %5292 = vmatpush1.msra.mxu0 0.0
    %5293 = vmatprep.subr.mxu0 0.0
    %5294 = vmatpush1.msra.mxu0 0.0
    %5295 = vmatprep.subr.mxu0 0.0
    %5296 = vmatpush1.msra.mxu0 0.0
    %5297 = vmatprep.subr.mxu0 0.0
    %5298 = vmatpush1.msra.mxu0 0.0
    %5299 = vmatprep.subr.mxu0 0.0
    %5300 = vmatpush1.msra.mxu0 0.0
    %5301 = vmatprep.subr.mxu0 0.0
    %5302 = vmatpush1.msra.mxu0 0.0
    %5303 = vmatprep.subr.mxu0 0.0
    %5304 = vmatpush1.msra.mxu0 0.0
    %5305 = vmatprep.subr.mxu0 0.0
    %5306 = vmatpush1.msra.mxu0 0.0
    %5307 = vmatprep.subr.mxu0 0.0
    %5308 = vmatpush1.msra.mxu0 0.0
    %5309 = vmatprep.subr.mxu0 0.0
    %5310 = vmatpush1.msra.mxu0 0.0
    %5311 = vmatprep.subr.mxu0 0.0
    %5312 = vmatpush1.msra.mxu0 0.0
    %5313 = vmatprep.subr.mxu0 0.0
    %5314 = vmatpush1.msra.mxu0 0.0
    %5315 = vmatprep.subr.mxu0 0.0
    %5316 = vmatpush1.msra.mxu0 0.0
    %5317 = vmatprep.subr.mxu0 0.0
    %5318 = vmatpush1.msra.mxu0 0.0
    %5319 = vmatprep.subr.mxu0 0.0
    %5320 = vmatpush1.msra.mxu0 0.0
    %5321 = vmatprep.subr.mxu0 0.0
    %5322 = vmatpush1.msra.mxu0 0.0
    %5323 = vmatprep.subr.mxu0 0.0
    %5324 = vmatpush1.msra.mxu0 0.0
    %5325 = vmatprep.mubr.f32.mxu0 0.0
    %5326 = vmatmul.mubr.f32.gmra.mrb[0].mxu0 %v5214
    %v5327 = vpop.f32.mrb[0].mxu0
    %v5328 = vadd.f32 0.0, %v5327
    %v5329 = vpop.f32.mrb[0].mxu0
    %5330 = vmatprep.mubr.f32.mxu0 0.0
    %5331 = vmatmul.mubr.f32.gmra.mrb[0].mxu0 %v5217
    %v5332 = vpop.f32.mrb[0].mxu0
    %v5333 = vadd.f32 0.0, %v5332
    %v5334 = vpop.f32.mrb[0].mxu0
    %5335 = vmatprep.mubr.f32.mxu0 0.0
    %5336 = vmatmul.mubr.f32.gmra.mrb[0].mxu0 %v5220
    %v5337 = vpop.f32.mrb[0].mxu0
    %v5338 = vadd.f32 0.0, %v5337
    %v5339 = vpop.f32.mrb[0].mxu0
    %5340 = vmatprep.mubr.f32.mxu0 0.0
    %5341 = vmatmul.mubr.f32.gmra.mrb[0].mxu0 %v5223
    %v5342 = vpop.f32.mrb[0].mxu0
    %v5343 = vadd.f32 0.0, %v5342
    %v5344 = vpop.f32.mrb[0].mxu0
    %5345 = vmatprep.mubr.f32.mxu0 0.0
    %5346 = vmatmul.mubr.f32.gmra.mrb[0].mxu0 %v5226
    %v5347 = vpop.f32.mrb[0].mxu0
    %v5348 = vadd.f32 0.0, %v5347
    %v5349 = vpop.f32.mrb[0].mxu0
    %5350 = vmatprep.mubr.f32.mxu0 0.0
    %5351 = vmatmul.mubr.f32.gmra.mrb[0].mxu0 %v5229
    %v5352 = vpop.f32.mrb[0].mxu0
    %v5353 = vadd.f32 0.0, %v5352
    %v5354 = vpop.f32.mrb[0].mxu0
    %5355 = vmatprep.mubr.f32.mxu0 0.0
    %5356 = vmatmul.mubr.f32.gmra.mrb[0].mxu0 %v5232
    %v5357 = vpop.f32.mrb[0].mxu0
    %v5358 = vadd.f32 0.0, %v5357
    %v5359 = vpop.f32.mrb[0].mxu0
    %5360 = vmatprep.mubr.f32.mxu0 0.0
    %5361 = vmatmul.mubr.f32.gmra.mrb[0].mxu0 %v5235
    %v5362 = vpop.f32.mrb[0].mxu0
    %v5363 = vadd.f32 0.0, %v5362
    %v5364 = vpop.f32.mrb[0].mxu0
    %5365 = vmatprep.mubr.f32.mxu0 0.0
    %5366 = vmatmul.mubr.f32.gmra.mrb[0].mxu0 %v5238
    %v5367 = vpop.f32.mrb[0].mxu0
    %v5368 = vadd.f32 0.0, %v5367
    %v5369 = vpop.f32.mrb[0].mxu0
    %5370 = vmatprep.mubr.f32.mxu0 0.0
    %5371 = vmatmul.mubr.f32.gmra.mrb[0].mxu0 %v5241
    %v5372 = vpop.f32.mrb[0].mxu0
    %v5373 = vadd.f32 0.0, %v5372
    %v5374 = vpop.f32.mrb[0].mxu0
    %5375 = vmatprep.mubr.f32.mxu0 0.0
    %5376 = vmatmul.mubr.f32.gmra.mrb[0].mxu0 %v5244
    %v5377 = vpop.f32.mrb[0].mxu0
    %v5378 = vadd.f32 0.0, %v5377
    %v5379 = vpop.f32.mrb[0].mxu0
    %5380 = vmatprep.mubr.f32.mxu0 0.0
    %5381 = vmatmul.mubr.f32.gmra.mrb[0].mxu0 %v5247
    %v5382 = vpop.f32.mrb[0].mxu0
    %v5383 = vadd.f32 0.0, %v5382
    %v5384 = vpop.f32.mrb[0].mxu0
    %5385 = vmatprep.mubr.f32.mxu0 0.0
    %5386 = vmatmul.mubr.f32.gmra.mrb[0].mxu0 %v5250
    %v5387 = vpop.f32.mrb[0].mxu0
    %v5388 = vadd.f32 0.0, %v5387
    %v5389 = vpop.f32.mrb[0].mxu0
    %5390 = vmatprep.mubr.f32.mxu0 0.0
    %5391 = vmatmul.mubr.f32.gmra.mrb[0].mxu0 %v5253
    %v5392 = vpop.f32.mrb[0].mxu0
    %v5393 = vadd.f32 0.0, %v5392
    %v5394 = vpop.f32.mrb[0].mxu0
    %5395 = vmatprep.mubr.f32.mxu0 0.0
    %5396 = vmatmul.mubr.f32.gmra.mrb[0].mxu0 %v5256
    %v5397 = vpop.f32.mrb[0].mxu0
    %v5398 = vadd.f32 0.0, %v5397
    %v5399 = vpop.f32.mrb[0].mxu0
    %5400 = vmatprep.mubr.f32.mxu0 0.0
    %5401 = vmatmul.mubr.f32.gmra.mrb[0].mxu0 %v5259
    %v5402 = vpop.f32.mrb[0].mxu0
    %v5403 = vadd.f32 0.0, %v5402
    %v5404 = vpop.f32.mrb[0].mxu0
    %5405 = vdwg.mxu0
    %v5406 = vadd.f32 %v5111, %v5328
    %v5407 = vadd.f32 %v5116, %v5333
    %v5408 = vadd.f32 %v5121, %v5338
    %v5409 = vadd.f32 %v5126, %v5343
    %v5410 = vadd.f32 %v5131, %v5348
    %v5411 = vadd.f32 %v5136, %v5353
    %v5412 = vadd.f32 %v5141, %v5358
    %v5413 = vadd.f32 %v5146, %v5363
    %v5414 = vadd.f32 %v5151, %v5368
    %v5415 = vadd.f32 %v5156, %v5373
    %v5416 = vadd.f32 %v5161, %v5378
    %v5417 = vadd.f32 %v5166, %v5383
    %v5418 = vadd.f32 %v5171, %v5388
    %v5419 = vadd.f32 %v5176, %v5393
    %v5420 = vadd.f32 %v5181, %v5398
    %v5421 = vadd.f32 %v5186, %v5403
    %v5422 = vld [vmem:[#allocation5 + $0x9] sm:$0xff]
    %v5423 = vld [vmem:[#allocation5 + $0x11] sm:$0xff]
    %v5424 = vld [vmem:[#allocation5 + $0x19] sm:$0xff]
    %v5425 = vld [vmem:[#allocation5 + $0x21] sm:$0xff]
    %v5426 = vld [vmem:[#allocation5 + $0x29] sm:$0xff]
    %v5427 = vld [vmem:[#allocation5 + $0x31] sm:$0xff]
    %v5428 = vld [vmem:[#allocation5 + $0x39] sm:$0xff]
    %v5429 = vld [vmem:[#allocation5 + $0x41] sm:$0xff]
    %v5430 = vld [vmem:[#allocation5 + $0x49] sm:$0xff]
    %v5431 = vld [vmem:[#allocation5 + $0x51] sm:$0xff]
    %v5432 = vld [vmem:[#allocation5 + $0x59] sm:$0xff]
    %v5433 = vld [vmem:[#allocation5 + $0x61] sm:$0xff]
    %v5434 = vld [vmem:[#allocation5 + $0x69] sm:$0xff]
    %v5435 = vld [vmem:[#allocation5 + $0x71] sm:$0xff]
    %v5436 = vld [vmem:[#allocation5 + $0x79] sm:$0xff]
    %v5437 = vld [vmem:[#allocation5 + $0x81] sm:$0xff]
    %v5438 = vld [vmem:[%s7 + $0xc0] sm:$0xff]
    %v5439 = vld [vmem:[%s7 + $0xc8] sm:$0xff]
    %v5440 = vld [vmem:[%s7 + $0xd0] sm:$0xff]
    %v5441 = vld [vmem:[%s7 + $0xd8] sm:$0xff]
    %v5442 = vld [vmem:[%s7 + $0xe0] sm:$0xff]
    %v5443 = vld [vmem:[%s7 + $0xe8] sm:$0xff]
    %v5444 = vld [vmem:[%s7 + $0xf0] sm:$0xff]
    %v5445 = vld [vmem:[%s7 + $0xf8] sm:$0xff]
    %v5447 = vsel %vm4295, %v5422, 0
    %v5450 = vsel %vm4295, %v5423, 0
    %v5453 = vsel %vm4295, %v5424, 0
    %v5456 = vsel %vm4295, %v5425, 0
    %v5459 = vsel %vm4295, %v5426, 0
    %v5462 = vsel %vm4295, %v5427, 0
    %v5465 = vsel %vm4295, %v5428, 0
    %v5468 = vsel %vm4295, %v5429, 0
    %v5471 = vsel %vm4295, %v5430, 0
    %v5474 = vsel %vm4295, %v5431, 0
    %v5477 = vsel %vm4295, %v5432, 0
    %v5480 = vsel %vm4295, %v5433, 0
    %v5483 = vsel %vm4295, %v5434, 0
    %v5486 = vsel %vm4295, %v5435, 0
    %v5489 = vsel %vm4295, %v5436, 0
    %v5492 = vsel %vm4295, %v5437, 0
    %5494 = vmatprep.subr.mxu0 0.0
    %5495 = vmatpush1.msra.mxu0 %v5438
    %5496 = vmatprep.subr.mxu0 0.0
    %5497 = vmatpush1.msra.mxu0 %v5439
    %5498 = vmatprep.subr.mxu0 0.0
    %5499 = vmatpush1.msra.mxu0 %v5440
    %5500 = vmatprep.subr.mxu0 0.0
    %5501 = vmatpush1.msra.mxu0 %v5441
    %5502 = vmatprep.subr.mxu0 0.0
    %5503 = vmatpush1.msra.mxu0 %v5442
    %5504 = vmatprep.subr.mxu0 0.0
    %5505 = vmatpush1.msra.mxu0 %v5443
    %5506 = vmatprep.subr.mxu0 0.0
    %5507 = vmatpush1.msra.mxu0 %v5444
    %5508 = vmatprep.subr.mxu0 0.0
    %5509 = vmatpush1.msra.mxu0 %v5445
    %5510 = vmatprep.subr.mxu0 0.0
    %5511 = vmatpush1.msra.mxu0 0.0
    %5512 = vmatprep.subr.mxu0 0.0
    %5513 = vmatpush1.msra.mxu0 0.0
    %5514 = vmatprep.subr.mxu0 0.0
    %5515 = vmatpush1.msra.mxu0 0.0
    %5516 = vmatprep.subr.mxu0 0.0
    %5517 = vmatpush1.msra.mxu0 0.0
    %5518 = vmatprep.subr.mxu0 0.0
    %5519 = vmatpush1.msra.mxu0 0.0
    %5520 = vmatprep.subr.mxu0 0.0
    %5521 = vmatpush1.msra.mxu0 0.0
    %5522 = vmatprep.subr.mxu0 0.0
    %5523 = vmatpush1.msra.mxu0 0.0
    %5524 = vmatprep.subr.mxu0 0.0
    %5525 = vmatpush1.msra.mxu0 0.0
    %5526 = vmatprep.subr.mxu0 0.0
    %5527 = vmatpush1.msra.mxu0 0.0
    %5528 = vmatprep.subr.mxu0 0.0
    %5529 = vmatpush1.msra.mxu0 0.0
    %5530 = vmatprep.subr.mxu0 0.0
    %5531 = vmatpush1.msra.mxu0 0.0
    %5532 = vmatprep.subr.mxu0 0.0
    %5533 = vmatpush1.msra.mxu0 0.0
    %5534 = vmatprep.subr.mxu0 0.0
    %5535 = vmatpush1.msra.mxu0 0.0
    %5536 = vmatprep.subr.mxu0 0.0
    %5537 = vmatpush1.msra.mxu0 0.0
    %5538 = vmatprep.subr.mxu0 0.0
    %5539 = vmatpush1.msra.mxu0 0.0
    %5540 = vmatprep.subr.mxu0 0.0
    %5541 = vmatpush1.msra.mxu0 0.0
    %5542 = vmatprep.subr.mxu0 0.0
    %5543 = vmatpush1.msra.mxu0 0.0
    %5544 = vmatprep.subr.mxu0 0.0
    %5545 = vmatpush1.msra.mxu0 0.0
    %5546 = vmatprep.subr.mxu0 0.0
    %5547 = vmatpush1.msra.mxu0 0.0
    %5548 = vmatprep.subr.mxu0 0.0
    %5549 = vmatpush1.msra.mxu0 0.0
    %5550 = vmatprep.subr.mxu0 0.0
    %5551 = vmatpush1.msra.mxu0 0.0
    %5552 = vmatprep.subr.mxu0 0.0
    %5553 = vmatpush1.msra.mxu0 0.0
    %5554 = vmatprep.subr.mxu0 0.0
    %5555 = vmatpush1.msra.mxu0 0.0
    %5556 = vmatprep.subr.mxu0 0.0
    %5557 = vmatpush1.msra.mxu0 0.0
    %5558 = vmatprep.mubr.f32.mxu0 0.0
    %5559 = vmatmul.mubr.f32.gmra.mrb[0].mxu0 %v5447
    %v5560 = vpop.f32.mrb[0].mxu0
    %v5561 = vadd.f32 0.0, %v5560
    %v5562 = vpop.f32.mrb[0].mxu0
    %5563 = vmatprep.mubr.f32.mxu0 0.0
    %5564 = vmatmul.mubr.f32.gmra.mrb[0].mxu0 %v5450
    %v5565 = vpop.f32.mrb[0].mxu0
    %v5566 = vadd.f32 0.0, %v5565
    %v5567 = vpop.f32.mrb[0].mxu0
    %5568 = vmatprep.mubr.f32.mxu0 0.0
    %5569 = vmatmul.mubr.f32.gmra.mrb[0].mxu0 %v5453
    %v5570 = vpop.f32.mrb[0].mxu0
    %v5571 = vadd.f32 0.0, %v5570
    %v5572 = vpop.f32.mrb[0].mxu0
    %5573 = vmatprep.mubr.f32.mxu0 0.0
    %5574 = vmatmul.mubr.f32.gmra.mrb[0].mxu0 %v5456
    %v5575 = vpop.f32.mrb[0].mxu0
    %v5576 = vadd.f32 0.0, %v5575
    %v5577 = vpop.f32.mrb[0].mxu0
    %5578 = vmatprep.mubr.f32.mxu0 0.0
    %5579 = vmatmul.mubr.f32.gmra.mrb[0].mxu0 %v5459
    %v5580 = vpop.f32.mrb[0].mxu0
    %v5581 = vadd.f32 0.0, %v5580
    %v5582 = vpop.f32.mrb[0].mxu0
    %5583 = vmatprep.mubr.f32.mxu0 0.0
    %5584 = vmatmul.mubr.f32.gmra.mrb[0].mxu0 %v5462
    %v5585 = vpop.f32.mrb[0].mxu0
    %v5586 = vadd.f32 0.0, %v5585
    %v5587 = vpop.f32.mrb[0].mxu0
    %5588 = vmatprep.mubr.f32.mxu0 0.0
    %5589 = vmatmul.mubr.f32.gmra.mrb[0].mxu0 %v5465
    %v5590 = vpop.f32.mrb[0].mxu0
    %v5591 = vadd.f32 0.0, %v5590
    %v5592 = vpop.f32.mrb[0].mxu0
    %5593 = vmatprep.mubr.f32.mxu0 0.0
    %5594 = vmatmul.mubr.f32.gmra.mrb[0].mxu0 %v5468
    %v5595 = vpop.f32.mrb[0].mxu0
    %v5596 = vadd.f32 0.0, %v5595
    %v5597 = vpop.f32.mrb[0].mxu0
    %5598 = vmatprep.mubr.f32.mxu0 0.0
    %5599 = vmatmul.mubr.f32.gmra.mrb[0].mxu0 %v5471
    %v5600 = vpop.f32.mrb[0].mxu0
    %v5601 = vadd.f32 0.0, %v5600
    %v5602 = vpop.f32.mrb[0].mxu0
    %5603 = vmatprep.mubr.f32.mxu0 0.0
    %5604 = vmatmul.mubr.f32.gmra.mrb[0].mxu0 %v5474
    %v5605 = vpop.f32.mrb[0].mxu0
    %v5606 = vadd.f32 0.0, %v5605
    %v5607 = vpop.f32.mrb[0].mxu0
    %5608 = vmatprep.mubr.f32.mxu0 0.0
    %5609 = vmatmul.mubr.f32.gmra.mrb[0].mxu0 %v5477
    %v5610 = vpop.f32.mrb[0].mxu0
    %v5611 = vadd.f32 0.0, %v5610
    %v5612 = vpop.f32.mrb[0].mxu0
    %5613 = vmatprep.mubr.f32.mxu0 0.0
    %5614 = vmatmul.mubr.f32.gmra.mrb[0].mxu0 %v5480
    %v5615 = vpop.f32.mrb[0].mxu0
    %v5616 = vadd.f32 0.0, %v5615
    %v5617 = vpop.f32.mrb[0].mxu0
    %5618 = vmatprep.mubr.f32.mxu0 0.0
    %5619 = vmatmul.mubr.f32.gmra.mrb[0].mxu0 %v5483
    %v5620 = vpop.f32.mrb[0].mxu0
    %v5621 = vadd.f32 0.0, %v5620
    %v5622 = vpop.f32.mrb[0].mxu0
    %5623 = vmatprep.mubr.f32.mxu0 0.0
    %5624 = vmatmul.mubr.f32.gmra.mrb[0].mxu0 %v5486
    %v5625 = vpop.f32.mrb[0].mxu0
    %v5626 = vadd.f32 0.0, %v5625
    %v5627 = vpop.f32.mrb[0].mxu0
    %5628 = vmatprep.mubr.f32.mxu0 0.0
    %5629 = vmatmul.mubr.f32.gmra.mrb[0].mxu0 %v5489
    %v5630 = vpop.f32.mrb[0].mxu0
    %v5631 = vadd.f32 0.0, %v5630
    %v5632 = vpop.f32.mrb[0].mxu0
    %5633 = vmatprep.mubr.f32.mxu0 0.0
    %5634 = vmatmul.mubr.f32.gmra.mrb[0].mxu0 %v5492
    %v5635 = vpop.f32.mrb[0].mxu0
    %v5636 = vadd.f32 0.0, %v5635
    %v5637 = vpop.f32.mrb[0].mxu0
    %5638 = vdwg.mxu0
    %v5639 = vadd.f32 %v5406, %v5561
    %v5640 = vadd.f32 %v5407, %v5566
    %v5641 = vadd.f32 %v5408, %v5571
    %v5642 = vadd.f32 %v5409, %v5576
    %v5643 = vadd.f32 %v5410, %v5581
    %v5644 = vadd.f32 %v5411, %v5586
    %v5645 = vadd.f32 %v5412, %v5591
    %v5646 = vadd.f32 %v5413, %v5596
    %v5647 = vadd.f32 %v5414, %v5601
    %v5648 = vadd.f32 %v5415, %v5606
    %v5649 = vadd.f32 %v5416, %v5611
    %v5650 = vadd.f32 %v5417, %v5616
    %v5651 = vadd.f32 %v5418, %v5621
    %v5652 = vadd.f32 %v5419, %v5626
    %v5653 = vadd.f32 %v5420, %v5631
    %v5654 = vadd.f32 %v5421, %v5636
    %v5655 = vld [vmem:[%s8] sm:$0x1]
    %v5657 = vlaneseq
    %v5658 = vshrl.u32 %v5657, 7
    %v5659 = vsub.s32 0, %v5658
    %v5660 = vrot.slane %v5655, %v5659
    %v5662 = vadd.f32 %v5639, %v5660
    %v5663 = vadd.f32 %v5640, %v5660
    %v5664 = vadd.f32 %v5641, %v5660
    %v5665 = vadd.f32 %v5642, %v5660
    %v5666 = vadd.f32 %v5643, %v5660
    %v5667 = vadd.f32 %v5644, %v5660
    %v5668 = vadd.f32 %v5645, %v5660
    %v5669 = vadd.f32 %v5646, %v5660
    %v5670 = vadd.f32 %v5647, %v5660
    %v5671 = vadd.f32 %v5648, %v5660
    %v5672 = vadd.f32 %v5649, %v5660
    %v5673 = vadd.f32 %v5650, %v5660
    %v5674 = vadd.f32 %v5651, %v5660
    %v5675 = vadd.f32 %v5652, %v5660
    %v5676 = vadd.f32 %v5653, %v5660
    %v5677 = vadd.f32 %v5654, %v5660
    %v5678 = vmax.f32 %v5662, 0.0
    %v5679 = vmax.f32 %v5663, 0.0
    %v5680 = vmax.f32 %v5664, 0.0
    %v5681 = vmax.f32 %v5665, 0.0
    %v5682 = vmax.f32 %v5666, 0.0
    %v5683 = vmax.f32 %v5667, 0.0
    %v5684 = vmax.f32 %v5668, 0.0
    %v5685 = vmax.f32 %v5669, 0.0
    %v5686 = vmax.f32 %v5670, 0.0
    %v5687 = vmax.f32 %v5671, 0.0
    %v5688 = vmax.f32 %v5672, 0.0
    %v5689 = vmax.f32 %v5673, 0.0
    %v5690 = vmax.f32 %v5674, 0.0
    %v5691 = vmax.f32 %v5675, 0.0
    %v5692 = vmax.f32 %v5676, 0.0
    %v5693 = vmax.f32 %v5677, 0.0
    %v5694 = vld [vmem:[%s9] sm:$0x1]
    %v5695 = vld [vmem:[%s10] sm:$0x1]
    %v5696 = vand.u32 %v4039, 7
    %v5697 = vand.u32 %v4040, 7
    %v5698 = vand.u32 %v4041, 7
    %v5699 = vand.u32 %v4042, 7
    %v5700 = vand.u32 %v4043, 7
    %v5701 = vand.u32 %v4044, 7
    %v5702 = vand.u32 %v4045, 7
    %v5703 = vand.u32 %v4046, 7
    %v5704 = vand.u32 %v4047, 7
    %v5705 = vand.u32 %v4048, 7
    %v5706 = vand.u32 %v4049, 7
    %v5707 = vand.u32 %v4050, 7
    %v5708 = vand.u32 %v4051, 7
    %v5709 = vand.u32 %v4052, 7
    %v5710 = vand.u32 %v4053, 7
    %v5711 = vand.u32 %v4054, 7
    %vm5712 = vcmp.lt.s32.totalorder %v4007, 4
    %vm5713 = vcmp.lt.s32.totalorder %v4008, 4
    %vm5714 = vcmp.lt.s32.totalorder %v4009, 4
    %vm5715 = vcmp.lt.s32.totalorder %v4010, 4
    %vm5716 = vcmp.lt.s32.totalorder %v4011, 4
    %vm5717 = vcmp.lt.s32.totalorder %v4012, 4
    %vm5718 = vcmp.lt.s32.totalorder %v4013, 4
    %vm5719 = vcmp.lt.s32.totalorder %v4014, 4
    %vm5720 = vcmp.lt.s32.totalorder %v4015, 4
    %vm5721 = vcmp.lt.s32.totalorder %v4016, 4
    %vm5722 = vcmp.lt.s32.totalorder %v4017, 4
    %vm5723 = vcmp.lt.s32.totalorder %v4018, 4
    %vm5724 = vcmp.lt.s32.totalorder %v4019, 4
    %vm5725 = vcmp.lt.s32.totalorder %v4020, 4
    %vm5726 = vcmp.lt.s32.totalorder %v4021, 4
    %vm5727 = vcmp.lt.s32.totalorder %v4022, 4
    %vm5728 = vcmp.lt.s32.totalorder %v5696, 5
    %vm5729 = vcmp.lt.s32.totalorder %v5697, 5
    %vm5730 = vcmp.lt.s32.totalorder %v5698, 5
    %vm5731 = vcmp.lt.s32.totalorder %v5699, 5
    %vm5732 = vcmp.lt.s32.totalorder %v5700, 5
    %vm5733 = vcmp.lt.s32.totalorder %v5701, 5
    %vm5734 = vcmp.lt.s32.totalorder %v5702, 5
    %vm5735 = vcmp.lt.s32.totalorder %v5703, 5
    %vm5736 = vcmp.lt.s32.totalorder %v5704, 5
    %vm5737 = vcmp.lt.s32.totalorder %v5705, 5
    %vm5738 = vcmp.lt.s32.totalorder %v5706, 5
    %vm5739 = vcmp.lt.s32.totalorder %v5707, 5
    %vm5740 = vcmp.lt.s32.totalorder %v5708, 5
    %vm5741 = vcmp.lt.s32.totalorder %v5709, 5
    %vm5742 = vcmp.lt.s32.totalorder %v5710, 5
    %vm5743 = vcmp.lt.s32.totalorder %v5711, 5
    %vm5744 = vmand %vm5712, %vm5728
    %vm5745 = vmand %vm5713, %vm5729
    %vm5746 = vmand %vm5714, %vm5730
    %vm5747 = vmand %vm5715, %vm5731
    %vm5748 = vmand %vm5716, %vm5732
    %vm5749 = vmand %vm5717, %vm5733
    %vm5750 = vmand %vm5718, %vm5734
    %vm5751 = vmand %vm5719, %vm5735
    %vm5752 = vmand %vm5720, %vm5736
    %vm5753 = vmand %vm5721, %vm5737
    %vm5754 = vmand %vm5722, %vm5738
    %vm5755 = vmand %vm5723, %vm5739
    %vm5756 = vmand %vm5724, %vm5740
    %vm5757 = vmand %vm5725, %vm5741
    %vm5758 = vmand %vm5726, %vm5742
    %vm5759 = vmand %vm5727, %vm5743
    %v5760 = vsel %vm5744, 1, 0
    %v5761 = vsel %vm5745, 1, 0
    %v5762 = vsel %vm5746, 1, 0
    %v5763 = vsel %vm5747, 1, 0
    %v5764 = vsel %vm5748, 1, 0
    %v5765 = vsel %vm5749, 1, 0
    %v5766 = vsel %vm5750, 1, 0
    %v5767 = vsel %vm5751, 1, 0
    %v5768 = vsel %vm5752, 1, 0
    %v5769 = vsel %vm5753, 1, 0
    %v5770 = vsel %vm5754, 1, 0
    %v5771 = vsel %vm5755, 1, 0
    %v5772 = vsel %vm5756, 1, 0
    %v5773 = vsel %vm5757, 1, 0
    %v5774 = vsel %vm5758, 1, 0
    %v5775 = vsel %vm5759, 1, 0
    %v5776 = vcvt.s32.f32 %v5760
    %v5777 = vcvt.s32.f32 %v5761
    %v5778 = vcvt.s32.f32 %v5762
    %v5779 = vcvt.s32.f32 %v5763
    %v5780 = vcvt.s32.f32 %v5764
    %v5781 = vcvt.s32.f32 %v5765
    %v5782 = vcvt.s32.f32 %v5766
    %v5783 = vcvt.s32.f32 %v5767
    %v5784 = vcvt.s32.f32 %v5768
    %v5785 = vcvt.s32.f32 %v5769
    %v5786 = vcvt.s32.f32 %v5770
    %v5787 = vcvt.s32.f32 %v5771
    %v5788 = vcvt.s32.f32 %v5772
    %v5789 = vcvt.s32.f32 %v5773
    %v5790 = vcvt.s32.f32 %v5774
    %v5791 = vcvt.s32.f32 %v5775
    %v5792 = vmul.f32 %v5678, %v5776
    %v5793 = vmul.f32 %v5679, %v5777
    %v5794 = vmul.f32 %v5680, %v5778
    %v5795 = vmul.f32 %v5681, %v5779
    %v5796 = vmul.f32 %v5682, %v5780
    %v5797 = vmul.f32 %v5683, %v5781
    %v5798 = vmul.f32 %v5684, %v5782
    %v5799 = vmul.f32 %v5685, %v5783
    %v5800 = vmul.f32 %v5686, %v5784
    %v5801 = vmul.f32 %v5687, %v5785
    %v5802 = vmul.f32 %v5688, %v5786
    %v5803 = vmul.f32 %v5689, %v5787
    %v5804 = vmul.f32 %v5690, %v5788
    %v5805 = vmul.f32 %v5691, %v5789
    %v5806 = vmul.f32 %v5692, %v5790
    %v5807 = vmul.f32 %v5693, %v5791
    %vm5808 = vcmask 261120
    %v5809 = vsel %vm5808, %v5792, 0.0
    %v5810 = vsel %vm5808, %v5793, 0.0
    %v5811 = vadd.f32 %v5809, %v5810
    %v5812 = vsel %vm5808, %v5794, 0.0
    %v5813 = vadd.f32 %v5811, %v5812
    %v5814 = vsel %vm5808, %v5795, 0.0
    %v5815 = vadd.f32 %v5813, %v5814
    %v5816 = vsel %vm5808, %v5796, 0.0
    %v5817 = vadd.f32 %v5815, %v5816
    %v5818 = vsel %vm5808, %v5797, 0.0
    %v5819 = vadd.f32 %v5817, %v5818
    %v5820 = vsel %vm5808, %v5798, 0.0
    %v5821 = vadd.f32 %v5819, %v5820
    %v5822 = vsel %vm5808, %v5799, 0.0
    %v5823 = vadd.f32 %v5821, %v5822
    %v5824 = vsel %vm5808, %v5800, 0.0
    %v5825 = vadd.f32 %v5823, %v5824
    %v5826 = vsel %vm5808, %v5801, 0.0
    %v5827 = vadd.f32 %v5825, %v5826
    %v5828 = vsel %vm5808, %v5802, 0.0
    %v5829 = vadd.f32 %v5827, %v5828
    %v5830 = vsel %vm5808, %v5803, 0.0
    %v5831 = vadd.f32 %v5829, %v5830
    %v5832 = vsel %vm5808, %v5804, 0.0
    %v5833 = vadd.f32 %v5831, %v5832
    %v5834 = vsel %vm5808, %v5805, 0.0
    %v5835 = vadd.f32 %v5833, %v5834
    %v5836 = vsel %vm5808, %v5806, 0.0
    %v5837 = vadd.f32 %v5835, %v5836
    %v5838 = vsel %vm5808, %v5807, 0.0
    %v5839 = vadd.f32 %v5837, %v5838
    %v5840 = vrot.slane %v5839, 4
    %v5841 = vadd.f32 %v5839, %v5840
    %v5842 = vrot.slane %v5841, 2
    %v5843 = vadd.f32 %v5841, %v5842
    %v5844 = vrot.slane %v5843, 1
    %v5845 = vadd.f32 %v5843, %v5844
    %v5846 = vmul.f32 %v5845, 0.025
    %v5847 = vsub.f32 %v5678, %v5846
    %v5848 = vsub.f32 %v5679, %v5846
    %v5849 = vsub.f32 %v5680, %v5846
    %v5850 = vsub.f32 %v5681, %v5846
    %v5851 = vsub.f32 %v5682, %v5846
    %v5852 = vsub.f32 %v5683, %v5846
    %v5853 = vsub.f32 %v5684, %v5846
    %v5854 = vsub.f32 %v5685, %v5846
    %v5855 = vsub.f32 %v5686, %v5846
    %v5856 = vsub.f32 %v5687, %v5846
    %v5857 = vsub.f32 %v5688, %v5846
    %v5858 = vsub.f32 %v5689, %v5846
    %v5859 = vsub.f32 %v5690, %v5846
    %v5860 = vsub.f32 %v5691, %v5846
    %v5861 = vsub.f32 %v5692, %v5846
    %v5862 = vsub.f32 %v5693, %v5846
    %v5863 = vmul.f32 %v5847, %v5776
    %v5864 = vmul.f32 %v5848, %v5777
    %v5865 = vmul.f32 %v5849, %v5778
    %v5866 = vmul.f32 %v5850, %v5779
    %v5867 = vmul.f32 %v5851, %v5780
    %v5868 = vmul.f32 %v5852, %v5781
    %v5869 = vmul.f32 %v5853, %v5782
    %v5870 = vmul.f32 %v5854, %v5783
    %v5871 = vmul.f32 %v5855, %v5784
    %v5872 = vmul.f32 %v5856, %v5785
    %v5873 = vmul.f32 %v5857, %v5786
    %v5874 = vmul.f32 %v5858, %v5787
    %v5875 = vmul.f32 %v5859, %v5788
    %v5876 = vmul.f32 %v5860, %v5789
    %v5877 = vmul.f32 %v5861, %v5790
    %v5878 = vmul.f32 %v5862, %v5791
    %v5879 = vmul.f32 %v5863, %v5863
    %v5880 = vmul.f32 %v5864, %v5864
    %v5881 = vmul.f32 %v5865, %v5865
    %v5882 = vmul.f32 %v5866, %v5866
    %v5883 = vmul.f32 %v5867, %v5867
    %v5884 = vmul.f32 %v5868, %v5868
    %v5885 = vmul.f32 %v5869, %v5869
    %v5886 = vmul.f32 %v5870, %v5870
    %v5887 = vmul.f32 %v5871, %v5871
    %v5888 = vmul.f32 %v5872, %v5872
    %v5889 = vmul.f32 %v5873, %v5873
    %v5890 = vmul.f32 %v5874, %v5874
    %v5891 = vmul.f32 %v5875, %v5875
    %v5892 = vmul.f32 %v5876, %v5876
    %v5893 = vmul.f32 %v5877, %v5877
    %v5894 = vmul.f32 %v5878, %v5878
    %v5895 = vsel %vm5808, %v5879, 0.0
    %v5896 = vsel %vm5808, %v5880, 0.0
    %v5897 = vadd.f32 %v5895, %v5896
    %v5898 = vsel %vm5808, %v5881, 0.0
    %v5899 = vadd.f32 %v5897, %v5898
    %v5900 = vsel %vm5808, %v5882, 0.0
    %v5901 = vadd.f32 %v5899, %v5900
    %v5902 = vsel %vm5808, %v5883, 0.0
    %v5903 = vadd.f32 %v5901, %v5902
    %v5904 = vsel %vm5808, %v5884, 0.0
    %v5905 = vadd.f32 %v5903, %v5904
    %v5906 = vsel %vm5808, %v5885, 0.0
    %v5907 = vadd.f32 %v5905, %v5906
    %v5908 = vsel %vm5808, %v5886, 0.0
    %v5909 = vadd.f32 %v5907, %v5908
    %v5910 = vsel %vm5808, %v5887, 0.0
    %v5911 = vadd.f32 %v5909, %v5910
    %v5912 = vsel %vm5808, %v5888, 0.0
    %v5913 = vadd.f32 %v5911, %v5912
    %v5914 = vsel %vm5808, %v5889, 0.0
    %v5915 = vadd.f32 %v5913, %v5914
    %v5916 = vsel %vm5808, %v5890, 0.0
    %v5917 = vadd.f32 %v5915, %v5916
    %v5918 = vsel %vm5808, %v5891, 0.0
    %v5919 = vadd.f32 %v5917, %v5918
    %v5920 = vsel %vm5808, %v5892, 0.0
    %v5921 = vadd.f32 %v5919, %v5920
    %v5922 = vsel %vm5808, %v5893, 0.0
    %v5923 = vadd.f32 %v5921, %v5922
    %v5924 = vsel %vm5808, %v5894, 0.0
    %v5925 = vadd.f32 %v5923, %v5924
    %v5926 = vrot.slane %v5925, 4
    %v5927 = vadd.f32 %v5925, %v5926
    %v5928 = vrot.slane %v5927, 2
    %v5929 = vadd.f32 %v5927, %v5928
    %v5930 = vrot.slane %v5929, 1
    %v5931 = vadd.f32 %v5929, %v5930
    %v5932 = vmul.f32 %v5931, 0.025
    %v5933 = vadd.f32 %v5932, 1e-05
    %v5934 = vrsqrt.pop %v5933
    %v5935 = vmul.f32 %v5934, %v5694
    %v5936 = vlaneseq
    %v5937 = vshrl.u32 %v5936, 7
    %v5938 = vsub.s32 0, %v5937
    %v5939 = vrot.slane %v5935, %v5938
    %v5940 = vmul.f32 %v5847, %v5939
    %v5941 = vmul.f32 %v5848, %v5939
    %v5942 = vmul.f32 %v5849, %v5939
    %v5943 = vmul.f32 %v5850, %v5939
    %v5944 = vmul.f32 %v5851, %v5939
    %v5945 = vmul.f32 %v5852, %v5939
    %v5946 = vmul.f32 %v5853, %v5939
    %v5947 = vmul.f32 %v5854, %v5939
    %v5948 = vmul.f32 %v5855, %v5939
    %v5949 = vmul.f32 %v5856, %v5939
    %v5950 = vmul.f32 %v5857, %v5939
    %v5951 = vmul.f32 %v5858, %v5939
    %v5952 = vmul.f32 %v5859, %v5939
    %v5953 = vmul.f32 %v5860, %v5939
    %v5954 = vmul.f32 %v5861, %v5939
    %v5955 = vmul.f32 %v5862, %v5939
    %v5957 = vlaneseq
    %v5958 = vshrl.u32 %v5957, 7
    %v5959 = vsub.s32 0, %v5958
    %v5960 = vrot.slane %v5695, %v5959
    %v5962 = vadd.f32 %v5940, %v5960
    %v5963 = vadd.f32 %v5941, %v5960
    %v5964 = vadd.f32 %v5942, %v5960
    %v5965 = vadd.f32 %v5943, %v5960
    %v5966 = vadd.f32 %v5944, %v5960
    %v5967 = vadd.f32 %v5945, %v5960
    %v5968 = vadd.f32 %v5946, %v5960
    %v5969 = vadd.f32 %v5947, %v5960
    %v5970 = vadd.f32 %v5948, %v5960
    %v5971 = vadd.f32 %v5949, %v5960
    %v5972 = vadd.f32 %v5950, %v5960
    %v5973 = vadd.f32 %v5951, %v5960
    %v5974 = vadd.f32 %v5952, %v5960
    %v5975 = vadd.f32 %v5953, %v5960
    %v5976 = vadd.f32 %v5954, %v5960
    %v5977 = vadd.f32 %v5955, %v5960
    %5978 = vst.msk [vmem:[#allocation6] sm:$0xff] %vm5808, %v5962
    %5979 = vst.msk [vmem:[#allocation6 + $0x8] sm:$0xff] %vm5808, %v5963
    %5980 = vst.msk [vmem:[#allocation6 + $0x10] sm:$0xff] %vm5808, %v5964
    %5981 = vst.msk [vmem:[#allocation6 + $0x18] sm:$0xff] %vm5808, %v5965
    %5982 = vst.msk [vmem:[#allocation6 + $0x20] sm:$0xff] %vm5808, %v5966
    %5983 = vst.msk [vmem:[#allocation6 + $0x28] sm:$0xff] %vm5808, %v5967
    %5984 = vst.msk [vmem:[#allocation6 + $0x30] sm:$0xff] %vm5808, %v5968
    %5985 = vst.msk [vmem:[#allocation6 + $0x38] sm:$0xff] %vm5808, %v5969
    %5986 = vst.msk [vmem:[#allocation6 + $0x40] sm:$0xff] %vm5808, %v5970
    %5987 = vst.msk [vmem:[#allocation6 + $0x48] sm:$0xff] %vm5808, %v5971
    %5988 = vst.msk [vmem:[#allocation6 + $0x50] sm:$0xff] %vm5808, %v5972
    %5989 = vst.msk [vmem:[#allocation6 + $0x58] sm:$0xff] %vm5808, %v5973
    %5990 = vst.msk [vmem:[#allocation6 + $0x60] sm:$0xff] %vm5808, %v5974
    %5991 = vst.msk [vmem:[#allocation6 + $0x68] sm:$0xff] %vm5808, %v5975
    %5992 = vst.msk [vmem:[#allocation6 + $0x70] sm:$0xff] %vm5808, %v5976
    %5993 = vst.msk [vmem:[#allocation6 + $0x78] sm:$0xff] %vm5808, %v5977
    %v5994 = vld [vmem:[#allocation6] ss:$2 sm:$0x3]
    %s5995 = scalar_lea.vmem [#allocation6], 1
    %v5996 = vld [vmem:[%s5995] ss:$2 sm:$0x3]
    %s5997 = scalar_lea.vmem [#allocation6], 8
    %v5998 = vld [vmem:[%s5997] ss:$2 sm:$0x3]
    %s5999 = scalar_lea.vmem [#allocation6], 9
    %v6000 = vld [vmem:[%s5999] ss:$2 sm:$0x3]
    %v6001 = vmax.f32 %v5994, %v5996
    %v6002 = vmax.f32 %v5998, %v6000
    %v6003 = vmax.f32 %v6001, %v6002
    %vm6004 = vcmask 253952
    %6005 = vst.msk [vmem:[#allocation7] sm:$0x1] %vm6004, %v6003
    %vm6006 = vcmask 254977
    %6007 = vst.msk [vmem:[#allocation7 + $0x1] sm:$0x2] %vm6006, %v6003
    %s6008 = scalar_lea.vmem [#allocation6], 16
    %v6009 = vld [vmem:[%s6008] ss:$2 sm:$0x3]
    %s6010 = scalar_lea.vmem [#allocation6], 17
    %v6011 = vld [vmem:[%s6010] ss:$2 sm:$0x3]
    %s6012 = scalar_lea.vmem [#allocation6], 24
    %v6013 = vld [vmem:[%s6012] ss:$2 sm:$0x3]
    %s6014 = scalar_lea.vmem [#allocation6], 25
    %v6015 = vld [vmem:[%s6014] ss:$2 sm:$0x3]
    %v6016 = vmax.f32 %v6009, %v6011
    %v6017 = vmax.f32 %v6013, %v6015
    %v6018 = vmax.f32 %v6016, %v6017
    %6019 = vst.msk [vmem:[#allocation7 + $0x4] sm:$0x1] %vm6004, %v6018
    %6020 = vst.msk [vmem:[#allocation7 + $0x5] sm:$0x2] %vm6006, %v6018
    %s6021 = scalar_lea.vmem [#allocation6], 64
    %v6022 = vld [vmem:[%s6021] ss:$2 sm:$0x3]
    %s6023 = scalar_lea.vmem [#allocation6], 65
    %v6024 = vld [vmem:[%s6023] ss:$2 sm:$0x3]
    %s6025 = scalar_lea.vmem [#allocation6], 72
    %v6026 = vld [vmem:[%s6025] ss:$2 sm:$0x3]
    %s6027 = scalar_lea.vmem [#allocation6], 73
    %v6028 = vld [vmem:[%s6027] ss:$2 sm:$0x3]
    %v6029 = vmax.f32 %v6022, %v6024
    %v6030 = vmax.f32 %v6026, %v6028
    %v6031 = vmax.f32 %v6029, %v6030
    %6032 = vst.msk [vmem:[#allocation7 + $0x1] sm:$0x1] %vm6004, %v6031
    %6033 = vst.msk [vmem:[#allocation7 + $0x2] sm:$0x2] %vm6006, %v6031
    %s6034 = scalar_lea.vmem [#allocation6], 80
    %v6035 = vld [vmem:[%s6034] ss:$2 sm:$0x3]
    %s6036 = scalar_lea.vmem [#allocation6], 81
    %v6037 = vld [vmem:[%s6036] ss:$2 sm:$0x3]
    %s6038 = scalar_lea.vmem [#allocation6], 88
    %v6039 = vld [vmem:[%s6038] ss:$2 sm:$0x3]
    %s6040 = scalar_lea.vmem [#allocation6], 89
    %v6041 = vld [vmem:[%s6040] ss:$2 sm:$0x3]
    %v6042 = vmax.f32 %v6035, %v6037
    %v6043 = vmax.f32 %v6039, %v6041
    %v6044 = vmax.f32 %v6042, %v6043
    %6045 = vst.msk [vmem:[#allocation7 + $0x5] sm:$0x1] %vm6004, %v6044
    %6046 = vst.msk [vmem:[#allocation7 + $0x6] sm:$0x2] %vm6006, %v6044
    %v6047 = vld [vmem:[#allocation7] sm:$0x3]
    %v6048 = vld [vmem:[%s11] sm:$0xff]
    %v6049 = vld [vmem:[%s11 + $0x8] sm:$0xff]
    %v6050 = vld [vmem:[%s11 + $0x10] sm:$0xff]
    %v6051 = vld [vmem:[%s11 + $0x18] sm:$0xff]
    %v6052 = vld [vmem:[%s11 + $0x20] sm:$0xff]
    %v6053 = vld [vmem:[%s11 + $0x28] sm:$0xff]
    %v6054 = vld [vmem:[%s11 + $0x30] sm:$0xff]
    %v6055 = vld [vmem:[%s11 + $0x38] sm:$0xff]
    %v6056 = vld [vmem:[%s11 + $0x40] sm:$0xff]
    %v6057 = vld [vmem:[%s11 + $0x48] sm:$0xff]
    %v6058 = vld [vmem:[%s11 + $0x50] sm:$0xff]
    %v6059 = vld [vmem:[%s11 + $0x58] sm:$0xff]
    %v6060 = vld [vmem:[%s11 + $0x60] sm:$0xff]
    %v6061 = vld [vmem:[%s11 + $0x68] sm:$0xff]
    %v6062 = vld [vmem:[%s11 + $0x70] sm:$0xff]
    %v6063 = vld [vmem:[%s11 + $0x78] sm:$0xff]
    %v6064 = vld [vmem:[%s11 + $0x80] sm:$0xff]
    %v6065 = vld [vmem:[%s11 + $0x88] sm:$0xff]
    %v6066 = vld [vmem:[%s11 + $0x90] sm:$0xff]
    %v6067 = vld [vmem:[%s11 + $0x98] sm:$0xff]
    %v6068 = vld [vmem:[%s11 + $0xa0] sm:$0xff]
    %v6069 = vld [vmem:[%s11 + $0xa8] sm:$0xff]
    %v6070 = vld [vmem:[%s11 + $0xb0] sm:$0xff]
    %v6071 = vld [vmem:[%s11 + $0xb8] sm:$0xff]
    %v6072 = vld [vmem:[%s11 + $0xc0] sm:$0xff]
    %v6073 = vld [vmem:[%s11 + $0xc8] sm:$0xff]
    %v6074 = vld [vmem:[%s11 + $0xd0] sm:$0xff]
    %v6075 = vld [vmem:[%s11 + $0xd8] sm:$0xff]
    %v6076 = vld [vmem:[%s11 + $0xe0] sm:$0xff]
    %v6077 = vld [vmem:[%s11 + $0xe8] sm:$0xff]
    %v6078 = vld [vmem:[%s11 + $0xf0] sm:$0xff]
    %v6079 = vld [vmem:[%s11 + $0xf8] sm:$0xff]
    %v6080 = vld [vmem:[#allocation7 + $0x2] sm:$0x3]
    %v6081 = vld [vmem:[%s11 + $0x100] sm:$0xff]
    %v6082 = vld [vmem:[%s11 + $0x108] sm:$0xff]
    %v6083 = vld [vmem:[%s11 + $0x110] sm:$0xff]
    %v6084 = vld [vmem:[%s11 + $0x118] sm:$0xff]
    %v6085 = vld [vmem:[%s11 + $0x120] sm:$0xff]
    %v6086 = vld [vmem:[%s11 + $0x128] sm:$0xff]
    %v6087 = vld [vmem:[%s11 + $0x130] sm:$0xff]
    %v6088 = vld [vmem:[%s11 + $0x138] sm:$0xff]
    %v6089 = vld [vmem:[%s11 + $0x140] sm:$0xff]
    %v6090 = vld [vmem:[%s11 + $0x148] sm:$0xff]
    %v6091 = vld [vmem:[%s11 + $0x150] sm:$0xff]
    %v6092 = vld [vmem:[%s11 + $0x158] sm:$0xff]
    %v6093 = vld [vmem:[%s11 + $0x160] sm:$0xff]
    %v6094 = vld [vmem:[%s11 + $0x168] sm:$0xff]
    %v6095 = vld [vmem:[%s11 + $0x170] sm:$0xff]
    %v6096 = vld [vmem:[%s11 + $0x178] sm:$0xff]
    %v6097 = vld [vmem:[%s11 + $0x180] sm:$0xff]
    %v6098 = vld [vmem:[%s11 + $0x188] sm:$0xff]
    %v6099 = vld [vmem:[%s11 + $0x190] sm:$0xff]
    %v6100 = vld [vmem:[%s11 + $0x198] sm:$0xff]
    %v6101 = vld [vmem:[%s11 + $0x1a0] sm:$0xff]
    %v6102 = vld [vmem:[%s11 + $0x1a8] sm:$0xff]
    %v6103 = vld [vmem:[%s11 + $0x1b0] sm:$0xff]
    %v6104 = vld [vmem:[%s11 + $0x1b8] sm:$0xff]
    %v6105 = vld [vmem:[%s11 + $0x1c0] sm:$0xff]
    %v6106 = vld [vmem:[%s11 + $0x1c8] sm:$0xff]
    %v6107 = vld [vmem:[%s11 + $0x1d0] sm:$0xff]
    %v6108 = vld [vmem:[%s11 + $0x1d8] sm:$0xff]
    %v6109 = vld [vmem:[%s11 + $0x1e0] sm:$0xff]
    %v6110 = vld [vmem:[%s11 + $0x1e8] sm:$0xff]
    %v6111 = vld [vmem:[%s11 + $0x1f0] sm:$0xff]
    %v6112 = vld [vmem:[%s11 + $0x1f8] sm:$0xff]
    %v6114 = vsel %vm5808, %v6080, 0
    %6116 = vmatprep.subr.mxu0 %v6082
    %6117 = vmatpush1.msra.mxu0 %v6081
    %6118 = vmatprep.subr.mxu0 %v6090
    %6119 = vmatpush1.msra.mxu0 %v6089
    %6120 = vmatprep.subr.mxu0 %v6098
    %6121 = vmatpush1.msra.mxu0 %v6097
    %6122 = vmatprep.subr.mxu0 %v6106
    %6123 = vmatpush1.msra.mxu0 %v6105
    %6124 = vmatprep.subr.mxu0 0.0
    %6125 = vmatpush1.msra.mxu0 0.0
    %6126 = vmatprep.subr.mxu0 0.0
    %6127 = vmatpush1.msra.mxu0 0.0
    %6128 = vmatprep.subr.mxu0 0.0
    %6129 = vmatpush1.msra.mxu0 0.0
    %6130 = vmatprep.subr.mxu0 0.0
    %6131 = vmatpush1.msra.mxu0 0.0
    %6132 = vmatprep.subr.mxu0 0.0
    %6133 = vmatpush1.msra.mxu0 0.0
    %6134 = vmatprep.subr.mxu0 0.0
    %6135 = vmatpush1.msra.mxu0 0.0
    %6136 = vmatprep.subr.mxu0 0.0
    %6137 = vmatpush1.msra.mxu0 0.0
    %6138 = vmatprep.subr.mxu0 0.0
    %6139 = vmatpush1.msra.mxu0 0.0
    %6140 = vmatprep.subr.mxu0 0.0
    %6141 = vmatpush1.msra.mxu0 0.0
    %6142 = vmatprep.subr.mxu0 0.0
    %6143 = vmatpush1.msra.mxu0 0.0
    %6144 = vmatprep.subr.mxu0 0.0
    %6145 = vmatpush1.msra.mxu0 0.0
    %6146 = vmatprep.subr.mxu0 0.0
    %6147 = vmatpush1.msra.mxu0 0.0
    %6148 = vmatprep.subr.mxu0 0.0
    %6149 = vmatpush1.msra.mxu0 0.0
    %6150 = vmatprep.subr.mxu0 0.0
    %6151 = vmatpush1.msra.mxu0 0.0
    %6152 = vmatprep.subr.mxu0 0.0
    %6153 = vmatpush1.msra.mxu0 0.0
    %6154 = vmatprep.subr.mxu0 0.0
    %6155 = vmatpush1.msra.mxu0 0.0
    %6156 = vmatprep.subr.mxu0 0.0
    %6157 = vmatpush1.msra.mxu0 0.0
    %6158 = vmatprep.subr.mxu0 0.0
    %6159 = vmatpush1.msra.mxu0 0.0
    %6160 = vmatprep.subr.mxu0 0.0
    %6161 = vmatpush1.msra.mxu0 0.0
    %6162 = vmatprep.subr.mxu0 0.0
    %6163 = vmatpush1.msra.mxu0 0.0
    %6164 = vmatprep.subr.mxu0 0.0
    %6165 = vmatpush1.msra.mxu0 0.0
    %6166 = vmatprep.subr.mxu0 0.0
    %6167 = vmatpush1.msra.mxu0 0.0
    %6168 = vmatprep.subr.mxu0 0.0
    %6169 = vmatpush1.msra.mxu0 0.0
    %6170 = vmatprep.subr.mxu0 0.0
    %6171 = vmatpush1.msra.mxu0 0.0
    %6172 = vmatprep.subr.mxu0 0.0
    %6173 = vmatpush1.msra.mxu0 0.0
    %6174 = vmatprep.subr.mxu0 0.0
    %6175 = vmatpush1.msra.mxu0 0.0
    %6176 = vmatprep.subr.mxu0 0.0
    %6177 = vmatpush1.msra.mxu0 0.0
    %6178 = vmatprep.subr.mxu0 0.0
    %6179 = vmatpush1.msra.mxu0 0.0
    %6180 = vmatprep.mubr.f32.mxu0 0.0
    %6181 = vmatmul.mubr.f32.gmra.mrb[0].mxu0 %v6114
    %v6182 = vpop.f32.mrb[0].mxu0
    %v6183 = vadd.f32 0.0, %v6182
    %v6184 = vpop.f32.mrb[0].mxu0
    %v6185 = vadd.f32 0.0, %v6184
    %6186 = vdwg.mxu0
    %6187 = vmatprep.subr.mxu0 %v6084
    %6188 = vmatpush1.msra.mxu0 %v6083
    %6189 = vmatprep.subr.mxu0 %v6092
    %6190 = vmatpush1.msra.mxu0 %v6091
    %6191 = vmatprep.subr.mxu0 %v6100
    %6192 = vmatpush1.msra.mxu0 %v6099
    %6193 = vmatprep.subr.mxu0 %v6108
    %6194 = vmatpush1.msra.mxu0 %v6107
    %6195 = vmatprep.subr.mxu0 0.0
    %6196 = vmatpush1.msra.mxu0 0.0
    %6197 = vmatprep.subr.mxu0 0.0
    %6198 = vmatpush1.msra.mxu0 0.0
    %6199 = vmatprep.subr.mxu0 0.0
    %6200 = vmatpush1.msra.mxu0 0.0
    %6201 = vmatprep.subr.mxu0 0.0
    %6202 = vmatpush1.msra.mxu0 0.0
    %6203 = vmatprep.subr.mxu0 0.0
    %6204 = vmatpush1.msra.mxu0 0.0
    %6205 = vmatprep.subr.mxu0 0.0
    %6206 = vmatpush1.msra.mxu0 0.0
    %6207 = vmatprep.subr.mxu0 0.0
    %6208 = vmatpush1.msra.mxu0 0.0
    %6209 = vmatprep.subr.mxu0 0.0
    %6210 = vmatpush1.msra.mxu0 0.0
    %6211 = vmatprep.subr.mxu0 0.0
    %6212 = vmatpush1.msra.mxu0 0.0
    %6213 = vmatprep.subr.mxu0 0.0
    %6214 = vmatpush1.msra.mxu0 0.0
    %6215 = vmatprep.subr.mxu0 0.0
    %6216 = vmatpush1.msra.mxu0 0.0
    %6217 = vmatprep.subr.mxu0 0.0
    %6218 = vmatpush1.msra.mxu0 0.0
    %6219 = vmatprep.subr.mxu0 0.0
    %6220 = vmatpush1.msra.mxu0 0.0
    %6221 = vmatprep.subr.mxu0 0.0
    %6222 = vmatpush1.msra.mxu0 0.0
    %6223 = vmatprep.subr.mxu0 0.0
    %6224 = vmatpush1.msra.mxu0 0.0
    %6225 = vmatprep.subr.mxu0 0.0
    %6226 = vmatpush1.msra.mxu0 0.0
    %6227 = vmatprep.subr.mxu0 0.0
    %6228 = vmatpush1.msra.mxu0 0.0
    %6229 = vmatprep.subr.mxu0 0.0
    %6230 = vmatpush1.msra.mxu0 0.0
    %6231 = vmatprep.subr.mxu0 0.0
    %6232 = vmatpush1.msra.mxu0 0.0
    %6233 = vmatprep.subr.mxu0 0.0
    %6234 = vmatpush1.msra.mxu0 0.0
    %6235 = vmatprep.subr.mxu0 0.0
    %6236 = vmatpush1.msra.mxu0 0.0
    %6237 = vmatprep.subr.mxu0 0.0
    %6238 = vmatpush1.msra.mxu0 0.0
    %6239 = vmatprep.subr.mxu0 0.0
    %6240 = vmatpush1.msra.mxu0 0.0
    %6241 = vmatprep.subr.mxu0 0.0
    %6242 = vmatpush1.msra.mxu0 0.0
    %6243 = vmatprep.subr.mxu0 0.0
    %6244 = vmatpush1.msra.mxu0 0.0
    %6245 = vmatprep.subr.mxu0 0.0
    %6246 = vmatpush1.msra.mxu0 0.0
    %6247 = vmatprep.subr.mxu0 0.0
    %6248 = vmatpush1.msra.mxu0 0.0
    %6249 = vmatprep.subr.mxu0 0.0
    %6250 = vmatpush1.msra.mxu0 0.0
    %6251 = vmatprep.mubr.f32.mxu0 0.0
    %6252 = vmatmul.mubr.f32.gmra.mrb[0].mxu0 %v6114
    %v6253 = vpop.f32.mrb[0].mxu0
    %v6254 = vadd.f32 0.0, %v6253
    %v6255 = vpop.f32.mrb[0].mxu0
    %v6256 = vadd.f32 0.0, %v6255
    %6257 = vdwg.mxu0
    %6258 = vmatprep.subr.mxu0 %v6086
    %6259 = vmatpush1.msra.mxu0 %v6085
    %6260 = vmatprep.subr.mxu0 %v6094
    %6261 = vmatpush1.msra.mxu0 %v6093
    %6262 = vmatprep.subr.mxu0 %v6102
    %6263 = vmatpush1.msra.mxu0 %v6101
    %6264 = vmatprep.subr.mxu0 %v6110
    %6265 = vmatpush1.msra.mxu0 %v6109
    %6266 = vmatprep.subr.mxu0 0.0
    %6267 = vmatpush1.msra.mxu0 0.0
    %6268 = vmatprep.subr.mxu0 0.0
    %6269 = vmatpush1.msra.mxu0 0.0
    %6270 = vmatprep.subr.mxu0 0.0
    %6271 = vmatpush1.msra.mxu0 0.0
    %6272 = vmatprep.subr.mxu0 0.0
    %6273 = vmatpush1.msra.mxu0 0.0
    %6274 = vmatprep.subr.mxu0 0.0
    %6275 = vmatpush1.msra.mxu0 0.0
    %6276 = vmatprep.subr.mxu0 0.0
    %6277 = vmatpush1.msra.mxu0 0.0
    %6278 = vmatprep.subr.mxu0 0.0
    %6279 = vmatpush1.msra.mxu0 0.0
    %6280 = vmatprep.subr.mxu0 0.0
    %6281 = vmatpush1.msra.mxu0 0.0
    %6282 = vmatprep.subr.mxu0 0.0
    %6283 = vmatpush1.msra.mxu0 0.0
    %6284 = vmatprep.subr.mxu0 0.0
    %6285 = vmatpush1.msra.mxu0 0.0
    %6286 = vmatprep.subr.mxu0 0.0
    %6287 = vmatpush1.msra.mxu0 0.0
    %6288 = vmatprep.subr.mxu0 0.0
    %6289 = vmatpush1.msra.mxu0 0.0
    %6290 = vmatprep.subr.mxu0 0.0
    %6291 = vmatpush1.msra.mxu0 0.0
    %6292 = vmatprep.subr.mxu0 0.0
    %6293 = vmatpush1.msra.mxu0 0.0
    %6294 = vmatprep.subr.mxu0 0.0
    %6295 = vmatpush1.msra.mxu0 0.0
    %6296 = vmatprep.subr.mxu0 0.0
    %6297 = vmatpush1.msra.mxu0 0.0
    %6298 = vmatprep.subr.mxu0 0.0
    %6299 = vmatpush1.msra.mxu0 0.0
    %6300 = vmatprep.subr.mxu0 0.0
    %6301 = vmatpush1.msra.mxu0 0.0
    %6302 = vmatprep.subr.mxu0 0.0
    %6303 = vmatpush1.msra.mxu0 0.0
    %6304 = vmatprep.subr.mxu0 0.0
    %6305 = vmatpush1.msra.mxu0 0.0
    %6306 = vmatprep.subr.mxu0 0.0
    %6307 = vmatpush1.msra.mxu0 0.0
    %6308 = vmatprep.subr.mxu0 0.0
    %6309 = vmatpush1.msra.mxu0 0.0
    %6310 = vmatprep.subr.mxu0 0.0
    %6311 = vmatpush1.msra.mxu0 0.0
    %6312 = vmatprep.subr.mxu0 0.0
    %6313 = vmatpush1.msra.mxu0 0.0
    %6314 = vmatprep.subr.mxu0 0.0
    %6315 = vmatpush1.msra.mxu0 0.0
    %6316 = vmatprep.subr.mxu0 0.0
    %6317 = vmatpush1.msra.mxu0 0.0
    %6318 = vmatprep.subr.mxu0 0.0
    %6319 = vmatpush1.msra.mxu0 0.0
    %6320 = vmatprep.subr.mxu0 0.0
    %6321 = vmatpush1.msra.mxu0 0.0
    %6322 = vmatprep.mubr.f32.mxu0 0.0
    %6323 = vmatmul.mubr.f32.gmra.mrb[0].mxu0 %v6114
    %v6324 = vpop.f32.mrb[0].mxu0
    %v6325 = vadd.f32 0.0, %v6324
    %v6326 = vpop.f32.mrb[0].mxu0
    %v6327 = vadd.f32 0.0, %v6326
    %6328 = vdwg.mxu0
    %6329 = vmatprep.subr.mxu0 %v6088
    %6330 = vmatpush1.msra.mxu0 %v6087
    %6331 = vmatprep.subr.mxu0 %v6096
    %6332 = vmatpush1.msra.mxu0 %v6095
    %6333 = vmatprep.subr.mxu0 %v6104
    %6334 = vmatpush1.msra.mxu0 %v6103
    %6335 = vmatprep.subr.mxu0 %v6112
    %6336 = vmatpush1.msra.mxu0 %v6111
    %6337 = vmatprep.subr.mxu0 0.0
    %6338 = vmatpush1.msra.mxu0 0.0
    %6339 = vmatprep.subr.mxu0 0.0
    %6340 = vmatpush1.msra.mxu0 0.0
    %6341 = vmatprep.subr.mxu0 0.0
    %6342 = vmatpush1.msra.mxu0 0.0
    %6343 = vmatprep.subr.mxu0 0.0
    %6344 = vmatpush1.msra.mxu0 0.0
    %6345 = vmatprep.subr.mxu0 0.0
    %6346 = vmatpush1.msra.mxu0 0.0
    %6347 = vmatprep.subr.mxu0 0.0
    %6348 = vmatpush1.msra.mxu0 0.0
    %6349 = vmatprep.subr.mxu0 0.0
    %6350 = vmatpush1.msra.mxu0 0.0
    %6351 = vmatprep.subr.mxu0 0.0
    %6352 = vmatpush1.msra.mxu0 0.0
    %6353 = vmatprep.subr.mxu0 0.0
    %6354 = vmatpush1.msra.mxu0 0.0
    %6355 = vmatprep.subr.mxu0 0.0
    %6356 = vmatpush1.msra.mxu0 0.0
    %6357 = vmatprep.subr.mxu0 0.0
    %6358 = vmatpush1.msra.mxu0 0.0
    %6359 = vmatprep.subr.mxu0 0.0
    %6360 = vmatpush1.msra.mxu0 0.0
    %6361 = vmatprep.subr.mxu0 0.0
    %6362 = vmatpush1.msra.mxu0 0.0
    %6363 = vmatprep.subr.mxu0 0.0
    %6364 = vmatpush1.msra.mxu0 0.0
    %6365 = vmatprep.subr.mxu0 0.0
    %6366 = vmatpush1.msra.mxu0 0.0
    %6367 = vmatprep.subr.mxu0 0.0
    %6368 = vmatpush1.msra.mxu0 0.0
    %6369 = vmatprep.subr.mxu0 0.0
    %6370 = vmatpush1.msra.mxu0 0.0
    %6371 = vmatprep.subr.mxu0 0.0
    %6372 = vmatpush1.msra.mxu0 0.0
    %6373 = vmatprep.subr.mxu0 0.0
    %6374 = vmatpush1.msra.mxu0 0.0
    %6375 = vmatprep.subr.mxu0 0.0
    %6376 = vmatpush1.msra.mxu0 0.0
    %6377 = vmatprep.subr.mxu0 0.0
    %6378 = vmatpush1.msra.mxu0 0.0
    %6379 = vmatprep.subr.mxu0 0.0
    %6380 = vmatpush1.msra.mxu0 0.0
    %6381 = vmatprep.subr.mxu0 0.0
    %6382 = vmatpush1.msra.mxu0 0.0
    %6383 = vmatprep.subr.mxu0 0.0
    %6384 = vmatpush1.msra.mxu0 0.0
    %6385 = vmatprep.subr.mxu0 0.0
    %6386 = vmatpush1.msra.mxu0 0.0
    %6387 = vmatprep.subr.mxu0 0.0
    %6388 = vmatpush1.msra.mxu0 0.0
    %6389 = vmatprep.subr.mxu0 0.0
    %6390 = vmatpush1.msra.mxu0 0.0
    %6391 = vmatprep.subr.mxu0 0.0
    %6392 = vmatpush1.msra.mxu0 0.0
    %6393 = vmatprep.mubr.f32.mxu0 0.0
    %6394 = vmatmul.mubr.f32.gmra.mrb[0].mxu0 %v6114
    %v6395 = vpop.f32.mrb[0].mxu0
    %v6396 = vadd.f32 0.0, %v6395
    %v6397 = vpop.f32.mrb[0].mxu0
    %v6398 = vadd.f32 0.0, %v6397
    %6399 = vdwg.mxu0
    %v6401 = vsel %vm5808, %v6047, 0
    %6403 = vmatprep.subr.mxu0 %v6049
    %6404 = vmatpush1.msra.mxu0 %v6048
    %6405 = vmatprep.subr.mxu0 %v6057
    %6406 = vmatpush1.msra.mxu0 %v6056
    %6407 = vmatprep.subr.mxu0 %v6065
    %6408 = vmatpush1.msra.mxu0 %v6064
    %6409 = vmatprep.subr.mxu0 %v6073
    %6410 = vmatpush1.msra.mxu0 %v6072
    %6411 = vmatprep.subr.mxu0 0.0
    %6412 = vmatpush1.msra.mxu0 0.0
    %6413 = vmatprep.subr.mxu0 0.0
    %6414 = vmatpush1.msra.mxu0 0.0
    %6415 = vmatprep.subr.mxu0 0.0
    %6416 = vmatpush1.msra.mxu0 0.0
    %6417 = vmatprep.subr.mxu0 0.0
    %6418 = vmatpush1.msra.mxu0 0.0
    %6419 = vmatprep.subr.mxu0 0.0
    %6420 = vmatpush1.msra.mxu0 0.0
    %6421 = vmatprep.subr.mxu0 0.0
    %6422 = vmatpush1.msra.mxu0 0.0
    %6423 = vmatprep.subr.mxu0 0.0
    %6424 = vmatpush1.msra.mxu0 0.0
    %6425 = vmatprep.subr.mxu0 0.0
    %6426 = vmatpush1.msra.mxu0 0.0
    %6427 = vmatprep.subr.mxu0 0.0
    %6428 = vmatpush1.msra.mxu0 0.0
    %6429 = vmatprep.subr.mxu0 0.0
    %6430 = vmatpush1.msra.mxu0 0.0
    %6431 = vmatprep.subr.mxu0 0.0
    %6432 = vmatpush1.msra.mxu0 0.0
    %6433 = vmatprep.subr.mxu0 0.0
    %6434 = vmatpush1.msra.mxu0 0.0
    %6435 = vmatprep.subr.mxu0 0.0
    %6436 = vmatpush1.msra.mxu0 0.0
    %6437 = vmatprep.subr.mxu0 0.0
    %6438 = vmatpush1.msra.mxu0 0.0
    %6439 = vmatprep.subr.mxu0 0.0
    %6440 = vmatpush1.msra.mxu0 0.0
    %6441 = vmatprep.subr.mxu0 0.0
    %6442 = vmatpush1.msra.mxu0 0.0
    %6443 = vmatprep.subr.mxu0 0.0
    %6444 = vmatpush1.msra.mxu0 0.0
    %6445 = vmatprep.subr.mxu0 0.0
    %6446 = vmatpush1.msra.mxu0 0.0
    %6447 = vmatprep.subr.mxu0 0.0
    %6448 = vmatpush1.msra.mxu0 0.0
    %6449 = vmatprep.subr.mxu0 0.0
    %6450 = vmatpush1.msra.mxu0 0.0
    %6451 = vmatprep.subr.mxu0 0.0
    %6452 = vmatpush1.msra.mxu0 0.0
    %6453 = vmatprep.subr.mxu0 0.0
    %6454 = vmatpush1.msra.mxu0 0.0
    %6455 = vmatprep.subr.mxu0 0.0
    %6456 = vmatpush1.msra.mxu0 0.0
    %6457 = vmatprep.subr.mxu0 0.0
    %6458 = vmatpush1.msra.mxu0 0.0
    %6459 = vmatprep.subr.mxu0 0.0
    %6460 = vmatpush1.msra.mxu0 0.0
    %6461 = vmatprep.subr.mxu0 0.0
    %6462 = vmatpush1.msra.mxu0 0.0
    %6463 = vmatprep.subr.mxu0 0.0
    %6464 = vmatpush1.msra.mxu0 0.0
    %6465 = vmatprep.subr.mxu0 0.0
    %6466 = vmatpush1.msra.mxu0 0.0
    %6467 = vmatprep.mubr.f32.mxu0 0.0
    %6468 = vmatmul.mubr.f32.gmra.mrb[0].mxu0 %v6401
    %v6469 = vpop.f32.mrb[0].mxu0
    %v6470 = vadd.f32 %v6183, %v6469
    %v6471 = vpop.f32.mrb[0].mxu0
    %v6472 = vadd.f32 %v6185, %v6471
    %6473 = vdwg.mxu0
    %6474 = vmatprep.subr.mxu0 %v6051
    %6475 = vmatpush1.msra.mxu0 %v6050
    %6476 = vmatprep.subr.mxu0 %v6059
    %6477 = vmatpush1.msra.mxu0 %v6058
    %6478 = vmatprep.subr.mxu0 %v6067
    %6479 = vmatpush1.msra.mxu0 %v6066
    %6480 = vmatprep.subr.mxu0 %v6075
    %6481 = vmatpush1.msra.mxu0 %v6074
    %6482 = vmatprep.subr.mxu0 0.0
    %6483 = vmatpush1.msra.mxu0 0.0
    %6484 = vmatprep.subr.mxu0 0.0
    %6485 = vmatpush1.msra.mxu0 0.0
    %6486 = vmatprep.subr.mxu0 0.0
    %6487 = vmatpush1.msra.mxu0 0.0
    %6488 = vmatprep.subr.mxu0 0.0
    %6489 = vmatpush1.msra.mxu0 0.0
    %6490 = vmatprep.subr.mxu0 0.0
    %6491 = vmatpush1.msra.mxu0 0.0
    %6492 = vmatprep.subr.mxu0 0.0
    %6493 = vmatpush1.msra.mxu0 0.0
    %6494 = vmatprep.subr.mxu0 0.0
    %6495 = vmatpush1.msra.mxu0 0.0
    %6496 = vmatprep.subr.mxu0 0.0
    %6497 = vmatpush1.msra.mxu0 0.0
    %6498 = vmatprep.subr.mxu0 0.0
    %6499 = vmatpush1.msra.mxu0 0.0
    %6500 = vmatprep.subr.mxu0 0.0
    %6501 = vmatpush1.msra.mxu0 0.0
    %6502 = vmatprep.subr.mxu0 0.0
    %6503 = vmatpush1.msra.mxu0 0.0
    %6504 = vmatprep.subr.mxu0 0.0
    %6505 = vmatpush1.msra.mxu0 0.0
    %6506 = vmatprep.subr.mxu0 0.0
    %6507 = vmatpush1.msra.mxu0 0.0
    %6508 = vmatprep.subr.mxu0 0.0
    %6509 = vmatpush1.msra.mxu0 0.0
    %6510 = vmatprep.subr.mxu0 0.0
    %6511 = vmatpush1.msra.mxu0 0.0
    %6512 = vmatprep.subr.mxu0 0.0
    %6513 = vmatpush1.msra.mxu0 0.0
    %6514 = vmatprep.subr.mxu0 0.0
    %6515 = vmatpush1.msra.mxu0 0.0
    %6516 = vmatprep.subr.mxu0 0.0
    %6517 = vmatpush1.msra.mxu0 0.0
    %6518 = vmatprep.subr.mxu0 0.0
    %6519 = vmatpush1.msra.mxu0 0.0
    %6520 = vmatprep.subr.mxu0 0.0
    %6521 = vmatpush1.msra.mxu0 0.0
    %6522 = vmatprep.subr.mxu0 0.0
    %6523 = vmatpush1.msra.mxu0 0.0
    %6524 = vmatprep.subr.mxu0 0.0
    %6525 = vmatpush1.msra.mxu0 0.0
    %6526 = vmatprep.subr.mxu0 0.0
    %6527 = vmatpush1.msra.mxu0 0.0
    %6528 = vmatprep.subr.mxu0 0.0
    %6529 = vmatpush1.msra.mxu0 0.0
    %6530 = vmatprep.subr.mxu0 0.0
    %6531 = vmatpush1.msra.mxu0 0.0
    %6532 = vmatprep.subr.mxu0 0.0
    %6533 = vmatpush1.msra.mxu0 0.0
    %6534 = vmatprep.subr.mxu0 0.0
    %6535 = vmatpush1.msra.mxu0 0.0
    %6536 = vmatprep.subr.mxu0 0.0
    %6537 = vmatpush1.msra.mxu0 0.0
    %6538 = vmatprep.mubr.f32.mxu0 0.0
    %6539 = vmatmul.mubr.f32.gmra.mrb[0].mxu0 %v6401
    %v6540 = vpop.f32.mrb[0].mxu0
    %v6541 = vadd.f32 %v6254, %v6540
    %v6542 = vpop.f32.mrb[0].mxu0
    %v6543 = vadd.f32 %v6256, %v6542
    %6544 = vdwg.mxu0
    %6545 = vmatprep.subr.mxu0 %v6053
    %6546 = vmatpush1.msra.mxu0 %v6052
    %6547 = vmatprep.subr.mxu0 %v6061
    %6548 = vmatpush1.msra.mxu0 %v6060
    %6549 = vmatprep.subr.mxu0 %v6069
    %6550 = vmatpush1.msra.mxu0 %v6068
    %6551 = vmatprep.subr.mxu0 %v6077
    %6552 = vmatpush1.msra.mxu0 %v6076
    %6553 = vmatprep.subr.mxu0 0.0
    %6554 = vmatpush1.msra.mxu0 0.0
    %6555 = vmatprep.subr.mxu0 0.0
    %6556 = vmatpush1.msra.mxu0 0.0
    %6557 = vmatprep.subr.mxu0 0.0
    %6558 = vmatpush1.msra.mxu0 0.0
    %6559 = vmatprep.subr.mxu0 0.0
    %6560 = vmatpush1.msra.mxu0 0.0
    %6561 = vmatprep.subr.mxu0 0.0
    %6562 = vmatpush1.msra.mxu0 0.0
    %6563 = vmatprep.subr.mxu0 0.0
    %6564 = vmatpush1.msra.mxu0 0.0
    %6565 = vmatprep.subr.mxu0 0.0
    %6566 = vmatpush1.msra.mxu0 0.0
    %6567 = vmatprep.subr.mxu0 0.0
    %6568 = vmatpush1.msra.mxu0 0.0
    %6569 = vmatprep.subr.mxu0 0.0
    %6570 = vmatpush1.msra.mxu0 0.0
    %6571 = vmatprep.subr.mxu0 0.0
    %6572 = vmatpush1.msra.mxu0 0.0
    %6573 = vmatprep.subr.mxu0 0.0
    %6574 = vmatpush1.msra.mxu0 0.0
    %6575 = vmatprep.subr.mxu0 0.0
    %6576 = vmatpush1.msra.mxu0 0.0
    %6577 = vmatprep.subr.mxu0 0.0
    %6578 = vmatpush1.msra.mxu0 0.0
    %6579 = vmatprep.subr.mxu0 0.0
    %6580 = vmatpush1.msra.mxu0 0.0
    %6581 = vmatprep.subr.mxu0 0.0
    %6582 = vmatpush1.msra.mxu0 0.0
    %6583 = vmatprep.subr.mxu0 0.0
    %6584 = vmatpush1.msra.mxu0 0.0
    %6585 = vmatprep.subr.mxu0 0.0
    %6586 = vmatpush1.msra.mxu0 0.0
    %6587 = vmatprep.subr.mxu0 0.0
    %6588 = vmatpush1.msra.mxu0 0.0
    %6589 = vmatprep.subr.mxu0 0.0
    %6590 = vmatpush1.msra.mxu0 0.0
    %6591 = vmatprep.subr.mxu0 0.0
    %6592 = vmatpush1.msra.mxu0 0.0
    %6593 = vmatprep.subr.mxu0 0.0
    %6594 = vmatpush1.msra.mxu0 0.0
    %6595 = vmatprep.subr.mxu0 0.0
    %6596 = vmatpush1.msra.mxu0 0.0
    %6597 = vmatprep.subr.mxu0 0.0
    %6598 = vmatpush1.msra.mxu0 0.0
    %6599 = vmatprep.subr.mxu0 0.0
    %6600 = vmatpush1.msra.mxu0 0.0
    %6601 = vmatprep.subr.mxu0 0.0
    %6602 = vmatpush1.msra.mxu0 0.0
    %6603 = vmatprep.subr.mxu0 0.0
    %6604 = vmatpush1.msra.mxu0 0.0
    %6605 = vmatprep.subr.mxu0 0.0
    %6606 = vmatpush1.msra.mxu0 0.0
    %6607 = vmatprep.subr.mxu0 0.0
    %6608 = vmatpush1.msra.mxu0 0.0
    %6609 = vmatprep.mubr.f32.mxu0 0.0
    %6610 = vmatmul.mubr.f32.gmra.mrb[0].mxu0 %v6401
    %v6611 = vpop.f32.mrb[0].mxu0
    %v6612 = vadd.f32 %v6325, %v6611
    %v6613 = vpop.f32.mrb[0].mxu0
    %v6614 = vadd.f32 %v6327, %v6613
    %6615 = vdwg.mxu0
    %6616 = vmatprep.subr.mxu0 %v6055
    %6617 = vmatpush1.msra.mxu0 %v6054
    %6618 = vmatprep.subr.mxu0 %v6063
    %6619 = vmatpush1.msra.mxu0 %v6062
    %6620 = vmatprep.subr.mxu0 %v6071
    %6621 = vmatpush1.msra.mxu0 %v6070
    %6622 = vmatprep.subr.mxu0 %v6079
    %6623 = vmatpush1.msra.mxu0 %v6078
    %6624 = vmatprep.subr.mxu0 0.0
    %6625 = vmatpush1.msra.mxu0 0.0
    %6626 = vmatprep.subr.mxu0 0.0
    %6627 = vmatpush1.msra.mxu0 0.0
    %6628 = vmatprep.subr.mxu0 0.0
    %6629 = vmatpush1.msra.mxu0 0.0
    %6630 = vmatprep.subr.mxu0 0.0
    %6631 = vmatpush1.msra.mxu0 0.0
    %6632 = vmatprep.subr.mxu0 0.0
    %6633 = vmatpush1.msra.mxu0 0.0
    %6634 = vmatprep.subr.mxu0 0.0
    %6635 = vmatpush1.msra.mxu0 0.0
    %6636 = vmatprep.subr.mxu0 0.0
    %6637 = vmatpush1.msra.mxu0 0.0
    %6638 = vmatprep.subr.mxu0 0.0
    %6639 = vmatpush1.msra.mxu0 0.0
    %6640 = vmatprep.subr.mxu0 0.0
    %6641 = vmatpush1.msra.mxu0 0.0
    %6642 = vmatprep.subr.mxu0 0.0
    %6643 = vmatpush1.msra.mxu0 0.0
    %6644 = vmatprep.subr.mxu0 0.0
    %6645 = vmatpush1.msra.mxu0 0.0
    %6646 = vmatprep.subr.mxu0 0.0
    %6647 = vmatpush1.msra.mxu0 0.0
    %6648 = vmatprep.subr.mxu0 0.0
    %6649 = vmatpush1.msra.mxu0 0.0
    %6650 = vmatprep.subr.mxu0 0.0
    %6651 = vmatpush1.msra.mxu0 0.0
    %6652 = vmatprep.subr.mxu0 0.0
    %6653 = vmatpush1.msra.mxu0 0.0
    %6654 = vmatprep.subr.mxu0 0.0
    %6655 = vmatpush1.msra.mxu0 0.0
    %6656 = vmatprep.subr.mxu0 0.0
    %6657 = vmatpush1.msra.mxu0 0.0
    %6658 = vmatprep.subr.mxu0 0.0
    %6659 = vmatpush1.msra.mxu0 0.0
    %6660 = vmatprep.subr.mxu0 0.0
    %6661 = vmatpush1.msra.mxu0 0.0
    %6662 = vmatprep.subr.mxu0 0.0
    %6663 = vmatpush1.msra.mxu0 0.0
    %6664 = vmatprep.subr.mxu0 0.0
    %6665 = vmatpush1.msra.mxu0 0.0
    %6666 = vmatprep.subr.mxu0 0.0
    %6667 = vmatpush1.msra.mxu0 0.0
    %6668 = vmatprep.subr.mxu0 0.0
    %6669 = vmatpush1.msra.mxu0 0.0
    %6670 = vmatprep.subr.mxu0 0.0
    %6671 = vmatpush1.msra.mxu0 0.0
    %6672 = vmatprep.subr.mxu0 0.0
    %6673 = vmatpush1.msra.mxu0 0.0
    %6674 = vmatprep.subr.mxu0 0.0
    %6675 = vmatpush1.msra.mxu0 0.0
    %6676 = vmatprep.subr.mxu0 0.0
    %6677 = vmatpush1.msra.mxu0 0.0
    %6678 = vmatprep.subr.mxu0 0.0
    %6679 = vmatpush1.msra.mxu0 0.0
    %6680 = vmatprep.mubr.f32.mxu0 0.0
    %6681 = vmatmul.mubr.f32.gmra.mrb[0].mxu0 %v6401
    %v6682 = vpop.f32.mrb[0].mxu0
    %v6683 = vadd.f32 %v6396, %v6682
    %v6684 = vpop.f32.mrb[0].mxu0
    %v6685 = vadd.f32 %v6398, %v6684
    %6686 = vdwg.mxu0
    %v6687 = vld [vmem:[#allocation7 + $0x4] sm:$0x3]
    %v6688 = vld [vmem:[%s11 + $0x200] sm:$0xff]
    %v6689 = vld [vmem:[%s11 + $0x208] sm:$0xff]
    %v6690 = vld [vmem:[%s11 + $0x210] sm:$0xff]
    %v6691 = vld [vmem:[%s11 + $0x218] sm:$0xff]
    %v6692 = vld [vmem:[%s11 + $0x220] sm:$0xff]
    %v6693 = vld [vmem:[%s11 + $0x228] sm:$0xff]
    %v6694 = vld [vmem:[%s11 + $0x230] sm:$0xff]
    %v6695 = vld [vmem:[%s11 + $0x238] sm:$0xff]
    %v6696 = vld [vmem:[%s11 + $0x240] sm:$0xff]
    %v6697 = vld [vmem:[%s11 + $0x248] sm:$0xff]
    %v6698 = vld [vmem:[%s11 + $0x250] sm:$0xff]
    %v6699 = vld [vmem:[%s11 + $0x258] sm:$0xff]
    %v6700 = vld [vmem:[%s11 + $0x260] sm:$0xff]
    %v6701 = vld [vmem:[%s11 + $0x268] sm:$0xff]
    %v6702 = vld [vmem:[%s11 + $0x270] sm:$0xff]
    %v6703 = vld [vmem:[%s11 + $0x278] sm:$0xff]
    %v6704 = vld [vmem:[%s11 + $0x280] sm:$0xff]
    %v6705 = vld [vmem:[%s11 + $0x288] sm:$0xff]
    %v6706 = vld [vmem:[%s11 + $0x290] sm:$0xff]
    %v6707 = vld [vmem:[%s11 + $0x298] sm:$0xff]
    %v6708 = vld [vmem:[%s11 + $0x2a0] sm:$0xff]
    %v6709 = vld [vmem:[%s11 + $0x2a8] sm:$0xff]
    %v6710 = vld [vmem:[%s11 + $0x2b0] sm:$0xff]
    %v6711 = vld [vmem:[%s11 + $0x2b8] sm:$0xff]
    %v6712 = vld [vmem:[%s11 + $0x2c0] sm:$0xff]
    %v6713 = vld [vmem:[%s11 + $0x2c8] sm:$0xff]
    %v6714 = vld [vmem:[%s11 + $0x2d0] sm:$0xff]
    %v6715 = vld [vmem:[%s11 + $0x2d8] sm:$0xff]
    %v6716 = vld [vmem:[%s11 + $0x2e0] sm:$0xff]
    %v6717 = vld [vmem:[%s11 + $0x2e8] sm:$0xff]
    %v6718 = vld [vmem:[%s11 + $0x2f0] sm:$0xff]
    %v6719 = vld [vmem:[%s11 + $0x2f8] sm:$0xff]
    %v6721 = vsel %vm5808, %v6687, 0
    %6723 = vmatprep.subr.mxu0 %v6689
    %6724 = vmatpush1.msra.mxu0 %v6688
    %6725 = vmatprep.subr.mxu0 %v6697
    %6726 = vmatpush1.msra.mxu0 %v6696
    %6727 = vmatprep.subr.mxu0 %v6705
    %6728 = vmatpush1.msra.mxu0 %v6704
    %6729 = vmatprep.subr.mxu0 %v6713
    %6730 = vmatpush1.msra.mxu0 %v6712
    %6731 = vmatprep.subr.mxu0 0.0
    %6732 = vmatpush1.msra.mxu0 0.0
    %6733 = vmatprep.subr.mxu0 0.0
    %6734 = vmatpush1.msra.mxu0 0.0
    %6735 = vmatprep.subr.mxu0 0.0
    %6736 = vmatpush1.msra.mxu0 0.0
    %6737 = vmatprep.subr.mxu0 0.0
    %6738 = vmatpush1.msra.mxu0 0.0
    %6739 = vmatprep.subr.mxu0 0.0
    %6740 = vmatpush1.msra.mxu0 0.0
    %6741 = vmatprep.subr.mxu0 0.0
    %6742 = vmatpush1.msra.mxu0 0.0
    %6743 = vmatprep.subr.mxu0 0.0
    %6744 = vmatpush1.msra.mxu0 0.0
    %6745 = vmatprep.subr.mxu0 0.0
    %6746 = vmatpush1.msra.mxu0 0.0
    %6747 = vmatprep.subr.mxu0 0.0
    %6748 = vmatpush1.msra.mxu0 0.0
    %6749 = vmatprep.subr.mxu0 0.0
    %6750 = vmatpush1.msra.mxu0 0.0
    %6751 = vmatprep.subr.mxu0 0.0
    %6752 = vmatpush1.msra.mxu0 0.0
    %6753 = vmatprep.subr.mxu0 0.0
    %6754 = vmatpush1.msra.mxu0 0.0
    %6755 = vmatprep.subr.mxu0 0.0
    %6756 = vmatpush1.msra.mxu0 0.0
    %6757 = vmatprep.subr.mxu0 0.0
    %6758 = vmatpush1.msra.mxu0 0.0
    %6759 = vmatprep.subr.mxu0 0.0
    %6760 = vmatpush1.msra.mxu0 0.0
    %6761 = vmatprep.subr.mxu0 0.0
    %6762 = vmatpush1.msra.mxu0 0.0
    %6763 = vmatprep.subr.mxu0 0.0
    %6764 = vmatpush1.msra.mxu0 0.0
    %6765 = vmatprep.subr.mxu0 0.0
    %6766 = vmatpush1.msra.mxu0 0.0
    %6767 = vmatprep.subr.mxu0 0.0
    %6768 = vmatpush1.msra.mxu0 0.0
    %6769 = vmatprep.subr.mxu0 0.0
    %6770 = vmatpush1.msra.mxu0 0.0
    %6771 = vmatprep.subr.mxu0 0.0
    %6772 = vmatpush1.msra.mxu0 0.0
    %6773 = vmatprep.subr.mxu0 0.0
    %6774 = vmatpush1.msra.mxu0 0.0
    %6775 = vmatprep.subr.mxu0 0.0
    %6776 = vmatpush1.msra.mxu0 0.0
    %6777 = vmatprep.subr.mxu0 0.0
    %6778 = vmatpush1.msra.mxu0 0.0
    %6779 = vmatprep.subr.mxu0 0.0
    %6780 = vmatpush1.msra.mxu0 0.0
    %6781 = vmatprep.subr.mxu0 0.0
    %6782 = vmatpush1.msra.mxu0 0.0
    %6783 = vmatprep.subr.mxu0 0.0
    %6784 = vmatpush1.msra.mxu0 0.0
    %6785 = vmatprep.subr.mxu0 0.0
    %6786 = vmatpush1.msra.mxu0 0.0
    %6787 = vmatprep.mubr.f32.mxu0 0.0
    %6788 = vmatmul.mubr.f32.gmra.mrb[0].mxu0 %v6721
    %v6789 = vpop.f32.mrb[0].mxu0
    %v6790 = vadd.f32 0.0, %v6789
    %v6791 = vpop.f32.mrb[0].mxu0
    %v6792 = vadd.f32 0.0, %v6791
    %6793 = vdwg.mxu0
    %6794 = vmatprep.subr.mxu0 %v6691
    %6795 = vmatpush1.msra.mxu0 %v6690
    %6796 = vmatprep.subr.mxu0 %v6699
    %6797 = vmatpush1.msra.mxu0 %v6698
    %6798 = vmatprep.subr.mxu0 %v6707
    %6799 = vmatpush1.msra.mxu0 %v6706
    %6800 = vmatprep.subr.mxu0 %v6715
    %6801 = vmatpush1.msra.mxu0 %v6714
    %6802 = vmatprep.subr.mxu0 0.0
    %6803 = vmatpush1.msra.mxu0 0.0
    %6804 = vmatprep.subr.mxu0 0.0
    %6805 = vmatpush1.msra.mxu0 0.0
    %6806 = vmatprep.subr.mxu0 0.0
    %6807 = vmatpush1.msra.mxu0 0.0
    %6808 = vmatprep.subr.mxu0 0.0
    %6809 = vmatpush1.msra.mxu0 0.0
    %6810 = vmatprep.subr.mxu0 0.0
    %6811 = vmatpush1.msra.mxu0 0.0
    %6812 = vmatprep.subr.mxu0 0.0
    %6813 = vmatpush1.msra.mxu0 0.0
    %6814 = vmatprep.subr.mxu0 0.0
    %6815 = vmatpush1.msra.mxu0 0.0
    %6816 = vmatprep.subr.mxu0 0.0
    %6817 = vmatpush1.msra.mxu0 0.0
    %6818 = vmatprep.subr.mxu0 0.0
    %6819 = vmatpush1.msra.mxu0 0.0
    %6820 = vmatprep.subr.mxu0 0.0
    %6821 = vmatpush1.msra.mxu0 0.0
    %6822 = vmatprep.subr.mxu0 0.0
    %6823 = vmatpush1.msra.mxu0 0.0
    %6824 = vmatprep.subr.mxu0 0.0
    %6825 = vmatpush1.msra.mxu0 0.0
    %6826 = vmatprep.subr.mxu0 0.0
    %6827 = vmatpush1.msra.mxu0 0.0
    %6828 = vmatprep.subr.mxu0 0.0
    %6829 = vmatpush1.msra.mxu0 0.0
    %6830 = vmatprep.subr.mxu0 0.0
    %6831 = vmatpush1.msra.mxu0 0.0
    %6832 = vmatprep.subr.mxu0 0.0
    %6833 = vmatpush1.msra.mxu0 0.0
    %6834 = vmatprep.subr.mxu0 0.0
    %6835 = vmatpush1.msra.mxu0 0.0
    %6836 = vmatprep.subr.mxu0 0.0
    %6837 = vmatpush1.msra.mxu0 0.0
    %6838 = vmatprep.subr.mxu0 0.0
    %6839 = vmatpush1.msra.mxu0 0.0
    %6840 = vmatprep.subr.mxu0 0.0
    %6841 = vmatpush1.msra.mxu0 0.0
    %6842 = vmatprep.subr.mxu0 0.0
    %6843 = vmatpush1.msra.mxu0 0.0
    %6844 = vmatprep.subr.mxu0 0.0
    %6845 = vmatpush1.msra.mxu0 0.0
    %6846 = vmatprep.subr.mxu0 0.0
    %6847 = vmatpush1.msra.mxu0 0.0
    %6848 = vmatprep.subr.mxu0 0.0
    %6849 = vmatpush1.msra.mxu0 0.0
    %6850 = vmatprep.subr.mxu0 0.0
    %6851 = vmatpush1.msra.mxu0 0.0
    %6852 = vmatprep.subr.mxu0 0.0
    %6853 = vmatpush1.msra.mxu0 0.0
    %6854 = vmatprep.subr.mxu0 0.0
    %6855 = vmatpush1.msra.mxu0 0.0
    %6856 = vmatprep.subr.mxu0 0.0
    %6857 = vmatpush1.msra.mxu0 0.0
    %6858 = vmatprep.mubr.f32.mxu0 0.0
    %6859 = vmatmul.mubr.f32.gmra.mrb[0].mxu0 %v6721
    %v6860 = vpop.f32.mrb[0].mxu0
    %v6861 = vadd.f32 0.0, %v6860
    %v6862 = vpop.f32.mrb[0].mxu0
    %v6863 = vadd.f32 0.0, %v6862
    %6864 = vdwg.mxu0
    %6865 = vmatprep.subr.mxu0 %v6693
    %6866 = vmatpush1.msra.mxu0 %v6692
    %6867 = vmatprep.subr.mxu0 %v6701
    %6868 = vmatpush1.msra.mxu0 %v6700
    %6869 = vmatprep.subr.mxu0 %v6709
    %6870 = vmatpush1.msra.mxu0 %v6708
    %6871 = vmatprep.subr.mxu0 %v6717
    %6872 = vmatpush1.msra.mxu0 %v6716
    %6873 = vmatprep.subr.mxu0 0.0
    %6874 = vmatpush1.msra.mxu0 0.0
    %6875 = vmatprep.subr.mxu0 0.0
    %6876 = vmatpush1.msra.mxu0 0.0
    %6877 = vmatprep.subr.mxu0 0.0
    %6878 = vmatpush1.msra.mxu0 0.0
    %6879 = vmatprep.subr.mxu0 0.0
    %6880 = vmatpush1.msra.mxu0 0.0
    %6881 = vmatprep.subr.mxu0 0.0
    %6882 = vmatpush1.msra.mxu0 0.0
    %6883 = vmatprep.subr.mxu0 0.0
    %6884 = vmatpush1.msra.mxu0 0.0
    %6885 = vmatprep.subr.mxu0 0.0
    %6886 = vmatpush1.msra.mxu0 0.0
    %6887 = vmatprep.subr.mxu0 0.0
    %6888 = vmatpush1.msra.mxu0 0.0
    %6889 = vmatprep.subr.mxu0 0.0
    %6890 = vmatpush1.msra.mxu0 0.0
    %6891 = vmatprep.subr.mxu0 0.0
    %6892 = vmatpush1.msra.mxu0 0.0
    %6893 = vmatprep.subr.mxu0 0.0
    %6894 = vmatpush1.msra.mxu0 0.0
    %6895 = vmatprep.subr.mxu0 0.0
    %6896 = vmatpush1.msra.mxu0 0.0
    %6897 = vmatprep.subr.mxu0 0.0
    %6898 = vmatpush1.msra.mxu0 0.0
    %6899 = vmatprep.subr.mxu0 0.0
    %6900 = vmatpush1.msra.mxu0 0.0
    %6901 = vmatprep.subr.mxu0 0.0
    %6902 = vmatpush1.msra.mxu0 0.0
    %6903 = vmatprep.subr.mxu0 0.0
    %6904 = vmatpush1.msra.mxu0 0.0
    %6905 = vmatprep.subr.mxu0 0.0
    %6906 = vmatpush1.msra.mxu0 0.0
    %6907 = vmatprep.subr.mxu0 0.0
    %6908 = vmatpush1.msra.mxu0 0.0
    %6909 = vmatprep.subr.mxu0 0.0
    %6910 = vmatpush1.msra.mxu0 0.0
    %6911 = vmatprep.subr.mxu0 0.0
    %6912 = vmatpush1.msra.mxu0 0.0
    %6913 = vmatprep.subr.mxu0 0.0
    %6914 = vmatpush1.msra.mxu0 0.0
    %6915 = vmatprep.subr.mxu0 0.0
    %6916 = vmatpush1.msra.mxu0 0.0
    %6917 = vmatprep.subr.mxu0 0.0
    %6918 = vmatpush1.msra.mxu0 0.0
    %6919 = vmatprep.subr.mxu0 0.0
    %6920 = vmatpush1.msra.mxu0 0.0
    %6921 = vmatprep.subr.mxu0 0.0
    %6922 = vmatpush1.msra.mxu0 0.0
    %6923 = vmatprep.subr.mxu0 0.0
    %6924 = vmatpush1.msra.mxu0 0.0
    %6925 = vmatprep.subr.mxu0 0.0
    %6926 = vmatpush1.msra.mxu0 0.0
    %6927 = vmatprep.subr.mxu0 0.0
    %6928 = vmatpush1.msra.mxu0 0.0
    %6929 = vmatprep.mubr.f32.mxu0 0.0
    %6930 = vmatmul.mubr.f32.gmra.mrb[0].mxu0 %v6721
    %v6931 = vpop.f32.mrb[0].mxu0
    %v6932 = vadd.f32 0.0, %v6931
    %v6933 = vpop.f32.mrb[0].mxu0
    %v6934 = vadd.f32 0.0, %v6933
    %6935 = vdwg.mxu0
    %6936 = vmatprep.subr.mxu0 %v6695
    %6937 = vmatpush1.msra.mxu0 %v6694
    %6938 = vmatprep.subr.mxu0 %v6703
    %6939 = vmatpush1.msra.mxu0 %v6702
    %6940 = vmatprep.subr.mxu0 %v6711
    %6941 = vmatpush1.msra.mxu0 %v6710
    %6942 = vmatprep.subr.mxu0 %v6719
    %6943 = vmatpush1.msra.mxu0 %v6718
    %6944 = vmatprep.subr.mxu0 0.0
    %6945 = vmatpush1.msra.mxu0 0.0
    %6946 = vmatprep.subr.mxu0 0.0
    %6947 = vmatpush1.msra.mxu0 0.0
    %6948 = vmatprep.subr.mxu0 0.0
    %6949 = vmatpush1.msra.mxu0 0.0
    %6950 = vmatprep.subr.mxu0 0.0
    %6951 = vmatpush1.msra.mxu0 0.0
    %6952 = vmatprep.subr.mxu0 0.0
    %6953 = vmatpush1.msra.mxu0 0.0
    %6954 = vmatprep.subr.mxu0 0.0
    %6955 = vmatpush1.msra.mxu0 0.0
    %6956 = vmatprep.subr.mxu0 0.0
    %6957 = vmatpush1.msra.mxu0 0.0
    %6958 = vmatprep.subr.mxu0 0.0
    %6959 = vmatpush1.msra.mxu0 0.0
    %6960 = vmatprep.subr.mxu0 0.0
    %6961 = vmatpush1.msra.mxu0 0.0
    %6962 = vmatprep.subr.mxu0 0.0
    %6963 = vmatpush1.msra.mxu0 0.0
    %6964 = vmatprep.subr.mxu0 0.0
    %6965 = vmatpush1.msra.mxu0 0.0
    %6966 = vmatprep.subr.mxu0 0.0
    %6967 = vmatpush1.msra.mxu0 0.0
    %6968 = vmatprep.subr.mxu0 0.0
    %6969 = vmatpush1.msra.mxu0 0.0
    %6970 = vmatprep.subr.mxu0 0.0
    %6971 = vmatpush1.msra.mxu0 0.0
    %6972 = vmatprep.subr.mxu0 0.0
    %6973 = vmatpush1.msra.mxu0 0.0
    %6974 = vmatprep.subr.mxu0 0.0
    %6975 = vmatpush1.msra.mxu0 0.0
    %6976 = vmatprep.subr.mxu0 0.0
    %6977 = vmatpush1.msra.mxu0 0.0
    %6978 = vmatprep.subr.mxu0 0.0
    %6979 = vmatpush1.msra.mxu0 0.0
    %6980 = vmatprep.subr.mxu0 0.0
    %6981 = vmatpush1.msra.mxu0 0.0
    %6982 = vmatprep.subr.mxu0 0.0
    %6983 = vmatpush1.msra.mxu0 0.0
    %6984 = vmatprep.subr.mxu0 0.0
    %6985 = vmatpush1.msra.mxu0 0.0
    %6986 = vmatprep.subr.mxu0 0.0
    %6987 = vmatpush1.msra.mxu0 0.0
    %6988 = vmatprep.subr.mxu0 0.0
    %6989 = vmatpush1.msra.mxu0 0.0
    %6990 = vmatprep.subr.mxu0 0.0
    %6991 = vmatpush1.msra.mxu0 0.0
    %6992 = vmatprep.subr.mxu0 0.0
    %6993 = vmatpush1.msra.mxu0 0.0
    %6994 = vmatprep.subr.mxu0 0.0
    %6995 = vmatpush1.msra.mxu0 0.0
    %6996 = vmatprep.subr.mxu0 0.0
    %6997 = vmatpush1.msra.mxu0 0.0
    %6998 = vmatprep.subr.mxu0 0.0
    %6999 = vmatpush1.msra.mxu0 0.0
    %7000 = vmatprep.mubr.f32.mxu0 0.0
    %7001 = vmatmul.mubr.f32.gmra.mrb[0].mxu0 %v6721
    %v7002 = vpop.f32.mrb[0].mxu0
    %v7003 = vadd.f32 0.0, %v7002
    %v7004 = vpop.f32.mrb[0].mxu0
    %v7005 = vadd.f32 0.0, %v7004
    %7006 = vdwg.mxu0
    %v7007 = vadd.f32 %v6470, %v6790
    %v7008 = vadd.f32 %v6472, %v6792
    %v7009 = vadd.f32 %v6541, %v6861
    %v7010 = vadd.f32 %v6543, %v6863
    %v7011 = vadd.f32 %v6612, %v6932
    %v7012 = vadd.f32 %v6614, %v6934
    %v7013 = vadd.f32 %v6683, %v7003
    %v7014 = vadd.f32 %v6685, %v7005
    %v7015 = vld [vmem:[#allocation7 + $0x6] sm:$0x3]
    %v7016 = vld [vmem:[%s11 + $0x300] sm:$0xff]
    %v7017 = vld [vmem:[%s11 + $0x308] sm:$0xff]
    %v7018 = vld [vmem:[%s11 + $0x310] sm:$0xff]
    %v7019 = vld [vmem:[%s11 + $0x318] sm:$0xff]
    %v7020 = vld [vmem:[%s11 + $0x320] sm:$0xff]
    %v7021 = vld [vmem:[%s11 + $0x328] sm:$0xff]
    %v7022 = vld [vmem:[%s11 + $0x330] sm:$0xff]
    %v7023 = vld [vmem:[%s11 + $0x338] sm:$0xff]
    %v7024 = vld [vmem:[%s11 + $0x340] sm:$0xff]
    %v7025 = vld [vmem:[%s11 + $0x348] sm:$0xff]
    %v7026 = vld [vmem:[%s11 + $0x350] sm:$0xff]
    %v7027 = vld [vmem:[%s11 + $0x358] sm:$0xff]
    %v7028 = vld [vmem:[%s11 + $0x360] sm:$0xff]
    %v7029 = vld [vmem:[%s11 + $0x368] sm:$0xff]
    %v7030 = vld [vmem:[%s11 + $0x370] sm:$0xff]
    %v7031 = vld [vmem:[%s11 + $0x378] sm:$0xff]
    %v7032 = vld [vmem:[%s11 + $0x380] sm:$0xff]
    %v7033 = vld [vmem:[%s11 + $0x388] sm:$0xff]
    %v7034 = vld [vmem:[%s11 + $0x390] sm:$0xff]
    %v7035 = vld [vmem:[%s11 + $0x398] sm:$0xff]
    %v7036 = vld [vmem:[%s11 + $0x3a0] sm:$0xff]
    %v7037 = vld [vmem:[%s11 + $0x3a8] sm:$0xff]
    %v7038 = vld [vmem:[%s11 + $0x3b0] sm:$0xff]
    %v7039 = vld [vmem:[%s11 + $0x3b8] sm:$0xff]
    %v7040 = vld [vmem:[%s11 + $0x3c0] sm:$0xff]
    %v7041 = vld [vmem:[%s11 + $0x3c8] sm:$0xff]
    %v7042 = vld [vmem:[%s11 + $0x3d0] sm:$0xff]
    %v7043 = vld [vmem:[%s11 + $0x3d8] sm:$0xff]
    %v7044 = vld [vmem:[%s11 + $0x3e0] sm:$0xff]
    %v7045 = vld [vmem:[%s11 + $0x3e8] sm:$0xff]
    %v7046 = vld [vmem:[%s11 + $0x3f0] sm:$0xff]
    %v7047 = vld [vmem:[%s11 + $0x3f8] sm:$0xff]
    %v7049 = vsel %vm5808, %v7015, 0
    %7051 = vmatprep.subr.mxu0 %v7017
    %7052 = vmatpush1.msra.mxu0 %v7016
    %7053 = vmatprep.subr.mxu0 %v7025
    %7054 = vmatpush1.msra.mxu0 %v7024
    %7055 = vmatprep.subr.mxu0 %v7033
    %7056 = vmatpush1.msra.mxu0 %v7032
    %7057 = vmatprep.subr.mxu0 %v7041
    %7058 = vmatpush1.msra.mxu0 %v7040
    %7059 = vmatprep.subr.mxu0 0.0
    %7060 = vmatpush1.msra.mxu0 0.0
    %7061 = vmatprep.subr.mxu0 0.0
    %7062 = vmatpush1.msra.mxu0 0.0
    %7063 = vmatprep.subr.mxu0 0.0
    %7064 = vmatpush1.msra.mxu0 0.0
    %7065 = vmatprep.subr.mxu0 0.0
    %7066 = vmatpush1.msra.mxu0 0.0
    %7067 = vmatprep.subr.mxu0 0.0
    %7068 = vmatpush1.msra.mxu0 0.0
    %7069 = vmatprep.subr.mxu0 0.0
    %7070 = vmatpush1.msra.mxu0 0.0
    %7071 = vmatprep.subr.mxu0 0.0
    %7072 = vmatpush1.msra.mxu0 0.0
    %7073 = vmatprep.subr.mxu0 0.0
    %7074 = vmatpush1.msra.mxu0 0.0
    %7075 = vmatprep.subr.mxu0 0.0
    %7076 = vmatpush1.msra.mxu0 0.0
    %7077 = vmatprep.subr.mxu0 0.0
    %7078 = vmatpush1.msra.mxu0 0.0
    %7079 = vmatprep.subr.mxu0 0.0
    %7080 = vmatpush1.msra.mxu0 0.0
    %7081 = vmatprep.subr.mxu0 0.0
    %7082 = vmatpush1.msra.mxu0 0.0
    %7083 = vmatprep.subr.mxu0 0.0
    %7084 = vmatpush1.msra.mxu0 0.0
    %7085 = vmatprep.subr.mxu0 0.0
    %7086 = vmatpush1.msra.mxu0 0.0
    %7087 = vmatprep.subr.mxu0 0.0
    %7088 = vmatpush1.msra.mxu0 0.0
    %7089 = vmatprep.subr.mxu0 0.0
    %7090 = vmatpush1.msra.mxu0 0.0
    %7091 = vmatprep.subr.mxu0 0.0
    %7092 = vmatpush1.msra.mxu0 0.0
    %7093 = vmatprep.subr.mxu0 0.0
    %7094 = vmatpush1.msra.mxu0 0.0
    %7095 = vmatprep.subr.mxu0 0.0
    %7096 = vmatpush1.msra.mxu0 0.0
    %7097 = vmatprep.subr.mxu0 0.0
    %7098 = vmatpush1.msra.mxu0 0.0
    %7099 = vmatprep.subr.mxu0 0.0
    %7100 = vmatpush1.msra.mxu0 0.0
    %7101 = vmatprep.subr.mxu0 0.0
    %7102 = vmatpush1.msra.mxu0 0.0
    %7103 = vmatprep.subr.mxu0 0.0
    %7104 = vmatpush1.msra.mxu0 0.0
    %7105 = vmatprep.subr.mxu0 0.0
    %7106 = vmatpush1.msra.mxu0 0.0
    %7107 = vmatprep.subr.mxu0 0.0
    %7108 = vmatpush1.msra.mxu0 0.0
    %7109 = vmatprep.subr.mxu0 0.0
    %7110 = vmatpush1.msra.mxu0 0.0
    %7111 = vmatprep.subr.mxu0 0.0
    %7112 = vmatpush1.msra.mxu0 0.0
    %7113 = vmatprep.subr.mxu0 0.0
    %7114 = vmatpush1.msra.mxu0 0.0
    %7115 = vmatprep.mubr.f32.mxu0 0.0
    %7116 = vmatmul.mubr.f32.gmra.mrb[0].mxu0 %v7049
    %v7117 = vpop.f32.mrb[0].mxu0
    %v7118 = vadd.f32 0.0, %v7117
    %v7119 = vpop.f32.mrb[0].mxu0
    %v7120 = vadd.f32 0.0, %v7119
    %7121 = vdwg.mxu0
    %7122 = vmatprep.subr.mxu0 %v7019
    %7123 = vmatpush1.msra.mxu0 %v7018
    %7124 = vmatprep.subr.mxu0 %v7027
    %7125 = vmatpush1.msra.mxu0 %v7026
    %7126 = vmatprep.subr.mxu0 %v7035
    %7127 = vmatpush1.msra.mxu0 %v7034
    %7128 = vmatprep.subr.mxu0 %v7043
    %7129 = vmatpush1.msra.mxu0 %v7042
    %7130 = vmatprep.subr.mxu0 0.0
    %7131 = vmatpush1.msra.mxu0 0.0
    %7132 = vmatprep.subr.mxu0 0.0
    %7133 = vmatpush1.msra.mxu0 0.0
    %7134 = vmatprep.subr.mxu0 0.0
    %7135 = vmatpush1.msra.mxu0 0.0
    %7136 = vmatprep.subr.mxu0 0.0
    %7137 = vmatpush1.msra.mxu0 0.0
    %7138 = vmatprep.subr.mxu0 0.0
    %7139 = vmatpush1.msra.mxu0 0.0
    %7140 = vmatprep.subr.mxu0 0.0
    %7141 = vmatpush1.msra.mxu0 0.0
    %7142 = vmatprep.subr.mxu0 0.0
    %7143 = vmatpush1.msra.mxu0 0.0
    %7144 = vmatprep.subr.mxu0 0.0
    %7145 = vmatpush1.msra.mxu0 0.0
    %7146 = vmatprep.subr.mxu0 0.0
    %7147 = vmatpush1.msra.mxu0 0.0
    %7148 = vmatprep.subr.mxu0 0.0
    %7149 = vmatpush1.msra.mxu0 0.0
    %7150 = vmatprep.subr.mxu0 0.0
    %7151 = vmatpush1.msra.mxu0 0.0
    %7152 = vmatprep.subr.mxu0 0.0
    %7153 = vmatpush1.msra.mxu0 0.0
    %7154 = vmatprep.subr.mxu0 0.0
    %7155 = vmatpush1.msra.mxu0 0.0
    %7156 = vmatprep.subr.mxu0 0.0
    %7157 = vmatpush1.msra.mxu0 0.0
    %7158 = vmatprep.subr.mxu0 0.0
    %7159 = vmatpush1.msra.mxu0 0.0
    %7160 = vmatprep.subr.mxu0 0.0
    %7161 = vmatpush1.msra.mxu0 0.0
    %7162 = vmatprep.subr.mxu0 0.0
    %7163 = vmatpush1.msra.mxu0 0.0
    %7164 = vmatprep.subr.mxu0 0.0
    %7165 = vmatpush1.msra.mxu0 0.0
    %7166 = vmatprep.subr.mxu0 0.0
    %7167 = vmatpush1.msra.mxu0 0.0
    %7168 = vmatprep.subr.mxu0 0.0
    %7169 = vmatpush1.msra.mxu0 0.0
    %7170 = vmatprep.subr.mxu0 0.0
    %7171 = vmatpush1.msra.mxu0 0.0
    %7172 = vmatprep.subr.mxu0 0.0
    %7173 = vmatpush1.msra.mxu0 0.0
    %7174 = vmatprep.subr.mxu0 0.0
    %7175 = vmatpush1.msra.mxu0 0.0
    %7176 = vmatprep.subr.mxu0 0.0
    %7177 = vmatpush1.msra.mxu0 0.0
    %7178 = vmatprep.subr.mxu0 0.0
    %7179 = vmatpush1.msra.mxu0 0.0
    %7180 = vmatprep.subr.mxu0 0.0
    %7181 = vmatpush1.msra.mxu0 0.0
    %7182 = vmatprep.subr.mxu0 0.0
    %7183 = vmatpush1.msra.mxu0 0.0
    %7184 = vmatprep.subr.mxu0 0.0
    %7185 = vmatpush1.msra.mxu0 0.0
    %7186 = vmatprep.mubr.f32.mxu0 0.0
    %7187 = vmatmul.mubr.f32.gmra.mrb[0].mxu0 %v7049
    %v7188 = vpop.f32.mrb[0].mxu0
    %v7189 = vadd.f32 0.0, %v7188
    %v7190 = vpop.f32.mrb[0].mxu0
    %v7191 = vadd.f32 0.0, %v7190
    %7192 = vdwg.mxu0
    %7193 = vmatprep.subr.mxu0 %v7021
    %7194 = vmatpush1.msra.mxu0 %v7020
    %7195 = vmatprep.subr.mxu0 %v7029
    %7196 = vmatpush1.msra.mxu0 %v7028
    %7197 = vmatprep.subr.mxu0 %v7037
    %7198 = vmatpush1.msra.mxu0 %v7036
    %7199 = vmatprep.subr.mxu0 %v7045
    %7200 = vmatpush1.msra.mxu0 %v7044
    %7201 = vmatprep.subr.mxu0 0.0
    %7202 = vmatpush1.msra.mxu0 0.0
    %7203 = vmatprep.subr.mxu0 0.0
    %7204 = vmatpush1.msra.mxu0 0.0
    %7205 = vmatprep.subr.mxu0 0.0
    %7206 = vmatpush1.msra.mxu0 0.0
    %7207 = vmatprep.subr.mxu0 0.0
    %7208 = vmatpush1.msra.mxu0 0.0
    %7209 = vmatprep.subr.mxu0 0.0
    %7210 = vmatpush1.msra.mxu0 0.0
    %7211 = vmatprep.subr.mxu0 0.0
    %7212 = vmatpush1.msra.mxu0 0.0
    %7213 = vmatprep.subr.mxu0 0.0
    %7214 = vmatpush1.msra.mxu0 0.0
    %7215 = vmatprep.subr.mxu0 0.0
    %7216 = vmatpush1.msra.mxu0 0.0
    %7217 = vmatprep.subr.mxu0 0.0
    %7218 = vmatpush1.msra.mxu0 0.0
    %7219 = vmatprep.subr.mxu0 0.0
    %7220 = vmatpush1.msra.mxu0 0.0
    %7221 = vmatprep.subr.mxu0 0.0
    %7222 = vmatpush1.msra.mxu0 0.0
    %7223 = vmatprep.subr.mxu0 0.0
    %7224 = vmatpush1.msra.mxu0 0.0
    %7225 = vmatprep.subr.mxu0 0.0
    %7226 = vmatpush1.msra.mxu0 0.0
    %7227 = vmatprep.subr.mxu0 0.0
    %7228 = vmatpush1.msra.mxu0 0.0
    %7229 = vmatprep.subr.mxu0 0.0
    %7230 = vmatpush1.msra.mxu0 0.0
    %7231 = vmatprep.subr.mxu0 0.0
    %7232 = vmatpush1.msra.mxu0 0.0
    %7233 = vmatprep.subr.mxu0 0.0
    %7234 = vmatpush1.msra.mxu0 0.0
    %7235 = vmatprep.subr.mxu0 0.0
    %7236 = vmatpush1.msra.mxu0 0.0
    %7237 = vmatprep.subr.mxu0 0.0
    %7238 = vmatpush1.msra.mxu0 0.0
    %7239 = vmatprep.subr.mxu0 0.0
    %7240 = vmatpush1.msra.mxu0 0.0
    %7241 = vmatprep.subr.mxu0 0.0
    %7242 = vmatpush1.msra.mxu0 0.0
    %7243 = vmatprep.subr.mxu0 0.0
    %7244 = vmatpush1.msra.mxu0 0.0
    %7245 = vmatprep.subr.mxu0 0.0
    %7246 = vmatpush1.msra.mxu0 0.0
    %7247 = vmatprep.subr.mxu0 0.0
    %7248 = vmatpush1.msra.mxu0 0.0
    %7249 = vmatprep.subr.mxu0 0.0
    %7250 = vmatpush1.msra.mxu0 0.0
    %7251 = vmatprep.subr.mxu0 0.0
    %7252 = vmatpush1.msra.mxu0 0.0
    %7253 = vmatprep.subr.mxu0 0.0
    %7254 = vmatpush1.msra.mxu0 0.0
    %7255 = vmatprep.subr.mxu0 0.0
    %7256 = vmatpush1.msra.mxu0 0.0
    %7257 = vmatprep.mubr.f32.mxu0 0.0
    %7258 = vmatmul.mubr.f32.gmra.mrb[0].mxu0 %v7049
    %v7259 = vpop.f32.mrb[0].mxu0
    %v7260 = vadd.f32 0.0, %v7259
    %v7261 = vpop.f32.mrb[0].mxu0
    %v7262 = vadd.f32 0.0, %v7261
    %7263 = vdwg.mxu0
    %7264 = vmatprep.subr.mxu0 %v7023
    %7265 = vmatpush1.msra.mxu0 %v7022
    %7266 = vmatprep.subr.mxu0 %v7031
    %7267 = vmatpush1.msra.mxu0 %v7030
    %7268 = vmatprep.subr.mxu0 %v7039
    %7269 = vmatpush1.msra.mxu0 %v7038
    %7270 = vmatprep.subr.mxu0 %v7047
    %7271 = vmatpush1.msra.mxu0 %v7046
    %7272 = vmatprep.subr.mxu0 0.0
    %7273 = vmatpush1.msra.mxu0 0.0
    %7274 = vmatprep.subr.mxu0 0.0
    %7275 = vmatpush1.msra.mxu0 0.0
    %7276 = vmatprep.subr.mxu0 0.0
    %7277 = vmatpush1.msra.mxu0 0.0
    %7278 = vmatprep.subr.mxu0 0.0
    %7279 = vmatpush1.msra.mxu0 0.0
    %7280 = vmatprep.subr.mxu0 0.0
    %7281 = vmatpush1.msra.mxu0 0.0
    %7282 = vmatprep.subr.mxu0 0.0
    %7283 = vmatpush1.msra.mxu0 0.0
    %7284 = vmatprep.subr.mxu0 0.0
    %7285 = vmatpush1.msra.mxu0 0.0
    %7286 = vmatprep.subr.mxu0 0.0
    %7287 = vmatpush1.msra.mxu0 0.0
    %7288 = vmatprep.subr.mxu0 0.0
    %7289 = vmatpush1.msra.mxu0 0.0
    %7290 = vmatprep.subr.mxu0 0.0
    %7291 = vmatpush1.msra.mxu0 0.0
    %7292 = vmatprep.subr.mxu0 0.0
    %7293 = vmatpush1.msra.mxu0 0.0
    %7294 = vmatprep.subr.mxu0 0.0
    %7295 = vmatpush1.msra.mxu0 0.0
    %7296 = vmatprep.subr.mxu0 0.0
    %7297 = vmatpush1.msra.mxu0 0.0
    %7298 = vmatprep.subr.mxu0 0.0
    %7299 = vmatpush1.msra.mxu0 0.0
    %7300 = vmatprep.subr.mxu0 0.0
    %7301 = vmatpush1.msra.mxu0 0.0
    %7302 = vmatprep.subr.mxu0 0.0
    %7303 = vmatpush1.msra.mxu0 0.0
    %7304 = vmatprep.subr.mxu0 0.0
    %7305 = vmatpush1.msra.mxu0 0.0
    %7306 = vmatprep.subr.mxu0 0.0
    %7307 = vmatpush1.msra.mxu0 0.0
    %7308 = vmatprep.subr.mxu0 0.0
    %7309 = vmatpush1.msra.mxu0 0.0
    %7310 = vmatprep.subr.mxu0 0.0
    %7311 = vmatpush1.msra.mxu0 0.0
    %7312 = vmatprep.subr.mxu0 0.0
    %7313 = vmatpush1.msra.mxu0 0.0
    %7314 = vmatprep.subr.mxu0 0.0
    %7315 = vmatpush1.msra.mxu0 0.0
    %7316 = vmatprep.subr.mxu0 0.0
    %7317 = vmatpush1.msra.mxu0 0.0
    %7318 = vmatprep.subr.mxu0 0.0
    %7319 = vmatpush1.msra.mxu0 0.0
    %7320 = vmatprep.subr.mxu0 0.0
    %7321 = vmatpush1.msra.mxu0 0.0
    %7322 = vmatprep.subr.mxu0 0.0
    %7323 = vmatpush1.msra.mxu0 0.0
    %7324 = vmatprep.subr.mxu0 0.0
    %7325 = vmatpush1.msra.mxu0 0.0
    %7326 = vmatprep.subr.mxu0 0.0
    %7327 = vmatpush1.msra.mxu0 0.0
    %7328 = vmatprep.mubr.f32.mxu0 0.0
    %7329 = vmatmul.mubr.f32.gmra.mrb[0].mxu0 %v7049
    %v7330 = vpop.f32.mrb[0].mxu0
    %v7331 = vadd.f32 0.0, %v7330
    %v7332 = vpop.f32.mrb[0].mxu0
    %v7333 = vadd.f32 0.0, %v7332
    %7334 = vdwg.mxu0
    %v7335 = vadd.f32 %v7007, %v7118
    %v7336 = vadd.f32 %v7008, %v7120
    %v7337 = vadd.f32 %v7009, %v7189
    %v7338 = vadd.f32 %v7010, %v7191
    %v7339 = vadd.f32 %v7011, %v7260
    %v7340 = vadd.f32 %v7012, %v7262
    %v7341 = vadd.f32 %v7013, %v7331
    %v7342 = vadd.f32 %v7014, %v7333
    %v7343 = vld [vmem:[%s12] sm:$0xff]
    %v7345 = vlaneseq
    %v7346 = vshrl.u32 %v7345, 7
    %v7347 = vsub.s32 0, %v7346
    %v7348 = vrot.slane %v7343, %v7347
    %v7349 = vlaneseq
    %v7350 = vshrl.u32 %v7349, 7
    %v7351 = vsub.s32 1, %v7350
    %v7352 = vrot.slane %v7343, %v7351
    %v7353 = vlaneseq
    %v7354 = vshrl.u32 %v7353, 7
    %v7355 = vsub.s32 2, %v7354
    %v7356 = vrot.slane %v7343, %v7355
    %v7357 = vlaneseq
    %v7358 = vshrl.u32 %v7357, 7
    %v7359 = vsub.s32 3, %v7358
    %v7360 = vrot.slane %v7343, %v7359
    %v7361 = vlaneseq
    %v7362 = vshrl.u32 %v7361, 7
    %v7363 = vsub.s32 4, %v7362
    %v7364 = vrot.slane %v7343, %v7363
    %v7365 = vlaneseq
    %v7366 = vshrl.u32 %v7365, 7
    %v7367 = vsub.s32 5, %v7366
    %v7368 = vrot.slane %v7343, %v7367
    %v7369 = vlaneseq
    %v7370 = vshrl.u32 %v7369, 7
    %v7371 = vsub.s32 6, %v7370
    %v7372 = vrot.slane %v7343, %v7371
    %v7373 = vlaneseq
    %v7374 = vshrl.u32 %v7373, 7
    %v7375 = vsub.s32 7, %v7374
    %v7376 = vrot.slane %v7343, %v7375
    %v7385 = vadd.f32 %v7335, %v7348
    %v7386 = vadd.f32 %v7336, %v7352
    %v7387 = vadd.f32 %v7337, %v7356
    %v7388 = vadd.f32 %v7338, %v7360
    %v7389 = vadd.f32 %v7339, %v7364
    %v7390 = vadd.f32 %v7340, %v7368
    %v7391 = vadd.f32 %v7341, %v7372
    %v7392 = vadd.f32 %v7342, %v7376
    %v7393 = vmax.f32 %v7385, 0.0
    %v7394 = vmax.f32 %v7386, 0.0
    %v7395 = vmax.f32 %v7387, 0.0
    %v7396 = vmax.f32 %v7388, 0.0
    %v7397 = vmax.f32 %v7389, 0.0
    %v7398 = vmax.f32 %v7390, 0.0
    %v7399 = vmax.f32 %v7391, 0.0
    %v7400 = vmax.f32 %v7392, 0.0
    %v7409 = vcombine.low %v7393, %v7394
    %v7410 = vcombine.low %v7395, %v7396
    %v7412 = vunpack.c.l.s4 1983009808
    %v7413 = vunpack.c.0.s8 %v7412
    %v7414 = vlaneseq
    %v7415 = vshrl.u32 %v7414, 7
    %v7416 = vsub.s32 %v7413, %v7415
    %v7417 = vrot.slane %v7409, %v7416
    %v7419 = vunpack.c.l.s4 1983009808
    %v7420 = vunpack.c.0.s8 %v7419
    %v7421 = vlaneseq
    %v7422 = vshrl.u32 %v7421, 7
    %v7423 = vsub.s32 %v7420, %v7422
    %v7424 = vrot.slane %v7410, %v7423
    %v7425 = vcombine.low %v7417, %v7424
    %v7426 = vcombine.low %v7397, %v7398
    %v7427 = vcombine.low %v7399, %v7400
    %v7429 = vunpack.c.l.s4 1983009808
    %v7430 = vunpack.c.0.s8 %v7429
    %v7431 = vlaneseq
    %v7432 = vshrl.u32 %v7431, 7
    %v7433 = vsub.s32 %v7430, %v7432
    %v7434 = vrot.slane %v7426, %v7433
    %v7436 = vunpack.c.l.s4 1983009808
    %v7437 = vunpack.c.0.s8 %v7436
    %v7438 = vlaneseq
    %v7439 = vshrl.u32 %v7438, 7
    %v7440 = vsub.s32 %v7437, %v7439
    %v7441 = vrot.slane %v7427, %v7440
    %v7442 = vcombine.low %v7434, %v7441
    %7445 = vst [vmem:[#allocation8] sm:$0xff] %v7425
    %7446 = vst [vmem:[#allocation8 + $0x8] sm:$0xff] %v7442
    // Predicated region
    $region54: #{audio_network_forward.1} parent=1 // pred_check
      _
    $region55: #{audio_network_forward.1} parent=1 // pred_check_branch
      %7448 = sbr.rel (0) target = $region57
    $region56: #{audio_network_forward.1} parent=1 // pred_region
      %s7450 = ssub.s32 256, 256
      %7451 = vsyncadd [#allocation9], %s7450
      %s7453 = sshll.u32 [#allocation8], 4
      %s7454 = int_to_ptr.vmem [resolvable:$true] %s7453
      %7456 = dma.vmem_to_hbm [thread:$0]  %s7454, 256, %s13, [#allocation9]
    $region57: #{audio_network_forward.1} parent=1 // pred_fallthru
      _
    // Predicated region
    $region58: #{audio_network_forward.1} parent=1 // pred_check
      _
    $region59: #{audio_network_forward.1} parent=1 // pred_check_branch
      %7458 = sbr.rel (0) target = $region61
    $region60: #{audio_network_forward.1} parent=1 // pred_region
      %7459 = dma.done [#allocation9], 256
    $region61: #{audio_network_forward.1} parent=1 // pred_fallthru
      _
    %7460 = vsyncpa [#allocation9], 1

</llo_original>
